<compile_context>
chip_gen: v5e
topology: v5e:2x2
jax: 0.10.0
libtpu: 0.0.40
codegen_flags: <defaults>
</compile_context>

<pallas_src>
import math
from functools import partial

import jax
import jax.numpy as jnp
from jax.experimental import pallas as pl
from jax.experimental.pallas import tpu as pltpu

LEAKY_SLOPE = 0.2
LANE = 128


def _round_up(v, m):
    return -(-v // m) * m


# ---------------------------------------------------------------------------
# Pallas kernels
# ---------------------------------------------------------------------------
def _conv_kernel(x_ref, w_ref, b_ref, o_ref, col_ref, *,
                 offsets, n_pad, cin, bblk, slope):
    """KxK (dilated) conv + bias (+LeakyReLU) as ONE matmul, K = taps*Cin.

    x_ref  : (bblk, Cin, Sp)      bf16  zero-padded image, spatial flattened
    w_ref  : (Cout, T*Cin)        bf16
    b_ref  : (Cout, 1)            f32
    o_ref  : (bblk, Cout, n_pad)  n_pad = out_len rounded up to 128 lanes
    col_ref: (T*Cin, bblk*n_pad)  bf16  in-VMEM "im2col" scratch
    """
    for i in range(bblk):                       # static loops (small)
        for t, off in enumerate(offsets):
            col_ref[t * cin:(t + 1) * cin, i * n_pad:(i + 1) * n_pad] = \
                x_ref[i, :, off:off + n_pad]
    acc = jnp.dot(w_ref[...], col_ref[...],
                  preferred_element_type=jnp.float32)      # (Cout, bblk*n_pad)
    acc = acc + b_ref[...]                                 # f32 bias
    if slope is not None:                                  # fused LeakyReLU
        acc = jnp.where(acc >= 0.0, acc, acc * slope)
    for i in range(bblk):
        o_ref[i] = acc[:, i * n_pad:(i + 1) * n_pad].astype(o_ref.dtype)


def _ff_kernel(x_ref, w1_ref, b1_ref, mask_ref, w2_ref, b2_ref, o_ref,
               col1_ref, mid_ref, col2_ref, *,
               offs1, offs2, cin, cmid, bblk, m_w, n2_pad, slope):
    """FeedForward: conv3x3(dil=2) + leaky + conv3x3 + leaky fused in VMEM.

    The input is padded by (pad1+pad2) in the wrapper.  Conv1 is evaluated over
    the extended flat domain; the mask zeroes everything outside conv1's valid
    HxW interior, which makes the masked result exactly conv2's zero-padded
    input (same flat row stride) -- no stride conversion needed.
    """
    # ---- conv1 ----
    for i in range(bblk):
        for t, off in enumerate(offs1):
            col1_ref[t * cin:(t + 1) * cin, i * m_w:(i + 1) * m_w] = \
                x_ref[i, :, off:off + m_w]
    y1 = jnp.dot(w1_ref[...], col1_ref[...], preferred_element_type=jnp.float32)
    y1 = y1 + b1_ref[...]
    y1 = jnp.where(y1 >= 0.0, y1, y1 * slope)
    mid_ref[...] = (y1 * mask_ref[...]).astype(mid_ref.dtype)   # zero-pad ring
    # ---- conv2 ----
    for i in range(bblk):
        for t, off in enumerate(offs2):
            col2_ref[t * cmid:(t + 1) * cmid, i * n2_pad:(i + 1) * n2_pad] = \
                mid_ref[:, i * m_w + off:i * m_w + off + n2_pad]
    y2 = jnp.dot(w2_ref[...], col2_ref[...], preferred_element_type=jnp.float32)
    y2 = y2 + b2_ref[...]
    y2 = jnp.where(y2 >= 0.0, y2, y2 * slope)
    for i in range(bblk):
        o_ref[i] = y2[:, i * n2_pad:(i + 1) * n2_pad].astype(o_ref.dtype)


def _attention_kernel(*refs, num_scales, scales):
    """softmax(Q K^T / sqrt(D)) V for every patch scale of one batch element.

    refs = (q0,k0,v0, q1,k1,v1, ..., o0, o1, ...); blocks (1, L_s, D_s) bf16 in,
    f32 out.  Matmuls in bf16 with f32 accumulation; softmax in f32.
    """
    in_refs = refs[:3 * num_scales]
    out_refs = refs[3 * num_scales:]
    for s in range(num_scales):
        q = in_refs[3 * s][0]
        k = in_refs[3 * s + 1][0]
        v = in_refs[3 * s + 2][0]
        scores = jax.lax.dot_general(q, k, (((1,), (1,)), ((), ())),
                                     preferred_element_type=jnp.float32)
        scores = scores * scales[s]
        m = jnp.max(scores, axis=-1, keepdims=True)
        e = jnp.exp(scores - m)
        denom = jnp.sum(e, axis=-1, keepdims=True)
        p = e * pl.reciprocal(denom, approx=True)
        out = jax.lax.dot_general(p.astype(v.dtype), v,
                                  (((1,), (0,)), ((), ())),
                                  preferred_element_type=jnp.float32)
        out_refs[s][0] = out.astype(out_refs[s].dtype)


# ---------------------------------------------------------------------------
# Wrappers
# ---------------------------------------------------------------------------
def _grid_split(B):
    g = 2 if (B % 2 == 0 and B > 1) else 1     # >=2 parallel steps for v7x
    return g, B // g


def conv2d_pallas(x, weight, bias, *, padding, dilation=1, leaky_slope=None,
                  out_dtype=jnp.float32):
    """Conv2d (stride 1, square kernel, optional dilation) + bias (+LeakyReLU).
    x: (B, Cin, H, W); weight: (Cout, Cin, kh, kw)."""
    B, Cin, H, W = x.shape
    Cout, _, kh, kw = weight.shape
    Hp, Wp = H + 2 * padding, W + 2 * padding
    Ho, Wo = Hp - dilation * (kh - 1), Wp - dilation * (kw - 1)
    out_len = Ho * Wp                          # garbage cols sliced off later
    n_pad = _round_up(out_len, LANE)           # lane-dense matmul/store width
    offsets = tuple(ky * dilation * Wp + kx * dilation
                    for ky in range(kh) for kx in range(kw))
    sp_needed = offsets[-1] + n_pad
    extra_rows = max(0, -(-(sp_needed - Hp * Wp) // Wp))
    Sp = (Hp + extra_rows) * Wp
    assert offsets[-1] + n_pad <= Sp and Wo <= Wp - dilation * (kw - 1) + 0

    # Single pad: spatial pad + extra zero rows for the flat-tap tail.
    if padding or extra_rows:
        x = jnp.pad(x, ((0, 0), (0, 0),
                        (padding, padding + extra_rows), (padding, padding)))
    xflat = x.reshape(B, Cin, Sp).astype(jnp.bfloat16)

    wmat = weight.transpose(0, 2, 3, 1).reshape(Cout, kh * kw * Cin)
    wmat = wmat.astype(jnp.bfloat16)
    b2 = bias.reshape(Cout, 1).astype(jnp.float32)

    g, bblk = _grid_split(B)
    out_flat = pl.pallas_call(
        partial(_conv_kernel, offsets=offsets, n_pad=n_pad, cin=Cin,
                bblk=bblk, slope=leaky_slope),
        out_shape=jax.ShapeDtypeStruct((B, Cout, n_pad), out_dtype),
        grid=(g,),
        in_specs=[
            pl.BlockSpec((bblk, Cin, Sp), lambda i: (i, 0, 0)),
            pl.BlockSpec((Cout, kh * kw * Cin), lambda i: (0, 0)),
            pl.BlockSpec((Cout, 1), lambda i: (0, 0)),
        ],
        out_specs=pl.BlockSpec((bblk, Cout, n_pad), lambda i: (i, 0, 0)),
        scratch_shapes=[pltpu.VMEM((kh * kw * Cin, bblk * n_pad),
                                   jnp.bfloat16)],
        compiler_params=pltpu.CompilerParams(
            dimension_semantics=("parallel",)),
    )(xflat, wmat, b2)

    return out_flat[:, :, :out_len].reshape(B, Cout, Ho, Wp)[:, :, :, :Wo]


def feed_forward_pallas(x, p):
    """FeedForward: conv3x3(pad=2, dil=2) + leaky + conv3x3(pad=1) + leaky,
    both convs fused into one Pallas kernel with a VMEM intermediate."""
    B, C, H, W = x.shape
    k = 3
    pad1, dil1 = 2, 2
    pad2, dil2 = 1, 1
    p0 = pad1 + pad2
    Hp0, Wp0 = H + 2 * p0, W + 2 * p0

    offs2 = tuple(ky * dil2 * Wp0 + kx * dil2
                  for ky in range(k) for kx in range(k))
    n2_len = H * Wp0
    n2_pad = _round_up(n2_len, LANE)
    m_w = _round_up(n2_pad + offs2[-1], LANE)          # intermediate width/img

    offs1 = tuple(ky * dil1 * Wp0 + kx * dil1
                  for ky in range(k) for kx in range(k))
    sp_needed = m_w + offs1[-1]
    extra_rows = max(0, -(-(sp_needed - Hp0 * Wp0) // Wp0))
    Sp1 = (Hp0 + extra_rows) * Wp0

    xp = jnp.pad(x, ((0, 0), (0, 0), (p0, p0 + extra_rows), (p0, p0)))
    xflat = xp.reshape(B, C, Sp1).astype(jnp.bfloat16)

    w1 = p['w1'].transpose(0, 2, 3, 1).reshape(C, k * k * C).astype(jnp.bfloat16)
    w2 = p['w2'].transpose(0, 2, 3, 1).reshape(C, k * k * C).astype(jnp.bfloat16)
    b1 = p['b1'].reshape(C, 1).astype(jnp.float32)
    b2 = p['b2'].reshape(C, 1).astype(jnp.float32)

    g, bblk = _grid_split(B)

    # Mask selecting conv1's valid HxW interior inside the (pad1+pad2)-padded
    # flat domain; everything else (conv2's zero-pad ring + tap garbage) -> 0.
    idx = jnp.arange(m_w)
    r, cc = idx // Wp0, idx % Wp0
    valid = (r >= pad2) & (r < pad2 + H) & (cc >= pad2) & (cc < pad2 + W)
    mask = jnp.tile(valid.astype(jnp.float32), (bblk,)).reshape(1, bblk * m_w)

    out_flat = pl.pallas_call(
        partial(_ff_kernel, offs1=offs1, offs2=offs2, cin=C, cmid=C,
                bblk=bblk, m_w=m_w, n2_pad=n2_pad, slope=LEAKY_SLOPE),
        out_shape=jax.ShapeDtypeStruct((B, C, n2_pad), jnp.float32),
        grid=(g,),
        in_specs=[
            pl.BlockSpec((bblk, C, Sp1), lambda i: (i, 0, 0)),
            pl.BlockSpec((C, k * k * C), lambda i: (0, 0)),
            pl.BlockSpec((C, 1), lambda i: (0, 0)),
            pl.BlockSpec((1, bblk * m_w), lambda i: (0, 0)),
            pl.BlockSpec((C, k * k * C), lambda i: (0, 0)),
            pl.BlockSpec((C, 1), lambda i: (0, 0)),
        ],
        out_specs=pl.BlockSpec((bblk, C, n2_pad), lambda i: (i, 0, 0)),
        scratch_shapes=[
            pltpu.VMEM((k * k * C, bblk * m_w), jnp.bfloat16),     # im2col 1
            pltpu.VMEM((C, bblk * m_w), jnp.bfloat16),             # conv1 out
            pltpu.VMEM((k * k * C, bblk * n2_pad), jnp.bfloat16),  # im2col 2
        ],
        compiler_params=pltpu.CompilerParams(
            dimension_semantics=("parallel",)),
    )(xflat, w1, b1, mask, w2, b2)

    return out_flat[:, :, :n2_len].reshape(B, C, H, Wp0)[:, :, :, :W]


def _attention_pallas(qkvs, shapes, b):
    """Single pallas_call: all patch scales, grid over batch (parallel)."""
    ns = len(shapes)
    scales = tuple(1.0 / math.sqrt(D) for (_, D) in shapes)
    in_specs, out_specs, out_shapes = [], [], []
    for (L, D) in shapes:
        spec = pl.BlockSpec((1, L, D), lambda i: (i, 0, 0))
        in_specs += [spec] * 3
        out_specs.append(spec)
        out_shapes.append(jax.ShapeDtypeStruct((b, L, D), jnp.float32))
    outs = pl.pallas_call(
        partial(_attention_kernel, num_scales=ns, scales=scales),
        out_shape=tuple(out_shapes),
        grid=(b,),
        in_specs=in_specs,
        out_specs=tuple(out_specs),
        compiler_params=pltpu.CompilerParams(
            dimension_semantics=("parallel",)),
    )(*qkvs)
    return list(outs)


def multi_head_attention(x, p, patchsize, b, c):
    bt, _, h, w = x.shape
    t = bt // b
    d_k = c // len(patchsize)

    # Fused q/k/v 1x1-conv embeddings (3c output channels), bf16 output.
    qkv_w = jnp.concatenate([p['wq'], p['wk'], p['wv']], axis=0)
    qkv_b = jnp.concatenate([p['bq'], p['bk'], p['bv']], axis=0)
    qkv = conv2d_pallas(x, qkv_w, qkv_b, padding=0, out_dtype=jnp.bfloat16)
    _query, _key, _value = jnp.split(qkv, 3, axis=1)

    qkvs, shapes = [], []
    for s, (width, height) in enumerate(patchsize):
        out_h, out_w = h // height, w // width
        L = t * out_h * out_w
        D = d_k * height * width

        def to_patches(z):
            z = z[:, s * d_k:(s + 1) * d_k]                  # (bt, d_k, h, w)
            z = z.reshape(b, t, d_k, out_h, height, out_w, width)
            z = z.transpose(0, 1, 3, 5, 2, 4, 6)
            return z.reshape(b, L, D)

        qkvs += [to_patches(_query), to_patches(_key), to_patches(_value)]
        shapes.append((L, D))

    ys = _attention_pallas(qkvs, shapes, b)

    outs = []
    for s, (width, height) in enumerate(patchsize):
        out_h, out_w = h // height, w // width
        y = ys[s].reshape(b, t, out_h, out_w, d_k, height, width)
        y = y.transpose(0, 1, 4, 2, 5, 3, 6).reshape(bt, d_k, h, w)
        outs.append(y)
    output = jnp.concatenate(outs, axis=1)                   # (bt, c, h, w)
    return conv2d_pallas(output, p['wo'], p['bo'], padding=1,
                         leaky_slope=LEAKY_SLOPE)


def transformer_block_forward(xdict, params, patchsize):
    x, b, c = xdict['x'], xdict['b'], xdict['c']
    x = x + multi_head_attention(x, params['attn'], patchsize, b, c)
    x = x + feed_forward_pallas(x, params['ff'])
    return {'x': x, 'b': b, 'c': c}


# ---------------------------------------------------------------------------
# Pure-JAX reference (correctness check, f32 HIGHEST precision)
# ---------------------------------------------------------------------------
def _reference_forward(x, b, c, params, patchsize):
    hp = jax.lax.Precision.HIGHEST

    def conv(z, w, bias, padding, dilation=1):
        y = jax.lax.conv_general_dilated(
            z, w, window_strides=(1, 1),
            padding=((padding, padding), (padding, padding)),
            rhs_dilation=(dilation, dilation),
            dimension_numbers=('NCHW', 'OIHW', 'NCHW'), precision=hp)
        return y + bias.reshape(1, -1, 1, 1)

    def leaky(z):
        return jnp.where(z >= 0, z, LEAKY_SLOPE * z)

    bt, _, h, w = x.shape
    t = bt // b
    d_k = c // len(patchsize)
    ap, fp = params['attn'], params['ff']
    q_all = conv(x, ap['wq'], ap['bq'], 0)
    k_all = conv(x, ap['wk'], ap['bk'], 0)
    v_all = conv(x, ap['wv'], ap['bv'], 0)
    outs = []
    for s, (width, height) in enumerate(patchsize):
        out_h, out_w = h // height, w // width
        L, D = t * out_h * out_w, d_k * height * width

        def to_p(z):
            z = z[:, s * d_k:(s + 1) * d_k]
            z = z.reshape(b, t, d_k, out_h, height, out_w, width)
            return z.transpose(0, 1, 3, 5, 2, 4, 6).reshape(b, L, D)

        qp, kp, vp = to_p(q_all), to_p(k_all), to_p(v_all)
        sc = jnp.einsum('bld,bmd->blm', qp, kp, precision=hp) / math.sqrt(D)
        pa = jax.nn.softmax(sc, axis=-1)
        y = jnp.einsum('blm,bmd->bld', pa, vp, precision=hp)
        y = y.reshape(b, t, out_h, out_w, d_k, height, width)
        y = y.transpose(0, 1, 4, 2, 5, 3, 6).reshape(bt, d_k, h, w)
        outs.append(y)
    att = leaky(conv(jnp.concatenate(outs, axis=1), ap['wo'], ap['bo'], 1))
    x1 = x + att
    y = leaky(conv(x1, fp['w1'], fp['b1'], 2, 2))
    y = leaky(conv(y, fp['w2'], fp['b2'], 1))
    return x1 + y


# ---------------------------------------------------------------------------
def _init_conv(key, cout, cin, k):
    kw_, kb_ = jax.random.split(key)
    bound = 1.0 / math.sqrt(cin * k * k)
    w = jax.random.uniform(kw_, (cout, cin, k, k), minval=-bound,
                           maxval=bound, dtype=jnp.float32)
    bvec = jax.random.uniform(kb_, (cout,), minval=-bound, maxval=bound,
                              dtype=jnp.float32)
    return w, bvec


if __name__ == "__main__":
    hidden = 32                    # d_model == c (PyTorch default 128)
    b, t = 2, 2                    # video batch, frames; bt = b*t images
    bt = b * t
    h = w = 16
    patchsize = [(8, 8), (4, 4)]   # (width, height) per attention scale
    assert hidden % len(patchsize) == 0

    key = jax.random.PRNGKey(0)
    ks = jax.random.split(key, 7)
    wq, bq = _init_conv(ks[0], hidden, hidden, 1)
    wk, bk = _init_conv(ks[1], hidden, hidden, 1)
    wv, bv = _init_conv(ks[2], hidden, hidden, 1)
    wo, bo = _init_conv(ks[3], hidden, hidden, 3)
    w1, b1 = _init_conv(ks[4], hidden, hidden, 3)
    w2, b2 = _init_conv(ks[5], hidden, hidden, 3)
    params = {
        'attn': {'wq': wq, 'bq': bq, 'wk': wk, 'bk': bk, 'wv': wv, 'bv': bv,
                 'wo': wo, 'bo': bo},
        'ff': {'w1': w1, 'b1': b1, 'w2': w2, 'b2': b2},
    }
    x = jax.random.normal(ks[6], (bt, hidden, h, w), dtype=jnp.float32)

    @jax.jit
    def fwd(xx, pp):
        return transformer_block_forward(
            {'x': xx, 'b': b, 'c': hidden}, pp, patchsize)['x']

    y = fwd(x, params)
    jax.block_until_ready(y)
    assert y.shape == (bt, hidden, h, w), y.shape

    ref = _reference_forward(x, b, hidden, params, patchsize)
    err = float(jnp.max(jnp.abs(y - ref)))
    assert err < 5e-2, f"max abs error vs reference: {err}"
    print("KERNEL_OK")
</pallas_src>

<mosaic_0001>
module attributes {stable_mosaic.version = 11 : i64} {
  func.func @_conv_kernel(%arg0: i32, %arg1: memref<2x32x256xbf16, #tpu.memory_space<vmem>>, %arg2: memref<96x32xbf16, #tpu.memory_space<vmem>>, %arg3: memref<96x1xf32, #tpu.memory_space<vmem>>, %arg4: memref<2x96x256xbf16, #tpu.memory_space<vmem>>, %arg5: memref<32x512xbf16, #tpu.memory_space<vmem>>) attributes {dimension_semantics = [#tpu.dimension_semantics<parallel>], iteration_bounds = array<i64: 2>, scalar_prefetch = 0 : i64, scratch_operands = 1 : i64, tpu.core_type = #tpu.core_type<tc>, window_params = [{transform_indices = @transform_0, window_bounds = array<i64: 2, 32, 256>}, {pipeline_mode = #tpu.pipeline_mode<synchronous>, transform_indices = @transform_1, window_bounds = array<i64: 96, 32>}, {pipeline_mode = #tpu.pipeline_mode<synchronous>, transform_indices = @transform_2, window_bounds = array<i64: 96, 1>}, {transform_indices = @transform_3, window_bounds = array<i64: 2, 96, 256>}]} {
    %c0 = arith.constant 0 : index
    %c0_0 = arith.constant 0 : index
    %c0_1 = arith.constant 0 : index
    %0 = vector.load %arg1[%c0, %c0_0, %c0_1] : memref<2x32x256xbf16, #tpu.memory_space<vmem>>, vector<1x32x256xbf16>
    %1 = vector.shape_cast %0 : vector<1x32x256xbf16> to vector<32x256xbf16>
    %c0_2 = arith.constant 0 : index
    %c0_3 = arith.constant 0 : index
    %2 = vector.load %arg5[%c0_2, %c0_3] : memref<32x512xbf16, #tpu.memory_space<vmem>>, vector<32x256xbf16>
    tpu.vector_store %arg5[%c0_2, %c0_3], %1 {strides = array<i32>} : memref<32x512xbf16, #tpu.memory_space<vmem>>, vector<32x256xbf16>,
    %c1 = arith.constant 1 : index
    %c0_4 = arith.constant 0 : index
    %c0_5 = arith.constant 0 : index
    %3 = vector.load %arg1[%c1, %c0_4, %c0_5] : memref<2x32x256xbf16, #tpu.memory_space<vmem>>, vector<1x32x256xbf16>
    %4 = vector.shape_cast %3 : vector<1x32x256xbf16> to vector<32x256xbf16>
    %c0_6 = arith.constant 0 : index
    %c256 = arith.constant 256 : index
    %5 = vector.load %arg5[%c0_6, %c256] : memref<32x512xbf16, #tpu.memory_space<vmem>>, vector<32x256xbf16>
    tpu.vector_store %arg5[%c0_6, %c256], %4 {strides = array<i32>} : memref<32x512xbf16, #tpu.memory_space<vmem>>, vector<32x256xbf16>,
    %c0_7 = arith.constant 0 : index
    %c0_8 = arith.constant 0 : index
    %6 = vector.load %arg2[%c0_7, %c0_8] : memref<96x32xbf16, #tpu.memory_space<vmem>>, vector<96x32xbf16>
    %c0_9 = arith.constant 0 : index
    %c0_10 = arith.constant 0 : index
    %7 = vector.load %arg5[%c0_9, %c0_10] : memref<32x512xbf16, #tpu.memory_space<vmem>>, vector<32x512xbf16>
    %cst = arith.constant dense<0.000000e+00> : vector<96x512xf32>
    %8 = tpu.matmul %6, %7, %cst {dimension_numbers = #tpu.dot_dimension_numbers<[1], [0], [0], [1], [0, 0, 1, 1], [], []>} : vector<96x32xbf16>, vector<32x512xbf16>, vector<96x512xf32> -> vector<96x512xf32>
    %c0_11 = arith.constant 0 : index
    %c0_12 = arith.constant 0 : index
    %9 = vector.load %arg3[%c0_11, %c0_12] : memref<96x1xf32, #tpu.memory_space<vmem>>, vector<96x1xf32>
    %10 = vector.broadcast %9 : vector<96x1xf32> to vector<96x512xf32>
    %11 = arith.addf %8, %10 : vector<96x512xf32>
    %12 = vector.extract_strided_slice %11 {offsets = [0, 0], sizes = [96, 256], strides = [1, 1]} : vector<96x512xf32> to vector<96x256xf32>
    %13 = arith.truncf %12 : vector<96x256xf32> to vector<96x256xbf16>
    %c0_13 = arith.constant 0 : index
    %c0_14 = arith.constant 0 : index
    %c0_15 = arith.constant 0 : index
    %14 = vector.load %arg4[%c0_13, %c0_14, %c0_15] : memref<2x96x256xbf16, #tpu.memory_space<vmem>>, vector<1x96x256xbf16>
    %15 = vector.shape_cast %14 : vector<1x96x256xbf16> to vector<96x256xbf16>
    %16 = vector.shape_cast %13 : vector<96x256xbf16> to vector<1x96x256xbf16>
    tpu.vector_store %arg4[%c0_13, %c0_14, %c0_15], %16 {strides = array<i32>} : memref<2x96x256xbf16, #tpu.memory_space<vmem>>, vector<1x96x256xbf16>,
    %17 = vector.extract_strided_slice %11 {offsets = [0, 256], sizes = [96, 256], strides = [1, 1]} : vector<96x512xf32> to vector<96x256xf32>
    %18 = arith.truncf %17 : vector<96x256xf32> to vector<96x256xbf16>
    %c1_16 = arith.constant 1 : index
    %c0_17 = arith.constant 0 : index
    %c0_18 = arith.constant 0 : index
    %19 = vector.load %arg4[%c1_16, %c0_17, %c0_18] : memref<2x96x256xbf16, #tpu.memory_space<vmem>>, vector<1x96x256xbf16>
    %20 = vector.shape_cast %19 : vector<1x96x256xbf16> to vector<96x256xbf16>
    %21 = vector.shape_cast %18 : vector<96x256xbf16> to vector<1x96x256xbf16>
    tpu.vector_store %arg4[%c1_16, %c0_17, %c0_18], %21 {strides = array<i32>} : memref<2x96x256xbf16, #tpu.memory_space<vmem>>, vector<1x96x256xbf16>,
    return
  }
  func.func @transform_0(%arg0: i32) -> (i32, i32, i32) {
    %c0_i32 = arith.constant 0 : i32
    %c0_i32_0 = arith.constant 0 : i32
    %c0_i32_1 = arith.constant 0 : i32
    return %arg0, %c0_i32, %c0_i32_0 : i32, i32, i32
  }
  func.func @transform_1(%arg0: i32) -> (i32, i32) {
    %c0_i32 = arith.constant 0 : i32
    %c0_i32_0 = arith.constant 0 : i32
    %c0_i32_1 = arith.constant 0 : i32
    return %c0_i32, %c0_i32_0 : i32, i32
  }
  func.func @transform_2(%arg0: i32) -> (i32, i32) {
    %c0_i32 = arith.constant 0 : i32
    %c0_i32_0 = arith.constant 0 : i32
    %c0_i32_1 = arith.constant 0 : i32
    return %c0_i32, %c0_i32_0 : i32, i32
  }
  func.func @transform_3(%arg0: i32) -> (i32, i32, i32) {
    %c0_i32 = arith.constant 0 : i32
    %c0_i32_0 = arith.constant 0 : i32
    %c0_i32_1 = arith.constant 0 : i32
    return %arg0, %c0_i32, %c0_i32_0 : i32, i32, i32
  }
}

module attributes {stable_mosaic.version = 11 : i64} {
  func.func @_attention_kernel(%arg0: i32, %arg1: memref<1x8x1024xbf16, #tpu.memory_space<vmem>>, %arg2: memref<1x8x1024xbf16, #tpu.memory_space<vmem>>, %arg3: memref<1x8x1024xbf16, #tpu.memory_space<vmem>>, %arg4: memref<1x32x256xbf16, #tpu.memory_space<vmem>>, %arg5: memref<1x32x256xbf16, #tpu.memory_space<vmem>>, %arg6: memref<1x32x256xbf16, #tpu.memory_space<vmem>>, %arg7: memref<1x8x1024xf32, #tpu.memory_space<vmem>>, %arg8: memref<1x32x256xf32, #tpu.memory_space<vmem>>) attributes {dimension_semantics = [#tpu.dimension_semantics<parallel>], iteration_bounds = array<i64: 2>, scalar_prefetch = 0 : i64, scratch_operands = 0 : i64, tpu.core_type = #tpu.core_type<tc>, window_params = [{transform_indices = @transform_0, window_bounds = array<i64: 1, 8, 1024>}, {transform_indices = @transform_1, window_bounds = array<i64: 1, 8, 1024>}, {transform_indices = @transform_2, window_bounds = array<i64: 1, 8, 1024>}, {transform_indices = @transform_3, window_bounds = array<i64: 1, 32, 256>}, {transform_indices = @transform_4, window_bounds = array<i64: 1, 32, 256>}, {transform_indices = @transform_5, window_bounds = array<i64: 1, 32, 256>}, {transform_indices = @transform_6, window_bounds = array<i64: 1, 8, 1024>}, {transform_indices = @transform_7, window_bounds = array<i64: 1, 32, 256>}]} {
    %c0 = arith.constant 0 : index
    %c0_0 = arith.constant 0 : index
    %c0_1 = arith.constant 0 : index
    %0 = vector.load %arg1[%c0, %c0_0, %c0_1] : memref<1x8x1024xbf16, #tpu.memory_space<vmem>>, vector<1x8x1024xbf16>
    %1 = vector.shape_cast %0 : vector<1x8x1024xbf16> to vector<8x1024xbf16>
    %c0_2 = arith.constant 0 : index
    %c0_3 = arith.constant 0 : index
    %c0_4 = arith.constant 0 : index
    %2 = vector.load %arg2[%c0_2, %c0_3, %c0_4] : memref<1x8x1024xbf16, #tpu.memory_space<vmem>>, vector<1x8x1024xbf16>
    %3 = vector.shape_cast %2 : vector<1x8x1024xbf16> to vector<8x1024xbf16>
    %c0_5 = arith.constant 0 : index
    %c0_6 = arith.constant 0 : index
    %c0_7 = arith.constant 0 : index
    %4 = vector.load %arg3[%c0_5, %c0_6, %c0_7] : memref<1x8x1024xbf16, #tpu.memory_space<vmem>>, vector<1x8x1024xbf16>
    %5 = vector.shape_cast %4 : vector<1x8x1024xbf16> to vector<8x1024xbf16>
    %cst = arith.constant dense<0.000000e+00> : vector<8x8xf32>
    %6 = tpu.matmul %1, %3, %cst {dimension_numbers = #tpu.dot_dimension_numbers<[1], [1], [0], [0], [0, 0, 1, 0], [], []>} : vector<8x1024xbf16>, vector<8x1024xbf16>, vector<8x8xf32> -> vector<8x8xf32>
    %cst_8 = arith.constant 3.125000e-02 : f32
    %7 = vector.broadcast %cst_8 : f32 to vector<8x8xf32>
    %8 = arith.mulf %6, %7 : vector<8x8xf32>
    %cst_9 = arith.constant dense<0xFF800000> : vector<8xf32>
    %9 = vector.multi_reduction <maximumf>, %8, %cst_9 [1] : vector<8x8xf32> to vector<8xf32>
    %10 = vector.shape_cast %9 : vector<8xf32> to vector<8x1xf32>
    %11 = vector.broadcast %10 : vector<8x1xf32> to vector<8x8xf32>
    %12 = arith.subf %8, %11 : vector<8x8xf32>
    %13 = math.exp %12 : vector<8x8xf32>
    %cst_10 = arith.constant dense<0.000000e+00> : vector<8xf32>
    %14 = vector.multi_reduction <add>, %13, %cst_10 [1] : vector<8x8xf32> to vector<8xf32>
    %15 = vector.shape_cast %14 : vector<8xf32> to vector<8x1xf32>
    %16 = tpu.reciprocal %15 {approx = true} : vector<8x1xf32> -> vector<8x1xf32>
    %17 = vector.broadcast %16 : vector<8x1xf32> to vector<8x8xf32>
    %18 = arith.mulf %13, %17 : vector<8x8xf32>
    %19 = arith.truncf %18 : vector<8x8xf32> to vector<8x8xbf16>
    %cst_11 = arith.constant dense<0.000000e+00> : vector<8x1024xf32>
    %20 = tpu.matmul %19, %5, %cst_11 {dimension_numbers = #tpu.dot_dimension_numbers<[1], [0], [0], [1], [0, 0, 1, 1], [], []>} : vector<8x8xbf16>, vector<8x1024xbf16>, vector<8x1024xf32> -> vector<8x1024xf32>
    %c0_12 = arith.constant 0 : index
    %c0_13 = arith.constant 0 : index
    %c0_14 = arith.constant 0 : index
    %21 = vector.load %arg7[%c0_12, %c0_13, %c0_14] : memref<1x8x1024xf32, #tpu.memory_space<vmem>>, vector<1x8x1024xf32>
    %22 = vector.shape_cast %21 : vector<1x8x1024xf32> to vector<8x1024xf32>
    %23 = vector.shape_cast %20 : vector<8x1024xf32> to vector<1x8x1024xf32>
    tpu.vector_store %arg7[%c0_12, %c0_13, %c0_14], %23 {strides = array<i32>} : memref<1x8x1024xf32, #tpu.memory_space<vmem>>, vector<1x8x1024xf32>,
    %c0_15 = arith.constant 0 : index
    %c0_16 = arith.constant 0 : index
    %c0_17 = arith.constant 0 : index
    %24 = vector.load %arg4[%c0_15, %c0_16, %c0_17] : memref<1x32x256xbf16, #tpu.memory_space<vmem>>, vector<1x32x256xbf16>
    %25 = vector.shape_cast %24 : vector<1x32x256xbf16> to vector<32x256xbf16>
    %c0_18 = arith.constant 0 : index
    %c0_19 = arith.constant 0 : index
    %c0_20 = arith.constant 0 : index
    %26 = vector.load %arg5[%c0_18, %c0_19, %c0_20] : memref<1x32x256xbf16, #tpu.memory_space<vmem>>, vector<1x32x256xbf16>
    %27 = vector.shape_cast %26 : vector<1x32x256xbf16> to vector<32x256xbf16>
    %c0_21 = arith.constant 0 : index
    %c0_22 = arith.constant 0 : index
    %c0_23 = arith.constant 0 : index
    %28 = vector.load %arg6[%c0_21, %c0_22, %c0_23] : memref<1x32x256xbf16, #tpu.memory_space<vmem>>, vector<1x32x256xbf16>
    %29 = vector.shape_cast %28 : vector<1x32x256xbf16> to vector<32x256xbf16>
    %cst_24 = arith.constant dense<0.000000e+00> : vector<32x32xf32>
    %30 = tpu.matmul %25, %27, %cst_24 {dimension_numbers = #tpu.dot_dimension_numbers<[1], [1], [0], [0], [0, 0, 1, 0], [], []>} : vector<32x256xbf16>, vector<32x256xbf16>, vector<32x32xf32> -> vector<32x32xf32>
    %cst_25 = arith.constant 6.250000e-02 : f32
    %31 = vector.broadcast %cst_25 : f32 to vector<32x32xf32>
    %32 = arith.mulf %30, %31 : vector<32x32xf32>
    %cst_26 = arith.constant dense<0xFF800000> : vector<32xf32>
    %33 = vector.multi_reduction <maximumf>, %32, %cst_26 [1] : vector<32x32xf32> to vector<32xf32>
    %34 = vector.shape_cast %33 : vector<32xf32> to vector<32x1xf32>
    %35 = vector.broadcast %34 : vector<32x1xf32> to vector<32x32xf32>
    %36 = arith.subf %32, %35 : vector<32x32xf32>
    %37 = math.exp %36 : vector<32x32xf32>
    %cst_27 = arith.constant dense<0.000000e+00> : vector<32xf32>
    %38 = vector.multi_reduction <add>, %37, %cst_27 [1] : vector<32x32xf32> to vector<32xf32>
    %39 = vector.shape_cast %38 : vector<32xf32> to vector<32x1xf32>
    %40 = tpu.reciprocal %39 {approx = true} : vector<32x1xf32> -> vector<32x1xf32>
    %41 = vector.broadcast %40 : vector<32x1xf32> to vector<32x32xf32>
    %42 = arith.mulf %37, %41 : vector<32x32xf32>
    %43 = arith.truncf %42 : vector<32x32xf32> to vector<32x32xbf16>
    %cst_28 = arith.constant dense<0.000000e+00> : vector<32x256xf32>
    %44 = tpu.matmul %43, %29, %cst_28 {dimension_numbers = #tpu.dot_dimension_numbers<[1], [0], [0], [1], [0, 0, 1, 1], [], []>} : vector<32x32xbf16>, vector<32x256xbf16>, vector<32x256xf32> -> vector<32x256xf32>
    %c0_29 = arith.constant 0 : index
    %c0_30 = arith.constant 0 : index
    %c0_31 = arith.constant 0 : index
    %45 = vector.load %arg8[%c0_29, %c0_30, %c0_31] : memref<1x32x256xf32, #tpu.memory_space<vmem>>, vector<1x32x256xf32>
    %46 = vector.shape_cast %45 : vector<1x32x256xf32> to vector<32x256xf32>
    %47 = vector.shape_cast %44 : vector<32x256xf32> to vector<1x32x256xf32>
    tpu.vector_store %arg8[%c0_29, %c0_30, %c0_31], %47 {strides = array<i32>} : memref<1x32x256xf32, #tpu.memory_space<vmem>>, vector<1x32x256xf32>,
    return
  }
  func.func @transform_0(%arg0: i32) -> (i32, i32, i32) {
    %c0_i32 = arith.constant 0 : i32
    %c0_i32_0 = arith.constant 0 : i32
    %c0_i32_1 = arith.constant 0 : i32
    return %arg0, %c0_i32, %c0_i32_0 : i32, i32, i32
  }
  func.func @transform_1(%arg0: i32) -> (i32, i32, i32) {
    %c0_i32 = arith.constant 0 : i32
    %c0_i32_0 = arith.constant 0 : i32
    %c0_i32_1 = arith.constant 0 : i32
    return %arg0, %c0_i32, %c0_i32_0 : i32, i32, i32
  }
  func.func @transform_2(%arg0: i32) -> (i32, i32, i32) {
    %c0_i32 = arith.constant 0 : i32
    %c0_i32_0 = arith.constant 0 : i32
    %c0_i32_1 = arith.constant 0 : i32
    return %arg0, %c0_i32, %c0_i32_0 : i32, i32, i32
  }
  func.func @transform_3(%arg0: i32) -> (i32, i32, i32) {
    %c0_i32 = arith.constant 0 : i32
    %c0_i32_0 = arith.constant 0 : i32
    %c0_i32_1 = arith.constant 0 : i32
    return %arg0, %c0_i32, %c0_i32_0 : i32, i32, i32
  }
  func.func @transform_4(%arg0: i32) -> (i32, i32, i32) {
    %c0_i32 = arith.constant 0 : i32
    %c0_i32_0 = arith.constant 0 : i32
    %c0_i32_1 = arith.constant 0 : i32
    return %arg0, %c0_i32, %c0_i32_0 : i32, i32, i32
  }
  func.func @transform_5(%arg0: i32) -> (i32, i32, i32) {
    %c0_i32 = arith.constant 0 : i32
    %c0_i32_0 = arith.constant 0 : i32
    %c0_i32_1 = arith.constant 0 : i32
    return %arg0, %c0_i32, %c0_i32_0 : i32, i32, i32
  }
  func.func @transform_6(%arg0: i32) -> (i32, i32, i32) {
    %c0_i32 = arith.constant 0 : i32
    %c0_i32_0 = arith.constant 0 : i32
    %c0_i32_1 = arith.constant 0 : i32
    return %arg0, %c0_i32, %c0_i32_0 : i32, i32, i32
  }
  func.func @transform_7(%arg0: i32) -> (i32, i32, i32) {
    %c0_i32 = arith.constant 0 : i32
    %c0_i32_0 = arith.constant 0 : i32
    %c0_i32_1 = arith.constant 0 : i32
    return %arg0, %c0_i32, %c0_i32_0 : i32, i32, i32
  }
}

module attributes {stable_mosaic.version = 11 : i64} {
  func.func @_conv_kernel(%arg0: i32, %arg1: memref<2x32x432xbf16, #tpu.memory_space<vmem>>, %arg2: memref<32x288xbf16, #tpu.memory_space<vmem>>, %arg3: memref<32x1xf32, #tpu.memory_space<vmem>>, %arg4: memref<2x32x384xf32, #tpu.memory_space<vmem>>, %arg5: memref<288x768xbf16, #tpu.memory_space<vmem>>) attributes {dimension_semantics = [#tpu.dimension_semantics<parallel>], iteration_bounds = array<i64: 2>, scalar_prefetch = 0 : i64, scratch_operands = 1 : i64, tpu.core_type = #tpu.core_type<tc>, window_params = [{transform_indices = @transform_0, window_bounds = array<i64: 2, 32, 432>}, {pipeline_mode = #tpu.pipeline_mode<synchronous>, transform_indices = @transform_1, window_bounds = array<i64: 32, 288>}, {pipeline_mode = #tpu.pipeline_mode<synchronous>, transform_indices = @transform_2, window_bounds = array<i64: 32, 1>}, {transform_indices = @transform_3, window_bounds = array<i64: 2, 32, 384>}]} {
    %c0 = arith.constant 0 : index
    %c0_0 = arith.constant 0 : index
    %c0_1 = arith.constant 0 : index
    %0 = vector.load %arg1[%c0, %c0_0, %c0_1] : memref<2x32x432xbf16, #tpu.memory_space<vmem>>, vector<1x32x384xbf16>
    %1 = vector.shape_cast %0 : vector<1x32x384xbf16> to vector<32x384xbf16>
    %c0_2 = arith.constant 0 : index
    %c0_3 = arith.constant 0 : index
    %2 = vector.load %arg5[%c0_2, %c0_3] : memref<288x768xbf16, #tpu.memory_space<vmem>>, vector<32x384xbf16>
    tpu.vector_store %arg5[%c0_2, %c0_3], %1 {strides = array<i32>} : memref<288x768xbf16, #tpu.memory_space<vmem>>, vector<32x384xbf16>,
    %c0_4 = arith.constant 0 : index
    %c0_5 = arith.constant 0 : index
    %c1 = arith.constant 1 : index
    %3 = vector.load %arg1[%c0_4, %c0_5, %c1] : memref<2x32x432xbf16, #tpu.memory_space<vmem>>, vector<1x32x384xbf16>
    %4 = vector.shape_cast %3 : vector<1x32x384xbf16> to vector<32x384xbf16>
    %c32 = arith.constant 32 : index
    %c0_6 = arith.constant 0 : index
    %5 = vector.load %arg5[%c32, %c0_6] : memref<288x768xbf16, #tpu.memory_space<vmem>>, vector<32x384xbf16>
    tpu.vector_store %arg5[%c32, %c0_6], %4 {strides = array<i32>} : memref<288x768xbf16, #tpu.memory_space<vmem>>, vector<32x384xbf16>,
    %c0_7 = arith.constant 0 : index
    %c0_8 = arith.constant 0 : index
    %c2 = arith.constant 2 : index
    %6 = vector.load %arg1[%c0_7, %c0_8, %c2] : memref<2x32x432xbf16, #tpu.memory_space<vmem>>, vector<1x32x384xbf16>
    %7 = vector.shape_cast %6 : vector<1x32x384xbf16> to vector<32x384xbf16>
    %c64 = arith.constant 64 : index
    %c0_9 = arith.constant 0 : index
    %8 = vector.load %arg5[%c64, %c0_9] : memref<288x768xbf16, #tpu.memory_space<vmem>>, vector<32x384xbf16>
    tpu.vector_store %arg5[%c64, %c0_9], %7 {strides = array<i32>} : memref<288x768xbf16, #tpu.memory_space<vmem>>, vector<32x384xbf16>,
    %c0_10 = arith.constant 0 : index
    %c0_11 = arith.constant 0 : index
    %c18 = arith.constant 18 : index
    %9 = vector.load %arg1[%c0_10, %c0_11, %c18] : memref<2x32x432xbf16, #tpu.memory_space<vmem>>, vector<1x32x384xbf16>
    %10 = vector.shape_cast %9 : vector<1x32x384xbf16> to vector<32x384xbf16>
    %c96 = arith.constant 96 : index
    %c0_12 = arith.constant 0 : index
    %11 = vector.load %arg5[%c96, %c0_12] : memref<288x768xbf16, #tpu.memory_space<vmem>>, vector<32x384xbf16>
    tpu.vector_store %arg5[%c96, %c0_12], %10 {strides = array<i32>} : memref<288x768xbf16, #tpu.memory_space<vmem>>, vector<32x384xbf16>,
    %c0_13 = arith.constant 0 : index
    %c0_14 = arith.constant 0 : index
    %c19 = arith.constant 19 : index
    %12 = vector.load %arg1[%c0_13, %c0_14, %c19] : memref<2x32x432xbf16, #tpu.memory_space<vmem>>, vector<1x32x384xbf16>
    %13 = vector.shape_cast %12 : vector<1x32x384xbf16> to vector<32x384xbf16>
    %c128 = arith.constant 128 : index
    %c0_15 = arith.constant 0 : index
    %14 = vector.load %arg5[%c128, %c0_15] : memref<288x768xbf16, #tpu.memory_space<vmem>>, vector<32x384xbf16>
    tpu.vector_store %arg5[%c128, %c0_15], %13 {strides = array<i32>} : memref<288x768xbf16, #tpu.memory_space<vmem>>, vector<32x384xbf16>,
    %c0_16 = arith.constant 0 : index
    %c0_17 = arith.constant 0 : index
    %c20 = arith.constant 20 : index
    %15 = vector.load %arg1[%c0_16, %c0_17, %c20] : memref<2x32x432xbf16, #tpu.memory_space<vmem>>, vector<1x32x384xbf16>
    %16 = vector.shape_cast %15 : vector<1x32x384xbf16> to vector<32x384xbf16>
    %c160 = arith.constant 160 : index
    %c0_18 = arith.constant 0 : index
    %17 = vector.load %arg5[%c160, %c0_18] : memref<288x768xbf16, #tpu.memory_space<vmem>>, vector<32x384xbf16>
    tpu.vector_store %arg5[%c160, %c0_18], %16 {strides = array<i32>} : memref<288x768xbf16, #tpu.memory_space<vmem>>, vector<32x384xbf16>,
    %c0_19 = arith.constant 0 : index
    %c0_20 = arith.constant 0 : index
    %c36 = arith.constant 36 : index
    %18 = vector.load %arg1[%c0_19, %c0_20, %c36] : memref<2x32x432xbf16, #tpu.memory_space<vmem>>, vector<1x32x384xbf16>
    %19 = vector.shape_cast %18 : vector<1x32x384xbf16> to vector<32x384xbf16>
    %c192 = arith.constant 192 : index
    %c0_21 = arith.constant 0 : index
    %20 = vector.load %arg5[%c192, %c0_21] : memref<288x768xbf16, #tpu.memory_space<vmem>>, vector<32x384xbf16>
    tpu.vector_store %arg5[%c192, %c0_21], %19 {strides = array<i32>} : memref<288x768xbf16, #tpu.memory_space<vmem>>, vector<32x384xbf16>,
    %c0_22 = arith.constant 0 : index
    %c0_23 = arith.constant 0 : index
    %c37 = arith.constant 37 : index
    %21 = vector.load %arg1[%c0_22, %c0_23, %c37] : memref<2x32x432xbf16, #tpu.memory_space<vmem>>, vector<1x32x384xbf16>
    %22 = vector.shape_cast %21 : vector<1x32x384xbf16> to vector<32x384xbf16>
    %c224 = arith.constant 224 : index
    %c0_24 = arith.constant 0 : index
    %23 = vector.load %arg5[%c224, %c0_24] : memref<288x768xbf16, #tpu.memory_space<vmem>>, vector<32x384xbf16>
    tpu.vector_store %arg5[%c224, %c0_24], %22 {strides = array<i32>} : memref<288x768xbf16, #tpu.memory_space<vmem>>, vector<32x384xbf16>,
    %c0_25 = arith.constant 0 : index
    %c0_26 = arith.constant 0 : index
    %c38 = arith.constant 38 : index
    %24 = vector.load %arg1[%c0_25, %c0_26, %c38] : memref<2x32x432xbf16, #tpu.memory_space<vmem>>, vector<1x32x384xbf16>
    %25 = vector.shape_cast %24 : vector<1x32x384xbf16> to vector<32x384xbf16>
    %c256 = arith.constant 256 : index
    %c0_27 = arith.constant 0 : index
    %26 = vector.load %arg5[%c256, %c0_27] : memref<288x768xbf16, #tpu.memory_space<vmem>>, vector<32x384xbf16>
    tpu.vector_store %arg5[%c256, %c0_27], %25 {strides = array<i32>} : memref<288x768xbf16, #tpu.memory_space<vmem>>, vector<32x384xbf16>,
    %c1_28 = arith.constant 1 : index
    %c0_29 = arith.constant 0 : index
    %c0_30 = arith.constant 0 : index
    %27 = vector.load %arg1[%c1_28, %c0_29, %c0_30] : memref<2x32x432xbf16, #tpu.memory_space<vmem>>, vector<1x32x384xbf16>
    %28 = vector.shape_cast %27 : vector<1x32x384xbf16> to vector<32x384xbf16>
    %c0_31 = arith.constant 0 : index
    %c384 = arith.constant 384 : index
    %29 = vector.load %arg5[%c0_31, %c384] : memref<288x768xbf16, #tpu.memory_space<vmem>>, vector<32x384xbf16>
    tpu.vector_store %arg5[%c0_31, %c384], %28 {strides = array<i32>} : memref<288x768xbf16, #tpu.memory_space<vmem>>, vector<32x384xbf16>,
    %c1_32 = arith.constant 1 : index
    %c0_33 = arith.constant 0 : index
    %c1_34 = arith.constant 1 : index
    %30 = vector.load %arg1[%c1_32, %c0_33, %c1_34] : memref<2x32x432xbf16, #tpu.memory_space<vmem>>, vector<1x32x384xbf16>
    %31 = vector.shape_cast %30 : vector<1x32x384xbf16> to vector<32x384xbf16>
    %c32_35 = arith.constant 32 : index
    %c384_36 = arith.constant 384 : index
    %32 = vector.load %arg5[%c32_35, %c384_36] : memref<288x768xbf16, #tpu.memory_space<vmem>>, vector<32x384xbf16>
    tpu.vector_store %arg5[%c32_35, %c384_36], %31 {strides = array<i32>} : memref<288x768xbf16, #tpu.memory_space<vmem>>, vector<32x384xbf16>,
    %c1_37 = arith.constant 1 : index
    %c0_38 = arith.constant 0 : index
    %c2_39 = arith.constant 2 : index
    %33 = vector.load %arg1[%c1_37, %c0_38, %c2_39] : memref<2x32x432xbf16, #tpu.memory_space<vmem>>, vector<1x32x384xbf16>
    %34 = vector.shape_cast %33 : vector<1x32x384xbf16> to vector<32x384xbf16>
    %c64_40 = arith.constant 64 : index
    %c384_41 = arith.constant 384 : index
    %35 = vector.load %arg5[%c64_40, %c384_41] : memref<288x768xbf16, #tpu.memory_space<vmem>>, vector<32x384xbf16>
    tpu.vector_store %arg5[%c64_40, %c384_41], %34 {strides = array<i32>} : memref<288x768xbf16, #tpu.memory_space<vmem>>, vector<32x384xbf16>,
    %c1_42 = arith.constant 1 : index
    %c0_43 = arith.constant 0 : index
    %c18_44 = arith.constant 18 : index
    %36 = vector.load %arg1[%c1_42, %c0_43, %c18_44] : memref<2x32x432xbf16, #tpu.memory_space<vmem>>, vector<1x32x384xbf16>
    %37 = vector.shape_cast %36 : vector<1x32x384xbf16> to vector<32x384xbf16>
    %c96_45 = arith.constant 96 : index
    %c384_46 = arith.constant 384 : index
    %38 = vector.load %arg5[%c96_45, %c384_46] : memref<288x768xbf16, #tpu.memory_space<vmem>>, vector<32x384xbf16>
    tpu.vector_store %arg5[%c96_45, %c384_46], %37 {strides = array<i32>} : memref<288x768xbf16, #tpu.memory_space<vmem>>, vector<32x384xbf16>,
    %c1_47 = arith.constant 1 : index
    %c0_48 = arith.constant 0 : index
    %c19_49 = arith.constant 19 : index
    %39 = vector.load %arg1[%c1_47, %c0_48, %c19_49] : memref<2x32x432xbf16, #tpu.memory_space<vmem>>, vector<1x32x384xbf16>
    %40 = vector.shape_cast %39 : vector<1x32x384xbf16> to vector<32x384xbf16>
    %c128_50 = arith.constant 128 : index
    %c384_51 = arith.constant 384 : index
    %41 = vector.load %arg5[%c128_50, %c384_51] : memref<288x768xbf16, #tpu.memory_space<vmem>>, vector<32x384xbf16>
    tpu.vector_store %arg5[%c128_50, %c384_51], %40 {strides = array<i32>} : memref<288x768xbf16, #tpu.memory_space<vmem>>, vector<32x384xbf16>,
    %c1_52 = arith.constant 1 : index
    %c0_53 = arith.constant 0 : index
    %c20_54 = arith.constant 20 : index
    %42 = vector.load %arg1[%c1_52, %c0_53, %c20_54] : memref<2x32x432xbf16, #tpu.memory_space<vmem>>, vector<1x32x384xbf16>
    %43 = vector.shape_cast %42 : vector<1x32x384xbf16> to vector<32x384xbf16>
    %c160_55 = arith.constant 160 : index
    %c384_56 = arith.constant 384 : index
    %44 = vector.load %arg5[%c160_55, %c384_56] : memref<288x768xbf16, #tpu.memory_space<vmem>>, vector<32x384xbf16>
    tpu.vector_store %arg5[%c160_55, %c384_56], %43 {strides = array<i32>} : memref<288x768xbf16, #tpu.memory_space<vmem>>, vector<32x384xbf16>,
    %c1_57 = arith.constant 1 : index
    %c0_58 = arith.constant 0 : index
    %c36_59 = arith.constant 36 : index
    %45 = vector.load %arg1[%c1_57, %c0_58, %c36_59] : memref<2x32x432xbf16, #tpu.memory_space<vmem>>, vector<1x32x384xbf16>
    %46 = vector.shape_cast %45 : vector<1x32x384xbf16> to vector<32x384xbf16>
    %c192_60 = arith.constant 192 : index
    %c384_61 = arith.constant 384 : index
    %47 = vector.load %arg5[%c192_60, %c384_61] : memref<288x768xbf16, #tpu.memory_space<vmem>>, vector<32x384xbf16>
    tpu.vector_store %arg5[%c192_60, %c384_61], %46 {strides = array<i32>} : memref<288x768xbf16, #tpu.memory_space<vmem>>, vector<32x384xbf16>,
    %c1_62 = arith.constant 1 : index
    %c0_63 = arith.constant 0 : index
    %c37_64 = arith.constant 37 : index
    %48 = vector.load %arg1[%c1_62, %c0_63, %c37_64] : memref<2x32x432xbf16, #tpu.memory_space<vmem>>, vector<1x32x384xbf16>
    %49 = vector.shape_cast %48 : vector<1x32x384xbf16> to vector<32x384xbf16>
    %c224_65 = arith.constant 224 : index
    %c384_66 = arith.constant 384 : index
    %50 = vector.load %arg5[%c224_65, %c384_66] : memref<288x768xbf16, #tpu.memory_space<vmem>>, vector<32x384xbf16>
    tpu.vector_store %arg5[%c224_65, %c384_66], %49 {strides = array<i32>} : memref<288x768xbf16, #tpu.memory_space<vmem>>, vector<32x384xbf16>,
    %c1_67 = arith.constant 1 : index
    %c0_68 = arith.constant 0 : index
    %c38_69 = arith.constant 38 : index
    %51 = vector.load %arg1[%c1_67, %c0_68, %c38_69] : memref<2x32x432xbf16, #tpu.memory_space<vmem>>, vector<1x32x384xbf16>
    %52 = vector.shape_cast %51 : vector<1x32x384xbf16> to vector<32x384xbf16>
    %c256_70 = arith.constant 256 : index
    %c384_71 = arith.constant 384 : index
    %53 = vector.load %arg5[%c256_70, %c384_71] : memref<288x768xbf16, #tpu.memory_space<vmem>>, vector<32x384xbf16>
    tpu.vector_store %arg5[%c256_70, %c384_71], %52 {strides = array<i32>} : memref<288x768xbf16, #tpu.memory_space<vmem>>, vector<32x384xbf16>,
    %c0_72 = arith.constant 0 : index
    %c0_73 = arith.constant 0 : index
    %54 = vector.load %arg2[%c0_72, %c0_73] : memref<32x288xbf16, #tpu.memory_space<vmem>>, vector<32x288xbf16>
    %c0_74 = arith.constant 0 : index
    %c0_75 = arith.constant 0 : index
    %55 = vector.load %arg5[%c0_74, %c0_75] : memref<288x768xbf16, #tpu.memory_space<vmem>>, vector<288x768xbf16>
    %cst = arith.constant dense<0.000000e+00> : vector<32x768xf32>
    %56 = tpu.matmul %54, %55, %cst {dimension_numbers = #tpu.dot_dimension_numbers<[1], [0], [0], [1], [0, 0, 1, 1], [], []>} : vector<32x288xbf16>, vector<288x768xbf16>, vector<32x768xf32> -> vector<32x768xf32>
    %c0_76 = arith.constant 0 : index
    %c0_77 = arith.constant 0 : index
    %57 = vector.load %arg3[%c0_76, %c0_77] : memref<32x1xf32, #tpu.memory_space<vmem>>, vector<32x1xf32>
    %58 = vector.broadcast %57 : vector<32x1xf32> to vector<32x768xf32>
    %59 = arith.addf %56, %58 : vector<32x768xf32>
    %cst_78 = arith.constant 0.000000e+00 : f32
    %60 = vector.broadcast %cst_78 : f32 to vector<32x768xf32>
    %61 = arith.cmpf oge, %59, %60 : vector<32x768xf32>
    %cst_79 = arith.constant 2.000000e-01 : f32
    %62 = vector.broadcast %cst_79 : f32 to vector<32x768xf32>
    %63 = arith.mulf %59, %62 : vector<32x768xf32>
    %64 = arith.select %61, %59, %63 : vector<32x768xi1>, vector<32x768xf32>
    %65 = vector.extract_strided_slice %64 {offsets = [0, 0], sizes = [32, 384], strides = [1, 1]} : vector<32x768xf32> to vector<32x384xf32>
    %c0_80 = arith.constant 0 : index
    %c0_81 = arith.constant 0 : index
    %c0_82 = arith.constant 0 : index
    %66 = vector.load %arg4[%c0_80, %c0_81, %c0_82] : memref<2x32x384xf32, #tpu.memory_space<vmem>>, vector<1x32x384xf32>
    %67 = vector.shape_cast %66 : vector<1x32x384xf32> to vector<32x384xf32>
    %68 = vector.shape_cast %65 : vector<32x384xf32> to vector<1x32x384xf32>
    tpu.vector_store %arg4[%c0_80, %c0_81, %c0_82], %68 {strides = array<i32>} : memref<2x32x384xf32, #tpu.memory_space<vmem>>, vector<1x32x384xf32>,
    %69 = vector.extract_strided_slice %64 {offsets = [0, 384], sizes = [32, 384], strides = [1, 1]} : vector<32x768xf32> to vector<32x384xf32>
    %c1_83 = arith.constant 1 : index
    %c0_84 = arith.constant 0 : index
    %c0_85 = arith.constant 0 : index
    %70 = vector.load %arg4[%c1_83, %c0_84, %c0_85] : memref<2x32x384xf32, #tpu.memory_space<vmem>>, vector<1x32x384xf32>
    %71 = vector.shape_cast %70 : vector<1x32x384xf32> to vector<32x384xf32>
    %72 = vector.shape_cast %69 : vector<32x384xf32> to vector<1x32x384xf32>
    tpu.vector_store %arg4[%c1_83, %c0_84, %c0_85], %72 {strides = array<i32>} : memref<2x32x384xf32, #tpu.memory_space<vmem>>, vector<1x32x384xf32>,
    return
  }
  func.func @transform_0(%arg0: i32) -> (i32, i32, i32) {
    %c0_i32 = arith.constant 0 : i32
    %c0_i32_0 = arith.constant 0 : i32
    %c0_i32_1 = arith.constant 0 : i32
    return %arg0, %c0_i32, %c0_i32_0 : i32, i32, i32
  }
  func.func @transform_1(%arg0: i32) -> (i32, i32) {
    %c0_i32 = arith.constant 0 : i32
    %c0_i32_0 = arith.constant 0 : i32
    %c0_i32_1 = arith.constant 0 : i32
    return %c0_i32, %c0_i32_0 : i32, i32
  }
  func.func @transform_2(%arg0: i32) -> (i32, i32) {
    %c0_i32 = arith.constant 0 : i32
    %c0_i32_0 = arith.constant 0 : i32
    %c0_i32_1 = arith.constant 0 : i32
    return %c0_i32, %c0_i32_0 : i32, i32
  }
  func.func @transform_3(%arg0: i32) -> (i32, i32, i32) {
    %c0_i32 = arith.constant 0 : i32
    %c0_i32_0 = arith.constant 0 : i32
    %c0_i32_1 = arith.constant 0 : i32
    return %arg0, %c0_i32, %c0_i32_0 : i32, i32, i32
  }
}

module attributes {stable_mosaic.version = 11 : i64} {
  func.func @_ff_kernel(%arg0: i32, %arg1: memref<2x32x616xbf16, #tpu.memory_space<vmem>>, %arg2: memref<32x288xbf16, #tpu.memory_space<vmem>>, %arg3: memref<32x1xf32, #tpu.memory_space<vmem>>, %arg4: memref<1x1024xf32, #tpu.memory_space<vmem>>, %arg5: memref<32x288xbf16, #tpu.memory_space<vmem>>, %arg6: memref<32x1xf32, #tpu.memory_space<vmem>>, %arg7: memref<2x32x384xf32, #tpu.memory_space<vmem>>, %arg8: memref<288x1024xbf16, #tpu.memory_space<vmem>>, %arg9: memref<32x1024xbf16, #tpu.memory_space<vmem>>, %arg10: memref<288x768xbf16, #tpu.memory_space<vmem>>) attributes {dimension_semantics = [#tpu.dimension_semantics<parallel>], iteration_bounds = array<i64: 2>, scalar_prefetch = 0 : i64, scratch_operands = 3 : i64, tpu.core_type = #tpu.core_type<tc>, window_params = [{transform_indices = @transform_0, window_bounds = array<i64: 2, 32, 616>}, {pipeline_mode = #tpu.pipeline_mode<synchronous>, transform_indices = @transform_1, window_bounds = array<i64: 32, 288>}, {pipeline_mode = #tpu.pipeline_mode<synchronous>, transform_indices = @transform_2, window_bounds = array<i64: 32, 1>}, {pipeline_mode = #tpu.pipeline_mode<synchronous>, transform_indices = @transform_3, window_bounds = array<i64: 1, 1024>}, {pipeline_mode = #tpu.pipeline_mode<synchronous>, transform_indices = @transform_4, window_bounds = array<i64: 32, 288>}, {pipeline_mode = #tpu.pipeline_mode<synchronous>, transform_indices = @transform_5, window_bounds = array<i64: 32, 1>}, {transform_indices = @transform_6, window_bounds = array<i64: 2, 32, 384>}]} {
    %c0 = arith.constant 0 : index
    %c0_0 = arith.constant 0 : index
    %c0_1 = arith.constant 0 : index
    %0 = vector.load %arg1[%c0, %c0_0, %c0_1] : memref<2x32x616xbf16, #tpu.memory_space<vmem>>, vector<1x32x512xbf16>
    %1 = vector.shape_cast %0 : vector<1x32x512xbf16> to vector<32x512xbf16>
    %c0_2 = arith.constant 0 : index
    %c0_3 = arith.constant 0 : index
    %2 = vector.load %arg8[%c0_2, %c0_3] : memref<288x1024xbf16, #tpu.memory_space<vmem>>, vector<32x512xbf16>
    tpu.vector_store %arg8[%c0_2, %c0_3], %1 {strides = array<i32>} : memref<288x1024xbf16, #tpu.memory_space<vmem>>, vector<32x512xbf16>,
    %c0_4 = arith.constant 0 : index
    %c0_5 = arith.constant 0 : index
    %c2 = arith.constant 2 : index
    %3 = vector.load %arg1[%c0_4, %c0_5, %c2] : memref<2x32x616xbf16, #tpu.memory_space<vmem>>, vector<1x32x512xbf16>
    %4 = vector.shape_cast %3 : vector<1x32x512xbf16> to vector<32x512xbf16>
    %c32 = arith.constant 32 : index
    %c0_6 = arith.constant 0 : index
    %5 = vector.load %arg8[%c32, %c0_6] : memref<288x1024xbf16, #tpu.memory_space<vmem>>, vector<32x512xbf16>
    tpu.vector_store %arg8[%c32, %c0_6], %4 {strides = array<i32>} : memref<288x1024xbf16, #tpu.memory_space<vmem>>, vector<32x512xbf16>,
    %c0_7 = arith.constant 0 : index
    %c0_8 = arith.constant 0 : index
    %c4 = arith.constant 4 : index
    %6 = vector.load %arg1[%c0_7, %c0_8, %c4] : memref<2x32x616xbf16, #tpu.memory_space<vmem>>, vector<1x32x512xbf16>
    %7 = vector.shape_cast %6 : vector<1x32x512xbf16> to vector<32x512xbf16>
    %c64 = arith.constant 64 : index
    %c0_9 = arith.constant 0 : index
    %8 = vector.load %arg8[%c64, %c0_9] : memref<288x1024xbf16, #tpu.memory_space<vmem>>, vector<32x512xbf16>
    tpu.vector_store %arg8[%c64, %c0_9], %7 {strides = array<i32>} : memref<288x1024xbf16, #tpu.memory_space<vmem>>, vector<32x512xbf16>,
    %c0_10 = arith.constant 0 : index
    %c0_11 = arith.constant 0 : index
    %c44 = arith.constant 44 : index
    %9 = vector.load %arg1[%c0_10, %c0_11, %c44] : memref<2x32x616xbf16, #tpu.memory_space<vmem>>, vector<1x32x512xbf16>
    %10 = vector.shape_cast %9 : vector<1x32x512xbf16> to vector<32x512xbf16>
    %c96 = arith.constant 96 : index
    %c0_12 = arith.constant 0 : index
    %11 = vector.load %arg8[%c96, %c0_12] : memref<288x1024xbf16, #tpu.memory_space<vmem>>, vector<32x512xbf16>
    tpu.vector_store %arg8[%c96, %c0_12], %10 {strides = array<i32>} : memref<288x1024xbf16, #tpu.memory_space<vmem>>, vector<32x512xbf16>,
    %c0_13 = arith.constant 0 : index
    %c0_14 = arith.constant 0 : index
    %c46 = arith.constant 46 : index
    %12 = vector.load %arg1[%c0_13, %c0_14, %c46] : memref<2x32x616xbf16, #tpu.memory_space<vmem>>, vector<1x32x512xbf16>
    %13 = vector.shape_cast %12 : vector<1x32x512xbf16> to vector<32x512xbf16>
    %c128 = arith.constant 128 : index
    %c0_15 = arith.constant 0 : index
    %14 = vector.load %arg8[%c128, %c0_15] : memref<288x1024xbf16, #tpu.memory_space<vmem>>, vector<32x512xbf16>
    tpu.vector_store %arg8[%c128, %c0_15], %13 {strides = array<i32>} : memref<288x1024xbf16, #tpu.memory_space<vmem>>, vector<32x512xbf16>,
    %c0_16 = arith.constant 0 : index
    %c0_17 = arith.constant 0 : index
    %c48 = arith.constant 48 : index
    %15 = vector.load %arg1[%c0_16, %c0_17, %c48] : memref<2x32x616xbf16, #tpu.memory_space<vmem>>, vector<1x32x512xbf16>
    %16 = vector.shape_cast %15 : vector<1x32x512xbf16> to vector<32x512xbf16>
    %c160 = arith.constant 160 : index
    %c0_18 = arith.constant 0 : index
    %17 = vector.load %arg8[%c160, %c0_18] : memref<288x1024xbf16, #tpu.memory_space<vmem>>, vector<32x512xbf16>
    tpu.vector_store %arg8[%c160, %c0_18], %16 {strides = array<i32>} : memref<288x1024xbf16, #tpu.memory_space<vmem>>, vector<32x512xbf16>,
    %c0_19 = arith.constant 0 : index
    %c0_20 = arith.constant 0 : index
    %c88 = arith.constant 88 : index
    %18 = vector.load %arg1[%c0_19, %c0_20, %c88] : memref<2x32x616xbf16, #tpu.memory_space<vmem>>, vector<1x32x512xbf16>
    %19 = vector.shape_cast %18 : vector<1x32x512xbf16> to vector<32x512xbf16>
    %c192 = arith.constant 192 : index
    %c0_21 = arith.constant 0 : index
    %20 = vector.load %arg8[%c192, %c0_21] : memref<288x1024xbf16, #tpu.memory_space<vmem>>, vector<32x512xbf16>
    tpu.vector_store %arg8[%c192, %c0_21], %19 {strides = array<i32>} : memref<288x1024xbf16, #tpu.memory_space<vmem>>, vector<32x512xbf16>,
    %c0_22 = arith.constant 0 : index
    %c0_23 = arith.constant 0 : index
    %c90 = arith.constant 90 : index
    %21 = vector.load %arg1[%c0_22, %c0_23, %c90] : memref<2x32x616xbf16, #tpu.memory_space<vmem>>, vector<1x32x512xbf16>
    %22 = vector.shape_cast %21 : vector<1x32x512xbf16> to vector<32x512xbf16>
    %c224 = arith.constant 224 : index
    %c0_24 = arith.constant 0 : index
    %23 = vector.load %arg8[%c224, %c0_24] : memref<288x1024xbf16, #tpu.memory_space<vmem>>, vector<32x512xbf16>
    tpu.vector_store %arg8[%c224, %c0_24], %22 {strides = array<i32>} : memref<288x1024xbf16, #tpu.memory_space<vmem>>, vector<32x512xbf16>,
    %c0_25 = arith.constant 0 : index
    %c0_26 = arith.constant 0 : index
    %c92 = arith.constant 92 : index
    %24 = vector.load %arg1[%c0_25, %c0_26, %c92] : memref<2x32x616xbf16, #tpu.memory_space<vmem>>, vector<1x32x512xbf16>
    %25 = vector.shape_cast %24 : vector<1x32x512xbf16> to vector<32x512xbf16>
    %c256 = arith.constant 256 : index
    %c0_27 = arith.constant 0 : index
    %26 = vector.load %arg8[%c256, %c0_27] : memref<288x1024xbf16, #tpu.memory_space<vmem>>, vector<32x512xbf16>
    tpu.vector_store %arg8[%c256, %c0_27], %25 {strides = array<i32>} : memref<288x1024xbf16, #tpu.memory_space<vmem>>, vector<32x512xbf16>,
    %c1 = arith.constant 1 : index
    %c0_28 = arith.constant 0 : index
    %c0_29 = arith.constant 0 : index
    %27 = vector.load %arg1[%c1, %c0_28, %c0_29] : memref<2x32x616xbf16, #tpu.memory_space<vmem>>, vector<1x32x512xbf16>
    %28 = vector.shape_cast %27 : vector<1x32x512xbf16> to vector<32x512xbf16>
    %c0_30 = arith.constant 0 : index
    %c512 = arith.constant 512 : index
    %29 = vector.load %arg8[%c0_30, %c512] : memref<288x1024xbf16, #tpu.memory_space<vmem>>, vector<32x512xbf16>
    tpu.vector_store %arg8[%c0_30, %c512], %28 {strides = array<i32>} : memref<288x1024xbf16, #tpu.memory_space<vmem>>, vector<32x512xbf16>,
    %c1_31 = arith.constant 1 : index
    %c0_32 = arith.constant 0 : index
    %c2_33 = arith.constant 2 : index
    %30 = vector.load %arg1[%c1_31, %c0_32, %c2_33] : memref<2x32x616xbf16, #tpu.memory_space<vmem>>, vector<1x32x512xbf16>
    %31 = vector.shape_cast %30 : vector<1x32x512xbf16> to vector<32x512xbf16>
    %c32_34 = arith.constant 32 : index
    %c512_35 = arith.constant 512 : index
    %32 = vector.load %arg8[%c32_34, %c512_35] : memref<288x1024xbf16, #tpu.memory_space<vmem>>, vector<32x512xbf16>
    tpu.vector_store %arg8[%c32_34, %c512_35], %31 {strides = array<i32>} : memref<288x1024xbf16, #tpu.memory_space<vmem>>, vector<32x512xbf16>,
    %c1_36 = arith.constant 1 : index
    %c0_37 = arith.constant 0 : index
    %c4_38 = arith.constant 4 : index
    %33 = vector.load %arg1[%c1_36, %c0_37, %c4_38] : memref<2x32x616xbf16, #tpu.memory_space<vmem>>, vector<1x32x512xbf16>
    %34 = vector.shape_cast %33 : vector<1x32x512xbf16> to vector<32x512xbf16>
    %c64_39 = arith.constant 64 : index
    %c512_40 = arith.constant 512 : index
    %35 = vector.load %arg8[%c64_39, %c512_40] : memref<288x1024xbf16, #tpu.memory_space<vmem>>, vector<32x512xbf16>
    tpu.vector_store %arg8[%c64_39, %c512_40], %34 {strides = array<i32>} : memref<288x1024xbf16, #tpu.memory_space<vmem>>, vector<32x512xbf16>,
    %c1_41 = arith.constant 1 : index
    %c0_42 = arith.constant 0 : index
    %c44_43 = arith.constant 44 : index
    %36 = vector.load %arg1[%c1_41, %c0_42, %c44_43] : memref<2x32x616xbf16, #tpu.memory_space<vmem>>, vector<1x32x512xbf16>
    %37 = vector.shape_cast %36 : vector<1x32x512xbf16> to vector<32x512xbf16>
    %c96_44 = arith.constant 96 : index
    %c512_45 = arith.constant 512 : index
    %38 = vector.load %arg8[%c96_44, %c512_45] : memref<288x1024xbf16, #tpu.memory_space<vmem>>, vector<32x512xbf16>
    tpu.vector_store %arg8[%c96_44, %c512_45], %37 {strides = array<i32>} : memref<288x1024xbf16, #tpu.memory_space<vmem>>, vector<32x512xbf16>,
    %c1_46 = arith.constant 1 : index
    %c0_47 = arith.constant 0 : index
    %c46_48 = arith.constant 46 : index
    %39 = vector.load %arg1[%c1_46, %c0_47, %c46_48] : memref<2x32x616xbf16, #tpu.memory_space<vmem>>, vector<1x32x512xbf16>
    %40 = vector.shape_cast %39 : vector<1x32x512xbf16> to vector<32x512xbf16>
    %c128_49 = arith.constant 128 : index
    %c512_50 = arith.constant 512 : index
    %41 = vector.load %arg8[%c128_49, %c512_50] : memref<288x1024xbf16, #tpu.memory_space<vmem>>, vector<32x512xbf16>
    tpu.vector_store %arg8[%c128_49, %c512_50], %40 {strides = array<i32>} : memref<288x1024xbf16, #tpu.memory_space<vmem>>, vector<32x512xbf16>,
    %c1_51 = arith.constant 1 : index
    %c0_52 = arith.constant 0 : index
    %c48_53 = arith.constant 48 : index
    %42 = vector.load %arg1[%c1_51, %c0_52, %c48_53] : memref<2x32x616xbf16, #tpu.memory_space<vmem>>, vector<1x32x512xbf16>
    %43 = vector.shape_cast %42 : vector<1x32x512xbf16> to vector<32x512xbf16>
    %c160_54 = arith.constant 160 : index
    %c512_55 = arith.constant 512 : index
    %44 = vector.load %arg8[%c160_54, %c512_55] : memref<288x1024xbf16, #tpu.memory_space<vmem>>, vector<32x512xbf16>
    tpu.vector_store %arg8[%c160_54, %c512_55], %43 {strides = array<i32>} : memref<288x1024xbf16, #tpu.memory_space<vmem>>, vector<32x512xbf16>,
    %c1_56 = arith.constant 1 : index
    %c0_57 = arith.constant 0 : index
    %c88_58 = arith.constant 88 : index
    %45 = vector.load %arg1[%c1_56, %c0_57, %c88_58] : memref<2x32x616xbf16, #tpu.memory_space<vmem>>, vector<1x32x512xbf16>
    %46 = vector.shape_cast %45 : vector<1x32x512xbf16> to vector<32x512xbf16>
    %c192_59 = arith.constant 192 : index
    %c512_60 = arith.constant 512 : index
    %47 = vector.load %arg8[%c192_59, %c512_60] : memref<288x1024xbf16, #tpu.memory_space<vmem>>, vector<32x512xbf16>
    tpu.vector_store %arg8[%c192_59, %c512_60], %46 {strides = array<i32>} : memref<288x1024xbf16, #tpu.memory_space<vmem>>, vector<32x512xbf16>,
    %c1_61 = arith.constant 1 : index
    %c0_62 = arith.constant 0 : index
    %c90_63 = arith.constant 90 : index
    %48 = vector.load %arg1[%c1_61, %c0_62, %c90_63] : memref<2x32x616xbf16, #tpu.memory_space<vmem>>, vector<1x32x512xbf16>
    %49 = vector.shape_cast %48 : vector<1x32x512xbf16> to vector<32x512xbf16>
    %c224_64 = arith.constant 224 : index
    %c512_65 = arith.constant 512 : index
    %50 = vector.load %arg8[%c224_64, %c512_65] : memref<288x1024xbf16, #tpu.memory_space<vmem>>, vector<32x512xbf16>
    tpu.vector_store %arg8[%c224_64, %c512_65], %49 {strides = array<i32>} : memref<288x1024xbf16, #tpu.memory_space<vmem>>, vector<32x512xbf16>,
    %c1_66 = arith.constant 1 : index
    %c0_67 = arith.constant 0 : index
    %c92_68 = arith.constant 92 : index
    %51 = vector.load %arg1[%c1_66, %c0_67, %c92_68] : memref<2x32x616xbf16, #tpu.memory_space<vmem>>, vector<1x32x512xbf16>
    %52 = vector.shape_cast %51 : vector<1x32x512xbf16> to vector<32x512xbf16>
    %c256_69 = arith.constant 256 : index
    %c512_70 = arith.constant 512 : index
    %53 = vector.load %arg8[%c256_69, %c512_70] : memref<288x1024xbf16, #tpu.memory_space<vmem>>, vector<32x512xbf16>
    tpu.vector_store %arg8[%c256_69, %c512_70], %52 {strides = array<i32>} : memref<288x1024xbf16, #tpu.memory_space<vmem>>, vector<32x512xbf16>,
    %c0_71 = arith.constant 0 : index
    %c0_72 = arith.constant 0 : index
    %54 = vector.load %arg2[%c0_71, %c0_72] : memref<32x288xbf16, #tpu.memory_space<vmem>>, vector<32x288xbf16>
    %c0_73 = arith.constant 0 : index
    %c0_74 = arith.constant 0 : index
    %55 = vector.load %arg8[%c0_73, %c0_74] : memref<288x1024xbf16, #tpu.memory_space<vmem>>, vector<288x1024xbf16>
    %cst = arith.constant dense<0.000000e+00> : vector<32x1024xf32>
    %56 = tpu.matmul %54, %55, %cst {dimension_numbers = #tpu.dot_dimension_numbers<[1], [0], [0], [1], [0, 0, 1, 1], [], []>} : vector<32x288xbf16>, vector<288x1024xbf16>, vector<32x1024xf32> -> vector<32x1024xf32>
    %c0_75 = arith.constant 0 : index
    %c0_76 = arith.constant 0 : index
    %57 = vector.load %arg3[%c0_75, %c0_76] : memref<32x1xf32, #tpu.memory_space<vmem>>, vector<32x1xf32>
    %58 = vector.broadcast %57 : vector<32x1xf32> to vector<32x1024xf32>
    %59 = arith.addf %56, %58 : vector<32x1024xf32>
    %cst_77 = arith.constant 0.000000e+00 : f32
    %60 = vector.broadcast %cst_77 : f32 to vector<32x1024xf32>
    %61 = arith.cmpf oge, %59, %60 : vector<32x1024xf32>
    %cst_78 = arith.constant 2.000000e-01 : f32
    %62 = vector.broadcast %cst_78 : f32 to vector<32x1024xf32>
    %63 = arith.mulf %59, %62 : vector<32x1024xf32>
    %64 = arith.select %61, %59, %63 : vector<32x1024xi1>, vector<32x1024xf32>
    %c0_79 = arith.constant 0 : index
    %c0_80 = arith.constant 0 : index
    %65 = vector.load %arg4[%c0_79, %c0_80] : memref<1x1024xf32, #tpu.memory_space<vmem>>, vector<1x1024xf32>
    %66 = vector.broadcast %65 : vector<1x1024xf32> to vector<32x1024xf32>
    %67 = arith.mulf %64, %66 : vector<32x1024xf32>
    %68 = arith.truncf %67 : vector<32x1024xf32> to vector<32x1024xbf16>
    %c0_81 = arith.constant 0 : index
    %c0_82 = arith.constant 0 : index
    %69 = vector.load %arg9[%c0_81, %c0_82] : memref<32x1024xbf16, #tpu.memory_space<vmem>>, vector<32x1024xbf16>
    tpu.vector_store %arg9[%c0_81, %c0_82], %68 {strides = array<i32>} : memref<32x1024xbf16, #tpu.memory_space<vmem>>, vector<32x1024xbf16>,
    %c0_83 = arith.constant 0 : index
    %c0_84 = arith.constant 0 : index
    %70 = vector.load %arg9[%c0_83, %c0_84] : memref<32x1024xbf16, #tpu.memory_space<vmem>>, vector<32x384xbf16>
    %c0_85 = arith.constant 0 : index
    %c0_86 = arith.constant 0 : index
    %71 = vector.load %arg10[%c0_85, %c0_86] : memref<288x768xbf16, #tpu.memory_space<vmem>>, vector<32x384xbf16>
    tpu.vector_store %arg10[%c0_85, %c0_86], %70 {strides = array<i32>} : memref<288x768xbf16, #tpu.memory_space<vmem>>, vector<32x384xbf16>,
    %c0_87 = arith.constant 0 : index
    %c1_88 = arith.constant 1 : index
    %72 = vector.load %arg9[%c0_87, %c1_88] : memref<32x1024xbf16, #tpu.memory_space<vmem>>, vector<32x384xbf16>
    %c32_89 = arith.constant 32 : index
    %c0_90 = arith.constant 0 : index
    %73 = vector.load %arg10[%c32_89, %c0_90] : memref<288x768xbf16, #tpu.memory_space<vmem>>, vector<32x384xbf16>
    tpu.vector_store %arg10[%c32_89, %c0_90], %72 {strides = array<i32>} : memref<288x768xbf16, #tpu.memory_space<vmem>>, vector<32x384xbf16>,
    %c0_91 = arith.constant 0 : index
    %c2_92 = arith.constant 2 : index
    %74 = vector.load %arg9[%c0_91, %c2_92] : memref<32x1024xbf16, #tpu.memory_space<vmem>>, vector<32x384xbf16>
    %c64_93 = arith.constant 64 : index
    %c0_94 = arith.constant 0 : index
    %75 = vector.load %arg10[%c64_93, %c0_94] : memref<288x768xbf16, #tpu.memory_space<vmem>>, vector<32x384xbf16>
    tpu.vector_store %arg10[%c64_93, %c0_94], %74 {strides = array<i32>} : memref<288x768xbf16, #tpu.memory_space<vmem>>, vector<32x384xbf16>,
    %c0_95 = arith.constant 0 : index
    %c22 = arith.constant 22 : index
    %76 = vector.load %arg9[%c0_95, %c22] : memref<32x1024xbf16, #tpu.memory_space<vmem>>, vector<32x384xbf16>
    %c96_96 = arith.constant 96 : index
    %c0_97 = arith.constant 0 : index
    %77 = vector.load %arg10[%c96_96, %c0_97] : memref<288x768xbf16, #tpu.memory_space<vmem>>, vector<32x384xbf16>
    tpu.vector_store %arg10[%c96_96, %c0_97], %76 {strides = array<i32>} : memref<288x768xbf16, #tpu.memory_space<vmem>>, vector<32x384xbf16>,
    %c0_98 = arith.constant 0 : index
    %c23 = arith.constant 23 : index
    %78 = vector.load %arg9[%c0_98, %c23] : memref<32x1024xbf16, #tpu.memory_space<vmem>>, vector<32x384xbf16>
    %c128_99 = arith.constant 128 : index
    %c0_100 = arith.constant 0 : index
    %79 = vector.load %arg10[%c128_99, %c0_100] : memref<288x768xbf16, #tpu.memory_space<vmem>>, vector<32x384xbf16>
    tpu.vector_store %arg10[%c128_99, %c0_100], %78 {strides = array<i32>} : memref<288x768xbf16, #tpu.memory_space<vmem>>, vector<32x384xbf16>,
    %c0_101 = arith.constant 0 : index
    %c24 = arith.constant 24 : index
    %80 = vector.load %arg9[%c0_101, %c24] : memref<32x1024xbf16, #tpu.memory_space<vmem>>, vector<32x384xbf16>
    %c160_102 = arith.constant 160 : index
    %c0_103 = arith.constant 0 : index
    %81 = vector.load %arg10[%c160_102, %c0_103] : memref<288x768xbf16, #tpu.memory_space<vmem>>, vector<32x384xbf16>
    tpu.vector_store %arg10[%c160_102, %c0_103], %80 {strides = array<i32>} : memref<288x768xbf16, #tpu.memory_space<vmem>>, vector<32x384xbf16>,
    %c0_104 = arith.constant 0 : index
    %c44_105 = arith.constant 44 : index
    %82 = vector.load %arg9[%c0_104, %c44_105] : memref<32x1024xbf16, #tpu.memory_space<vmem>>, vector<32x384xbf16>
    %c192_106 = arith.constant 192 : index
    %c0_107 = arith.constant 0 : index
    %83 = vector.load %arg10[%c192_106, %c0_107] : memref<288x768xbf16, #tpu.memory_space<vmem>>, vector<32x384xbf16>
    tpu.vector_store %arg10[%c192_106, %c0_107], %82 {strides = array<i32>} : memref<288x768xbf16, #tpu.memory_space<vmem>>, vector<32x384xbf16>,
    %c0_108 = arith.constant 0 : index
    %c45 = arith.constant 45 : index
    %84 = vector.load %arg9[%c0_108, %c45] : memref<32x1024xbf16, #tpu.memory_space<vmem>>, vector<32x384xbf16>
    %c224_109 = arith.constant 224 : index
    %c0_110 = arith.constant 0 : index
    %85 = vector.load %arg10[%c224_109, %c0_110] : memref<288x768xbf16, #tpu.memory_space<vmem>>, vector<32x384xbf16>
    tpu.vector_store %arg10[%c224_109, %c0_110], %84 {strides = array<i32>} : memref<288x768xbf16, #tpu.memory_space<vmem>>, vector<32x384xbf16>,
    %c0_111 = arith.constant 0 : index
    %c46_112 = arith.constant 46 : index
    %86 = vector.load %arg9[%c0_111, %c46_112] : memref<32x1024xbf16, #tpu.memory_space<vmem>>, vector<32x384xbf16>
    %c256_113 = arith.constant 256 : index
    %c0_114 = arith.constant 0 : index
    %87 = vector.load %arg10[%c256_113, %c0_114] : memref<288x768xbf16, #tpu.memory_space<vmem>>, vector<32x384xbf16>
    tpu.vector_store %arg10[%c256_113, %c0_114], %86 {strides = array<i32>} : memref<288x768xbf16, #tpu.memory_space<vmem>>, vector<32x384xbf16>,
    %c0_115 = arith.constant 0 : index
    %c512_116 = arith.constant 512 : index
    %88 = vector.load %arg9[%c0_115, %c512_116] : memref<32x1024xbf16, #tpu.memory_space<vmem>>, vector<32x384xbf16>
    %c0_117 = arith.constant 0 : index
    %c384 = arith.constant 384 : index
    %89 = vector.load %arg10[%c0_117, %c384] : memref<288x768xbf16, #tpu.memory_space<vmem>>, vector<32x384xbf16>
    tpu.vector_store %arg10[%c0_117, %c384], %88 {strides = array<i32>} : memref<288x768xbf16, #tpu.memory_space<vmem>>, vector<32x384xbf16>,
    %c0_118 = arith.constant 0 : index
    %c513 = arith.constant 513 : index
    %90 = vector.load %arg9[%c0_118, %c513] : memref<32x1024xbf16, #tpu.memory_space<vmem>>, vector<32x384xbf16>
    %c32_119 = arith.constant 32 : index
    %c384_120 = arith.constant 384 : index
    %91 = vector.load %arg10[%c32_119, %c384_120] : memref<288x768xbf16, #tpu.memory_space<vmem>>, vector<32x384xbf16>
    tpu.vector_store %arg10[%c32_119, %c384_120], %90 {strides = array<i32>} : memref<288x768xbf16, #tpu.memory_space<vmem>>, vector<32x384xbf16>,
    %c0_121 = arith.constant 0 : index
    %c514 = arith.constant 514 : index
    %92 = vector.load %arg9[%c0_121, %c514] : memref<32x1024xbf16, #tpu.memory_space<vmem>>, vector<32x384xbf16>
    %c64_122 = arith.constant 64 : index
    %c384_123 = arith.constant 384 : index
    %93 = vector.load %arg10[%c64_122, %c384_123] : memref<288x768xbf16, #tpu.memory_space<vmem>>, vector<32x384xbf16>
    tpu.vector_store %arg10[%c64_122, %c384_123], %92 {strides = array<i32>} : memref<288x768xbf16, #tpu.memory_space<vmem>>, vector<32x384xbf16>,
    %c0_124 = arith.constant 0 : index
    %c534 = arith.constant 534 : index
    %94 = vector.load %arg9[%c0_124, %c534] : memref<32x1024xbf16, #tpu.memory_space<vmem>>, vector<32x384xbf16>
    %c96_125 = arith.constant 96 : index
    %c384_126 = arith.constant 384 : index
    %95 = vector.load %arg10[%c96_125, %c384_126] : memref<288x768xbf16, #tpu.memory_space<vmem>>, vector<32x384xbf16>
    tpu.vector_store %arg10[%c96_125, %c384_126], %94 {strides = array<i32>} : memref<288x768xbf16, #tpu.memory_space<vmem>>, vector<32x384xbf16>,
    %c0_127 = arith.constant 0 : index
    %c535 = arith.constant 535 : index
    %96 = vector.load %arg9[%c0_127, %c535] : memref<32x1024xbf16, #tpu.memory_space<vmem>>, vector<32x384xbf16>
    %c128_128 = arith.constant 128 : index
    %c384_129 = arith.constant 384 : index
    %97 = vector.load %arg10[%c128_128, %c384_129] : memref<288x768xbf16, #tpu.memory_space<vmem>>, vector<32x384xbf16>
    tpu.vector_store %arg10[%c128_128, %c384_129], %96 {strides = array<i32>} : memref<288x768xbf16, #tpu.memory_space<vmem>>, vector<32x384xbf16>,
    %c0_130 = arith.constant 0 : index
    %c536 = arith.constant 536 : index
    %98 = vector.load %arg9[%c0_130, %c536] : memref<32x1024xbf16, #tpu.memory_space<vmem>>, vector<32x384xbf16>
    %c160_131 = arith.constant 160 : index
    %c384_132 = arith.constant 384 : index
    %99 = vector.load %arg10[%c160_131, %c384_132] : memref<288x768xbf16, #tpu.memory_space<vmem>>, vector<32x384xbf16>
    tpu.vector_store %arg10[%c160_131, %c384_132], %98 {strides = array<i32>} : memref<288x768xbf16, #tpu.memory_space<vmem>>, vector<32x384xbf16>,
    %c0_133 = arith.constant 0 : index
    %c556 = arith.constant 556 : index
    %100 = vector.load %arg9[%c0_133, %c556] : memref<32x1024xbf16, #tpu.memory_space<vmem>>, vector<32x384xbf16>
    %c192_134 = arith.constant 192 : index
    %c384_135 = arith.constant 384 : index
    %101 = vector.load %arg10[%c192_134, %c384_135] : memref<288x768xbf16, #tpu.memory_space<vmem>>, vector<32x384xbf16>
    tpu.vector_store %arg10[%c192_134, %c384_135], %100 {strides = array<i32>} : memref<288x768xbf16, #tpu.memory_space<vmem>>, vector<32x384xbf16>,
    %c0_136 = arith.constant 0 : index
    %c557 = arith.constant 557 : index
    %102 = vector.load %arg9[%c0_136, %c557] : memref<32x1024xbf16, #tpu.memory_space<vmem>>, vector<32x384xbf16>
    %c224_137 = arith.constant 224 : index
    %c384_138 = arith.constant 384 : index
    %103 = vector.load %arg10[%c224_137, %c384_138] : memref<288x768xbf16, #tpu.memory_space<vmem>>, vector<32x384xbf16>
    tpu.vector_store %arg10[%c224_137, %c384_138], %102 {strides = array<i32>} : memref<288x768xbf16, #tpu.memory_space<vmem>>, vector<32x384xbf16>,
    %c0_139 = arith.constant 0 : index
    %c558 = arith.constant 558 : index
    %104 = vector.load %arg9[%c0_139, %c558] : memref<32x1024xbf16, #tpu.memory_space<vmem>>, vector<32x384xbf16>
    %c256_140 = arith.constant 256 : index
    %c384_141 = arith.constant 384 : index
    %105 = vector.load %arg10[%c256_140, %c384_141] : memref<288x768xbf16, #tpu.memory_space<vmem>>, vector<32x384xbf16>
    tpu.vector_store %arg10[%c256_140, %c384_141], %104 {strides = array<i32>} : memref<288x768xbf16, #tpu.memory_space<vmem>>, vector<32x384xbf16>,
    %c0_142 = arith.constant 0 : index
    %c0_143 = arith.constant 0 : index
    %106 = vector.load %arg5[%c0_142, %c0_143] : memref<32x288xbf16, #tpu.memory_space<vmem>>, vector<32x288xbf16>
    %c0_144 = arith.constant 0 : index
    %c0_145 = arith.constant 0 : index
    %107 = vector.load %arg10[%c0_144, %c0_145] : memref<288x768xbf16, #tpu.memory_space<vmem>>, vector<288x768xbf16>
    %cst_146 = arith.constant dense<0.000000e+00> : vector<32x768xf32>
    %108 = tpu.matmul %106, %107, %cst_146 {dimension_numbers = #tpu.dot_dimension_numbers<[1], [0], [0], [1], [0, 0, 1, 1], [], []>} : vector<32x288xbf16>, vector<288x768xbf16>, vector<32x768xf32> -> vector<32x768xf32>
    %c0_147 = arith.constant 0 : index
    %c0_148 = arith.constant 0 : index
    %109 = vector.load %arg6[%c0_147, %c0_148] : memref<32x1xf32, #tpu.memory_space<vmem>>, vector<32x1xf32>
    %110 = vector.broadcast %109 : vector<32x1xf32> to vector<32x768xf32>
    %111 = arith.addf %108, %110 : vector<32x768xf32>
    %cst_149 = arith.constant 0.000000e+00 : f32
    %112 = vector.broadcast %cst_149 : f32 to vector<32x768xf32>
    %113 = arith.cmpf oge, %111, %112 : vector<32x768xf32>
    %cst_150 = arith.constant 2.000000e-01 : f32
    %114 = vector.broadcast %cst_150 : f32 to vector<32x768xf32>
    %115 = arith.mulf %111, %114 : vector<32x768xf32>
    %116 = arith.select %113, %111, %115 : vector<32x768xi1>, vector<32x768xf32>
    %117 = vector.extract_strided_slice %116 {offsets = [0, 0], sizes = [32, 384], strides = [1, 1]} : vector<32x768xf32> to vector<32x384xf32>
    %c0_151 = arith.constant 0 : index
    %c0_152 = arith.constant 0 : index
    %c0_153 = arith.constant 0 : index
    %118 = vector.load %arg7[%c0_151, %c0_152, %c0_153] : memref<2x32x384xf32, #tpu.memory_space<vmem>>, vector<1x32x384xf32>
    %119 = vector.shape_cast %118 : vector<1x32x384xf32> to vector<32x384xf32>
    %120 = vector.shape_cast %117 : vector<32x384xf32> to vector<1x32x384xf32>
    tpu.vector_store %arg7[%c0_151, %c0_152, %c0_153], %120 {strides = array<i32>} : memref<2x32x384xf32, #tpu.memory_space<vmem>>, vector<1x32x384xf32>,
    %121 = vector.extract_strided_slice %116 {offsets = [0, 384], sizes = [32, 384], strides = [1, 1]} : vector<32x768xf32> to vector<32x384xf32>
    %c1_154 = arith.constant 1 : index
    %c0_155 = arith.constant 0 : index
    %c0_156 = arith.constant 0 : index
    %122 = vector.load %arg7[%c1_154, %c0_155, %c0_156] : memref<2x32x384xf32, #tpu.memory_space<vmem>>, vector<1x32x384xf32>
    %123 = vector.shape_cast %122 : vector<1x32x384xf32> to vector<32x384xf32>
    %124 = vector.shape_cast %121 : vector<32x384xf32> to vector<1x32x384xf32>
    tpu.vector_store %arg7[%c1_154, %c0_155, %c0_156], %124 {strides = array<i32>} : memref<2x32x384xf32, #tpu.memory_space<vmem>>, vector<1x32x384xf32>,
    return
  }
  func.func @transform_0(%arg0: i32) -> (i32, i32, i32) {
    %c0_i32 = arith.constant 0 : i32
    %c0_i32_0 = arith.constant 0 : i32
    %c0_i32_1 = arith.constant 0 : i32
    return %arg0, %c0_i32, %c0_i32_0 : i32, i32, i32
  }
  func.func @transform_1(%arg0: i32) -> (i32, i32) {
    %c0_i32 = arith.constant 0 : i32
    %c0_i32_0 = arith.constant 0 : i32
    %c0_i32_1 = arith.constant 0 : i32
    return %c0_i32, %c0_i32_0 : i32, i32
  }
  func.func @transform_2(%arg0: i32) -> (i32, i32) {
    %c0_i32 = arith.constant 0 : i32
    %c0_i32_0 = arith.constant 0 : i32
    %c0_i32_1 = arith.constant 0 : i32
    return %c0_i32, %c0_i32_0 : i32, i32
  }
  func.func @transform_3(%arg0: i32) -> (i32, i32) {
    %c0_i32 = arith.constant 0 : i32
    %c0_i32_0 = arith.constant 0 : i32
    %c0_i32_1 = arith.constant 0 : i32
    return %c0_i32, %c0_i32_0 : i32, i32
  }
  func.func @transform_4(%arg0: i32) -> (i32, i32) {
    %c0_i32 = arith.constant 0 : i32
    %c0_i32_0 = arith.constant 0 : i32
    %c0_i32_1 = arith.constant 0 : i32
    return %c0_i32, %c0_i32_0 : i32, i32
  }
  func.func @transform_5(%arg0: i32) -> (i32, i32) {
    %c0_i32 = arith.constant 0 : i32
    %c0_i32_0 = arith.constant 0 : i32
    %c0_i32_1 = arith.constant 0 : i32
    return %c0_i32, %c0_i32_0 : i32, i32
  }
  func.func @transform_6(%arg0: i32) -> (i32, i32, i32) {
    %c0_i32 = arith.constant 0 : i32
    %c0_i32_0 = arith.constant 0 : i32
    %c0_i32_1 = arith.constant 0 : i32
    return %arg0, %c0_i32, %c0_i32_0 : i32, i32, i32
  }
}

</mosaic_0001>

<llo_original>
// kernel: fwd.4
$region0: #{fwd.4}
  #allocation0 [shape = 'u32[]', space=smem, size = 0x4, offset = 0x4, fixed_abs, tag = 'smem constant byte address 0x4 - core index']
  #allocation1 [shape = 'u32[72,128]{1,0:T(1,128)}', space=vmem, size = 0x9000, scoped, tag = 'internal scratch']
  #allocation2 [shape = 'bf16[32,512]{1,0:T(8,128)(2,1)}', space=vmem, size = 0x8000, scoped, tag = 'scratch operand']
  %s0 = inlined_call_operand.vmem [shape: bf16[4,32,256], index: 0, kind: input, shape index: {}]
  %s1 = inlined_call_operand.vmem [shape: bf16[96,32], index: 1, kind: input, shape index: {}]
  %s2 = inlined_call_operand.vmem [shape: f32[96,1], index: 2, kind: input, shape index: {}]
  %s3 = inlined_call_operand.vmem [shape: bf16[4,96,256], index: 3, kind: output, shape index: {}]
  %s4 = sld [smem:[#allocation0]]
  $region45: #{fwd.4} parent=0
    _
  %s6 = ssub.s32 1, %s4
  %s7 = scalar_select 0, %s6, %s4
  loop: start=0, step=1, limit=4
  $region2: #{fwd.4} parent=0 // loop_pre_header
    _
  $region3: #{fwd.4} parent=0 // loop_header
    %s9 = sphi 0, %s13
    %p10 = scmp.ge.s32.totalorder %s9, 4
    %s19 = sphi 0, %s21
    %s22 = sphi 0, %s19
    %s23 = sphi 0, %s22
    %s39 = sphi 0, %s23
    %s43 = sphi 0, %s43
    %s45 = sphi 0, %s43
    %s46 = sphi 0, %s45
    %s60 = sphi 0, %s46
    %s64 = sphi 0, %s64
    %s66 = sphi 0, %s64
    %s67 = sphi 0, %s66
    %s81 = sphi 0, %s67
    %s87 = sphi 0, %s89
    %s90 = sphi 0, %s87
    %s91 = sphi 0, %s90
    %s107 = sphi 0, %s91
  $region4: #{fwd.4} parent=0 // loop_header_branch
    %12 = sbr.rel (%p10) target = $region8
  $region5: #{fwd.4} parent=0 // loop_body
    %s14 = ssub.s32 %s9, 1
    %s15 = ssub.s32 %s9, 2
    %s16 = sadd.s32 %s9, 1
    %s17 = ssub.s32 %s9, %s16
    %p18 = scmp.eq.s32.totalorder %s17, 0
    %s20 = sadd.s32 %s19, 1
    %s21 = scalar_select %p18, %s19, %s20
    %p24 = pneg %p18
    %p25 = scmp.eq.s32.totalorder %s9, 1
    %p26 = por %p24, %p25
    %p27 = scmp.ne.s32.totalorder %s19, %s22
    %p28 = scmp.eq.s32.totalorder %s9, 0
    %p29 = por %p27, %p28
    %p30 = scmp.ne.s32.totalorder %s19, %s22
    %p31 = scmp.eq.s32.totalorder %s14, 1
    %p32 = por %p30, %p31
    %p33 = scmp.ne.s32.totalorder %s22, %s23
    %p34 = scmp.eq.s32.totalorder %s14, 0
    %p35 = por %p33, %p34
    %p36 = scmp.ne.s32.totalorder %s22, %s23
    %p37 = scmp.eq.s32.totalorder %s15, 1
    %p38 = por %p36, %p37
    %p40 = scmp.ne.s32.totalorder %s23, %s39
    %p41 = scmp.eq.s32.totalorder %s15, 0
    %p42 = por %p40, %p41
    %s44 = sadd.s32 %s43, 1
    %p47 = scmp.eq.s32.totalorder %s9, 1
    %p48 = scmp.ne.s32.totalorder %s43, %s45
    %p49 = scmp.eq.s32.totalorder %s9, 0
    %p50 = por %p48, %p49
    %p51 = scmp.ne.s32.totalorder %s43, %s45
    %p52 = scmp.eq.s32.totalorder %s14, 1
    %p53 = por %p51, %p52
    %p54 = scmp.ne.s32.totalorder %s45, %s46
    %p55 = scmp.eq.s32.totalorder %s14, 0
    %p56 = por %p54, %p55
    %p57 = scmp.ne.s32.totalorder %s45, %s46
    %p58 = scmp.eq.s32.totalorder %s15, 1
    %p59 = por %p57, %p58
    %p61 = scmp.ne.s32.totalorder %s46, %s60
    %p62 = scmp.eq.s32.totalorder %s15, 0
    %p63 = por %p61, %p62
    %s65 = sadd.s32 %s64, 1
    %p68 = scmp.eq.s32.totalorder %s9, 1
    %p69 = scmp.ne.s32.totalorder %s64, %s66
    %p70 = scmp.eq.s32.totalorder %s9, 0
    %p71 = por %p69, %p70
    %p72 = scmp.ne.s32.totalorder %s64, %s66
    %p73 = scmp.eq.s32.totalorder %s14, 1
    %p74 = por %p72, %p73
    %p75 = scmp.ne.s32.totalorder %s66, %s67
    %p76 = scmp.eq.s32.totalorder %s14, 0
    %p77 = por %p75, %p76
    %p78 = scmp.ne.s32.totalorder %s66, %s67
    %p79 = scmp.eq.s32.totalorder %s15, 1
    %p80 = por %p78, %p79
    %p82 = scmp.ne.s32.totalorder %s67, %s81
    %p83 = scmp.eq.s32.totalorder %s15, 0
    %p84 = por %p82, %p83
    %s85 = ssub.s32 %s9, %s16
    %p86 = scmp.eq.s32.totalorder %s85, 0
    %s88 = sadd.s32 %s87, 1
    %s89 = scalar_select %p86, %s87, %s88
    %p92 = pneg %p86
    %p93 = scmp.eq.s32.totalorder %s9, 1
    %p94 = por %p92, %p93
    %p95 = scmp.ne.s32.totalorder %s87, %s90
    %p96 = scmp.eq.s32.totalorder %s9, 0
    %p97 = por %p95, %p96
    %p98 = scmp.ne.s32.totalorder %s87, %s90
    %p99 = scmp.eq.s32.totalorder %s14, 1
    %p100 = por %p98, %p99
    %p101 = scmp.ne.s32.totalorder %s90, %s91
    %p102 = scmp.eq.s32.totalorder %s14, 0
    %p103 = por %p101, %p102
    %p104 = scmp.ne.s32.totalorder %s90, %s91
    %p105 = scmp.eq.s32.totalorder %s15, 1
    %p106 = por %p104, %p105
    %p108 = scmp.ne.s32.totalorder %s91, %s107
    %p109 = scmp.eq.s32.totalorder %s15, 0
    %p110 = por %p108, %p109
    %p111 = scmp.le.s32.totalorder 1, %s9
    %p112 = scmp.lt.s32.totalorder %s9, 3
    %p113 = pnand %p111, %p112
    %p114 = pneg %p113
    // Predicated region
    $region9: #{fwd.4} parent=5 // pred_check
      _
    $region10: #{fwd.4} parent=5 // pred_check_branch
      %116 = sbr.rel (%p113) target = $region12
    $region11: #{fwd.4} parent=5 // pred_region
      %s117 = ssub.s32 %s9, 1
      // Predicated region
      $region13: #{fwd.4} parent=11 // pred_check
        %p118 = pneg %p56
      $region14: #{fwd.4} parent=11 // pred_check_branch
        %120 = sbr.rel (%p118) target = $region16
      $region15: #{fwd.4} parent=11 // pred_region
        _
      $region16: #{fwd.4} parent=11 // pred_fallthru
        _
      // Predicated region
      $region17: #{fwd.4} parent=11 // pred_check
        %p121 = pneg %p77
      $region18: #{fwd.4} parent=11 // pred_check_branch
        %123 = sbr.rel (%p121) target = $region20
      $region19: #{fwd.4} parent=11 // pred_region
        _
      $region20: #{fwd.4} parent=11 // pred_fallthru
        _
    $region12: #{fwd.4} parent=5 // pred_fallthru
      _
    %p124 = scmp.lt.s32.totalorder %s9, 2
    // Predicated region
    $region21: #{fwd.4} parent=5 // pred_check
      %p125 = pneg %p124
    $region22: #{fwd.4} parent=5 // pred_check_branch
      %127 = sbr.rel (%p125) target = $region24
    $region23: #{fwd.4} parent=5 // pred_region
      // Predicated region
      $region25: #{fwd.4} parent=23 // pred_check
        %p128 = pneg %p29
      $region26: #{fwd.4} parent=23 // pred_check_branch
        %130 = sbr.rel (%p128) target = $region28
      $region27: #{fwd.4} parent=23 // pred_region
        %s131 = smul.u32 2, %s9
        %p132 = scmp.lt.s32.totalorder %s131, 3
        %s133 = scalar_select %p132, %s131, 3
        %s134 = smul.addr %s133, 8
        %s135 = smul.addr %s134, 4
        %s136 = scalar_lea.vmem %s0, %s135
        %s137 = smul.u32 2, %s9
      $region28: #{fwd.4} parent=23 // pred_fallthru
        _
    $region24: #{fwd.4} parent=5 // pred_fallthru
      _
    %p138 = scmp.le.s32.totalorder 1, %s9
    %p139 = scmp.lt.s32.totalorder %s9, 3
    %p140 = pnand %p138, %p139
    %p141 = pneg %p140
    // Predicated region
    $region29: #{fwd.4} parent=5 // pred_check
      _
    $region30: #{fwd.4} parent=5 // pred_check_branch
      %143 = sbr.rel (%p140) target = $region32
    $region31: #{fwd.4} parent=5 // pred_region
      %s144 = ssub.s32 %s9, 1
      %s145 = smul.u32 2, %s14
      %p146 = scmp.lt.s32.totalorder %s145, 3
      %s147 = scalar_select %p146, %s145, 3
      %s148 = smul.addr %s147, 8
      %s149 = smul.addr %s148, 4
      %s150 = scalar_lea.vmem %s0, %s149
      %p151 = pneg %p35
      %p152 = pneg %p32
      %p153 = pneg %p56
      %p154 = pneg %p53
      %p155 = pneg %p77
      %p156 = pneg %p74
      %p157 = pneg %p103
      %p158 = pneg %p100
      %s159 = smul.u32 2, %s14
      %p160 = scmp.lt.s32.totalorder %s159, 3
      %s161 = scalar_select %p160, %s159, 3
      %s162 = smul.addr %s161, 24
      %s163 = smul.addr %s162, 4
      %s164 = scalar_lea.vmem %s3, %s163
      %s165 = smul.u32 2, %s14
      %p166 = scmp.lt.s32.totalorder %s165, 3
      %s167 = scalar_select %p166, %s165, 3
      %s168 = smul.addr %s167, 8
      %s169 = smul.addr %s168, 4
      %s170 = scalar_lea.vmem %s0, %s169
      %s171 = smul.u32 2, %s14
      %s172 = smul.u32 2, %s14
      %p173 = scmp.lt.s32.totalorder %s172, 3
      %s174 = scalar_select %p173, %s172, 3
      %s175 = smul.addr %s174, 24
      %s176 = smul.addr %s175, 4
      %s177 = scalar_lea.vmem %s3, %s176
      %s178 = smul.u32 2, %s14
      %v180 = vld [vmem:[%s170] sm:$0xff]
      %v181 = vld [vmem:[%s170 + $0x8] sm:$0xff]
      %v182 = vld [vmem:[%s170 + $0x10] sm:$0xff]
      %v183 = vld [vmem:[%s170 + $0x18] sm:$0xff]
      %184 = vst [vmem:[#allocation2] sm:$0xff] %v180
      %185 = vst [vmem:[#allocation2 + $0x10] sm:$0xff] %v181
      %186 = vst [vmem:[#allocation2 + $0x20] sm:$0xff] %v182
      %187 = vst [vmem:[#allocation2 + $0x30] sm:$0xff] %v183
      %s188 = scalar_lea.vmem %s170, 32
      %v189 = vld [vmem:[%s188] sm:$0xff]
      %v190 = vld [vmem:[%s188 + $0x8] sm:$0xff]
      %v191 = vld [vmem:[%s188 + $0x10] sm:$0xff]
      %v192 = vld [vmem:[%s188 + $0x18] sm:$0xff]
      %193 = vst [vmem:[#allocation2 + $0x8] sm:$0xff] %v189
      %194 = vst [vmem:[#allocation2 + $0x18] sm:$0xff] %v190
      %195 = vst [vmem:[#allocation2 + $0x28] sm:$0xff] %v191
      %196 = vst [vmem:[#allocation2 + $0x38] sm:$0xff] %v192
      %v197 = vld [vmem:[%s1] sm:$0xf]
      %v198 = vld [vmem:[%s1 + $0x4] sm:$0xf]
      %v199 = vld [vmem:[%s1 + $0x8] sm:$0xf]
      %v200 = vld [vmem:[%s1 + $0xc] sm:$0xf]
      %v201 = vld [vmem:[%s1 + $0x10] sm:$0xf]
      %v202 = vld [vmem:[%s1 + $0x14] sm:$0xf]
      %v203 = vld [vmem:[%s1 + $0x18] sm:$0xf]
      %v204 = vld [vmem:[%s1 + $0x1c] sm:$0xf]
      %v205 = vld [vmem:[%s1 + $0x20] sm:$0xf]
      %v206 = vld [vmem:[%s1 + $0x24] sm:$0xf]
      %v207 = vld [vmem:[%s1 + $0x28] sm:$0xf]
      %v208 = vld [vmem:[%s1 + $0x2c] sm:$0xf]
      %v209 = vld [vmem:[#allocation2] sm:$0xff]
      %v210 = vld [vmem:[#allocation2 + $0x8] sm:$0xff]
      %v211 = vld [vmem:[#allocation2 + $0x10] sm:$0xff]
      %v212 = vld [vmem:[#allocation2 + $0x18] sm:$0xff]
      %v213 = vld [vmem:[#allocation2 + $0x20] sm:$0xff]
      %v214 = vld [vmem:[#allocation2 + $0x28] sm:$0xff]
      %v215 = vld [vmem:[#allocation2 + $0x30] sm:$0xff]
      %v216 = vld [vmem:[#allocation2 + $0x38] sm:$0xff]
      %v217 = vld [vmem:[%s2] sm:$0xff]
      %v218 = vld [vmem:[%s2 + $0x8] sm:$0xff]
      %v219 = vld [vmem:[%s2 + $0x10] sm:$0xff]
      %v220 = vld [vmem:[%s2 + $0x18] sm:$0xff]
      %v221 = vld [vmem:[%s2 + $0x20] sm:$0xff]
      %v222 = vld [vmem:[%s2 + $0x28] sm:$0xff]
      %v223 = vld [vmem:[%s2 + $0x30] sm:$0xff]
      %v224 = vld [vmem:[%s2 + $0x38] sm:$0xff]
      %v225 = vld [vmem:[%s2 + $0x40] sm:$0xff]
      %v226 = vld [vmem:[%s2 + $0x48] sm:$0xff]
      %v227 = vld [vmem:[%s2 + $0x50] sm:$0xff]
      %v228 = vld [vmem:[%s2 + $0x58] sm:$0xff]
      %230 = vset.pattern.permute.xlu0 0
      %231 = vperm.xlu0 %230, %v217
      %v232 = vpop.permute.xlu0 %231
      %235 = vset.pattern.permute.xlu0 0
      %236 = vperm.xlu0 %235, %v218
      %v237 = vpop.permute.xlu0 %236
      %240 = vset.pattern.permute.xlu0 0
      %241 = vperm.xlu0 %240, %v219
      %v242 = vpop.permute.xlu0 %241
      %245 = vset.pattern.permute.xlu0 0
      %246 = vperm.xlu0 %245, %v220
      %v247 = vpop.permute.xlu0 %246
      %250 = vset.pattern.permute.xlu0 0
      %251 = vperm.xlu0 %250, %v221
      %v252 = vpop.permute.xlu0 %251
      %255 = vset.pattern.permute.xlu0 0
      %256 = vperm.xlu0 %255, %v222
      %v257 = vpop.permute.xlu0 %256
      %260 = vset.pattern.permute.xlu0 0
      %261 = vperm.xlu0 %260, %v223
      %v262 = vpop.permute.xlu0 %261
      %265 = vset.pattern.permute.xlu0 0
      %266 = vperm.xlu0 %265, %v224
      %v267 = vpop.permute.xlu0 %266
      %270 = vset.pattern.permute.xlu0 0
      %271 = vperm.xlu0 %270, %v225
      %v272 = vpop.permute.xlu0 %271
      %275 = vset.pattern.permute.xlu0 0
      %276 = vperm.xlu0 %275, %v226
      %v277 = vpop.permute.xlu0 %276
      %280 = vset.pattern.permute.xlu0 0
      %281 = vperm.xlu0 %280, %v227
      %v282 = vpop.permute.xlu0 %281
      %285 = vset.pattern.permute.xlu0 0
      %286 = vperm.xlu0 %285, %v228
      %v287 = vpop.permute.xlu0 %286
      %v301 = vunpack.c.l.b16 %v197
      %v302 = vunpack.c.l.b16 %v198
      %v303 = vunpack.c.l.b16 %v199
      %v304 = vunpack.c.l.b16 %v200
      %v305 = vunpack.c.l.b16 %v201
      %v306 = vunpack.c.l.b16 %v202
      %v307 = vunpack.c.l.b16 %v203
      %v308 = vunpack.c.l.b16 %v204
      %v309 = vunpack.c.l.b16 %v205
      %v310 = vunpack.c.l.b16 %v206
      %v311 = vunpack.c.l.b16 %v207
      %v312 = vunpack.c.l.b16 %v208
      %v313 = vpack.c.b16 %v302, %v301
      %v314 = vpack.c.b16 %v304, %v303
      %v315 = vpack.c.b16 %v306, %v305
      %v316 = vpack.c.b16 %v308, %v307
      %v317 = vpack.c.b16 %v310, %v309
      %v318 = vpack.c.b16 %v312, %v311
      %v327 = vunpack.c.l.b16 %v209
      %v328 = vunpack.c.h.b16 %v209
      %v329 = vunpack.c.l.b16 %v210
      %v330 = vunpack.c.h.b16 %v210
      %v331 = vunpack.c.l.b16 %v211
      %v332 = vunpack.c.h.b16 %v211
      %v333 = vunpack.c.l.b16 %v212
      %v334 = vunpack.c.h.b16 %v212
      %v335 = vunpack.c.l.b16 %v213
      %v336 = vunpack.c.h.b16 %v213
      %v337 = vunpack.c.l.b16 %v214
      %v338 = vunpack.c.h.b16 %v214
      %v339 = vunpack.c.l.b16 %v215
      %v340 = vunpack.c.h.b16 %v215
      %v341 = vunpack.c.l.b16 %v216
      %v342 = vunpack.c.h.b16 %v216
      %v343 = vpack.c.b16 %v331, %v327
      %v344 = vpack.c.b16 %v332, %v328
      %v345 = vpack.c.b16 %v333, %v329
      %v346 = vpack.c.b16 %v334, %v330
      %v347 = vpack.c.b16 %v339, %v335
      %v348 = vpack.c.b16 %v340, %v336
      %v349 = vpack.c.b16 %v341, %v337
      %v350 = vpack.c.b16 %v342, %v338
      %vm359 = vcmask 261120
      %v361 = vsel %vm359, %v313, 0
      %v364 = vsel %vm359, %v314, 0
      %v367 = vsel %vm359, %v315, 0
      %v370 = vsel %vm359, %v316, 0
      %v373 = vsel %vm359, %v317, 0
      %v376 = vsel %vm359, %v318, 0
      %378 = vmatpush.bf16.msra.mxu0 0
      %379 = vmatpush.bf16.msra.mxu0 0
      %380 = vmatpush.bf16.msra.mxu0 0
      %381 = vmatpush.bf16.msra.mxu0 0
      %382 = vmatpush.bf16.msra.mxu0 0
      %383 = vmatpush.bf16.msra.mxu0 0
      %384 = vmatpush.bf16.msra.mxu0 %v347
      %385 = vmatpush.bf16.msra.mxu0 %v343
      %386 = vmatmul.bf16.gmra.mxu0 %v361
      %v387 = vpop.f32.mrf.mxu0
      %v388 = vadd.f32 %v232, %v387
      %v389 = vpop.f32.mrf.mxu0
      %v390 = vadd.f32 %v237, %v389
      %391 = vmatmul.bf16.gmra.mxu0 %v364
      %v392 = vpop.f32.mrf.mxu0
      %v393 = vadd.f32 %v242, %v392
      %v394 = vpop.f32.mrf.mxu0
      %v395 = vadd.f32 %v247, %v394
      %396 = vmatmul.bf16.gmra.mxu0 %v367
      %v397 = vpop.f32.mrf.mxu0
      %v398 = vadd.f32 %v252, %v397
      %v399 = vpop.f32.mrf.mxu0
      %v400 = vadd.f32 %v257, %v399
      %401 = vmatmul.bf16.gmra.mxu0 %v370
      %v402 = vpop.f32.mrf.mxu0
      %v403 = vadd.f32 %v262, %v402
      %v404 = vpop.f32.mrf.mxu0
      %v405 = vadd.f32 %v267, %v404
      %406 = vmatmul.bf16.gmra.mxu0 %v373
      %v407 = vpop.f32.mrf.mxu0
      %v408 = vadd.f32 %v272, %v407
      %v409 = vpop.f32.mrf.mxu0
      %v410 = vadd.f32 %v277, %v409
      %411 = vmatmul.bf16.gmra.mxu0 %v376
      %v412 = vpop.f32.mrf.mxu0
      %v413 = vadd.f32 %v282, %v412
      %v414 = vpop.f32.mrf.mxu0
      %v415 = vadd.f32 %v287, %v414
      %416 = vdwg.mxu0
      %417 = vmatpush.bf16.msra.mxu0 0
      %418 = vmatpush.bf16.msra.mxu0 0
      %419 = vmatpush.bf16.msra.mxu0 0
      %420 = vmatpush.bf16.msra.mxu0 0
      %421 = vmatpush.bf16.msra.mxu0 0
      %422 = vmatpush.bf16.msra.mxu0 0
      %423 = vmatpush.bf16.msra.mxu0 %v348
      %424 = vmatpush.bf16.msra.mxu0 %v344
      %425 = vmatmul.bf16.gmra.mxu0 %v361
      %v426 = vpop.f32.mrf.mxu0
      %v427 = vadd.f32 %v232, %v426
      %v428 = vpop.f32.mrf.mxu0
      %v429 = vadd.f32 %v237, %v428
      %430 = vmatmul.bf16.gmra.mxu0 %v364
      %v431 = vpop.f32.mrf.mxu0
      %v432 = vadd.f32 %v242, %v431
      %v433 = vpop.f32.mrf.mxu0
      %v434 = vadd.f32 %v247, %v433
      %435 = vmatmul.bf16.gmra.mxu0 %v367
      %v436 = vpop.f32.mrf.mxu0
      %v437 = vadd.f32 %v252, %v436
      %v438 = vpop.f32.mrf.mxu0
      %v439 = vadd.f32 %v257, %v438
      %440 = vmatmul.bf16.gmra.mxu0 %v370
      %v441 = vpop.f32.mrf.mxu0
      %v442 = vadd.f32 %v262, %v441
      %v443 = vpop.f32.mrf.mxu0
      %v444 = vadd.f32 %v267, %v443
      %445 = vmatmul.bf16.gmra.mxu0 %v373
      %v446 = vpop.f32.mrf.mxu0
      %v447 = vadd.f32 %v272, %v446
      %v448 = vpop.f32.mrf.mxu0
      %v449 = vadd.f32 %v277, %v448
      %450 = vmatmul.bf16.gmra.mxu0 %v376
      %v451 = vpop.f32.mrf.mxu0
      %v452 = vadd.f32 %v282, %v451
      %v453 = vpop.f32.mrf.mxu0
      %v454 = vadd.f32 %v287, %v453
      %455 = vdwg.mxu0
      %456 = vmatpush.bf16.msra.mxu0 0
      %457 = vmatpush.bf16.msra.mxu0 0
      %458 = vmatpush.bf16.msra.mxu0 0
      %459 = vmatpush.bf16.msra.mxu0 0
      %460 = vmatpush.bf16.msra.mxu0 0
      %461 = vmatpush.bf16.msra.mxu0 0
      %462 = vmatpush.bf16.msra.mxu0 %v349
      %463 = vmatpush.bf16.msra.mxu0 %v345
      %464 = vmatmul.bf16.gmra.mxu0 %v361
      %v465 = vpop.f32.mrf.mxu0
      %v466 = vadd.f32 %v232, %v465
      %v467 = vpop.f32.mrf.mxu0
      %v468 = vadd.f32 %v237, %v467
      %469 = vmatmul.bf16.gmra.mxu0 %v364
      %v470 = vpop.f32.mrf.mxu0
      %v471 = vadd.f32 %v242, %v470
      %v472 = vpop.f32.mrf.mxu0
      %v473 = vadd.f32 %v247, %v472
      %474 = vmatmul.bf16.gmra.mxu0 %v367
      %v475 = vpop.f32.mrf.mxu0
      %v476 = vadd.f32 %v252, %v475
      %v477 = vpop.f32.mrf.mxu0
      %v478 = vadd.f32 %v257, %v477
      %479 = vmatmul.bf16.gmra.mxu0 %v370
      %v480 = vpop.f32.mrf.mxu0
      %v481 = vadd.f32 %v262, %v480
      %v482 = vpop.f32.mrf.mxu0
      %v483 = vadd.f32 %v267, %v482
      %484 = vmatmul.bf16.gmra.mxu0 %v373
      %v485 = vpop.f32.mrf.mxu0
      %v486 = vadd.f32 %v272, %v485
      %v487 = vpop.f32.mrf.mxu0
      %v488 = vadd.f32 %v277, %v487
      %489 = vmatmul.bf16.gmra.mxu0 %v376
      %v490 = vpop.f32.mrf.mxu0
      %v491 = vadd.f32 %v282, %v490
      %v492 = vpop.f32.mrf.mxu0
      %v493 = vadd.f32 %v287, %v492
      %494 = vdwg.mxu0
      %495 = vmatpush.bf16.msra.mxu0 0
      %496 = vmatpush.bf16.msra.mxu0 0
      %497 = vmatpush.bf16.msra.mxu0 0
      %498 = vmatpush.bf16.msra.mxu0 0
      %499 = vmatpush.bf16.msra.mxu0 0
      %500 = vmatpush.bf16.msra.mxu0 0
      %501 = vmatpush.bf16.msra.mxu0 %v350
      %502 = vmatpush.bf16.msra.mxu0 %v346
      %503 = vmatmul.bf16.gmra.mxu0 %v361
      %v504 = vpop.f32.mrf.mxu0
      %v505 = vadd.f32 %v232, %v504
      %v506 = vpop.f32.mrf.mxu0
      %v507 = vadd.f32 %v237, %v506
      %508 = vmatmul.bf16.gmra.mxu0 %v364
      %v509 = vpop.f32.mrf.mxu0
      %v510 = vadd.f32 %v242, %v509
      %v511 = vpop.f32.mrf.mxu0
      %v512 = vadd.f32 %v247, %v511
      %513 = vmatmul.bf16.gmra.mxu0 %v367
      %v514 = vpop.f32.mrf.mxu0
      %v515 = vadd.f32 %v252, %v514
      %v516 = vpop.f32.mrf.mxu0
      %v517 = vadd.f32 %v257, %v516
      %518 = vmatmul.bf16.gmra.mxu0 %v370
      %v519 = vpop.f32.mrf.mxu0
      %v520 = vadd.f32 %v262, %v519
      %v521 = vpop.f32.mrf.mxu0
      %v522 = vadd.f32 %v267, %v521
      %523 = vmatmul.bf16.gmra.mxu0 %v373
      %v524 = vpop.f32.mrf.mxu0
      %v525 = vadd.f32 %v272, %v524
      %v526 = vpop.f32.mrf.mxu0
      %v527 = vadd.f32 %v277, %v526
      %528 = vmatmul.bf16.gmra.mxu0 %v376
      %v529 = vpop.f32.mrf.mxu0
      %v530 = vadd.f32 %v282, %v529
      %v531 = vpop.f32.mrf.mxu0
      %v532 = vadd.f32 %v287, %v531
      %533 = vdwg.mxu0
      %v534 = vpack.c.bf16 %v427, %v388
      %v535 = vpack.c.bf16 %v429, %v390
      %v536 = vpack.c.bf16 %v432, %v393
      %v537 = vpack.c.bf16 %v434, %v395
      %v538 = vpack.c.bf16 %v437, %v398
      %v539 = vpack.c.bf16 %v439, %v400
      %v540 = vpack.c.bf16 %v442, %v403
      %v541 = vpack.c.bf16 %v444, %v405
      %v542 = vpack.c.bf16 %v447, %v408
      %v543 = vpack.c.bf16 %v449, %v410
      %v544 = vpack.c.bf16 %v452, %v413
      %v545 = vpack.c.bf16 %v454, %v415
      %546 = vst [vmem:[%s177] sm:$0xff] %v534
      %547 = vst [vmem:[%s177 + $0x8] sm:$0xff] %v535
      %548 = vst [vmem:[%s177 + $0x10] sm:$0xff] %v536
      %549 = vst [vmem:[%s177 + $0x18] sm:$0xff] %v537
      %550 = vst [vmem:[%s177 + $0x20] sm:$0xff] %v538
      %551 = vst [vmem:[%s177 + $0x28] sm:$0xff] %v539
      %552 = vst [vmem:[%s177 + $0x30] sm:$0xff] %v540
      %553 = vst [vmem:[%s177 + $0x38] sm:$0xff] %v541
      %554 = vst [vmem:[%s177 + $0x40] sm:$0xff] %v542
      %555 = vst [vmem:[%s177 + $0x48] sm:$0xff] %v543
      %556 = vst [vmem:[%s177 + $0x50] sm:$0xff] %v544
      %557 = vst [vmem:[%s177 + $0x58] sm:$0xff] %v545
      %v558 = vpack.c.bf16 %v505, %v466
      %v559 = vpack.c.bf16 %v507, %v468
      %v560 = vpack.c.bf16 %v510, %v471
      %v561 = vpack.c.bf16 %v512, %v473
      %v562 = vpack.c.bf16 %v515, %v476
      %v563 = vpack.c.bf16 %v517, %v478
      %v564 = vpack.c.bf16 %v520, %v481
      %v565 = vpack.c.bf16 %v522, %v483
      %v566 = vpack.c.bf16 %v525, %v486
      %v567 = vpack.c.bf16 %v527, %v488
      %v568 = vpack.c.bf16 %v530, %v491
      %v569 = vpack.c.bf16 %v532, %v493
      %s570 = scalar_lea.vmem %s177, 96
      %571 = vst [vmem:[%s570] sm:$0xff] %v558
      %572 = vst [vmem:[%s570 + $0x8] sm:$0xff] %v559
      %573 = vst [vmem:[%s570 + $0x10] sm:$0xff] %v560
      %574 = vst [vmem:[%s570 + $0x18] sm:$0xff] %v561
      %575 = vst [vmem:[%s570 + $0x20] sm:$0xff] %v562
      %576 = vst [vmem:[%s570 + $0x28] sm:$0xff] %v563
      %577 = vst [vmem:[%s570 + $0x30] sm:$0xff] %v564
      %578 = vst [vmem:[%s570 + $0x38] sm:$0xff] %v565
      %579 = vst [vmem:[%s570 + $0x40] sm:$0xff] %v566
      %580 = vst [vmem:[%s570 + $0x48] sm:$0xff] %v567
      %581 = vst [vmem:[%s570 + $0x50] sm:$0xff] %v568
      %582 = vst [vmem:[%s570 + $0x58] sm:$0xff] %v569
      %s583 = smul.u32 2, %s14
      %p584 = scmp.lt.s32.totalorder %s583, 3
      %s585 = scalar_select %p584, %s583, 3
      %s586 = smul.addr %s585, 24
      %s587 = smul.addr %s586, 4
      %s588 = scalar_lea.vmem %s3, %s587
      // Predicated region
      $region33: #{fwd.4} parent=31 // pred_check
        %p589 = pneg %p100
      $region34: #{fwd.4} parent=31 // pred_check_branch
        %591 = sbr.rel (%p589) target = $region36
      $region35: #{fwd.4} parent=31 // pred_region
        %s592 = smul.u32 2, %s14
      $region36: #{fwd.4} parent=31 // pred_fallthru
        _
    $region32: #{fwd.4} parent=5 // pred_fallthru
      _
    %p593 = scmp.le.s32.totalorder 2, %s9
    // Predicated region
    $region37: #{fwd.4} parent=5 // pred_check
      %p594 = pneg %p593
    $region38: #{fwd.4} parent=5 // pred_check_branch
      %596 = sbr.rel (%p594) target = $region40
    $region39: #{fwd.4} parent=5 // pred_region
      %s597 = ssub.s32 %s9, 2
      // Predicated region
      $region41: #{fwd.4} parent=39 // pred_check
        %p598 = pneg %p106
      $region42: #{fwd.4} parent=39 // pred_check_branch
        %600 = sbr.rel (%p598) target = $region44
      $region43: #{fwd.4} parent=39 // pred_region
        %s601 = smul.u32 2, %s15
        %p602 = scmp.lt.s32.totalorder %s601, 3
        %s603 = scalar_select %p602, %s601, 3
        %s604 = smul.addr %s603, 24
        %s605 = smul.addr %s604, 4
        %s606 = scalar_lea.vmem %s3, %s605
      $region44: #{fwd.4} parent=39 // pred_fallthru
        _
    $region40: #{fwd.4} parent=5 // pred_fallthru
      _
  $region6: #{fwd.4} parent=0 // loop_footer
    %s13 = sadd.s32 1, %s9
  $region7: #{fwd.4} parent=0 // loop_footer_branch
    %8 = sbr.rel target = $region3
  $region8: #{fwd.4} parent=0 // loop_exit
    _

// kernel: fwd.5
$region0: #{fwd.5}
  #allocation0 [shape = 'u32[]', space=smem, size = 0x4, offset = 0x4, fixed_abs, tag = 'smem constant byte address 0x4 - core index']
  #allocation1 [shape = 'u32[72,128]{1,0:T(1,128)}', space=vmem, size = 0x9000, scoped, tag = 'internal scratch']
  %s0 = inlined_call_operand.vmem [shape: bf16[2,8,1024], index: 0, kind: input, shape index: {}]
  %s1 = inlined_call_operand.vmem [shape: bf16[2,8,1024], index: 1, kind: input, shape index: {}]
  %s2 = inlined_call_operand.vmem [shape: bf16[2,8,1024], index: 2, kind: input, shape index: {}]
  %s3 = inlined_call_operand.vmem [shape: bf16[2,32,256], index: 3, kind: input, shape index: {}]
  %s4 = inlined_call_operand.vmem [shape: bf16[2,32,256], index: 4, kind: input, shape index: {}]
  %s5 = inlined_call_operand.vmem [shape: bf16[2,32,256], index: 5, kind: input, shape index: {}]
  %s6 = inlined_call_operand.vmem [shape: f32[2,8,1024], index: 6, kind: output, shape index: {0}]
  %s7 = inlined_call_operand.vmem [shape: f32[2,32,256], index: 7, kind: output, shape index: {1}]
  %8 = xla_tuple %s6, %s7
  %s9 = sld [smem:[#allocation0]]
  $region65: #{fwd.5} parent=0
    _
  %s11 = ssub.s32 1, %s9
  %s12 = scalar_select 0, %s11, %s9
  loop: start=0, step=1, limit=4
  $region2: #{fwd.5} parent=0 // loop_pre_header
    _
  $region3: #{fwd.5} parent=0 // loop_header
    %s14 = sphi 0, %s18
    %p15 = scmp.ge.s32.totalorder %s14, 4
    %s24 = sphi 0, %s26
    %s27 = sphi 0, %s24
    %s28 = sphi 0, %s27
    %s44 = sphi 0, %s28
    %s50 = sphi 0, %s52
    %s53 = sphi 0, %s50
    %s54 = sphi 0, %s53
    %s70 = sphi 0, %s54
    %s76 = sphi 0, %s78
    %s79 = sphi 0, %s76
    %s80 = sphi 0, %s79
    %s96 = sphi 0, %s80
    %s102 = sphi 0, %s104
    %s105 = sphi 0, %s102
    %s106 = sphi 0, %s105
    %s122 = sphi 0, %s106
    %s128 = sphi 0, %s130
    %s131 = sphi 0, %s128
    %s132 = sphi 0, %s131
    %s148 = sphi 0, %s132
    %s154 = sphi 0, %s156
    %s157 = sphi 0, %s154
    %s158 = sphi 0, %s157
    %s174 = sphi 0, %s158
    %s180 = sphi 0, %s182
    %s183 = sphi 0, %s180
    %s184 = sphi 0, %s183
    %s200 = sphi 0, %s184
    %s206 = sphi 0, %s208
    %s209 = sphi 0, %s206
    %s210 = sphi 0, %s209
    %s226 = sphi 0, %s210
  $region4: #{fwd.5} parent=0 // loop_header_branch
    %17 = sbr.rel (%p15) target = $region8
  $region5: #{fwd.5} parent=0 // loop_body
    %s19 = ssub.s32 %s14, 1
    %s20 = ssub.s32 %s14, 2
    %s21 = sadd.s32 %s14, 1
    %s22 = ssub.s32 %s14, %s21
    %p23 = scmp.eq.s32.totalorder %s22, 0
    %s25 = sadd.s32 %s24, 1
    %s26 = scalar_select %p23, %s24, %s25
    %p29 = pneg %p23
    %p30 = scmp.eq.s32.totalorder %s14, 1
    %p31 = por %p29, %p30
    %p32 = scmp.ne.s32.totalorder %s24, %s27
    %p33 = scmp.eq.s32.totalorder %s14, 0
    %p34 = por %p32, %p33
    %p35 = scmp.ne.s32.totalorder %s24, %s27
    %p36 = scmp.eq.s32.totalorder %s19, 1
    %p37 = por %p35, %p36
    %p38 = scmp.ne.s32.totalorder %s27, %s28
    %p39 = scmp.eq.s32.totalorder %s19, 0
    %p40 = por %p38, %p39
    %p41 = scmp.ne.s32.totalorder %s27, %s28
    %p42 = scmp.eq.s32.totalorder %s20, 1
    %p43 = por %p41, %p42
    %p45 = scmp.ne.s32.totalorder %s28, %s44
    %p46 = scmp.eq.s32.totalorder %s20, 0
    %p47 = por %p45, %p46
    %s48 = ssub.s32 %s14, %s21
    %p49 = scmp.eq.s32.totalorder %s48, 0
    %s51 = sadd.s32 %s50, 1
    %s52 = scalar_select %p49, %s50, %s51
    %p55 = pneg %p49
    %p56 = scmp.eq.s32.totalorder %s14, 1
    %p57 = por %p55, %p56
    %p58 = scmp.ne.s32.totalorder %s50, %s53
    %p59 = scmp.eq.s32.totalorder %s14, 0
    %p60 = por %p58, %p59
    %p61 = scmp.ne.s32.totalorder %s50, %s53
    %p62 = scmp.eq.s32.totalorder %s19, 1
    %p63 = por %p61, %p62
    %p64 = scmp.ne.s32.totalorder %s53, %s54
    %p65 = scmp.eq.s32.totalorder %s19, 0
    %p66 = por %p64, %p65
    %p67 = scmp.ne.s32.totalorder %s53, %s54
    %p68 = scmp.eq.s32.totalorder %s20, 1
    %p69 = por %p67, %p68
    %p71 = scmp.ne.s32.totalorder %s54, %s70
    %p72 = scmp.eq.s32.totalorder %s20, 0
    %p73 = por %p71, %p72
    %s74 = ssub.s32 %s14, %s21
    %p75 = scmp.eq.s32.totalorder %s74, 0
    %s77 = sadd.s32 %s76, 1
    %s78 = scalar_select %p75, %s76, %s77
    %p81 = pneg %p75
    %p82 = scmp.eq.s32.totalorder %s14, 1
    %p83 = por %p81, %p82
    %p84 = scmp.ne.s32.totalorder %s76, %s79
    %p85 = scmp.eq.s32.totalorder %s14, 0
    %p86 = por %p84, %p85
    %p87 = scmp.ne.s32.totalorder %s76, %s79
    %p88 = scmp.eq.s32.totalorder %s19, 1
    %p89 = por %p87, %p88
    %p90 = scmp.ne.s32.totalorder %s79, %s80
    %p91 = scmp.eq.s32.totalorder %s19, 0
    %p92 = por %p90, %p91
    %p93 = scmp.ne.s32.totalorder %s79, %s80
    %p94 = scmp.eq.s32.totalorder %s20, 1
    %p95 = por %p93, %p94
    %p97 = scmp.ne.s32.totalorder %s80, %s96
    %p98 = scmp.eq.s32.totalorder %s20, 0
    %p99 = por %p97, %p98
    %s100 = ssub.s32 %s14, %s21
    %p101 = scmp.eq.s32.totalorder %s100, 0
    %s103 = sadd.s32 %s102, 1
    %s104 = scalar_select %p101, %s102, %s103
    %p107 = pneg %p101
    %p108 = scmp.eq.s32.totalorder %s14, 1
    %p109 = por %p107, %p108
    %p110 = scmp.ne.s32.totalorder %s102, %s105
    %p111 = scmp.eq.s32.totalorder %s14, 0
    %p112 = por %p110, %p111
    %p113 = scmp.ne.s32.totalorder %s102, %s105
    %p114 = scmp.eq.s32.totalorder %s19, 1
    %p115 = por %p113, %p114
    %p116 = scmp.ne.s32.totalorder %s105, %s106
    %p117 = scmp.eq.s32.totalorder %s19, 0
    %p118 = por %p116, %p117
    %p119 = scmp.ne.s32.totalorder %s105, %s106
    %p120 = scmp.eq.s32.totalorder %s20, 1
    %p121 = por %p119, %p120
    %p123 = scmp.ne.s32.totalorder %s106, %s122
    %p124 = scmp.eq.s32.totalorder %s20, 0
    %p125 = por %p123, %p124
    %s126 = ssub.s32 %s14, %s21
    %p127 = scmp.eq.s32.totalorder %s126, 0
    %s129 = sadd.s32 %s128, 1
    %s130 = scalar_select %p127, %s128, %s129
    %p133 = pneg %p127
    %p134 = scmp.eq.s32.totalorder %s14, 1
    %p135 = por %p133, %p134
    %p136 = scmp.ne.s32.totalorder %s128, %s131
    %p137 = scmp.eq.s32.totalorder %s14, 0
    %p138 = por %p136, %p137
    %p139 = scmp.ne.s32.totalorder %s128, %s131
    %p140 = scmp.eq.s32.totalorder %s19, 1
    %p141 = por %p139, %p140
    %p142 = scmp.ne.s32.totalorder %s131, %s132
    %p143 = scmp.eq.s32.totalorder %s19, 0
    %p144 = por %p142, %p143
    %p145 = scmp.ne.s32.totalorder %s131, %s132
    %p146 = scmp.eq.s32.totalorder %s20, 1
    %p147 = por %p145, %p146
    %p149 = scmp.ne.s32.totalorder %s132, %s148
    %p150 = scmp.eq.s32.totalorder %s20, 0
    %p151 = por %p149, %p150
    %s152 = ssub.s32 %s14, %s21
    %p153 = scmp.eq.s32.totalorder %s152, 0
    %s155 = sadd.s32 %s154, 1
    %s156 = scalar_select %p153, %s154, %s155
    %p159 = pneg %p153
    %p160 = scmp.eq.s32.totalorder %s14, 1
    %p161 = por %p159, %p160
    %p162 = scmp.ne.s32.totalorder %s154, %s157
    %p163 = scmp.eq.s32.totalorder %s14, 0
    %p164 = por %p162, %p163
    %p165 = scmp.ne.s32.totalorder %s154, %s157
    %p166 = scmp.eq.s32.totalorder %s19, 1
    %p167 = por %p165, %p166
    %p168 = scmp.ne.s32.totalorder %s157, %s158
    %p169 = scmp.eq.s32.totalorder %s19, 0
    %p170 = por %p168, %p169
    %p171 = scmp.ne.s32.totalorder %s157, %s158
    %p172 = scmp.eq.s32.totalorder %s20, 1
    %p173 = por %p171, %p172
    %p175 = scmp.ne.s32.totalorder %s158, %s174
    %p176 = scmp.eq.s32.totalorder %s20, 0
    %p177 = por %p175, %p176
    %s178 = ssub.s32 %s14, %s21
    %p179 = scmp.eq.s32.totalorder %s178, 0
    %s181 = sadd.s32 %s180, 1
    %s182 = scalar_select %p179, %s180, %s181
    %p185 = pneg %p179
    %p186 = scmp.eq.s32.totalorder %s14, 1
    %p187 = por %p185, %p186
    %p188 = scmp.ne.s32.totalorder %s180, %s183
    %p189 = scmp.eq.s32.totalorder %s14, 0
    %p190 = por %p188, %p189
    %p191 = scmp.ne.s32.totalorder %s180, %s183
    %p192 = scmp.eq.s32.totalorder %s19, 1
    %p193 = por %p191, %p192
    %p194 = scmp.ne.s32.totalorder %s183, %s184
    %p195 = scmp.eq.s32.totalorder %s19, 0
    %p196 = por %p194, %p195
    %p197 = scmp.ne.s32.totalorder %s183, %s184
    %p198 = scmp.eq.s32.totalorder %s20, 1
    %p199 = por %p197, %p198
    %p201 = scmp.ne.s32.totalorder %s184, %s200
    %p202 = scmp.eq.s32.totalorder %s20, 0
    %p203 = por %p201, %p202
    %s204 = ssub.s32 %s14, %s21
    %p205 = scmp.eq.s32.totalorder %s204, 0
    %s207 = sadd.s32 %s206, 1
    %s208 = scalar_select %p205, %s206, %s207
    %p211 = pneg %p205
    %p212 = scmp.eq.s32.totalorder %s14, 1
    %p213 = por %p211, %p212
    %p214 = scmp.ne.s32.totalorder %s206, %s209
    %p215 = scmp.eq.s32.totalorder %s14, 0
    %p216 = por %p214, %p215
    %p217 = scmp.ne.s32.totalorder %s206, %s209
    %p218 = scmp.eq.s32.totalorder %s19, 1
    %p219 = por %p217, %p218
    %p220 = scmp.ne.s32.totalorder %s209, %s210
    %p221 = scmp.eq.s32.totalorder %s19, 0
    %p222 = por %p220, %p221
    %p223 = scmp.ne.s32.totalorder %s209, %s210
    %p224 = scmp.eq.s32.totalorder %s20, 1
    %p225 = por %p223, %p224
    %p227 = scmp.ne.s32.totalorder %s210, %s226
    %p228 = scmp.eq.s32.totalorder %s20, 0
    %p229 = por %p227, %p228
    %p230 = scmp.le.s32.totalorder 1, %s14
    %p231 = scmp.lt.s32.totalorder %s14, 3
    %p232 = pnand %p230, %p231
    %p233 = pneg %p232
    // Predicated region
    $region9: #{fwd.5} parent=5 // pred_check
      _
    $region10: #{fwd.5} parent=5 // pred_check_branch
      %235 = sbr.rel (%p232) target = $region12
    $region11: #{fwd.5} parent=5 // pred_region
      %s236 = ssub.s32 %s14, 1
    $region12: #{fwd.5} parent=5 // pred_fallthru
      _
    %p237 = scmp.lt.s32.totalorder %s14, 2
    // Predicated region
    $region13: #{fwd.5} parent=5 // pred_check
      %p238 = pneg %p237
    $region14: #{fwd.5} parent=5 // pred_check_branch
      %240 = sbr.rel (%p238) target = $region16
    $region15: #{fwd.5} parent=5 // pred_region
      // Predicated region
      $region17: #{fwd.5} parent=15 // pred_check
        %p241 = pneg %p34
      $region18: #{fwd.5} parent=15 // pred_check_branch
        %243 = sbr.rel (%p241) target = $region20
      $region19: #{fwd.5} parent=15 // pred_region
        %p244 = scmp.lt.s32.totalorder %s14, 1
        %s245 = scalar_select %p244, %s14, 1
        %s246 = smul.addr %s245, 8
        %s247 = smul.addr %s246, 4
        %s248 = scalar_lea.vmem %s0, %s247
      $region20: #{fwd.5} parent=15 // pred_fallthru
        _
      // Predicated region
      $region21: #{fwd.5} parent=15 // pred_check
        %p249 = pneg %p60
      $region22: #{fwd.5} parent=15 // pred_check_branch
        %251 = sbr.rel (%p249) target = $region24
      $region23: #{fwd.5} parent=15 // pred_region
        %p252 = scmp.lt.s32.totalorder %s14, 1
        %s253 = scalar_select %p252, %s14, 1
        %s254 = smul.addr %s253, 8
        %s255 = smul.addr %s254, 4
        %s256 = scalar_lea.vmem %s1, %s255
      $region24: #{fwd.5} parent=15 // pred_fallthru
        _
      // Predicated region
      $region25: #{fwd.5} parent=15 // pred_check
        %p257 = pneg %p86
      $region26: #{fwd.5} parent=15 // pred_check_branch
        %259 = sbr.rel (%p257) target = $region28
      $region27: #{fwd.5} parent=15 // pred_region
        %p260 = scmp.lt.s32.totalorder %s14, 1
        %s261 = scalar_select %p260, %s14, 1
        %s262 = smul.addr %s261, 8
        %s263 = smul.addr %s262, 4
        %s264 = scalar_lea.vmem %s2, %s263
      $region28: #{fwd.5} parent=15 // pred_fallthru
        _
      // Predicated region
      $region29: #{fwd.5} parent=15 // pred_check
        %p265 = pneg %p112
      $region30: #{fwd.5} parent=15 // pred_check_branch
        %267 = sbr.rel (%p265) target = $region32
      $region31: #{fwd.5} parent=15 // pred_region
        %p268 = scmp.lt.s32.totalorder %s14, 1
        %s269 = scalar_select %p268, %s14, 1
        %s270 = smul.addr %s269, 8
        %s271 = smul.addr %s270, 4
        %s272 = scalar_lea.vmem %s3, %s271
      $region32: #{fwd.5} parent=15 // pred_fallthru
        _
      // Predicated region
      $region33: #{fwd.5} parent=15 // pred_check
        %p273 = pneg %p138
      $region34: #{fwd.5} parent=15 // pred_check_branch
        %275 = sbr.rel (%p273) target = $region36
      $region35: #{fwd.5} parent=15 // pred_region
        %p276 = scmp.lt.s32.totalorder %s14, 1
        %s277 = scalar_select %p276, %s14, 1
        %s278 = smul.addr %s277, 8
        %s279 = smul.addr %s278, 4
        %s280 = scalar_lea.vmem %s4, %s279
      $region36: #{fwd.5} parent=15 // pred_fallthru
        _
      // Predicated region
      $region37: #{fwd.5} parent=15 // pred_check
        %p281 = pneg %p164
      $region38: #{fwd.5} parent=15 // pred_check_branch
        %283 = sbr.rel (%p281) target = $region40
      $region39: #{fwd.5} parent=15 // pred_region
        %p284 = scmp.lt.s32.totalorder %s14, 1
        %s285 = scalar_select %p284, %s14, 1
        %s286 = smul.addr %s285, 8
        %s287 = smul.addr %s286, 4
        %s288 = scalar_lea.vmem %s5, %s287
      $region40: #{fwd.5} parent=15 // pred_fallthru
        _
    $region16: #{fwd.5} parent=5 // pred_fallthru
      _
    %p289 = scmp.le.s32.totalorder 1, %s14
    %p290 = scmp.lt.s32.totalorder %s14, 3
    %p291 = pnand %p289, %p290
    %p292 = pneg %p291
    // Predicated region
    $region41: #{fwd.5} parent=5 // pred_check
      _
    $region42: #{fwd.5} parent=5 // pred_check_branch
      %294 = sbr.rel (%p291) target = $region44
    $region43: #{fwd.5} parent=5 // pred_region
      %s295 = ssub.s32 %s14, 1
      %p296 = scmp.lt.s32.totalorder %s19, 1
      %s297 = scalar_select %p296, %s19, 1
      %s298 = smul.addr %s297, 8
      %s299 = smul.addr %s298, 4
      %s300 = scalar_lea.vmem %s0, %s299
      %p301 = pneg %p40
      %p302 = pneg %p37
      %p303 = scmp.lt.s32.totalorder %s19, 1
      %s304 = scalar_select %p303, %s19, 1
      %s305 = smul.addr %s304, 8
      %s306 = smul.addr %s305, 4
      %s307 = scalar_lea.vmem %s1, %s306
      %p308 = pneg %p66
      %p309 = pneg %p63
      %p310 = scmp.lt.s32.totalorder %s19, 1
      %s311 = scalar_select %p310, %s19, 1
      %s312 = smul.addr %s311, 8
      %s313 = smul.addr %s312, 4
      %s314 = scalar_lea.vmem %s2, %s313
      %p315 = pneg %p92
      %p316 = pneg %p89
      %p317 = scmp.lt.s32.totalorder %s19, 1
      %s318 = scalar_select %p317, %s19, 1
      %s319 = smul.addr %s318, 8
      %s320 = smul.addr %s319, 4
      %s321 = scalar_lea.vmem %s3, %s320
      %p322 = pneg %p118
      %p323 = pneg %p115
      %p324 = scmp.lt.s32.totalorder %s19, 1
      %s325 = scalar_select %p324, %s19, 1
      %s326 = smul.addr %s325, 8
      %s327 = smul.addr %s326, 4
      %s328 = scalar_lea.vmem %s4, %s327
      %p329 = pneg %p144
      %p330 = pneg %p141
      %p331 = scmp.lt.s32.totalorder %s19, 1
      %s332 = scalar_select %p331, %s19, 1
      %s333 = smul.addr %s332, 8
      %s334 = smul.addr %s333, 4
      %s335 = scalar_lea.vmem %s5, %s334
      %p336 = pneg %p170
      %p337 = pneg %p167
      %p338 = pneg %p196
      %p339 = pneg %p193
      %p340 = scmp.lt.s32.totalorder %s19, 1
      %s341 = scalar_select %p340, %s19, 1
      %s342 = smul.addr %s341, 8
      %s343 = smul.addr %s342, 8
      %s344 = scalar_lea.vmem %s6, %s343
      %p345 = pneg %p222
      %p346 = pneg %p219
      %p347 = scmp.lt.s32.totalorder %s19, 1
      %s348 = scalar_select %p347, %s19, 1
      %s349 = smul.addr %s348, 8
      %s350 = smul.addr %s349, 8
      %s351 = scalar_lea.vmem %s7, %s350
      %p352 = scmp.lt.s32.totalorder %s19, 1
      %s353 = scalar_select %p352, %s19, 1
      %s354 = smul.addr %s353, 8
      %s355 = smul.addr %s354, 4
      %s356 = scalar_lea.vmem %s0, %s355
      %p357 = scmp.lt.s32.totalorder %s19, 1
      %s358 = scalar_select %p357, %s19, 1
      %s359 = smul.addr %s358, 8
      %s360 = smul.addr %s359, 4
      %s361 = scalar_lea.vmem %s1, %s360
      %p362 = scmp.lt.s32.totalorder %s19, 1
      %s363 = scalar_select %p362, %s19, 1
      %s364 = smul.addr %s363, 8
      %s365 = smul.addr %s364, 4
      %s366 = scalar_lea.vmem %s2, %s365
      %p367 = scmp.lt.s32.totalorder %s19, 1
      %s368 = scalar_select %p367, %s19, 1
      %s369 = smul.addr %s368, 8
      %s370 = smul.addr %s369, 4
      %s371 = scalar_lea.vmem %s3, %s370
      %p372 = scmp.lt.s32.totalorder %s19, 1
      %s373 = scalar_select %p372, %s19, 1
      %s374 = smul.addr %s373, 8
      %s375 = smul.addr %s374, 4
      %s376 = scalar_lea.vmem %s4, %s375
      %p377 = scmp.lt.s32.totalorder %s19, 1
      %s378 = scalar_select %p377, %s19, 1
      %s379 = smul.addr %s378, 8
      %s380 = smul.addr %s379, 4
      %s381 = scalar_lea.vmem %s5, %s380
      %p382 = scmp.lt.s32.totalorder %s19, 1
      %s383 = scalar_select %p382, %s19, 1
      %s384 = smul.addr %s383, 8
      %s385 = smul.addr %s384, 8
      %s386 = scalar_lea.vmem %s6, %s385
      %p387 = scmp.lt.s32.totalorder %s19, 1
      %s388 = scalar_select %p387, %s19, 1
      %s389 = smul.addr %s388, 8
      %s390 = smul.addr %s389, 8
      %s391 = scalar_lea.vmem %s7, %s390
      %v393 = vld [vmem:[%s356] sm:$0xff]
      %v394 = vld [vmem:[%s356 + $0x8] sm:$0xff]
      %v395 = vld [vmem:[%s356 + $0x10] sm:$0xff]
      %v396 = vld [vmem:[%s356 + $0x18] sm:$0xff]
      %v397 = vld [vmem:[%s361] sm:$0xff]
      %v398 = vld [vmem:[%s361 + $0x8] sm:$0xff]
      %v399 = vld [vmem:[%s361 + $0x10] sm:$0xff]
      %v400 = vld [vmem:[%s361 + $0x18] sm:$0xff]
      %v401 = vld [vmem:[%s366] sm:$0xff]
      %v402 = vld [vmem:[%s366 + $0x8] sm:$0xff]
      %v403 = vld [vmem:[%s366 + $0x10] sm:$0xff]
      %v404 = vld [vmem:[%s366 + $0x18] sm:$0xff]
      %v409 = vunpack.c.l.b16 %v393
      %v410 = vunpack.c.h.b16 %v393
      %v411 = vunpack.c.l.b16 %v394
      %v412 = vunpack.c.h.b16 %v394
      %v413 = vunpack.c.l.b16 %v395
      %v414 = vunpack.c.h.b16 %v395
      %v415 = vunpack.c.l.b16 %v396
      %v416 = vunpack.c.h.b16 %v396
      %v417 = vpack.c.b16 %v409, %v409
      %v418 = vpack.c.b16 %v410, %v410
      %v419 = vpack.c.b16 %v411, %v411
      %v420 = vpack.c.b16 %v412, %v412
      %v421 = vpack.c.b16 %v413, %v413
      %v422 = vpack.c.b16 %v414, %v414
      %v423 = vpack.c.b16 %v415, %v415
      %v424 = vpack.c.b16 %v416, %v416
      %v437 = vunpack.c.l.b16 %v397
      %v438 = vunpack.c.h.b16 %v397
      %v439 = vunpack.c.l.b16 %v398
      %v440 = vunpack.c.h.b16 %v398
      %v441 = vunpack.c.l.b16 %v399
      %v442 = vunpack.c.h.b16 %v399
      %v443 = vunpack.c.l.b16 %v400
      %v444 = vunpack.c.h.b16 %v400
      %v445 = vpack.c.b16 %v437, %v437
      %v446 = vpack.c.b16 %v438, %v438
      %v447 = vpack.c.b16 %v439, %v439
      %v448 = vpack.c.b16 %v440, %v440
      %v449 = vpack.c.b16 %v441, %v441
      %v450 = vpack.c.b16 %v442, %v442
      %v451 = vpack.c.b16 %v443, %v443
      %v452 = vpack.c.b16 %v444, %v444
      %461 = vmatpush.bf16.xpose.msra.mxu0 0
      %462 = vmatpush.bf16.xpose.msra.mxu0 0
      %463 = vmatpush.bf16.xpose.msra.mxu0 0
      %464 = vmatpush.bf16.xpose.msra.mxu0 0
      %465 = vmatpush.bf16.xpose.msra.mxu0 0
      %466 = vmatpush.bf16.xpose.msra.mxu0 0
      %467 = vmatpush.bf16.xpose.msra.mxu0 0
      %468 = vmatpush.bf16.xpose.msra.mxu0 %v445
      %469 = vmatmul.bf16.gmra.mxu0 %v417
      %v470 = vpop.f32.mrf.mxu0
      %v471 = vadd.f32 0.0, %v470
      %v472 = vpop.f32.mrf.mxu0
      %473 = vdwg.mxu0
      %474 = vmatpush.bf16.xpose.msra.mxu0 0
      %475 = vmatpush.bf16.xpose.msra.mxu0 0
      %476 = vmatpush.bf16.xpose.msra.mxu0 0
      %477 = vmatpush.bf16.xpose.msra.mxu0 0
      %478 = vmatpush.bf16.xpose.msra.mxu0 0
      %479 = vmatpush.bf16.xpose.msra.mxu0 0
      %480 = vmatpush.bf16.xpose.msra.mxu0 0
      %481 = vmatpush.bf16.xpose.msra.mxu0 %v446
      %482 = vmatmul.bf16.gmra.mxu0 %v418
      %v483 = vpop.f32.mrf.mxu0
      %v484 = vadd.f32 %v471, %v483
      %v485 = vpop.f32.mrf.mxu0
      %486 = vdwg.mxu0
      %487 = vmatpush.bf16.xpose.msra.mxu0 0
      %488 = vmatpush.bf16.xpose.msra.mxu0 0
      %489 = vmatpush.bf16.xpose.msra.mxu0 0
      %490 = vmatpush.bf16.xpose.msra.mxu0 0
      %491 = vmatpush.bf16.xpose.msra.mxu0 0
      %492 = vmatpush.bf16.xpose.msra.mxu0 0
      %493 = vmatpush.bf16.xpose.msra.mxu0 0
      %494 = vmatpush.bf16.xpose.msra.mxu0 %v447
      %495 = vmatmul.bf16.gmra.mxu0 %v419
      %v496 = vpop.f32.mrf.mxu0
      %v497 = vadd.f32 %v484, %v496
      %v498 = vpop.f32.mrf.mxu0
      %499 = vdwg.mxu0
      %500 = vmatpush.bf16.xpose.msra.mxu0 0
      %501 = vmatpush.bf16.xpose.msra.mxu0 0
      %502 = vmatpush.bf16.xpose.msra.mxu0 0
      %503 = vmatpush.bf16.xpose.msra.mxu0 0
      %504 = vmatpush.bf16.xpose.msra.mxu0 0
      %505 = vmatpush.bf16.xpose.msra.mxu0 0
      %506 = vmatpush.bf16.xpose.msra.mxu0 0
      %507 = vmatpush.bf16.xpose.msra.mxu0 %v448
      %508 = vmatmul.bf16.gmra.mxu0 %v420
      %v509 = vpop.f32.mrf.mxu0
      %v510 = vadd.f32 %v497, %v509
      %v511 = vpop.f32.mrf.mxu0
      %512 = vdwg.mxu0
      %513 = vmatpush.bf16.xpose.msra.mxu0 0
      %514 = vmatpush.bf16.xpose.msra.mxu0 0
      %515 = vmatpush.bf16.xpose.msra.mxu0 0
      %516 = vmatpush.bf16.xpose.msra.mxu0 0
      %517 = vmatpush.bf16.xpose.msra.mxu0 0
      %518 = vmatpush.bf16.xpose.msra.mxu0 0
      %519 = vmatpush.bf16.xpose.msra.mxu0 0
      %520 = vmatpush.bf16.xpose.msra.mxu0 %v449
      %521 = vmatmul.bf16.gmra.mxu0 %v421
      %v522 = vpop.f32.mrf.mxu0
      %v523 = vadd.f32 %v510, %v522
      %v524 = vpop.f32.mrf.mxu0
      %525 = vdwg.mxu0
      %526 = vmatpush.bf16.xpose.msra.mxu0 0
      %527 = vmatpush.bf16.xpose.msra.mxu0 0
      %528 = vmatpush.bf16.xpose.msra.mxu0 0
      %529 = vmatpush.bf16.xpose.msra.mxu0 0
      %530 = vmatpush.bf16.xpose.msra.mxu0 0
      %531 = vmatpush.bf16.xpose.msra.mxu0 0
      %532 = vmatpush.bf16.xpose.msra.mxu0 0
      %533 = vmatpush.bf16.xpose.msra.mxu0 %v450
      %534 = vmatmul.bf16.gmra.mxu0 %v422
      %v535 = vpop.f32.mrf.mxu0
      %v536 = vadd.f32 %v523, %v535
      %v537 = vpop.f32.mrf.mxu0
      %538 = vdwg.mxu0
      %539 = vmatpush.bf16.xpose.msra.mxu0 0
      %540 = vmatpush.bf16.xpose.msra.mxu0 0
      %541 = vmatpush.bf16.xpose.msra.mxu0 0
      %542 = vmatpush.bf16.xpose.msra.mxu0 0
      %543 = vmatpush.bf16.xpose.msra.mxu0 0
      %544 = vmatpush.bf16.xpose.msra.mxu0 0
      %545 = vmatpush.bf16.xpose.msra.mxu0 0
      %546 = vmatpush.bf16.xpose.msra.mxu0 %v451
      %547 = vmatmul.bf16.gmra.mxu0 %v423
      %v548 = vpop.f32.mrf.mxu0
      %v549 = vadd.f32 %v536, %v548
      %v550 = vpop.f32.mrf.mxu0
      %551 = vdwg.mxu0
      %552 = vmatpush.bf16.xpose.msra.mxu0 0
      %553 = vmatpush.bf16.xpose.msra.mxu0 0
      %554 = vmatpush.bf16.xpose.msra.mxu0 0
      %555 = vmatpush.bf16.xpose.msra.mxu0 0
      %556 = vmatpush.bf16.xpose.msra.mxu0 0
      %557 = vmatpush.bf16.xpose.msra.mxu0 0
      %558 = vmatpush.bf16.xpose.msra.mxu0 0
      %559 = vmatpush.bf16.xpose.msra.mxu0 %v452
      %560 = vmatmul.bf16.gmra.mxu0 %v424
      %v561 = vpop.f32.mrf.mxu0
      %v562 = vadd.f32 %v549, %v561
      %v563 = vpop.f32.mrf.mxu0
      %564 = vdwg.mxu0
      %v565 = vmul.f32 %v562, 0.03125
      %vm566 = vcmask 64512
      %v567 = vsel %vm566, %v565, -inf
      %568 = vmax.xlane.f32.xlu0 %v567
      %v569 = vpop.xlane.xlu0 %568
      %v570 = vsub.f32 %v565, %v569
      %v571 = vmul.f32 %v570, 1.442695
      %v572 = vpow.pop %v571
      %v573 = vsel %vm566, %v572, 0.0
      %574 = vadd.xlane.f32.xlu0 %v573
      %v575 = vpop.xlane.xlu0 %574
      %v576 = vrcp.pop %v575
      %v577 = vmul.f32 %v572, %v576
      %v578 = vpack.c.bf16 %v577, %v577
      %v583 = vunpack.c.l.b16 %v401
      %v584 = vunpack.c.h.b16 %v401
      %v585 = vunpack.c.l.b16 %v402
      %v586 = vunpack.c.h.b16 %v402
      %v587 = vunpack.c.l.b16 %v403
      %v588 = vunpack.c.h.b16 %v403
      %v589 = vunpack.c.l.b16 %v404
      %v590 = vunpack.c.h.b16 %v404
      %v591 = vpack.c.b16 %v583, %v583
      %v592 = vpack.c.b16 %v584, %v584
      %v593 = vpack.c.b16 %v585, %v585
      %v594 = vpack.c.b16 %v586, %v586
      %v595 = vpack.c.b16 %v587, %v587
      %v596 = vpack.c.b16 %v588, %v588
      %v597 = vpack.c.b16 %v589, %v589
      %v598 = vpack.c.b16 %v590, %v590
      %v600 = vsel %vm566, %v578, 0
      %vm602 = vcmask 1043456
      %v604 = vsel %vm602, %v591, 0
      %v607 = vsel %vm602, %v592, 0
      %v610 = vsel %vm602, %v593, 0
      %v613 = vsel %vm602, %v594, 0
      %v616 = vsel %vm602, %v595, 0
      %v619 = vsel %vm602, %v596, 0
      %v622 = vsel %vm602, %v597, 0
      %v625 = vsel %vm602, %v598, 0
      %627 = vmatpush.bf16.msra.mxu0 0
      %628 = vmatpush.bf16.msra.mxu0 0
      %629 = vmatpush.bf16.msra.mxu0 0
      %630 = vmatpush.bf16.msra.mxu0 0
      %631 = vmatpush.bf16.msra.mxu0 0
      %632 = vmatpush.bf16.msra.mxu0 0
      %633 = vmatpush.bf16.msra.mxu0 0
      %634 = vmatpush.bf16.msra.mxu0 %v604
      %635 = vmatmul.bf16.gmra.mxu0 %v600
      %v636 = vpop.f32.mrf.mxu0
      %v637 = vadd.f32 0.0, %v636
      %v638 = vpop.f32.mrf.mxu0
      %639 = vdwg.mxu0
      %640 = vmatpush.bf16.msra.mxu0 0
      %641 = vmatpush.bf16.msra.mxu0 0
      %642 = vmatpush.bf16.msra.mxu0 0
      %643 = vmatpush.bf16.msra.mxu0 0
      %644 = vmatpush.bf16.msra.mxu0 0
      %645 = vmatpush.bf16.msra.mxu0 0
      %646 = vmatpush.bf16.msra.mxu0 0
      %647 = vmatpush.bf16.msra.mxu0 %v607
      %648 = vmatmul.bf16.gmra.mxu0 %v600
      %v649 = vpop.f32.mrf.mxu0
      %v650 = vadd.f32 0.0, %v649
      %v651 = vpop.f32.mrf.mxu0
      %652 = vdwg.mxu0
      %653 = vmatpush.bf16.msra.mxu0 0
      %654 = vmatpush.bf16.msra.mxu0 0
      %655 = vmatpush.bf16.msra.mxu0 0
      %656 = vmatpush.bf16.msra.mxu0 0
      %657 = vmatpush.bf16.msra.mxu0 0
      %658 = vmatpush.bf16.msra.mxu0 0
      %659 = vmatpush.bf16.msra.mxu0 0
      %660 = vmatpush.bf16.msra.mxu0 %v610
      %661 = vmatmul.bf16.gmra.mxu0 %v600
      %v662 = vpop.f32.mrf.mxu0
      %v663 = vadd.f32 0.0, %v662
      %v664 = vpop.f32.mrf.mxu0
      %665 = vdwg.mxu0
      %666 = vmatpush.bf16.msra.mxu0 0
      %667 = vmatpush.bf16.msra.mxu0 0
      %668 = vmatpush.bf16.msra.mxu0 0
      %669 = vmatpush.bf16.msra.mxu0 0
      %670 = vmatpush.bf16.msra.mxu0 0
      %671 = vmatpush.bf16.msra.mxu0 0
      %672 = vmatpush.bf16.msra.mxu0 0
      %673 = vmatpush.bf16.msra.mxu0 %v613
      %674 = vmatmul.bf16.gmra.mxu0 %v600
      %v675 = vpop.f32.mrf.mxu0
      %v676 = vadd.f32 0.0, %v675
      %v677 = vpop.f32.mrf.mxu0
      %678 = vdwg.mxu0
      %679 = vmatpush.bf16.msra.mxu0 0
      %680 = vmatpush.bf16.msra.mxu0 0
      %681 = vmatpush.bf16.msra.mxu0 0
      %682 = vmatpush.bf16.msra.mxu0 0
      %683 = vmatpush.bf16.msra.mxu0 0
      %684 = vmatpush.bf16.msra.mxu0 0
      %685 = vmatpush.bf16.msra.mxu0 0
      %686 = vmatpush.bf16.msra.mxu0 %v616
      %687 = vmatmul.bf16.gmra.mxu0 %v600
      %v688 = vpop.f32.mrf.mxu0
      %v689 = vadd.f32 0.0, %v688
      %v690 = vpop.f32.mrf.mxu0
      %691 = vdwg.mxu0
      %692 = vmatpush.bf16.msra.mxu0 0
      %693 = vmatpush.bf16.msra.mxu0 0
      %694 = vmatpush.bf16.msra.mxu0 0
      %695 = vmatpush.bf16.msra.mxu0 0
      %696 = vmatpush.bf16.msra.mxu0 0
      %697 = vmatpush.bf16.msra.mxu0 0
      %698 = vmatpush.bf16.msra.mxu0 0
      %699 = vmatpush.bf16.msra.mxu0 %v619
      %700 = vmatmul.bf16.gmra.mxu0 %v600
      %v701 = vpop.f32.mrf.mxu0
      %v702 = vadd.f32 0.0, %v701
      %v703 = vpop.f32.mrf.mxu0
      %704 = vdwg.mxu0
      %705 = vmatpush.bf16.msra.mxu0 0
      %706 = vmatpush.bf16.msra.mxu0 0
      %707 = vmatpush.bf16.msra.mxu0 0
      %708 = vmatpush.bf16.msra.mxu0 0
      %709 = vmatpush.bf16.msra.mxu0 0
      %710 = vmatpush.bf16.msra.mxu0 0
      %711 = vmatpush.bf16.msra.mxu0 0
      %712 = vmatpush.bf16.msra.mxu0 %v622
      %713 = vmatmul.bf16.gmra.mxu0 %v600
      %v714 = vpop.f32.mrf.mxu0
      %v715 = vadd.f32 0.0, %v714
      %v716 = vpop.f32.mrf.mxu0
      %717 = vdwg.mxu0
      %718 = vmatpush.bf16.msra.mxu0 0
      %719 = vmatpush.bf16.msra.mxu0 0
      %720 = vmatpush.bf16.msra.mxu0 0
      %721 = vmatpush.bf16.msra.mxu0 0
      %722 = vmatpush.bf16.msra.mxu0 0
      %723 = vmatpush.bf16.msra.mxu0 0
      %724 = vmatpush.bf16.msra.mxu0 0
      %725 = vmatpush.bf16.msra.mxu0 %v625
      %726 = vmatmul.bf16.gmra.mxu0 %v600
      %v727 = vpop.f32.mrf.mxu0
      %v728 = vadd.f32 0.0, %v727
      %v729 = vpop.f32.mrf.mxu0
      %730 = vdwg.mxu0
      %731 = vst [vmem:[%s386] sm:$0xff] %v637
      %732 = vst [vmem:[%s386 + $0x8] sm:$0xff] %v650
      %733 = vst [vmem:[%s386 + $0x10] sm:$0xff] %v663
      %734 = vst [vmem:[%s386 + $0x18] sm:$0xff] %v676
      %735 = vst [vmem:[%s386 + $0x20] sm:$0xff] %v689
      %736 = vst [vmem:[%s386 + $0x28] sm:$0xff] %v702
      %737 = vst [vmem:[%s386 + $0x30] sm:$0xff] %v715
      %738 = vst [vmem:[%s386 + $0x38] sm:$0xff] %v728
      %v739 = vld [vmem:[%s371] sm:$0xff]
      %v740 = vld [vmem:[%s371 + $0x8] sm:$0xff]
      %v741 = vld [vmem:[%s371 + $0x10] sm:$0xff]
      %v742 = vld [vmem:[%s371 + $0x18] sm:$0xff]
      %v743 = vld [vmem:[%s376] sm:$0xff]
      %v744 = vld [vmem:[%s376 + $0x8] sm:$0xff]
      %v745 = vld [vmem:[%s376 + $0x10] sm:$0xff]
      %v746 = vld [vmem:[%s376 + $0x18] sm:$0xff]
      %v747 = vld [vmem:[%s381] sm:$0xff]
      %v748 = vld [vmem:[%s381 + $0x8] sm:$0xff]
      %v749 = vld [vmem:[%s381 + $0x10] sm:$0xff]
      %v750 = vld [vmem:[%s381 + $0x18] sm:$0xff]
      %v755 = vunpack.c.l.b16 %v739
      %v756 = vunpack.c.h.b16 %v739
      %v757 = vunpack.c.l.b16 %v740
      %v758 = vunpack.c.h.b16 %v740
      %v759 = vunpack.c.l.b16 %v741
      %v760 = vunpack.c.h.b16 %v741
      %v761 = vunpack.c.l.b16 %v742
      %v762 = vunpack.c.h.b16 %v742
      %v763 = vpack.c.b16 %v757, %v755
      %v764 = vpack.c.b16 %v758, %v756
      %v765 = vpack.c.b16 %v761, %v759
      %v766 = vpack.c.b16 %v762, %v760
      %v775 = vunpack.c.l.b16 %v743
      %v776 = vunpack.c.h.b16 %v743
      %v777 = vunpack.c.l.b16 %v744
      %v778 = vunpack.c.h.b16 %v744
      %v779 = vunpack.c.l.b16 %v745
      %v780 = vunpack.c.h.b16 %v745
      %v781 = vunpack.c.l.b16 %v746
      %v782 = vunpack.c.h.b16 %v746
      %v783 = vpack.c.b16 %v777, %v775
      %v784 = vpack.c.b16 %v778, %v776
      %v785 = vpack.c.b16 %v781, %v779
      %v786 = vpack.c.b16 %v782, %v780
      %791 = vmatpush.bf16.xpose.msra.mxu0 0
      %792 = vmatpush.bf16.xpose.msra.mxu0 0
      %793 = vmatpush.bf16.xpose.msra.mxu0 0
      %794 = vmatpush.bf16.xpose.msra.mxu0 0
      %795 = vmatpush.bf16.xpose.msra.mxu0 0
      %796 = vmatpush.bf16.xpose.msra.mxu0 0
      %797 = vmatpush.bf16.xpose.msra.mxu0 %v785
      %798 = vmatpush.bf16.xpose.msra.mxu0 %v783
      %799 = vmatmul.bf16.gmra.mxu0 %v763
      %v800 = vpop.f32.mrf.mxu0
      %v801 = vadd.f32 0.0, %v800
      %v802 = vpop.f32.mrf.mxu0
      %v803 = vadd.f32 0.0, %v802
      %804 = vmatmul.bf16.gmra.mxu0 %v765
      %v805 = vpop.f32.mrf.mxu0
      %v806 = vadd.f32 0.0, %v805
      %v807 = vpop.f32.mrf.mxu0
      %v808 = vadd.f32 0.0, %v807
      %809 = vdwg.mxu0
      %810 = vmatpush.bf16.xpose.msra.mxu0 0
      %811 = vmatpush.bf16.xpose.msra.mxu0 0
      %812 = vmatpush.bf16.xpose.msra.mxu0 0
      %813 = vmatpush.bf16.xpose.msra.mxu0 0
      %814 = vmatpush.bf16.xpose.msra.mxu0 0
      %815 = vmatpush.bf16.xpose.msra.mxu0 0
      %816 = vmatpush.bf16.xpose.msra.mxu0 %v786
      %817 = vmatpush.bf16.xpose.msra.mxu0 %v784
      %818 = vmatmul.bf16.gmra.mxu0 %v764
      %v819 = vpop.f32.mrf.mxu0
      %v820 = vadd.f32 %v801, %v819
      %v821 = vpop.f32.mrf.mxu0
      %v822 = vadd.f32 %v803, %v821
      %823 = vmatmul.bf16.gmra.mxu0 %v766
      %v824 = vpop.f32.mrf.mxu0
      %v825 = vadd.f32 %v806, %v824
      %v826 = vpop.f32.mrf.mxu0
      %v827 = vadd.f32 %v808, %v826
      %828 = vdwg.mxu0
      %v829 = vmul.f32 %v820, 0.0625
      %v830 = vmul.f32 %v822, 0.0625
      %v831 = vmul.f32 %v825, 0.0625
      %v832 = vmul.f32 %v827, 0.0625
      %vm833 = vcmask 261120
      %v834 = vsel %vm833, %v829, -inf
      %835 = vmax.xlane.f32.xlu0 %v834
      %v836 = vpop.xlane.xlu0 %835
      %v837 = vsel %vm833, %v830, -inf
      %838 = vmax.xlane.f32.xlu0 %v837
      %v839 = vpop.xlane.xlu0 %838
      %v840 = vsel %vm833, %v831, -inf
      %841 = vmax.xlane.f32.xlu0 %v840
      %v842 = vpop.xlane.xlu0 %841
      %v843 = vsel %vm833, %v832, -inf
      %844 = vmax.xlane.f32.xlu0 %v843
      %v845 = vpop.xlane.xlu0 %844
      %v846 = vsub.f32 %v829, %v836
      %v847 = vsub.f32 %v830, %v839
      %v848 = vsub.f32 %v831, %v842
      %v849 = vsub.f32 %v832, %v845
      %v850 = vmul.f32 %v846, 1.442695
      %v851 = vpow.pop %v850
      %v852 = vmul.f32 %v847, 1.442695
      %v853 = vpow.pop %v852
      %v854 = vmul.f32 %v848, 1.442695
      %v855 = vpow.pop %v854
      %v856 = vmul.f32 %v849, 1.442695
      %v857 = vpow.pop %v856
      %v858 = vsel %vm833, %v851, 0.0
      %859 = vadd.xlane.f32.xlu0 %v858
      %v860 = vpop.xlane.xlu0 %859
      %v861 = vsel %vm833, %v853, 0.0
      %862 = vadd.xlane.f32.xlu0 %v861
      %v863 = vpop.xlane.xlu0 %862
      %v864 = vsel %vm833, %v855, 0.0
      %865 = vadd.xlane.f32.xlu0 %v864
      %v866 = vpop.xlane.xlu0 %865
      %v867 = vsel %vm833, %v857, 0.0
      %868 = vadd.xlane.f32.xlu0 %v867
      %v869 = vpop.xlane.xlu0 %868
      %v870 = vrcp.pop %v860
      %v871 = vrcp.pop %v863
      %v872 = vrcp.pop %v866
      %v873 = vrcp.pop %v869
      %v874 = vmul.f32 %v851, %v870
      %v875 = vmul.f32 %v853, %v871
      %v876 = vmul.f32 %v855, %v872
      %v877 = vmul.f32 %v857, %v873
      %v878 = vpack.c.bf16 %v875, %v874
      %v879 = vpack.c.bf16 %v877, %v876
      %v884 = vunpack.c.l.b16 %v747
      %v885 = vunpack.c.h.b16 %v747
      %v886 = vunpack.c.l.b16 %v748
      %v887 = vunpack.c.h.b16 %v748
      %v888 = vunpack.c.l.b16 %v749
      %v889 = vunpack.c.h.b16 %v749
      %v890 = vunpack.c.l.b16 %v750
      %v891 = vunpack.c.h.b16 %v750
      %v892 = vpack.c.b16 %v886, %v884
      %v893 = vpack.c.b16 %v887, %v885
      %v894 = vpack.c.b16 %v890, %v888
      %v895 = vpack.c.b16 %v891, %v889
      %v901 = vsel %vm833, %v878, 0
      %v904 = vsel %vm833, %v879, 0
      %906 = vmatpush.bf16.msra.mxu0 0
      %907 = vmatpush.bf16.msra.mxu0 0
      %908 = vmatpush.bf16.msra.mxu0 0
      %909 = vmatpush.bf16.msra.mxu0 0
      %910 = vmatpush.bf16.msra.mxu0 0
      %911 = vmatpush.bf16.msra.mxu0 0
      %912 = vmatpush.bf16.msra.mxu0 %v894
      %913 = vmatpush.bf16.msra.mxu0 %v892
      %914 = vmatmul.bf16.gmra.mxu0 %v901
      %v915 = vpop.f32.mrf.mxu0
      %v916 = vadd.f32 0.0, %v915
      %v917 = vpop.f32.mrf.mxu0
      %v918 = vadd.f32 0.0, %v917
      %919 = vmatmul.bf16.gmra.mxu0 %v904
      %v920 = vpop.f32.mrf.mxu0
      %v921 = vadd.f32 0.0, %v920
      %v922 = vpop.f32.mrf.mxu0
      %v923 = vadd.f32 0.0, %v922
      %924 = vdwg.mxu0
      %925 = vmatpush.bf16.msra.mxu0 0
      %926 = vmatpush.bf16.msra.mxu0 0
      %927 = vmatpush.bf16.msra.mxu0 0
      %928 = vmatpush.bf16.msra.mxu0 0
      %929 = vmatpush.bf16.msra.mxu0 0
      %930 = vmatpush.bf16.msra.mxu0 0
      %931 = vmatpush.bf16.msra.mxu0 %v895
      %932 = vmatpush.bf16.msra.mxu0 %v893
      %933 = vmatmul.bf16.gmra.mxu0 %v901
      %v934 = vpop.f32.mrf.mxu0
      %v935 = vadd.f32 0.0, %v934
      %v936 = vpop.f32.mrf.mxu0
      %v937 = vadd.f32 0.0, %v936
      %938 = vmatmul.bf16.gmra.mxu0 %v904
      %v939 = vpop.f32.mrf.mxu0
      %v940 = vadd.f32 0.0, %v939
      %v941 = vpop.f32.mrf.mxu0
      %v942 = vadd.f32 0.0, %v941
      %943 = vdwg.mxu0
      %944 = vst [vmem:[%s391] sm:$0xff] %v916
      %945 = vst [vmem:[%s391 + $0x8] sm:$0xff] %v935
      %946 = vst [vmem:[%s391 + $0x10] sm:$0xff] %v918
      %947 = vst [vmem:[%s391 + $0x18] sm:$0xff] %v937
      %948 = vst [vmem:[%s391 + $0x20] sm:$0xff] %v921
      %949 = vst [vmem:[%s391 + $0x28] sm:$0xff] %v940
      %950 = vst [vmem:[%s391 + $0x30] sm:$0xff] %v923
      %951 = vst [vmem:[%s391 + $0x38] sm:$0xff] %v942
      %p952 = scmp.lt.s32.totalorder %s19, 1
      %s953 = scalar_select %p952, %s19, 1
      %s954 = smul.addr %s953, 8
      %s955 = smul.addr %s954, 8
      %s956 = scalar_lea.vmem %s6, %s955
      %p957 = scmp.lt.s32.totalorder %s19, 1
      %s958 = scalar_select %p957, %s19, 1
      %s959 = smul.addr %s958, 8
      %s960 = smul.addr %s959, 8
      %s961 = scalar_lea.vmem %s7, %s960
      // Predicated region
      $region45: #{fwd.5} parent=43 // pred_check
        %p962 = pneg %p193
      $region46: #{fwd.5} parent=43 // pred_check_branch
        %964 = sbr.rel (%p962) target = $region48
      $region47: #{fwd.5} parent=43 // pred_region
        _
      $region48: #{fwd.5} parent=43 // pred_fallthru
        _
      // Predicated region
      $region49: #{fwd.5} parent=43 // pred_check
        %p965 = pneg %p219
      $region50: #{fwd.5} parent=43 // pred_check_branch
        %967 = sbr.rel (%p965) target = $region52
      $region51: #{fwd.5} parent=43 // pred_region
        _
      $region52: #{fwd.5} parent=43 // pred_fallthru
        _
    $region44: #{fwd.5} parent=5 // pred_fallthru
      _
    %p968 = scmp.le.s32.totalorder 2, %s14
    // Predicated region
    $region53: #{fwd.5} parent=5 // pred_check
      %p969 = pneg %p968
    $region54: #{fwd.5} parent=5 // pred_check_branch
      %971 = sbr.rel (%p969) target = $region56
    $region55: #{fwd.5} parent=5 // pred_region
      %s972 = ssub.s32 %s14, 2
      // Predicated region
      $region57: #{fwd.5} parent=55 // pred_check
        %p973 = pneg %p199
      $region58: #{fwd.5} parent=55 // pred_check_branch
        %975 = sbr.rel (%p973) target = $region60
      $region59: #{fwd.5} parent=55 // pred_region
        %p976 = scmp.lt.s32.totalorder %s20, 1
        %s977 = scalar_select %p976, %s20, 1
        %s978 = smul.addr %s977, 8
        %s979 = smul.addr %s978, 8
        %s980 = scalar_lea.vmem %s6, %s979
      $region60: #{fwd.5} parent=55 // pred_fallthru
        _
      // Predicated region
      $region61: #{fwd.5} parent=55 // pred_check
        %p981 = pneg %p225
      $region62: #{fwd.5} parent=55 // pred_check_branch
        %983 = sbr.rel (%p981) target = $region64
      $region63: #{fwd.5} parent=55 // pred_region
        %p984 = scmp.lt.s32.totalorder %s20, 1
        %s985 = scalar_select %p984, %s20, 1
        %s986 = smul.addr %s985, 8
        %s987 = smul.addr %s986, 8
        %s988 = scalar_lea.vmem %s7, %s987
      $region64: #{fwd.5} parent=55 // pred_fallthru
        _
    $region56: #{fwd.5} parent=5 // pred_fallthru
      _
  $region6: #{fwd.5} parent=0 // loop_footer
    %s18 = sadd.s32 1, %s14
  $region7: #{fwd.5} parent=0 // loop_footer_branch
    %13 = sbr.rel target = $region3
  $region8: #{fwd.5} parent=0 // loop_exit
    _

// kernel: fwd.6
$region0: #{fwd.6}
  #allocation0 [shape = 'u32[]', space=smem, size = 0x4, offset = 0x4, fixed_abs, tag = 'smem constant byte address 0x4 - core index']
  #allocation1 [shape = 'u32[72,128]{1,0:T(1,128)}', space=vmem, size = 0x9000, scoped, tag = 'internal scratch']
  #allocation2 [shape = 'bf16[288,768]{1,0:T(8,128)(2,1)}', space=vmem, size = 0x6c000, scoped, tag = 'scratch operand']
  %s0 = inlined_call_operand.vmem [shape: bf16[4,32,432], index: 0, kind: input, shape index: {}]
  %s1 = inlined_call_operand.vmem [shape: bf16[32,288], index: 1, kind: input, shape index: {}]
  %s2 = inlined_call_operand.vmem [shape: f32[32,1], index: 2, kind: input, shape index: {}]
  %s3 = inlined_call_operand.vmem [shape: f32[4,32,384], index: 3, kind: output, shape index: {}]
  %s4 = sld [smem:[#allocation0]]
  $region45: #{fwd.6} parent=0
    _
  %s6 = ssub.s32 1, %s4
  %s7 = scalar_select 0, %s6, %s4
  loop: start=0, step=1, limit=4
  $region2: #{fwd.6} parent=0 // loop_pre_header
    _
  $region3: #{fwd.6} parent=0 // loop_header
    %s9 = sphi 0, %s13
    %p10 = scmp.ge.s32.totalorder %s9, 4
    %s19 = sphi 0, %s21
    %s22 = sphi 0, %s19
    %s23 = sphi 0, %s22
    %s39 = sphi 0, %s23
    %s43 = sphi 0, %s43
    %s45 = sphi 0, %s43
    %s46 = sphi 0, %s45
    %s60 = sphi 0, %s46
    %s64 = sphi 0, %s64
    %s66 = sphi 0, %s64
    %s67 = sphi 0, %s66
    %s81 = sphi 0, %s67
    %s87 = sphi 0, %s89
    %s90 = sphi 0, %s87
    %s91 = sphi 0, %s90
    %s107 = sphi 0, %s91
  $region4: #{fwd.6} parent=0 // loop_header_branch
    %12 = sbr.rel (%p10) target = $region8
  $region5: #{fwd.6} parent=0 // loop_body
    %s14 = ssub.s32 %s9, 1
    %s15 = ssub.s32 %s9, 2
    %s16 = sadd.s32 %s9, 1
    %s17 = ssub.s32 %s9, %s16
    %p18 = scmp.eq.s32.totalorder %s17, 0
    %s20 = sadd.s32 %s19, 1
    %s21 = scalar_select %p18, %s19, %s20
    %p24 = pneg %p18
    %p25 = scmp.eq.s32.totalorder %s9, 1
    %p26 = por %p24, %p25
    %p27 = scmp.ne.s32.totalorder %s19, %s22
    %p28 = scmp.eq.s32.totalorder %s9, 0
    %p29 = por %p27, %p28
    %p30 = scmp.ne.s32.totalorder %s19, %s22
    %p31 = scmp.eq.s32.totalorder %s14, 1
    %p32 = por %p30, %p31
    %p33 = scmp.ne.s32.totalorder %s22, %s23
    %p34 = scmp.eq.s32.totalorder %s14, 0
    %p35 = por %p33, %p34
    %p36 = scmp.ne.s32.totalorder %s22, %s23
    %p37 = scmp.eq.s32.totalorder %s15, 1
    %p38 = por %p36, %p37
    %p40 = scmp.ne.s32.totalorder %s23, %s39
    %p41 = scmp.eq.s32.totalorder %s15, 0
    %p42 = por %p40, %p41
    %s44 = sadd.s32 %s43, 1
    %p47 = scmp.eq.s32.totalorder %s9, 1
    %p48 = scmp.ne.s32.totalorder %s43, %s45
    %p49 = scmp.eq.s32.totalorder %s9, 0
    %p50 = por %p48, %p49
    %p51 = scmp.ne.s32.totalorder %s43, %s45
    %p52 = scmp.eq.s32.totalorder %s14, 1
    %p53 = por %p51, %p52
    %p54 = scmp.ne.s32.totalorder %s45, %s46
    %p55 = scmp.eq.s32.totalorder %s14, 0
    %p56 = por %p54, %p55
    %p57 = scmp.ne.s32.totalorder %s45, %s46
    %p58 = scmp.eq.s32.totalorder %s15, 1
    %p59 = por %p57, %p58
    %p61 = scmp.ne.s32.totalorder %s46, %s60
    %p62 = scmp.eq.s32.totalorder %s15, 0
    %p63 = por %p61, %p62
    %s65 = sadd.s32 %s64, 1
    %p68 = scmp.eq.s32.totalorder %s9, 1
    %p69 = scmp.ne.s32.totalorder %s64, %s66
    %p70 = scmp.eq.s32.totalorder %s9, 0
    %p71 = por %p69, %p70
    %p72 = scmp.ne.s32.totalorder %s64, %s66
    %p73 = scmp.eq.s32.totalorder %s14, 1
    %p74 = por %p72, %p73
    %p75 = scmp.ne.s32.totalorder %s66, %s67
    %p76 = scmp.eq.s32.totalorder %s14, 0
    %p77 = por %p75, %p76
    %p78 = scmp.ne.s32.totalorder %s66, %s67
    %p79 = scmp.eq.s32.totalorder %s15, 1
    %p80 = por %p78, %p79
    %p82 = scmp.ne.s32.totalorder %s67, %s81
    %p83 = scmp.eq.s32.totalorder %s15, 0
    %p84 = por %p82, %p83
    %s85 = ssub.s32 %s9, %s16
    %p86 = scmp.eq.s32.totalorder %s85, 0
    %s88 = sadd.s32 %s87, 1
    %s89 = scalar_select %p86, %s87, %s88
    %p92 = pneg %p86
    %p93 = scmp.eq.s32.totalorder %s9, 1
    %p94 = por %p92, %p93
    %p95 = scmp.ne.s32.totalorder %s87, %s90
    %p96 = scmp.eq.s32.totalorder %s9, 0
    %p97 = por %p95, %p96
    %p98 = scmp.ne.s32.totalorder %s87, %s90
    %p99 = scmp.eq.s32.totalorder %s14, 1
    %p100 = por %p98, %p99
    %p101 = scmp.ne.s32.totalorder %s90, %s91
    %p102 = scmp.eq.s32.totalorder %s14, 0
    %p103 = por %p101, %p102
    %p104 = scmp.ne.s32.totalorder %s90, %s91
    %p105 = scmp.eq.s32.totalorder %s15, 1
    %p106 = por %p104, %p105
    %p108 = scmp.ne.s32.totalorder %s91, %s107
    %p109 = scmp.eq.s32.totalorder %s15, 0
    %p110 = por %p108, %p109
    %p111 = scmp.le.s32.totalorder 1, %s9
    %p112 = scmp.lt.s32.totalorder %s9, 3
    %p113 = pnand %p111, %p112
    %p114 = pneg %p113
    // Predicated region
    $region9: #{fwd.6} parent=5 // pred_check
      _
    $region10: #{fwd.6} parent=5 // pred_check_branch
      %116 = sbr.rel (%p113) target = $region12
    $region11: #{fwd.6} parent=5 // pred_region
      %s117 = ssub.s32 %s9, 1
      // Predicated region
      $region13: #{fwd.6} parent=11 // pred_check
        %p118 = pneg %p56
      $region14: #{fwd.6} parent=11 // pred_check_branch
        %120 = sbr.rel (%p118) target = $region16
      $region15: #{fwd.6} parent=11 // pred_region
        _
      $region16: #{fwd.6} parent=11 // pred_fallthru
        _
      // Predicated region
      $region17: #{fwd.6} parent=11 // pred_check
        %p121 = pneg %p77
      $region18: #{fwd.6} parent=11 // pred_check_branch
        %123 = sbr.rel (%p121) target = $region20
      $region19: #{fwd.6} parent=11 // pred_region
        _
      $region20: #{fwd.6} parent=11 // pred_fallthru
        _
    $region12: #{fwd.6} parent=5 // pred_fallthru
      _
    %p124 = scmp.lt.s32.totalorder %s9, 2
    // Predicated region
    $region21: #{fwd.6} parent=5 // pred_check
      %p125 = pneg %p124
    $region22: #{fwd.6} parent=5 // pred_check_branch
      %127 = sbr.rel (%p125) target = $region24
    $region23: #{fwd.6} parent=5 // pred_region
      // Predicated region
      $region25: #{fwd.6} parent=23 // pred_check
        %p128 = pneg %p29
      $region26: #{fwd.6} parent=23 // pred_check_branch
        %130 = sbr.rel (%p128) target = $region28
      $region27: #{fwd.6} parent=23 // pred_region
        %s131 = smul.u32 2, %s9
        %p132 = scmp.lt.s32.totalorder %s131, 3
        %s133 = scalar_select %p132, %s131, 3
        %s134 = smul.addr %s133, 16
        %s135 = smul.addr %s134, 4
        %s136 = scalar_lea.vmem %s0, %s135
        %s137 = smul.u32 2, %s9
      $region28: #{fwd.6} parent=23 // pred_fallthru
        _
    $region24: #{fwd.6} parent=5 // pred_fallthru
      _
    %p138 = scmp.le.s32.totalorder 1, %s9
    %p139 = scmp.lt.s32.totalorder %s9, 3
    %p140 = pnand %p138, %p139
    %p141 = pneg %p140
    // Predicated region
    $region29: #{fwd.6} parent=5 // pred_check
      _
    $region30: #{fwd.6} parent=5 // pred_check_branch
      %143 = sbr.rel (%p140) target = $region32
    $region31: #{fwd.6} parent=5 // pred_region
      %s144 = ssub.s32 %s9, 1
      %s145 = smul.u32 2, %s14
      %p146 = scmp.lt.s32.totalorder %s145, 3
      %s147 = scalar_select %p146, %s145, 3
      %s148 = smul.addr %s147, 16
      %s149 = smul.addr %s148, 4
      %s150 = scalar_lea.vmem %s0, %s149
      %p151 = pneg %p35
      %p152 = pneg %p32
      %p153 = pneg %p56
      %p154 = pneg %p53
      %p155 = pneg %p77
      %p156 = pneg %p74
      %p157 = pneg %p103
      %p158 = pneg %p100
      %s159 = smul.u32 2, %s14
      %p160 = scmp.lt.s32.totalorder %s159, 3
      %s161 = scalar_select %p160, %s159, 3
      %s162 = smul.addr %s161, 12
      %s163 = smul.addr %s162, 8
      %s164 = scalar_lea.vmem %s3, %s163
      %s165 = smul.u32 2, %s14
      %p166 = scmp.lt.s32.totalorder %s165, 3
      %s167 = scalar_select %p166, %s165, 3
      %s168 = smul.addr %s167, 16
      %s169 = smul.addr %s168, 4
      %s170 = scalar_lea.vmem %s0, %s169
      %s171 = smul.u32 2, %s14
      %s172 = smul.u32 2, %s14
      %p173 = scmp.lt.s32.totalorder %s172, 3
      %s174 = scalar_select %p173, %s172, 3
      %s175 = smul.addr %s174, 12
      %s176 = smul.addr %s175, 8
      %s177 = scalar_lea.vmem %s3, %s176
      %s178 = smul.u32 2, %s14
      %v180 = vld [vmem:[%s170] sm:$0xff]
      %v181 = vld [vmem:[%s170 + $0x8] sm:$0xf]
      %v182 = vld [vmem:[%s170 + $0x10] sm:$0xff]
      %v183 = vld [vmem:[%s170 + $0x18] sm:$0xf]
      %v184 = vld [vmem:[%s170 + $0x20] sm:$0xff]
      %v185 = vld [vmem:[%s170 + $0x28] sm:$0xf]
      %v186 = vld [vmem:[%s170 + $0x30] sm:$0xff]
      %v187 = vld [vmem:[%s170 + $0x38] sm:$0xf]
      %188 = vst [vmem:[#allocation2] sm:$0xff] %v180
      %189 = vst [vmem:[#allocation2 + $0x8] sm:$0xf] %v181
      %190 = vst [vmem:[#allocation2 + $0x18] sm:$0xff] %v182
      %191 = vst [vmem:[#allocation2 + $0x20] sm:$0xf] %v183
      %192 = vst [vmem:[#allocation2 + $0x30] sm:$0xff] %v184
      %193 = vst [vmem:[#allocation2 + $0x38] sm:$0xf] %v185
      %194 = vst [vmem:[#allocation2 + $0x48] sm:$0xff] %v186
      %195 = vst [vmem:[#allocation2 + $0x50] sm:$0xf] %v187
      %v196 = vld [vmem:[%s170] sm:$0xff]
      %v197 = vld [vmem:[%s170 + $0x8] sm:$0xff]
      %v198 = vld [vmem:[%s170 + $0x10] sm:$0xff]
      %v199 = vld [vmem:[%s170 + $0x18] sm:$0xff]
      %v200 = vld [vmem:[%s170 + $0x20] sm:$0xff]
      %v201 = vld [vmem:[%s170 + $0x28] sm:$0xff]
      %v202 = vld [vmem:[%s170 + $0x30] sm:$0xff]
      %v203 = vld [vmem:[%s170 + $0x38] sm:$0xff]
      %212 = vrot.lane.b32.xlu0 %v196, 127
      %v213 = vpop.permute.xlu0 %212
      %214 = vrot.lane.b32.xlu0 %v197, 127
      %v215 = vpop.permute.xlu0 %214
      %216 = vrot.lane.b32.xlu0 %v198, 127
      %v217 = vpop.permute.xlu0 %216
      %218 = vrot.lane.b32.xlu0 %v199, 127
      %v219 = vpop.permute.xlu0 %218
      %220 = vrot.lane.b32.xlu0 %v200, 127
      %v221 = vpop.permute.xlu0 %220
      %222 = vrot.lane.b32.xlu0 %v201, 127
      %v223 = vpop.permute.xlu0 %222
      %224 = vrot.lane.b32.xlu0 %v202, 127
      %v225 = vpop.permute.xlu0 %224
      %226 = vrot.lane.b32.xlu0 %v203, 127
      %v227 = vpop.permute.xlu0 %226
      %v228 = vrot.slane %v213, 4
      %v229 = vrot.slane %v215, 4
      %v230 = vrot.slane %v217, 4
      %v231 = vrot.slane %v219, 4
      %v232 = vrot.slane %v221, 4
      %v233 = vrot.slane %v223, 4
      %v234 = vrot.slane %v225, 4
      %v235 = vrot.slane %v227, 4
      %vm236 = vcmask 1043456
      %v237 = vsel %vm236, %v228, %v229
      %vm238 = vcmask 1039360
      %v239 = vsel %vm238, %v213, %v237
      %v240 = vsel %vm238, %v215, %v229
      %v241 = vsel %vm236, %v230, %v231
      %v242 = vsel %vm238, %v217, %v241
      %v243 = vsel %vm238, %v219, %v231
      %v244 = vsel %vm236, %v232, %v233
      %v245 = vsel %vm238, %v221, %v244
      %v246 = vsel %vm238, %v223, %v233
      %v247 = vsel %vm236, %v234, %v235
      %v248 = vsel %vm238, %v225, %v247
      %v249 = vsel %vm238, %v227, %v235
      %258 = vst [vmem:[#allocation2 + $0x60] sm:$0xff] %v239
      %259 = vst [vmem:[#allocation2 + $0x68] sm:$0xf] %v240
      %260 = vst [vmem:[#allocation2 + $0x78] sm:$0xff] %v242
      %261 = vst [vmem:[#allocation2 + $0x80] sm:$0xf] %v243
      %262 = vst [vmem:[#allocation2 + $0x90] sm:$0xff] %v245
      %263 = vst [vmem:[#allocation2 + $0x98] sm:$0xf] %v246
      %264 = vst [vmem:[#allocation2 + $0xa8] sm:$0xff] %v248
      %265 = vst [vmem:[#allocation2 + $0xb0] sm:$0xf] %v249
      %v266 = vld [vmem:[%s170] sm:$0xff]
      %v267 = vld [vmem:[%s170 + $0x8] sm:$0xff]
      %v268 = vld [vmem:[%s170 + $0x10] sm:$0xff]
      %v269 = vld [vmem:[%s170 + $0x18] sm:$0xff]
      %v270 = vld [vmem:[%s170 + $0x20] sm:$0xff]
      %v271 = vld [vmem:[%s170 + $0x28] sm:$0xff]
      %v272 = vld [vmem:[%s170 + $0x30] sm:$0xff]
      %v273 = vld [vmem:[%s170 + $0x38] sm:$0xff]
      %282 = vrot.lane.b32.xlu0 %v266, 126
      %v283 = vpop.permute.xlu0 %282
      %284 = vrot.lane.b32.xlu0 %v267, 126
      %v285 = vpop.permute.xlu0 %284
      %286 = vrot.lane.b32.xlu0 %v268, 126
      %v287 = vpop.permute.xlu0 %286
      %288 = vrot.lane.b32.xlu0 %v269, 126
      %v289 = vpop.permute.xlu0 %288
      %290 = vrot.lane.b32.xlu0 %v270, 126
      %v291 = vpop.permute.xlu0 %290
      %292 = vrot.lane.b32.xlu0 %v271, 126
      %v293 = vpop.permute.xlu0 %292
      %294 = vrot.lane.b32.xlu0 %v272, 126
      %v295 = vpop.permute.xlu0 %294
      %296 = vrot.lane.b32.xlu0 %v273, 126
      %v297 = vpop.permute.xlu0 %296
      %v298 = vrot.slane %v283, 4
      %v299 = vrot.slane %v285, 4
      %v300 = vrot.slane %v287, 4
      %v301 = vrot.slane %v289, 4
      %v302 = vrot.slane %v291, 4
      %v303 = vrot.slane %v293, 4
      %v304 = vrot.slane %v295, 4
      %v305 = vrot.slane %v297, 4
      %v306 = vsel %vm236, %v298, %v299
      %vm307 = vcmask 1031168
      %v308 = vsel %vm307, %v283, %v306
      %v309 = vsel %vm307, %v285, %v299
      %v310 = vsel %vm236, %v300, %v301
      %v311 = vsel %vm307, %v287, %v310
      %v312 = vsel %vm307, %v289, %v301
      %v313 = vsel %vm236, %v302, %v303
      %v314 = vsel %vm307, %v291, %v313
      %v315 = vsel %vm307, %v293, %v303
      %v316 = vsel %vm236, %v304, %v305
      %v317 = vsel %vm307, %v295, %v316
      %v318 = vsel %vm307, %v297, %v305
      %327 = vst [vmem:[#allocation2 + $0xc0] sm:$0xff] %v308
      %328 = vst [vmem:[#allocation2 + $0xc8] sm:$0xf] %v309
      %329 = vst [vmem:[#allocation2 + $0xd8] sm:$0xff] %v311
      %330 = vst [vmem:[#allocation2 + $0xe0] sm:$0xf] %v312
      %331 = vst [vmem:[#allocation2 + $0xf0] sm:$0xff] %v314
      %332 = vst [vmem:[#allocation2 + $0xf8] sm:$0xf] %v315
      %333 = vst [vmem:[#allocation2 + $0x108] sm:$0xff] %v317
      %334 = vst [vmem:[#allocation2 + $0x110] sm:$0xf] %v318
      %v335 = vld [vmem:[%s170] sm:$0xff]
      %v336 = vld [vmem:[%s170 + $0x8] sm:$0xff]
      %v337 = vld [vmem:[%s170 + $0x10] sm:$0xff]
      %v338 = vld [vmem:[%s170 + $0x18] sm:$0xff]
      %v339 = vld [vmem:[%s170 + $0x20] sm:$0xff]
      %v340 = vld [vmem:[%s170 + $0x28] sm:$0xff]
      %v341 = vld [vmem:[%s170 + $0x30] sm:$0xff]
      %v342 = vld [vmem:[%s170 + $0x38] sm:$0xff]
      %351 = vrot.lane.b32.xlu0 %v335, 110
      %v352 = vpop.permute.xlu0 %351
      %353 = vrot.lane.b32.xlu0 %v336, 110
      %v354 = vpop.permute.xlu0 %353
      %355 = vrot.lane.b32.xlu0 %v337, 110
      %v356 = vpop.permute.xlu0 %355
      %357 = vrot.lane.b32.xlu0 %v338, 110
      %v358 = vpop.permute.xlu0 %357
      %359 = vrot.lane.b32.xlu0 %v339, 110
      %v360 = vpop.permute.xlu0 %359
      %361 = vrot.lane.b32.xlu0 %v340, 110
      %v362 = vpop.permute.xlu0 %361
      %363 = vrot.lane.b32.xlu0 %v341, 110
      %v364 = vpop.permute.xlu0 %363
      %365 = vrot.lane.b32.xlu0 %v342, 110
      %v366 = vpop.permute.xlu0 %365
      %v367 = vrot.slane %v352, 4
      %v368 = vrot.slane %v354, 4
      %v369 = vrot.slane %v356, 4
      %v370 = vrot.slane %v358, 4
      %v371 = vrot.slane %v360, 4
      %v372 = vrot.slane %v362, 4
      %v373 = vrot.slane %v364, 4
      %v374 = vrot.slane %v366, 4
      %v375 = vsel %vm236, %v367, %v368
      %vm376 = vcmask 900096
      %v377 = vsel %vm376, %v352, %v375
      %v378 = vsel %vm376, %v354, %v368
      %v379 = vsel %vm236, %v369, %v370
      %v380 = vsel %vm376, %v356, %v379
      %v381 = vsel %vm376, %v358, %v370
      %v382 = vsel %vm236, %v371, %v372
      %v383 = vsel %vm376, %v360, %v382
      %v384 = vsel %vm376, %v362, %v372
      %v385 = vsel %vm236, %v373, %v374
      %v386 = vsel %vm376, %v364, %v385
      %v387 = vsel %vm376, %v366, %v374
      %396 = vst [vmem:[#allocation2 + $0x120] sm:$0xff] %v377
      %397 = vst [vmem:[#allocation2 + $0x128] sm:$0xf] %v378
      %398 = vst [vmem:[#allocation2 + $0x138] sm:$0xff] %v380
      %399 = vst [vmem:[#allocation2 + $0x140] sm:$0xf] %v381
      %400 = vst [vmem:[#allocation2 + $0x150] sm:$0xff] %v383
      %401 = vst [vmem:[#allocation2 + $0x158] sm:$0xf] %v384
      %402 = vst [vmem:[#allocation2 + $0x168] sm:$0xff] %v386
      %403 = vst [vmem:[#allocation2 + $0x170] sm:$0xf] %v387
      %v404 = vld [vmem:[%s170] sm:$0xff]
      %v405 = vld [vmem:[%s170 + $0x8] sm:$0xff]
      %v406 = vld [vmem:[%s170 + $0x10] sm:$0xff]
      %v407 = vld [vmem:[%s170 + $0x18] sm:$0xff]
      %v408 = vld [vmem:[%s170 + $0x20] sm:$0xff]
      %v409 = vld [vmem:[%s170 + $0x28] sm:$0xff]
      %v410 = vld [vmem:[%s170 + $0x30] sm:$0xff]
      %v411 = vld [vmem:[%s170 + $0x38] sm:$0xff]
      %420 = vrot.lane.b32.xlu0 %v404, 109
      %v421 = vpop.permute.xlu0 %420
      %422 = vrot.lane.b32.xlu0 %v405, 109
      %v423 = vpop.permute.xlu0 %422
      %424 = vrot.lane.b32.xlu0 %v406, 109
      %v425 = vpop.permute.xlu0 %424
      %426 = vrot.lane.b32.xlu0 %v407, 109
      %v427 = vpop.permute.xlu0 %426
      %428 = vrot.lane.b32.xlu0 %v408, 109
      %v429 = vpop.permute.xlu0 %428
      %430 = vrot.lane.b32.xlu0 %v409, 109
      %v431 = vpop.permute.xlu0 %430
      %432 = vrot.lane.b32.xlu0 %v410, 109
      %v433 = vpop.permute.xlu0 %432
      %434 = vrot.lane.b32.xlu0 %v411, 109
      %v435 = vpop.permute.xlu0 %434
      %v436 = vrot.slane %v421, 4
      %v437 = vrot.slane %v423, 4
      %v438 = vrot.slane %v425, 4
      %v439 = vrot.slane %v427, 4
      %v440 = vrot.slane %v429, 4
      %v441 = vrot.slane %v431, 4
      %v442 = vrot.slane %v433, 4
      %v443 = vrot.slane %v435, 4
      %v444 = vsel %vm236, %v436, %v437
      %vm445 = vcmask 891904
      %v446 = vsel %vm445, %v421, %v444
      %v447 = vsel %vm445, %v423, %v437
      %v448 = vsel %vm236, %v438, %v439
      %v449 = vsel %vm445, %v425, %v448
      %v450 = vsel %vm445, %v427, %v439
      %v451 = vsel %vm236, %v440, %v441
      %v452 = vsel %vm445, %v429, %v451
      %v453 = vsel %vm445, %v431, %v441
      %v454 = vsel %vm236, %v442, %v443
      %v455 = vsel %vm445, %v433, %v454
      %v456 = vsel %vm445, %v435, %v443
      %465 = vst [vmem:[#allocation2 + $0x180] sm:$0xff] %v446
      %466 = vst [vmem:[#allocation2 + $0x188] sm:$0xf] %v447
      %467 = vst [vmem:[#allocation2 + $0x198] sm:$0xff] %v449
      %468 = vst [vmem:[#allocation2 + $0x1a0] sm:$0xf] %v450
      %469 = vst [vmem:[#allocation2 + $0x1b0] sm:$0xff] %v452
      %470 = vst [vmem:[#allocation2 + $0x1b8] sm:$0xf] %v453
      %471 = vst [vmem:[#allocation2 + $0x1c8] sm:$0xff] %v455
      %472 = vst [vmem:[#allocation2 + $0x1d0] sm:$0xf] %v456
      %v473 = vld [vmem:[%s170] sm:$0xff]
      %v474 = vld [vmem:[%s170 + $0x8] sm:$0xff]
      %v475 = vld [vmem:[%s170 + $0x10] sm:$0xff]
      %v476 = vld [vmem:[%s170 + $0x18] sm:$0xff]
      %v477 = vld [vmem:[%s170 + $0x20] sm:$0xff]
      %v478 = vld [vmem:[%s170 + $0x28] sm:$0xff]
      %v479 = vld [vmem:[%s170 + $0x30] sm:$0xff]
      %v480 = vld [vmem:[%s170 + $0x38] sm:$0xff]
      %489 = vrot.lane.b32.xlu0 %v473, 108
      %v490 = vpop.permute.xlu0 %489
      %491 = vrot.lane.b32.xlu0 %v474, 108
      %v492 = vpop.permute.xlu0 %491
      %493 = vrot.lane.b32.xlu0 %v475, 108
      %v494 = vpop.permute.xlu0 %493
      %495 = vrot.lane.b32.xlu0 %v476, 108
      %v496 = vpop.permute.xlu0 %495
      %497 = vrot.lane.b32.xlu0 %v477, 108
      %v498 = vpop.permute.xlu0 %497
      %499 = vrot.lane.b32.xlu0 %v478, 108
      %v500 = vpop.permute.xlu0 %499
      %501 = vrot.lane.b32.xlu0 %v479, 108
      %v502 = vpop.permute.xlu0 %501
      %503 = vrot.lane.b32.xlu0 %v480, 108
      %v504 = vpop.permute.xlu0 %503
      %v505 = vrot.slane %v490, 4
      %v506 = vrot.slane %v492, 4
      %v507 = vrot.slane %v494, 4
      %v508 = vrot.slane %v496, 4
      %v509 = vrot.slane %v498, 4
      %v510 = vrot.slane %v500, 4
      %v511 = vrot.slane %v502, 4
      %v512 = vrot.slane %v504, 4
      %v513 = vsel %vm236, %v505, %v506
      %vm514 = vcmask 883712
      %v515 = vsel %vm514, %v490, %v513
      %v516 = vsel %vm514, %v492, %v506
      %v517 = vsel %vm236, %v507, %v508
      %v518 = vsel %vm514, %v494, %v517
      %v519 = vsel %vm514, %v496, %v508
      %v520 = vsel %vm236, %v509, %v510
      %v521 = vsel %vm514, %v498, %v520
      %v522 = vsel %vm514, %v500, %v510
      %v523 = vsel %vm236, %v511, %v512
      %v524 = vsel %vm514, %v502, %v523
      %v525 = vsel %vm514, %v504, %v512
      %534 = vst [vmem:[#allocation2 + $0x1e0] sm:$0xff] %v515
      %535 = vst [vmem:[#allocation2 + $0x1e8] sm:$0xf] %v516
      %536 = vst [vmem:[#allocation2 + $0x1f8] sm:$0xff] %v518
      %537 = vst [vmem:[#allocation2 + $0x200] sm:$0xf] %v519
      %538 = vst [vmem:[#allocation2 + $0x210] sm:$0xff] %v521
      %539 = vst [vmem:[#allocation2 + $0x218] sm:$0xf] %v522
      %540 = vst [vmem:[#allocation2 + $0x228] sm:$0xff] %v524
      %541 = vst [vmem:[#allocation2 + $0x230] sm:$0xf] %v525
      %v542 = vld [vmem:[%s170] sm:$0xff]
      %v543 = vld [vmem:[%s170 + $0x8] sm:$0xff]
      %v544 = vld [vmem:[%s170 + $0x10] sm:$0xff]
      %v545 = vld [vmem:[%s170 + $0x18] sm:$0xff]
      %v546 = vld [vmem:[%s170 + $0x20] sm:$0xff]
      %v547 = vld [vmem:[%s170 + $0x28] sm:$0xff]
      %v548 = vld [vmem:[%s170 + $0x30] sm:$0xff]
      %v549 = vld [vmem:[%s170 + $0x38] sm:$0xff]
      %558 = vrot.lane.b32.xlu0 %v542, 92
      %v559 = vpop.permute.xlu0 %558
      %560 = vrot.lane.b32.xlu0 %v543, 92
      %v561 = vpop.permute.xlu0 %560
      %562 = vrot.lane.b32.xlu0 %v544, 92
      %v563 = vpop.permute.xlu0 %562
      %564 = vrot.lane.b32.xlu0 %v545, 92
      %v565 = vpop.permute.xlu0 %564
      %566 = vrot.lane.b32.xlu0 %v546, 92
      %v567 = vpop.permute.xlu0 %566
      %568 = vrot.lane.b32.xlu0 %v547, 92
      %v569 = vpop.permute.xlu0 %568
      %570 = vrot.lane.b32.xlu0 %v548, 92
      %v571 = vpop.permute.xlu0 %570
      %572 = vrot.lane.b32.xlu0 %v549, 92
      %v573 = vpop.permute.xlu0 %572
      %v574 = vrot.slane %v559, 4
      %v575 = vrot.slane %v561, 4
      %v576 = vrot.slane %v563, 4
      %v577 = vrot.slane %v565, 4
      %v578 = vrot.slane %v567, 4
      %v579 = vrot.slane %v569, 4
      %v580 = vrot.slane %v571, 4
      %v581 = vrot.slane %v573, 4
      %v582 = vsel %vm236, %v574, %v575
      %vm583 = vcmask 752640
      %v584 = vsel %vm583, %v559, %v582
      %v585 = vsel %vm583, %v561, %v575
      %v586 = vsel %vm236, %v576, %v577
      %v587 = vsel %vm583, %v563, %v586
      %v588 = vsel %vm583, %v565, %v577
      %v589 = vsel %vm236, %v578, %v579
      %v590 = vsel %vm583, %v567, %v589
      %v591 = vsel %vm583, %v569, %v579
      %v592 = vsel %vm236, %v580, %v581
      %v593 = vsel %vm583, %v571, %v592
      %v594 = vsel %vm583, %v573, %v581
      %603 = vst [vmem:[#allocation2 + $0x240] sm:$0xff] %v584
      %604 = vst [vmem:[#allocation2 + $0x248] sm:$0xf] %v585
      %605 = vst [vmem:[#allocation2 + $0x258] sm:$0xff] %v587
      %606 = vst [vmem:[#allocation2 + $0x260] sm:$0xf] %v588
      %607 = vst [vmem:[#allocation2 + $0x270] sm:$0xff] %v590
      %608 = vst [vmem:[#allocation2 + $0x278] sm:$0xf] %v591
      %609 = vst [vmem:[#allocation2 + $0x288] sm:$0xff] %v593
      %610 = vst [vmem:[#allocation2 + $0x290] sm:$0xf] %v594
      %v611 = vld [vmem:[%s170] sm:$0xff]
      %v612 = vld [vmem:[%s170 + $0x8] sm:$0xff]
      %v613 = vld [vmem:[%s170 + $0x10] sm:$0xff]
      %v614 = vld [vmem:[%s170 + $0x18] sm:$0xff]
      %v615 = vld [vmem:[%s170 + $0x20] sm:$0xff]
      %v616 = vld [vmem:[%s170 + $0x28] sm:$0xff]
      %v617 = vld [vmem:[%s170 + $0x30] sm:$0xff]
      %v618 = vld [vmem:[%s170 + $0x38] sm:$0xff]
      %627 = vrot.lane.b32.xlu0 %v611, 91
      %v628 = vpop.permute.xlu0 %627
      %629 = vrot.lane.b32.xlu0 %v612, 91
      %v630 = vpop.permute.xlu0 %629
      %631 = vrot.lane.b32.xlu0 %v613, 91
      %v632 = vpop.permute.xlu0 %631
      %633 = vrot.lane.b32.xlu0 %v614, 91
      %v634 = vpop.permute.xlu0 %633
      %635 = vrot.lane.b32.xlu0 %v615, 91
      %v636 = vpop.permute.xlu0 %635
      %637 = vrot.lane.b32.xlu0 %v616, 91
      %v638 = vpop.permute.xlu0 %637
      %639 = vrot.lane.b32.xlu0 %v617, 91
      %v640 = vpop.permute.xlu0 %639
      %641 = vrot.lane.b32.xlu0 %v618, 91
      %v642 = vpop.permute.xlu0 %641
      %v643 = vrot.slane %v628, 4
      %v644 = vrot.slane %v630, 4
      %v645 = vrot.slane %v632, 4
      %v646 = vrot.slane %v634, 4
      %v647 = vrot.slane %v636, 4
      %v648 = vrot.slane %v638, 4
      %v649 = vrot.slane %v640, 4
      %v650 = vrot.slane %v642, 4
      %v651 = vsel %vm236, %v643, %v644
      %vm652 = vcmask 744448
      %v653 = vsel %vm652, %v628, %v651
      %v654 = vsel %vm652, %v630, %v644
      %v655 = vsel %vm236, %v645, %v646
      %v656 = vsel %vm652, %v632, %v655
      %v657 = vsel %vm652, %v634, %v646
      %v658 = vsel %vm236, %v647, %v648
      %v659 = vsel %vm652, %v636, %v658
      %v660 = vsel %vm652, %v638, %v648
      %v661 = vsel %vm236, %v649, %v650
      %v662 = vsel %vm652, %v640, %v661
      %v663 = vsel %vm652, %v642, %v650
      %672 = vst [vmem:[#allocation2 + $0x2a0] sm:$0xff] %v653
      %673 = vst [vmem:[#allocation2 + $0x2a8] sm:$0xf] %v654
      %674 = vst [vmem:[#allocation2 + $0x2b8] sm:$0xff] %v656
      %675 = vst [vmem:[#allocation2 + $0x2c0] sm:$0xf] %v657
      %676 = vst [vmem:[#allocation2 + $0x2d0] sm:$0xff] %v659
      %677 = vst [vmem:[#allocation2 + $0x2d8] sm:$0xf] %v660
      %678 = vst [vmem:[#allocation2 + $0x2e8] sm:$0xff] %v662
      %679 = vst [vmem:[#allocation2 + $0x2f0] sm:$0xf] %v663
      %v680 = vld [vmem:[%s170] sm:$0xff]
      %v681 = vld [vmem:[%s170 + $0x8] sm:$0xff]
      %v682 = vld [vmem:[%s170 + $0x10] sm:$0xff]
      %v683 = vld [vmem:[%s170 + $0x18] sm:$0xff]
      %v684 = vld [vmem:[%s170 + $0x20] sm:$0xff]
      %v685 = vld [vmem:[%s170 + $0x28] sm:$0xff]
      %v686 = vld [vmem:[%s170 + $0x30] sm:$0xff]
      %v687 = vld [vmem:[%s170 + $0x38] sm:$0xff]
      %696 = vrot.lane.b32.xlu0 %v680, 90
      %v697 = vpop.permute.xlu0 %696
      %698 = vrot.lane.b32.xlu0 %v681, 90
      %v699 = vpop.permute.xlu0 %698
      %700 = vrot.lane.b32.xlu0 %v682, 90
      %v701 = vpop.permute.xlu0 %700
      %702 = vrot.lane.b32.xlu0 %v683, 90
      %v703 = vpop.permute.xlu0 %702
      %704 = vrot.lane.b32.xlu0 %v684, 90
      %v705 = vpop.permute.xlu0 %704
      %706 = vrot.lane.b32.xlu0 %v685, 90
      %v707 = vpop.permute.xlu0 %706
      %708 = vrot.lane.b32.xlu0 %v686, 90
      %v709 = vpop.permute.xlu0 %708
      %710 = vrot.lane.b32.xlu0 %v687, 90
      %v711 = vpop.permute.xlu0 %710
      %v712 = vrot.slane %v697, 4
      %v713 = vrot.slane %v699, 4
      %v714 = vrot.slane %v701, 4
      %v715 = vrot.slane %v703, 4
      %v716 = vrot.slane %v705, 4
      %v717 = vrot.slane %v707, 4
      %v718 = vrot.slane %v709, 4
      %v719 = vrot.slane %v711, 4
      %v720 = vsel %vm236, %v712, %v713
      %vm721 = vcmask 736256
      %v722 = vsel %vm721, %v697, %v720
      %v723 = vsel %vm721, %v699, %v713
      %v724 = vsel %vm236, %v714, %v715
      %v725 = vsel %vm721, %v701, %v724
      %v726 = vsel %vm721, %v703, %v715
      %v727 = vsel %vm236, %v716, %v717
      %v728 = vsel %vm721, %v705, %v727
      %v729 = vsel %vm721, %v707, %v717
      %v730 = vsel %vm236, %v718, %v719
      %v731 = vsel %vm721, %v709, %v730
      %v732 = vsel %vm721, %v711, %v719
      %741 = vst [vmem:[#allocation2 + $0x300] sm:$0xff] %v722
      %742 = vst [vmem:[#allocation2 + $0x308] sm:$0xf] %v723
      %743 = vst [vmem:[#allocation2 + $0x318] sm:$0xff] %v725
      %744 = vst [vmem:[#allocation2 + $0x320] sm:$0xf] %v726
      %745 = vst [vmem:[#allocation2 + $0x330] sm:$0xff] %v728
      %746 = vst [vmem:[#allocation2 + $0x338] sm:$0xf] %v729
      %747 = vst [vmem:[#allocation2 + $0x348] sm:$0xff] %v731
      %748 = vst [vmem:[#allocation2 + $0x350] sm:$0xf] %v732
      %s749 = scalar_lea.vmem %s170, 64
      %v750 = vld [vmem:[%s749] sm:$0xff]
      %v751 = vld [vmem:[%s749 + $0x8] sm:$0xf]
      %v752 = vld [vmem:[%s749 + $0x10] sm:$0xff]
      %v753 = vld [vmem:[%s749 + $0x18] sm:$0xf]
      %v754 = vld [vmem:[%s749 + $0x20] sm:$0xff]
      %v755 = vld [vmem:[%s749 + $0x28] sm:$0xf]
      %v756 = vld [vmem:[%s749 + $0x30] sm:$0xff]
      %v757 = vld [vmem:[%s749 + $0x38] sm:$0xf]
      %758 = vst [vmem:[#allocation2 + $0xc] sm:$0xff] %v750
      %759 = vst [vmem:[#allocation2 + $0x14] sm:$0xf] %v751
      %760 = vst [vmem:[#allocation2 + $0x24] sm:$0xff] %v752
      %761 = vst [vmem:[#allocation2 + $0x2c] sm:$0xf] %v753
      %762 = vst [vmem:[#allocation2 + $0x3c] sm:$0xff] %v754
      %763 = vst [vmem:[#allocation2 + $0x44] sm:$0xf] %v755
      %764 = vst [vmem:[#allocation2 + $0x54] sm:$0xff] %v756
      %765 = vst [vmem:[#allocation2 + $0x5c] sm:$0xf] %v757
      %v766 = vld [vmem:[%s749] sm:$0xff]
      %v767 = vld [vmem:[%s749 + $0x8] sm:$0xff]
      %v768 = vld [vmem:[%s749 + $0x10] sm:$0xff]
      %v769 = vld [vmem:[%s749 + $0x18] sm:$0xff]
      %v770 = vld [vmem:[%s749 + $0x20] sm:$0xff]
      %v771 = vld [vmem:[%s749 + $0x28] sm:$0xff]
      %v772 = vld [vmem:[%s749 + $0x30] sm:$0xff]
      %v773 = vld [vmem:[%s749 + $0x38] sm:$0xff]
      %782 = vrot.lane.b32.xlu0 %v766, 127
      %v783 = vpop.permute.xlu0 %782
      %784 = vrot.lane.b32.xlu0 %v767, 127
      %v785 = vpop.permute.xlu0 %784
      %786 = vrot.lane.b32.xlu0 %v768, 127
      %v787 = vpop.permute.xlu0 %786
      %788 = vrot.lane.b32.xlu0 %v769, 127
      %v789 = vpop.permute.xlu0 %788
      %790 = vrot.lane.b32.xlu0 %v770, 127
      %v791 = vpop.permute.xlu0 %790
      %792 = vrot.lane.b32.xlu0 %v771, 127
      %v793 = vpop.permute.xlu0 %792
      %794 = vrot.lane.b32.xlu0 %v772, 127
      %v795 = vpop.permute.xlu0 %794
      %796 = vrot.lane.b32.xlu0 %v773, 127
      %v797 = vpop.permute.xlu0 %796
      %v798 = vrot.slane %v783, 4
      %v799 = vrot.slane %v785, 4
      %v800 = vrot.slane %v787, 4
      %v801 = vrot.slane %v789, 4
      %v802 = vrot.slane %v791, 4
      %v803 = vrot.slane %v793, 4
      %v804 = vrot.slane %v795, 4
      %v805 = vrot.slane %v797, 4
      %v806 = vsel %vm236, %v798, %v799
      %v807 = vsel %vm238, %v783, %v806
      %v808 = vsel %vm238, %v785, %v799
      %v809 = vsel %vm236, %v800, %v801
      %v810 = vsel %vm238, %v787, %v809
      %v811 = vsel %vm238, %v789, %v801
      %v812 = vsel %vm236, %v802, %v803
      %v813 = vsel %vm238, %v791, %v812
      %v814 = vsel %vm238, %v793, %v803
      %v815 = vsel %vm236, %v804, %v805
      %v816 = vsel %vm238, %v795, %v815
      %v817 = vsel %vm238, %v797, %v805
      %826 = vst [vmem:[#allocation2 + $0x6c] sm:$0xff] %v807
      %827 = vst [vmem:[#allocation2 + $0x74] sm:$0xf] %v808
      %828 = vst [vmem:[#allocation2 + $0x84] sm:$0xff] %v810
      %829 = vst [vmem:[#allocation2 + $0x8c] sm:$0xf] %v811
      %830 = vst [vmem:[#allocation2 + $0x9c] sm:$0xff] %v813
      %831 = vst [vmem:[#allocation2 + $0xa4] sm:$0xf] %v814
      %832 = vst [vmem:[#allocation2 + $0xb4] sm:$0xff] %v816
      %833 = vst [vmem:[#allocation2 + $0xbc] sm:$0xf] %v817
      %v834 = vld [vmem:[%s749] sm:$0xff]
      %v835 = vld [vmem:[%s749 + $0x8] sm:$0xff]
      %v836 = vld [vmem:[%s749 + $0x10] sm:$0xff]
      %v837 = vld [vmem:[%s749 + $0x18] sm:$0xff]
      %v838 = vld [vmem:[%s749 + $0x20] sm:$0xff]
      %v839 = vld [vmem:[%s749 + $0x28] sm:$0xff]
      %v840 = vld [vmem:[%s749 + $0x30] sm:$0xff]
      %v841 = vld [vmem:[%s749 + $0x38] sm:$0xff]
      %850 = vrot.lane.b32.xlu0 %v834, 126
      %v851 = vpop.permute.xlu0 %850
      %852 = vrot.lane.b32.xlu0 %v835, 126
      %v853 = vpop.permute.xlu0 %852
      %854 = vrot.lane.b32.xlu0 %v836, 126
      %v855 = vpop.permute.xlu0 %854
      %856 = vrot.lane.b32.xlu0 %v837, 126
      %v857 = vpop.permute.xlu0 %856
      %858 = vrot.lane.b32.xlu0 %v838, 126
      %v859 = vpop.permute.xlu0 %858
      %860 = vrot.lane.b32.xlu0 %v839, 126
      %v861 = vpop.permute.xlu0 %860
      %862 = vrot.lane.b32.xlu0 %v840, 126
      %v863 = vpop.permute.xlu0 %862
      %864 = vrot.lane.b32.xlu0 %v841, 126
      %v865 = vpop.permute.xlu0 %864
      %v866 = vrot.slane %v851, 4
      %v867 = vrot.slane %v853, 4
      %v868 = vrot.slane %v855, 4
      %v869 = vrot.slane %v857, 4
      %v870 = vrot.slane %v859, 4
      %v871 = vrot.slane %v861, 4
      %v872 = vrot.slane %v863, 4
      %v873 = vrot.slane %v865, 4
      %v874 = vsel %vm236, %v866, %v867
      %v875 = vsel %vm307, %v851, %v874
      %v876 = vsel %vm307, %v853, %v867
      %v877 = vsel %vm236, %v868, %v869
      %v878 = vsel %vm307, %v855, %v877
      %v879 = vsel %vm307, %v857, %v869
      %v880 = vsel %vm236, %v870, %v871
      %v881 = vsel %vm307, %v859, %v880
      %v882 = vsel %vm307, %v861, %v871
      %v883 = vsel %vm236, %v872, %v873
      %v884 = vsel %vm307, %v863, %v883
      %v885 = vsel %vm307, %v865, %v873
      %894 = vst [vmem:[#allocation2 + $0xcc] sm:$0xff] %v875
      %895 = vst [vmem:[#allocation2 + $0xd4] sm:$0xf] %v876
      %896 = vst [vmem:[#allocation2 + $0xe4] sm:$0xff] %v878
      %897 = vst [vmem:[#allocation2 + $0xec] sm:$0xf] %v879
      %898 = vst [vmem:[#allocation2 + $0xfc] sm:$0xff] %v881
      %899 = vst [vmem:[#allocation2 + $0x104] sm:$0xf] %v882
      %900 = vst [vmem:[#allocation2 + $0x114] sm:$0xff] %v884
      %901 = vst [vmem:[#allocation2 + $0x11c] sm:$0xf] %v885
      %v902 = vld [vmem:[%s749] sm:$0xff]
      %v903 = vld [vmem:[%s749 + $0x8] sm:$0xff]
      %v904 = vld [vmem:[%s749 + $0x10] sm:$0xff]
      %v905 = vld [vmem:[%s749 + $0x18] sm:$0xff]
      %v906 = vld [vmem:[%s749 + $0x20] sm:$0xff]
      %v907 = vld [vmem:[%s749 + $0x28] sm:$0xff]
      %v908 = vld [vmem:[%s749 + $0x30] sm:$0xff]
      %v909 = vld [vmem:[%s749 + $0x38] sm:$0xff]
      %918 = vrot.lane.b32.xlu0 %v902, 110
      %v919 = vpop.permute.xlu0 %918
      %920 = vrot.lane.b32.xlu0 %v903, 110
      %v921 = vpop.permute.xlu0 %920
      %922 = vrot.lane.b32.xlu0 %v904, 110
      %v923 = vpop.permute.xlu0 %922
      %924 = vrot.lane.b32.xlu0 %v905, 110
      %v925 = vpop.permute.xlu0 %924
      %926 = vrot.lane.b32.xlu0 %v906, 110
      %v927 = vpop.permute.xlu0 %926
      %928 = vrot.lane.b32.xlu0 %v907, 110
      %v929 = vpop.permute.xlu0 %928
      %930 = vrot.lane.b32.xlu0 %v908, 110
      %v931 = vpop.permute.xlu0 %930
      %932 = vrot.lane.b32.xlu0 %v909, 110
      %v933 = vpop.permute.xlu0 %932
      %v934 = vrot.slane %v919, 4
      %v935 = vrot.slane %v921, 4
      %v936 = vrot.slane %v923, 4
      %v937 = vrot.slane %v925, 4
      %v938 = vrot.slane %v927, 4
      %v939 = vrot.slane %v929, 4
      %v940 = vrot.slane %v931, 4
      %v941 = vrot.slane %v933, 4
      %v942 = vsel %vm236, %v934, %v935
      %v943 = vsel %vm376, %v919, %v942
      %v944 = vsel %vm376, %v921, %v935
      %v945 = vsel %vm236, %v936, %v937
      %v946 = vsel %vm376, %v923, %v945
      %v947 = vsel %vm376, %v925, %v937
      %v948 = vsel %vm236, %v938, %v939
      %v949 = vsel %vm376, %v927, %v948
      %v950 = vsel %vm376, %v929, %v939
      %v951 = vsel %vm236, %v940, %v941
      %v952 = vsel %vm376, %v931, %v951
      %v953 = vsel %vm376, %v933, %v941
      %962 = vst [vmem:[#allocation2 + $0x12c] sm:$0xff] %v943
      %963 = vst [vmem:[#allocation2 + $0x134] sm:$0xf] %v944
      %964 = vst [vmem:[#allocation2 + $0x144] sm:$0xff] %v946
      %965 = vst [vmem:[#allocation2 + $0x14c] sm:$0xf] %v947
      %966 = vst [vmem:[#allocation2 + $0x15c] sm:$0xff] %v949
      %967 = vst [vmem:[#allocation2 + $0x164] sm:$0xf] %v950
      %968 = vst [vmem:[#allocation2 + $0x174] sm:$0xff] %v952
      %969 = vst [vmem:[#allocation2 + $0x17c] sm:$0xf] %v953
      %v970 = vld [vmem:[%s749] sm:$0xff]
      %v971 = vld [vmem:[%s749 + $0x8] sm:$0xff]
      %v972 = vld [vmem:[%s749 + $0x10] sm:$0xff]
      %v973 = vld [vmem:[%s749 + $0x18] sm:$0xff]
      %v974 = vld [vmem:[%s749 + $0x20] sm:$0xff]
      %v975 = vld [vmem:[%s749 + $0x28] sm:$0xff]
      %v976 = vld [vmem:[%s749 + $0x30] sm:$0xff]
      %v977 = vld [vmem:[%s749 + $0x38] sm:$0xff]
      %986 = vrot.lane.b32.xlu0 %v970, 109
      %v987 = vpop.permute.xlu0 %986
      %988 = vrot.lane.b32.xlu0 %v971, 109
      %v989 = vpop.permute.xlu0 %988
      %990 = vrot.lane.b32.xlu0 %v972, 109
      %v991 = vpop.permute.xlu0 %990
      %992 = vrot.lane.b32.xlu0 %v973, 109
      %v993 = vpop.permute.xlu0 %992
      %994 = vrot.lane.b32.xlu0 %v974, 109
      %v995 = vpop.permute.xlu0 %994
      %996 = vrot.lane.b32.xlu0 %v975, 109
      %v997 = vpop.permute.xlu0 %996
      %998 = vrot.lane.b32.xlu0 %v976, 109
      %v999 = vpop.permute.xlu0 %998
      %1000 = vrot.lane.b32.xlu0 %v977, 109
      %v1001 = vpop.permute.xlu0 %1000
      %v1002 = vrot.slane %v987, 4
      %v1003 = vrot.slane %v989, 4
      %v1004 = vrot.slane %v991, 4
      %v1005 = vrot.slane %v993, 4
      %v1006 = vrot.slane %v995, 4
      %v1007 = vrot.slane %v997, 4
      %v1008 = vrot.slane %v999, 4
      %v1009 = vrot.slane %v1001, 4
      %v1010 = vsel %vm236, %v1002, %v1003
      %v1011 = vsel %vm445, %v987, %v1010
      %v1012 = vsel %vm445, %v989, %v1003
      %v1013 = vsel %vm236, %v1004, %v1005
      %v1014 = vsel %vm445, %v991, %v1013
      %v1015 = vsel %vm445, %v993, %v1005
      %v1016 = vsel %vm236, %v1006, %v1007
      %v1017 = vsel %vm445, %v995, %v1016
      %v1018 = vsel %vm445, %v997, %v1007
      %v1019 = vsel %vm236, %v1008, %v1009
      %v1020 = vsel %vm445, %v999, %v1019
      %v1021 = vsel %vm445, %v1001, %v1009
      %1030 = vst [vmem:[#allocation2 + $0x18c] sm:$0xff] %v1011
      %1031 = vst [vmem:[#allocation2 + $0x194] sm:$0xf] %v1012
      %1032 = vst [vmem:[#allocation2 + $0x1a4] sm:$0xff] %v1014
      %1033 = vst [vmem:[#allocation2 + $0x1ac] sm:$0xf] %v1015
      %1034 = vst [vmem:[#allocation2 + $0x1bc] sm:$0xff] %v1017
      %1035 = vst [vmem:[#allocation2 + $0x1c4] sm:$0xf] %v1018
      %1036 = vst [vmem:[#allocation2 + $0x1d4] sm:$0xff] %v1020
      %1037 = vst [vmem:[#allocation2 + $0x1dc] sm:$0xf] %v1021
      %v1038 = vld [vmem:[%s749] sm:$0xff]
      %v1039 = vld [vmem:[%s749 + $0x8] sm:$0xff]
      %v1040 = vld [vmem:[%s749 + $0x10] sm:$0xff]
      %v1041 = vld [vmem:[%s749 + $0x18] sm:$0xff]
      %v1042 = vld [vmem:[%s749 + $0x20] sm:$0xff]
      %v1043 = vld [vmem:[%s749 + $0x28] sm:$0xff]
      %v1044 = vld [vmem:[%s749 + $0x30] sm:$0xff]
      %v1045 = vld [vmem:[%s749 + $0x38] sm:$0xff]
      %1054 = vrot.lane.b32.xlu0 %v1038, 108
      %v1055 = vpop.permute.xlu0 %1054
      %1056 = vrot.lane.b32.xlu0 %v1039, 108
      %v1057 = vpop.permute.xlu0 %1056
      %1058 = vrot.lane.b32.xlu0 %v1040, 108
      %v1059 = vpop.permute.xlu0 %1058
      %1060 = vrot.lane.b32.xlu0 %v1041, 108
      %v1061 = vpop.permute.xlu0 %1060
      %1062 = vrot.lane.b32.xlu0 %v1042, 108
      %v1063 = vpop.permute.xlu0 %1062
      %1064 = vrot.lane.b32.xlu0 %v1043, 108
      %v1065 = vpop.permute.xlu0 %1064
      %1066 = vrot.lane.b32.xlu0 %v1044, 108
      %v1067 = vpop.permute.xlu0 %1066
      %1068 = vrot.lane.b32.xlu0 %v1045, 108
      %v1069 = vpop.permute.xlu0 %1068
      %v1070 = vrot.slane %v1055, 4
      %v1071 = vrot.slane %v1057, 4
      %v1072 = vrot.slane %v1059, 4
      %v1073 = vrot.slane %v1061, 4
      %v1074 = vrot.slane %v1063, 4
      %v1075 = vrot.slane %v1065, 4
      %v1076 = vrot.slane %v1067, 4
      %v1077 = vrot.slane %v1069, 4
      %v1078 = vsel %vm236, %v1070, %v1071
      %v1079 = vsel %vm514, %v1055, %v1078
      %v1080 = vsel %vm514, %v1057, %v1071
      %v1081 = vsel %vm236, %v1072, %v1073
      %v1082 = vsel %vm514, %v1059, %v1081
      %v1083 = vsel %vm514, %v1061, %v1073
      %v1084 = vsel %vm236, %v1074, %v1075
      %v1085 = vsel %vm514, %v1063, %v1084
      %v1086 = vsel %vm514, %v1065, %v1075
      %v1087 = vsel %vm236, %v1076, %v1077
      %v1088 = vsel %vm514, %v1067, %v1087
      %v1089 = vsel %vm514, %v1069, %v1077
      %1098 = vst [vmem:[#allocation2 + $0x1ec] sm:$0xff] %v1079
      %1099 = vst [vmem:[#allocation2 + $0x1f4] sm:$0xf] %v1080
      %1100 = vst [vmem:[#allocation2 + $0x204] sm:$0xff] %v1082
      %1101 = vst [vmem:[#allocation2 + $0x20c] sm:$0xf] %v1083
      %1102 = vst [vmem:[#allocation2 + $0x21c] sm:$0xff] %v1085
      %1103 = vst [vmem:[#allocation2 + $0x224] sm:$0xf] %v1086
      %1104 = vst [vmem:[#allocation2 + $0x234] sm:$0xff] %v1088
      %1105 = vst [vmem:[#allocation2 + $0x23c] sm:$0xf] %v1089
      %v1106 = vld [vmem:[%s749] sm:$0xff]
      %v1107 = vld [vmem:[%s749 + $0x8] sm:$0xff]
      %v1108 = vld [vmem:[%s749 + $0x10] sm:$0xff]
      %v1109 = vld [vmem:[%s749 + $0x18] sm:$0xff]
      %v1110 = vld [vmem:[%s749 + $0x20] sm:$0xff]
      %v1111 = vld [vmem:[%s749 + $0x28] sm:$0xff]
      %v1112 = vld [vmem:[%s749 + $0x30] sm:$0xff]
      %v1113 = vld [vmem:[%s749 + $0x38] sm:$0xff]
      %1122 = vrot.lane.b32.xlu0 %v1106, 92
      %v1123 = vpop.permute.xlu0 %1122
      %1124 = vrot.lane.b32.xlu0 %v1107, 92
      %v1125 = vpop.permute.xlu0 %1124
      %1126 = vrot.lane.b32.xlu0 %v1108, 92
      %v1127 = vpop.permute.xlu0 %1126
      %1128 = vrot.lane.b32.xlu0 %v1109, 92
      %v1129 = vpop.permute.xlu0 %1128
      %1130 = vrot.lane.b32.xlu0 %v1110, 92
      %v1131 = vpop.permute.xlu0 %1130
      %1132 = vrot.lane.b32.xlu0 %v1111, 92
      %v1133 = vpop.permute.xlu0 %1132
      %1134 = vrot.lane.b32.xlu0 %v1112, 92
      %v1135 = vpop.permute.xlu0 %1134
      %1136 = vrot.lane.b32.xlu0 %v1113, 92
      %v1137 = vpop.permute.xlu0 %1136
      %v1138 = vrot.slane %v1123, 4
      %v1139 = vrot.slane %v1125, 4
      %v1140 = vrot.slane %v1127, 4
      %v1141 = vrot.slane %v1129, 4
      %v1142 = vrot.slane %v1131, 4
      %v1143 = vrot.slane %v1133, 4
      %v1144 = vrot.slane %v1135, 4
      %v1145 = vrot.slane %v1137, 4
      %v1146 = vsel %vm236, %v1138, %v1139
      %v1147 = vsel %vm583, %v1123, %v1146
      %v1148 = vsel %vm583, %v1125, %v1139
      %v1149 = vsel %vm236, %v1140, %v1141
      %v1150 = vsel %vm583, %v1127, %v1149
      %v1151 = vsel %vm583, %v1129, %v1141
      %v1152 = vsel %vm236, %v1142, %v1143
      %v1153 = vsel %vm583, %v1131, %v1152
      %v1154 = vsel %vm583, %v1133, %v1143
      %v1155 = vsel %vm236, %v1144, %v1145
      %v1156 = vsel %vm583, %v1135, %v1155
      %v1157 = vsel %vm583, %v1137, %v1145
      %1166 = vst [vmem:[#allocation2 + $0x24c] sm:$0xff] %v1147
      %1167 = vst [vmem:[#allocation2 + $0x254] sm:$0xf] %v1148
      %1168 = vst [vmem:[#allocation2 + $0x264] sm:$0xff] %v1150
      %1169 = vst [vmem:[#allocation2 + $0x26c] sm:$0xf] %v1151
      %1170 = vst [vmem:[#allocation2 + $0x27c] sm:$0xff] %v1153
      %1171 = vst [vmem:[#allocation2 + $0x284] sm:$0xf] %v1154
      %1172 = vst [vmem:[#allocation2 + $0x294] sm:$0xff] %v1156
      %1173 = vst [vmem:[#allocation2 + $0x29c] sm:$0xf] %v1157
      %v1174 = vld [vmem:[%s749] sm:$0xff]
      %v1175 = vld [vmem:[%s749 + $0x8] sm:$0xff]
      %v1176 = vld [vmem:[%s749 + $0x10] sm:$0xff]
      %v1177 = vld [vmem:[%s749 + $0x18] sm:$0xff]
      %v1178 = vld [vmem:[%s749 + $0x20] sm:$0xff]
      %v1179 = vld [vmem:[%s749 + $0x28] sm:$0xff]
      %v1180 = vld [vmem:[%s749 + $0x30] sm:$0xff]
      %v1181 = vld [vmem:[%s749 + $0x38] sm:$0xff]
      %1190 = vrot.lane.b32.xlu0 %v1174, 91
      %v1191 = vpop.permute.xlu0 %1190
      %1192 = vrot.lane.b32.xlu0 %v1175, 91
      %v1193 = vpop.permute.xlu0 %1192
      %1194 = vrot.lane.b32.xlu0 %v1176, 91
      %v1195 = vpop.permute.xlu0 %1194
      %1196 = vrot.lane.b32.xlu0 %v1177, 91
      %v1197 = vpop.permute.xlu0 %1196
      %1198 = vrot.lane.b32.xlu0 %v1178, 91
      %v1199 = vpop.permute.xlu0 %1198
      %1200 = vrot.lane.b32.xlu0 %v1179, 91
      %v1201 = vpop.permute.xlu0 %1200
      %1202 = vrot.lane.b32.xlu0 %v1180, 91
      %v1203 = vpop.permute.xlu0 %1202
      %1204 = vrot.lane.b32.xlu0 %v1181, 91
      %v1205 = vpop.permute.xlu0 %1204
      %v1206 = vrot.slane %v1191, 4
      %v1207 = vrot.slane %v1193, 4
      %v1208 = vrot.slane %v1195, 4
      %v1209 = vrot.slane %v1197, 4
      %v1210 = vrot.slane %v1199, 4
      %v1211 = vrot.slane %v1201, 4
      %v1212 = vrot.slane %v1203, 4
      %v1213 = vrot.slane %v1205, 4
      %v1214 = vsel %vm236, %v1206, %v1207
      %v1215 = vsel %vm652, %v1191, %v1214
      %v1216 = vsel %vm652, %v1193, %v1207
      %v1217 = vsel %vm236, %v1208, %v1209
      %v1218 = vsel %vm652, %v1195, %v1217
      %v1219 = vsel %vm652, %v1197, %v1209
      %v1220 = vsel %vm236, %v1210, %v1211
      %v1221 = vsel %vm652, %v1199, %v1220
      %v1222 = vsel %vm652, %v1201, %v1211
      %v1223 = vsel %vm236, %v1212, %v1213
      %v1224 = vsel %vm652, %v1203, %v1223
      %v1225 = vsel %vm652, %v1205, %v1213
      %1234 = vst [vmem:[#allocation2 + $0x2ac] sm:$0xff] %v1215
      %1235 = vst [vmem:[#allocation2 + $0x2b4] sm:$0xf] %v1216
      %1236 = vst [vmem:[#allocation2 + $0x2c4] sm:$0xff] %v1218
      %1237 = vst [vmem:[#allocation2 + $0x2cc] sm:$0xf] %v1219
      %1238 = vst [vmem:[#allocation2 + $0x2dc] sm:$0xff] %v1221
      %1239 = vst [vmem:[#allocation2 + $0x2e4] sm:$0xf] %v1222
      %1240 = vst [vmem:[#allocation2 + $0x2f4] sm:$0xff] %v1224
      %1241 = vst [vmem:[#allocation2 + $0x2fc] sm:$0xf] %v1225
      %v1242 = vld [vmem:[%s749] sm:$0xff]
      %v1243 = vld [vmem:[%s749 + $0x8] sm:$0xff]
      %v1244 = vld [vmem:[%s749 + $0x10] sm:$0xff]
      %v1245 = vld [vmem:[%s749 + $0x18] sm:$0xff]
      %v1246 = vld [vmem:[%s749 + $0x20] sm:$0xff]
      %v1247 = vld [vmem:[%s749 + $0x28] sm:$0xff]
      %v1248 = vld [vmem:[%s749 + $0x30] sm:$0xff]
      %v1249 = vld [vmem:[%s749 + $0x38] sm:$0xff]
      %1258 = vrot.lane.b32.xlu0 %v1242, 90
      %v1259 = vpop.permute.xlu0 %1258
      %1260 = vrot.lane.b32.xlu0 %v1243, 90
      %v1261 = vpop.permute.xlu0 %1260
      %1262 = vrot.lane.b32.xlu0 %v1244, 90
      %v1263 = vpop.permute.xlu0 %1262
      %1264 = vrot.lane.b32.xlu0 %v1245, 90
      %v1265 = vpop.permute.xlu0 %1264
      %1266 = vrot.lane.b32.xlu0 %v1246, 90
      %v1267 = vpop.permute.xlu0 %1266
      %1268 = vrot.lane.b32.xlu0 %v1247, 90
      %v1269 = vpop.permute.xlu0 %1268
      %1270 = vrot.lane.b32.xlu0 %v1248, 90
      %v1271 = vpop.permute.xlu0 %1270
      %1272 = vrot.lane.b32.xlu0 %v1249, 90
      %v1273 = vpop.permute.xlu0 %1272
      %v1274 = vrot.slane %v1259, 4
      %v1275 = vrot.slane %v1261, 4
      %v1276 = vrot.slane %v1263, 4
      %v1277 = vrot.slane %v1265, 4
      %v1278 = vrot.slane %v1267, 4
      %v1279 = vrot.slane %v1269, 4
      %v1280 = vrot.slane %v1271, 4
      %v1281 = vrot.slane %v1273, 4
      %v1282 = vsel %vm236, %v1274, %v1275
      %v1283 = vsel %vm721, %v1259, %v1282
      %v1284 = vsel %vm721, %v1261, %v1275
      %v1285 = vsel %vm236, %v1276, %v1277
      %v1286 = vsel %vm721, %v1263, %v1285
      %v1287 = vsel %vm721, %v1265, %v1277
      %v1288 = vsel %vm236, %v1278, %v1279
      %v1289 = vsel %vm721, %v1267, %v1288
      %v1290 = vsel %vm721, %v1269, %v1279
      %v1291 = vsel %vm236, %v1280, %v1281
      %v1292 = vsel %vm721, %v1271, %v1291
      %v1293 = vsel %vm721, %v1273, %v1281
      %1302 = vst [vmem:[#allocation2 + $0x30c] sm:$0xff] %v1283
      %1303 = vst [vmem:[#allocation2 + $0x314] sm:$0xf] %v1284
      %1304 = vst [vmem:[#allocation2 + $0x324] sm:$0xff] %v1286
      %1305 = vst [vmem:[#allocation2 + $0x32c] sm:$0xf] %v1287
      %1306 = vst [vmem:[#allocation2 + $0x33c] sm:$0xff] %v1289
      %1307 = vst [vmem:[#allocation2 + $0x344] sm:$0xf] %v1290
      %1308 = vst [vmem:[#allocation2 + $0x354] sm:$0xff] %v1292
      %1309 = vst [vmem:[#allocation2 + $0x35c] sm:$0xf] %v1293
      %v1310 = vld [vmem:[%s1] sm:$0xff]
      %v1311 = vld [vmem:[%s1 + $0x8] sm:$0xf]
      %v1312 = vld [vmem:[%s1 + $0xc] sm:$0xff]
      %v1313 = vld [vmem:[%s1 + $0x14] sm:$0xf]
      %v1314 = vld [vmem:[%s1 + $0x18] sm:$0xff]
      %v1315 = vld [vmem:[%s1 + $0x20] sm:$0xf]
      %v1316 = vld [vmem:[%s1 + $0x24] sm:$0xff]
      %v1317 = vld [vmem:[%s1 + $0x2c] sm:$0xf]
      %v1318 = vld [vmem:[#allocation2] sm:$0xff]
      %v1319 = vld [vmem:[#allocation2 + $0x8] sm:$0xff]
      %v1320 = vld [vmem:[#allocation2 + $0x10] sm:$0xff]
      %v1321 = vld [vmem:[#allocation2 + $0x18] sm:$0xff]
      %v1322 = vld [vmem:[#allocation2 + $0x20] sm:$0xff]
      %v1323 = vld [vmem:[#allocation2 + $0x28] sm:$0xff]
      %v1324 = vld [vmem:[#allocation2 + $0x30] sm:$0xff]
      %v1325 = vld [vmem:[#allocation2 + $0x38] sm:$0xff]
      %v1326 = vld [vmem:[#allocation2 + $0x40] sm:$0xff]
      %v1327 = vld [vmem:[#allocation2 + $0x48] sm:$0xff]
      %v1328 = vld [vmem:[#allocation2 + $0x50] sm:$0xff]
      %v1329 = vld [vmem:[#allocation2 + $0x58] sm:$0xff]
      %v1330 = vld [vmem:[#allocation2 + $0x60] sm:$0xff]
      %v1331 = vld [vmem:[#allocation2 + $0x68] sm:$0xff]
      %v1332 = vld [vmem:[#allocation2 + $0x70] sm:$0xff]
      %v1333 = vld [vmem:[#allocation2 + $0x78] sm:$0xff]
      %v1334 = vld [vmem:[#allocation2 + $0x80] sm:$0xff]
      %v1335 = vld [vmem:[#allocation2 + $0x88] sm:$0xff]
      %v1336 = vld [vmem:[#allocation2 + $0x90] sm:$0xff]
      %v1337 = vld [vmem:[#allocation2 + $0x98] sm:$0xff]
      %v1338 = vld [vmem:[#allocation2 + $0xa0] sm:$0xff]
      %v1339 = vld [vmem:[#allocation2 + $0xa8] sm:$0xff]
      %v1340 = vld [vmem:[#allocation2 + $0xb0] sm:$0xff]
      %v1341 = vld [vmem:[#allocation2 + $0xb8] sm:$0xff]
      %v1342 = vld [vmem:[#allocation2 + $0xc0] sm:$0xff]
      %v1343 = vld [vmem:[#allocation2 + $0xc8] sm:$0xff]
      %v1344 = vld [vmem:[#allocation2 + $0xd0] sm:$0xff]
      %v1345 = vld [vmem:[#allocation2 + $0xd8] sm:$0xff]
      %v1346 = vld [vmem:[#allocation2 + $0xe0] sm:$0xff]
      %v1347 = vld [vmem:[#allocation2 + $0xe8] sm:$0xff]
      %v1348 = vld [vmem:[#allocation2 + $0xf0] sm:$0xff]
      %v1349 = vld [vmem:[#allocation2 + $0xf8] sm:$0xff]
      %v1350 = vld [vmem:[#allocation2 + $0x100] sm:$0xff]
      %v1351 = vld [vmem:[#allocation2 + $0x108] sm:$0xff]
      %v1352 = vld [vmem:[#allocation2 + $0x110] sm:$0xff]
      %v1353 = vld [vmem:[#allocation2 + $0x118] sm:$0xff]
      %v1354 = vld [vmem:[#allocation2 + $0x120] sm:$0xff]
      %v1355 = vld [vmem:[#allocation2 + $0x128] sm:$0xff]
      %v1356 = vld [vmem:[#allocation2 + $0x130] sm:$0xff]
      %v1357 = vld [vmem:[#allocation2 + $0x138] sm:$0xff]
      %v1358 = vld [vmem:[#allocation2 + $0x140] sm:$0xff]
      %v1359 = vld [vmem:[#allocation2 + $0x148] sm:$0xff]
      %v1360 = vld [vmem:[#allocation2 + $0x150] sm:$0xff]
      %v1361 = vld [vmem:[#allocation2 + $0x158] sm:$0xff]
      %v1362 = vld [vmem:[#allocation2 + $0x160] sm:$0xff]
      %v1363 = vld [vmem:[#allocation2 + $0x168] sm:$0xff]
      %v1364 = vld [vmem:[#allocation2 + $0x170] sm:$0xff]
      %v1365 = vld [vmem:[#allocation2 + $0x178] sm:$0xff]
      %v1366 = vld [vmem:[#allocation2 + $0x180] sm:$0xff]
      %v1367 = vld [vmem:[#allocation2 + $0x188] sm:$0xff]
      %v1368 = vld [vmem:[#allocation2 + $0x190] sm:$0xff]
      %v1369 = vld [vmem:[#allocation2 + $0x198] sm:$0xff]
      %v1370 = vld [vmem:[#allocation2 + $0x1a0] sm:$0xff]
      %v1371 = vld [vmem:[#allocation2 + $0x1a8] sm:$0xff]
      %v1372 = vld [vmem:[#allocation2 + $0x1b0] sm:$0xff]
      %v1373 = vld [vmem:[#allocation2 + $0x1b8] sm:$0xff]
      %v1374 = vld [vmem:[#allocation2 + $0x1c0] sm:$0xff]
      %v1375 = vld [vmem:[#allocation2 + $0x1c8] sm:$0xff]
      %v1376 = vld [vmem:[#allocation2 + $0x1d0] sm:$0xff]
      %v1377 = vld [vmem:[#allocation2 + $0x1d8] sm:$0xff]
      %v1378 = vld [vmem:[#allocation2 + $0x1e0] sm:$0xff]
      %v1379 = vld [vmem:[#allocation2 + $0x1e8] sm:$0xff]
      %v1380 = vld [vmem:[#allocation2 + $0x1f0] sm:$0xff]
      %v1381 = vld [vmem:[#allocation2 + $0x1f8] sm:$0xff]
      %v1382 = vld [vmem:[#allocation2 + $0x200] sm:$0xff]
      %v1383 = vld [vmem:[#allocation2 + $0x208] sm:$0xff]
      %v1384 = vld [vmem:[#allocation2 + $0x210] sm:$0xff]
      %v1385 = vld [vmem:[#allocation2 + $0x218] sm:$0xff]
      %v1386 = vld [vmem:[#allocation2 + $0x220] sm:$0xff]
      %v1387 = vld [vmem:[#allocation2 + $0x228] sm:$0xff]
      %v1388 = vld [vmem:[#allocation2 + $0x230] sm:$0xff]
      %v1389 = vld [vmem:[#allocation2 + $0x238] sm:$0xff]
      %v1390 = vld [vmem:[#allocation2 + $0x240] sm:$0xff]
      %v1391 = vld [vmem:[#allocation2 + $0x248] sm:$0xff]
      %v1392 = vld [vmem:[#allocation2 + $0x250] sm:$0xff]
      %v1393 = vld [vmem:[#allocation2 + $0x258] sm:$0xff]
      %v1394 = vld [vmem:[#allocation2 + $0x260] sm:$0xff]
      %v1395 = vld [vmem:[#allocation2 + $0x268] sm:$0xff]
      %v1396 = vld [vmem:[#allocation2 + $0x270] sm:$0xff]
      %v1397 = vld [vmem:[#allocation2 + $0x278] sm:$0xff]
      %v1398 = vld [vmem:[#allocation2 + $0x280] sm:$0xff]
      %v1399 = vld [vmem:[#allocation2 + $0x288] sm:$0xff]
      %v1400 = vld [vmem:[#allocation2 + $0x290] sm:$0xff]
      %v1401 = vld [vmem:[#allocation2 + $0x298] sm:$0xff]
      %v1402 = vld [vmem:[#allocation2 + $0x2a0] sm:$0xff]
      %v1403 = vld [vmem:[#allocation2 + $0x2a8] sm:$0xff]
      %v1404 = vld [vmem:[#allocation2 + $0x2b0] sm:$0xff]
      %v1405 = vld [vmem:[#allocation2 + $0x2b8] sm:$0xff]
      %v1406 = vld [vmem:[#allocation2 + $0x2c0] sm:$0xff]
      %v1407 = vld [vmem:[#allocation2 + $0x2c8] sm:$0xff]
      %v1408 = vld [vmem:[#allocation2 + $0x2d0] sm:$0xff]
      %v1409 = vld [vmem:[#allocation2 + $0x2d8] sm:$0xff]
      %v1410 = vld [vmem:[#allocation2 + $0x2e0] sm:$0xff]
      %v1411 = vld [vmem:[#allocation2 + $0x2e8] sm:$0xff]
      %v1412 = vld [vmem:[#allocation2 + $0x2f0] sm:$0xff]
      %v1413 = vld [vmem:[#allocation2 + $0x2f8] sm:$0xff]
      %v1414 = vld [vmem:[#allocation2 + $0x300] sm:$0xff]
      %v1415 = vld [vmem:[#allocation2 + $0x308] sm:$0xff]
      %v1416 = vld [vmem:[#allocation2 + $0x310] sm:$0xff]
      %v1417 = vld [vmem:[#allocation2 + $0x318] sm:$0xff]
      %v1418 = vld [vmem:[#allocation2 + $0x320] sm:$0xff]
      %v1419 = vld [vmem:[#allocation2 + $0x328] sm:$0xff]
      %v1420 = vld [vmem:[#allocation2 + $0x330] sm:$0xff]
      %v1421 = vld [vmem:[#allocation2 + $0x338] sm:$0xff]
      %v1422 = vld [vmem:[#allocation2 + $0x340] sm:$0xff]
      %v1423 = vld [vmem:[#allocation2 + $0x348] sm:$0xff]
      %v1424 = vld [vmem:[#allocation2 + $0x350] sm:$0xff]
      %v1425 = vld [vmem:[#allocation2 + $0x358] sm:$0xff]
      %v1426 = vld [vmem:[%s2] sm:$0xff]
      %v1427 = vld [vmem:[%s2 + $0x8] sm:$0xff]
      %v1428 = vld [vmem:[%s2 + $0x10] sm:$0xff]
      %v1429 = vld [vmem:[%s2 + $0x18] sm:$0xff]
      %1431 = vset.pattern.permute.xlu0 0
      %1432 = vperm.xlu0 %1431, %v1426
      %v1433 = vpop.permute.xlu0 %1432
      %1436 = vset.pattern.permute.xlu0 0
      %1437 = vperm.xlu0 %1436, %v1427
      %v1438 = vpop.permute.xlu0 %1437
      %1441 = vset.pattern.permute.xlu0 0
      %1442 = vperm.xlu0 %1441, %v1428
      %v1443 = vpop.permute.xlu0 %1442
      %1446 = vset.pattern.permute.xlu0 0
      %1447 = vperm.xlu0 %1446, %v1429
      %v1448 = vpop.permute.xlu0 %1447
      %v1458 = vunpack.c.l.b16 %v1310
      %v1459 = vunpack.c.h.b16 %v1310
      %v1460 = vunpack.c.l.b16 %v1311
      %v1461 = vunpack.c.l.b16 %v1312
      %v1462 = vunpack.c.h.b16 %v1312
      %v1463 = vunpack.c.l.b16 %v1313
      %v1464 = vunpack.c.l.b16 %v1314
      %v1465 = vunpack.c.h.b16 %v1314
      %v1466 = vunpack.c.l.b16 %v1315
      %v1467 = vunpack.c.l.b16 %v1316
      %v1468 = vunpack.c.h.b16 %v1316
      %v1469 = vunpack.c.l.b16 %v1317
      %v1470 = vpack.c.b16 %v1461, %v1458
      %v1471 = vpack.c.b16 %v1462, %v1459
      %v1472 = vpack.c.b16 %v1463, %v1460
      %v1473 = vpack.c.b16 %v1467, %v1464
      %v1474 = vpack.c.b16 %v1468, %v1465
      %v1475 = vpack.c.b16 %v1469, %v1466
      %v1588 = vunpack.c.l.b16 %v1318
      %v1589 = vunpack.c.h.b16 %v1318
      %v1590 = vunpack.c.l.b16 %v1319
      %v1591 = vunpack.c.h.b16 %v1319
      %v1592 = vunpack.c.l.b16 %v1320
      %v1593 = vunpack.c.h.b16 %v1320
      %v1594 = vunpack.c.l.b16 %v1321
      %v1595 = vunpack.c.h.b16 %v1321
      %v1596 = vunpack.c.l.b16 %v1322
      %v1597 = vunpack.c.h.b16 %v1322
      %v1598 = vunpack.c.l.b16 %v1323
      %v1599 = vunpack.c.h.b16 %v1323
      %v1600 = vunpack.c.l.b16 %v1324
      %v1601 = vunpack.c.h.b16 %v1324
      %v1602 = vunpack.c.l.b16 %v1325
      %v1603 = vunpack.c.h.b16 %v1325
      %v1604 = vunpack.c.l.b16 %v1326
      %v1605 = vunpack.c.h.b16 %v1326
      %v1606 = vunpack.c.l.b16 %v1327
      %v1607 = vunpack.c.h.b16 %v1327
      %v1608 = vunpack.c.l.b16 %v1328
      %v1609 = vunpack.c.h.b16 %v1328
      %v1610 = vunpack.c.l.b16 %v1329
      %v1611 = vunpack.c.h.b16 %v1329
      %v1612 = vunpack.c.l.b16 %v1330
      %v1613 = vunpack.c.h.b16 %v1330
      %v1614 = vunpack.c.l.b16 %v1331
      %v1615 = vunpack.c.h.b16 %v1331
      %v1616 = vunpack.c.l.b16 %v1332
      %v1617 = vunpack.c.h.b16 %v1332
      %v1618 = vunpack.c.l.b16 %v1333
      %v1619 = vunpack.c.h.b16 %v1333
      %v1620 = vunpack.c.l.b16 %v1334
      %v1621 = vunpack.c.h.b16 %v1334
      %v1622 = vunpack.c.l.b16 %v1335
      %v1623 = vunpack.c.h.b16 %v1335
      %v1624 = vunpack.c.l.b16 %v1336
      %v1625 = vunpack.c.h.b16 %v1336
      %v1626 = vunpack.c.l.b16 %v1337
      %v1627 = vunpack.c.h.b16 %v1337
      %v1628 = vunpack.c.l.b16 %v1338
      %v1629 = vunpack.c.h.b16 %v1338
      %v1630 = vunpack.c.l.b16 %v1339
      %v1631 = vunpack.c.h.b16 %v1339
      %v1632 = vunpack.c.l.b16 %v1340
      %v1633 = vunpack.c.h.b16 %v1340
      %v1634 = vunpack.c.l.b16 %v1341
      %v1635 = vunpack.c.h.b16 %v1341
      %v1636 = vunpack.c.l.b16 %v1342
      %v1637 = vunpack.c.h.b16 %v1342
      %v1638 = vunpack.c.l.b16 %v1343
      %v1639 = vunpack.c.h.b16 %v1343
      %v1640 = vunpack.c.l.b16 %v1344
      %v1641 = vunpack.c.h.b16 %v1344
      %v1642 = vunpack.c.l.b16 %v1345
      %v1643 = vunpack.c.h.b16 %v1345
      %v1644 = vunpack.c.l.b16 %v1346
      %v1645 = vunpack.c.h.b16 %v1346
      %v1646 = vunpack.c.l.b16 %v1347
      %v1647 = vunpack.c.h.b16 %v1347
      %v1648 = vunpack.c.l.b16 %v1348
      %v1649 = vunpack.c.h.b16 %v1348
      %v1650 = vunpack.c.l.b16 %v1349
      %v1651 = vunpack.c.h.b16 %v1349
      %v1652 = vunpack.c.l.b16 %v1350
      %v1653 = vunpack.c.h.b16 %v1350
      %v1654 = vunpack.c.l.b16 %v1351
      %v1655 = vunpack.c.h.b16 %v1351
      %v1656 = vunpack.c.l.b16 %v1352
      %v1657 = vunpack.c.h.b16 %v1352
      %v1658 = vunpack.c.l.b16 %v1353
      %v1659 = vunpack.c.h.b16 %v1353
      %v1660 = vunpack.c.l.b16 %v1354
      %v1661 = vunpack.c.h.b16 %v1354
      %v1662 = vunpack.c.l.b16 %v1355
      %v1663 = vunpack.c.h.b16 %v1355
      %v1664 = vunpack.c.l.b16 %v1356
      %v1665 = vunpack.c.h.b16 %v1356
      %v1666 = vunpack.c.l.b16 %v1357
      %v1667 = vunpack.c.h.b16 %v1357
      %v1668 = vunpack.c.l.b16 %v1358
      %v1669 = vunpack.c.h.b16 %v1358
      %v1670 = vunpack.c.l.b16 %v1359
      %v1671 = vunpack.c.h.b16 %v1359
      %v1672 = vunpack.c.l.b16 %v1360
      %v1673 = vunpack.c.h.b16 %v1360
      %v1674 = vunpack.c.l.b16 %v1361
      %v1675 = vunpack.c.h.b16 %v1361
      %v1676 = vunpack.c.l.b16 %v1362
      %v1677 = vunpack.c.h.b16 %v1362
      %v1678 = vunpack.c.l.b16 %v1363
      %v1679 = vunpack.c.h.b16 %v1363
      %v1680 = vunpack.c.l.b16 %v1364
      %v1681 = vunpack.c.h.b16 %v1364
      %v1682 = vunpack.c.l.b16 %v1365
      %v1683 = vunpack.c.h.b16 %v1365
      %v1684 = vunpack.c.l.b16 %v1366
      %v1685 = vunpack.c.h.b16 %v1366
      %v1686 = vunpack.c.l.b16 %v1367
      %v1687 = vunpack.c.h.b16 %v1367
      %v1688 = vunpack.c.l.b16 %v1368
      %v1689 = vunpack.c.h.b16 %v1368
      %v1690 = vunpack.c.l.b16 %v1369
      %v1691 = vunpack.c.h.b16 %v1369
      %v1692 = vunpack.c.l.b16 %v1370
      %v1693 = vunpack.c.h.b16 %v1370
      %v1694 = vunpack.c.l.b16 %v1371
      %v1695 = vunpack.c.h.b16 %v1371
      %v1696 = vunpack.c.l.b16 %v1372
      %v1697 = vunpack.c.h.b16 %v1372
      %v1698 = vunpack.c.l.b16 %v1373
      %v1699 = vunpack.c.h.b16 %v1373
      %v1700 = vunpack.c.l.b16 %v1374
      %v1701 = vunpack.c.h.b16 %v1374
      %v1702 = vunpack.c.l.b16 %v1375
      %v1703 = vunpack.c.h.b16 %v1375
      %v1704 = vunpack.c.l.b16 %v1376
      %v1705 = vunpack.c.h.b16 %v1376
      %v1706 = vunpack.c.l.b16 %v1377
      %v1707 = vunpack.c.h.b16 %v1377
      %v1708 = vunpack.c.l.b16 %v1378
      %v1709 = vunpack.c.h.b16 %v1378
      %v1710 = vunpack.c.l.b16 %v1379
      %v1711 = vunpack.c.h.b16 %v1379
      %v1712 = vunpack.c.l.b16 %v1380
      %v1713 = vunpack.c.h.b16 %v1380
      %v1714 = vunpack.c.l.b16 %v1381
      %v1715 = vunpack.c.h.b16 %v1381
      %v1716 = vunpack.c.l.b16 %v1382
      %v1717 = vunpack.c.h.b16 %v1382
      %v1718 = vunpack.c.l.b16 %v1383
      %v1719 = vunpack.c.h.b16 %v1383
      %v1720 = vunpack.c.l.b16 %v1384
      %v1721 = vunpack.c.h.b16 %v1384
      %v1722 = vunpack.c.l.b16 %v1385
      %v1723 = vunpack.c.h.b16 %v1385
      %v1724 = vunpack.c.l.b16 %v1386
      %v1725 = vunpack.c.h.b16 %v1386
      %v1726 = vunpack.c.l.b16 %v1387
      %v1727 = vunpack.c.h.b16 %v1387
      %v1728 = vunpack.c.l.b16 %v1388
      %v1729 = vunpack.c.h.b16 %v1388
      %v1730 = vunpack.c.l.b16 %v1389
      %v1731 = vunpack.c.h.b16 %v1389
      %v1732 = vunpack.c.l.b16 %v1390
      %v1733 = vunpack.c.h.b16 %v1390
      %v1734 = vunpack.c.l.b16 %v1391
      %v1735 = vunpack.c.h.b16 %v1391
      %v1736 = vunpack.c.l.b16 %v1392
      %v1737 = vunpack.c.h.b16 %v1392
      %v1738 = vunpack.c.l.b16 %v1393
      %v1739 = vunpack.c.h.b16 %v1393
      %v1740 = vunpack.c.l.b16 %v1394
      %v1741 = vunpack.c.h.b16 %v1394
      %v1742 = vunpack.c.l.b16 %v1395
      %v1743 = vunpack.c.h.b16 %v1395
      %v1744 = vunpack.c.l.b16 %v1396
      %v1745 = vunpack.c.h.b16 %v1396
      %v1746 = vunpack.c.l.b16 %v1397
      %v1747 = vunpack.c.h.b16 %v1397
      %v1748 = vunpack.c.l.b16 %v1398
      %v1749 = vunpack.c.h.b16 %v1398
      %v1750 = vunpack.c.l.b16 %v1399
      %v1751 = vunpack.c.h.b16 %v1399
      %v1752 = vunpack.c.l.b16 %v1400
      %v1753 = vunpack.c.h.b16 %v1400
      %v1754 = vunpack.c.l.b16 %v1401
      %v1755 = vunpack.c.h.b16 %v1401
      %v1756 = vunpack.c.l.b16 %v1402
      %v1757 = vunpack.c.h.b16 %v1402
      %v1758 = vunpack.c.l.b16 %v1403
      %v1759 = vunpack.c.h.b16 %v1403
      %v1760 = vunpack.c.l.b16 %v1404
      %v1761 = vunpack.c.h.b16 %v1404
      %v1762 = vunpack.c.l.b16 %v1405
      %v1763 = vunpack.c.h.b16 %v1405
      %v1764 = vunpack.c.l.b16 %v1406
      %v1765 = vunpack.c.h.b16 %v1406
      %v1766 = vunpack.c.l.b16 %v1407
      %v1767 = vunpack.c.h.b16 %v1407
      %v1768 = vunpack.c.l.b16 %v1408
      %v1769 = vunpack.c.h.b16 %v1408
      %v1770 = vunpack.c.l.b16 %v1409
      %v1771 = vunpack.c.h.b16 %v1409
      %v1772 = vunpack.c.l.b16 %v1410
      %v1773 = vunpack.c.h.b16 %v1410
      %v1774 = vunpack.c.l.b16 %v1411
      %v1775 = vunpack.c.h.b16 %v1411
      %v1776 = vunpack.c.l.b16 %v1412
      %v1777 = vunpack.c.h.b16 %v1412
      %v1778 = vunpack.c.l.b16 %v1413
      %v1779 = vunpack.c.h.b16 %v1413
      %v1780 = vunpack.c.l.b16 %v1414
      %v1781 = vunpack.c.h.b16 %v1414
      %v1782 = vunpack.c.l.b16 %v1415
      %v1783 = vunpack.c.h.b16 %v1415
      %v1784 = vunpack.c.l.b16 %v1416
      %v1785 = vunpack.c.h.b16 %v1416
      %v1786 = vunpack.c.l.b16 %v1417
      %v1787 = vunpack.c.h.b16 %v1417
      %v1788 = vunpack.c.l.b16 %v1418
      %v1789 = vunpack.c.h.b16 %v1418
      %v1790 = vunpack.c.l.b16 %v1419
      %v1791 = vunpack.c.h.b16 %v1419
      %v1792 = vunpack.c.l.b16 %v1420
      %v1793 = vunpack.c.h.b16 %v1420
      %v1794 = vunpack.c.l.b16 %v1421
      %v1795 = vunpack.c.h.b16 %v1421
      %v1796 = vunpack.c.l.b16 %v1422
      %v1797 = vunpack.c.h.b16 %v1422
      %v1798 = vunpack.c.l.b16 %v1423
      %v1799 = vunpack.c.h.b16 %v1423
      %v1800 = vunpack.c.l.b16 %v1424
      %v1801 = vunpack.c.h.b16 %v1424
      %v1802 = vunpack.c.l.b16 %v1425
      %v1803 = vunpack.c.h.b16 %v1425
      %v1804 = vpack.c.b16 %v1594, %v1588
      %v1805 = vpack.c.b16 %v1595, %v1589
      %v1806 = vpack.c.b16 %v1596, %v1590
      %v1807 = vpack.c.b16 %v1597, %v1591
      %v1808 = vpack.c.b16 %v1598, %v1592
      %v1809 = vpack.c.b16 %v1599, %v1593
      %v1810 = vpack.c.b16 %v1606, %v1600
      %v1811 = vpack.c.b16 %v1607, %v1601
      %v1812 = vpack.c.b16 %v1608, %v1602
      %v1813 = vpack.c.b16 %v1609, %v1603
      %v1814 = vpack.c.b16 %v1610, %v1604
      %v1815 = vpack.c.b16 %v1611, %v1605
      %v1816 = vpack.c.b16 %v1618, %v1612
      %v1817 = vpack.c.b16 %v1619, %v1613
      %v1818 = vpack.c.b16 %v1620, %v1614
      %v1819 = vpack.c.b16 %v1621, %v1615
      %v1820 = vpack.c.b16 %v1622, %v1616
      %v1821 = vpack.c.b16 %v1623, %v1617
      %v1822 = vpack.c.b16 %v1630, %v1624
      %v1823 = vpack.c.b16 %v1631, %v1625
      %v1824 = vpack.c.b16 %v1632, %v1626
      %v1825 = vpack.c.b16 %v1633, %v1627
      %v1826 = vpack.c.b16 %v1634, %v1628
      %v1827 = vpack.c.b16 %v1635, %v1629
      %v1828 = vpack.c.b16 %v1642, %v1636
      %v1829 = vpack.c.b16 %v1643, %v1637
      %v1830 = vpack.c.b16 %v1644, %v1638
      %v1831 = vpack.c.b16 %v1645, %v1639
      %v1832 = vpack.c.b16 %v1646, %v1640
      %v1833 = vpack.c.b16 %v1647, %v1641
      %v1834 = vpack.c.b16 %v1654, %v1648
      %v1835 = vpack.c.b16 %v1655, %v1649
      %v1836 = vpack.c.b16 %v1656, %v1650
      %v1837 = vpack.c.b16 %v1657, %v1651
      %v1838 = vpack.c.b16 %v1658, %v1652
      %v1839 = vpack.c.b16 %v1659, %v1653
      %v1840 = vpack.c.b16 %v1666, %v1660
      %v1841 = vpack.c.b16 %v1667, %v1661
      %v1842 = vpack.c.b16 %v1668, %v1662
      %v1843 = vpack.c.b16 %v1669, %v1663
      %v1844 = vpack.c.b16 %v1670, %v1664
      %v1845 = vpack.c.b16 %v1671, %v1665
      %v1846 = vpack.c.b16 %v1678, %v1672
      %v1847 = vpack.c.b16 %v1679, %v1673
      %v1848 = vpack.c.b16 %v1680, %v1674
      %v1849 = vpack.c.b16 %v1681, %v1675
      %v1850 = vpack.c.b16 %v1682, %v1676
      %v1851 = vpack.c.b16 %v1683, %v1677
      %v1852 = vpack.c.b16 %v1690, %v1684
      %v1853 = vpack.c.b16 %v1691, %v1685
      %v1854 = vpack.c.b16 %v1692, %v1686
      %v1855 = vpack.c.b16 %v1693, %v1687
      %v1856 = vpack.c.b16 %v1694, %v1688
      %v1857 = vpack.c.b16 %v1695, %v1689
      %v1858 = vpack.c.b16 %v1702, %v1696
      %v1859 = vpack.c.b16 %v1703, %v1697
      %v1860 = vpack.c.b16 %v1704, %v1698
      %v1861 = vpack.c.b16 %v1705, %v1699
      %v1862 = vpack.c.b16 %v1706, %v1700
      %v1863 = vpack.c.b16 %v1707, %v1701
      %v1864 = vpack.c.b16 %v1714, %v1708
      %v1865 = vpack.c.b16 %v1715, %v1709
      %v1866 = vpack.c.b16 %v1716, %v1710
      %v1867 = vpack.c.b16 %v1717, %v1711
      %v1868 = vpack.c.b16 %v1718, %v1712
      %v1869 = vpack.c.b16 %v1719, %v1713
      %v1870 = vpack.c.b16 %v1726, %v1720
      %v1871 = vpack.c.b16 %v1727, %v1721
      %v1872 = vpack.c.b16 %v1728, %v1722
      %v1873 = vpack.c.b16 %v1729, %v1723
      %v1874 = vpack.c.b16 %v1730, %v1724
      %v1875 = vpack.c.b16 %v1731, %v1725
      %v1876 = vpack.c.b16 %v1738, %v1732
      %v1877 = vpack.c.b16 %v1739, %v1733
      %v1878 = vpack.c.b16 %v1740, %v1734
      %v1879 = vpack.c.b16 %v1741, %v1735
      %v1880 = vpack.c.b16 %v1742, %v1736
      %v1881 = vpack.c.b16 %v1743, %v1737
      %v1882 = vpack.c.b16 %v1750, %v1744
      %v1883 = vpack.c.b16 %v1751, %v1745
      %v1884 = vpack.c.b16 %v1752, %v1746
      %v1885 = vpack.c.b16 %v1753, %v1747
      %v1886 = vpack.c.b16 %v1754, %v1748
      %v1887 = vpack.c.b16 %v1755, %v1749
      %v1888 = vpack.c.b16 %v1762, %v1756
      %v1889 = vpack.c.b16 %v1763, %v1757
      %v1890 = vpack.c.b16 %v1764, %v1758
      %v1891 = vpack.c.b16 %v1765, %v1759
      %v1892 = vpack.c.b16 %v1766, %v1760
      %v1893 = vpack.c.b16 %v1767, %v1761
      %v1894 = vpack.c.b16 %v1774, %v1768
      %v1895 = vpack.c.b16 %v1775, %v1769
      %v1896 = vpack.c.b16 %v1776, %v1770
      %v1897 = vpack.c.b16 %v1777, %v1771
      %v1898 = vpack.c.b16 %v1778, %v1772
      %v1899 = vpack.c.b16 %v1779, %v1773
      %v1900 = vpack.c.b16 %v1786, %v1780
      %v1901 = vpack.c.b16 %v1787, %v1781
      %v1902 = vpack.c.b16 %v1788, %v1782
      %v1903 = vpack.c.b16 %v1789, %v1783
      %v1904 = vpack.c.b16 %v1790, %v1784
      %v1905 = vpack.c.b16 %v1791, %v1785
      %v1906 = vpack.c.b16 %v1798, %v1792
      %v1907 = vpack.c.b16 %v1799, %v1793
      %v1908 = vpack.c.b16 %v1800, %v1794
      %v1909 = vpack.c.b16 %v1801, %v1795
      %v1910 = vpack.c.b16 %v1802, %v1796
      %v1911 = vpack.c.b16 %v1803, %v1797
      %vm2020 = vcmask 261120
      %v2022 = vsel %vm2020, %v1472, 0
      %v2025 = vsel %vm2020, %v1475, 0
      %2027 = vmatpush.bf16.msra.mxu0 %v1846
      %2028 = vmatpush.bf16.msra.mxu0 %v1840
      %2029 = vmatpush.bf16.msra.mxu0 %v1834
      %2030 = vmatpush.bf16.msra.mxu0 %v1828
      %2031 = vmatpush.bf16.msra.mxu0 %v1822
      %2032 = vmatpush.bf16.msra.mxu0 %v1816
      %2033 = vmatpush.bf16.msra.mxu0 %v1810
      %2034 = vmatpush.bf16.msra.mxu0 %v1804
      %2035 = vmatmul.bf16.gmra.mxu0 %v1470
      %v2036 = vpop.f32.mrf.mxu0
      %v2037 = vadd.f32 %v1433, %v2036
      %v2038 = vpop.f32.mrf.mxu0
      %v2039 = vadd.f32 %v1438, %v2038
      %2040 = vmatmul.bf16.gmra.mxu0 %v1473
      %v2041 = vpop.f32.mrf.mxu0
      %v2042 = vadd.f32 %v1443, %v2041
      %v2043 = vpop.f32.mrf.mxu0
      %v2044 = vadd.f32 %v1448, %v2043
      %2045 = vdwg.mxu0
      %2046 = vmatpush.bf16.msra.mxu0 %v1894
      %2047 = vmatpush.bf16.msra.mxu0 %v1888
      %2048 = vmatpush.bf16.msra.mxu0 %v1882
      %2049 = vmatpush.bf16.msra.mxu0 %v1876
      %2050 = vmatpush.bf16.msra.mxu0 %v1870
      %2051 = vmatpush.bf16.msra.mxu0 %v1864
      %2052 = vmatpush.bf16.msra.mxu0 %v1858
      %2053 = vmatpush.bf16.msra.mxu0 %v1852
      %2054 = vmatmul.bf16.gmra.mxu0 %v1471
      %v2055 = vpop.f32.mrf.mxu0
      %v2056 = vadd.f32 %v2037, %v2055
      %v2057 = vpop.f32.mrf.mxu0
      %v2058 = vadd.f32 %v2039, %v2057
      %2059 = vmatmul.bf16.gmra.mxu0 %v1474
      %v2060 = vpop.f32.mrf.mxu0
      %v2061 = vadd.f32 %v2042, %v2060
      %v2062 = vpop.f32.mrf.mxu0
      %v2063 = vadd.f32 %v2044, %v2062
      %2064 = vdwg.mxu0
      %2065 = vmatpush.bf16.msra.mxu0 0
      %2066 = vmatpush.bf16.msra.mxu0 0
      %2067 = vmatpush.bf16.msra.mxu0 0
      %2068 = vmatpush.bf16.msra.mxu0 0
      %2069 = vmatpush.bf16.msra.mxu0 0
      %2070 = vmatpush.bf16.msra.mxu0 0
      %2071 = vmatpush.bf16.msra.mxu0 %v1906
      %2072 = vmatpush.bf16.msra.mxu0 %v1900
      %2073 = vmatmul.bf16.gmra.mxu0 %v2022
      %v2074 = vpop.f32.mrf.mxu0
      %v2075 = vadd.f32 %v2056, %v2074
      %v2076 = vpop.f32.mrf.mxu0
      %v2077 = vadd.f32 %v2058, %v2076
      %2078 = vmatmul.bf16.gmra.mxu0 %v2025
      %v2079 = vpop.f32.mrf.mxu0
      %v2080 = vadd.f32 %v2061, %v2079
      %v2081 = vpop.f32.mrf.mxu0
      %v2082 = vadd.f32 %v2063, %v2081
      %2083 = vdwg.mxu0
      %2084 = vmatpush.bf16.msra.mxu0 %v1847
      %2085 = vmatpush.bf16.msra.mxu0 %v1841
      %2086 = vmatpush.bf16.msra.mxu0 %v1835
      %2087 = vmatpush.bf16.msra.mxu0 %v1829
      %2088 = vmatpush.bf16.msra.mxu0 %v1823
      %2089 = vmatpush.bf16.msra.mxu0 %v1817
      %2090 = vmatpush.bf16.msra.mxu0 %v1811
      %2091 = vmatpush.bf16.msra.mxu0 %v1805
      %2092 = vmatmul.bf16.gmra.mxu0 %v1470
      %v2093 = vpop.f32.mrf.mxu0
      %v2094 = vadd.f32 %v1433, %v2093
      %v2095 = vpop.f32.mrf.mxu0
      %v2096 = vadd.f32 %v1438, %v2095
      %2097 = vmatmul.bf16.gmra.mxu0 %v1473
      %v2098 = vpop.f32.mrf.mxu0
      %v2099 = vadd.f32 %v1443, %v2098
      %v2100 = vpop.f32.mrf.mxu0
      %v2101 = vadd.f32 %v1448, %v2100
      %2102 = vdwg.mxu0
      %2103 = vmatpush.bf16.msra.mxu0 %v1895
      %2104 = vmatpush.bf16.msra.mxu0 %v1889
      %2105 = vmatpush.bf16.msra.mxu0 %v1883
      %2106 = vmatpush.bf16.msra.mxu0 %v1877
      %2107 = vmatpush.bf16.msra.mxu0 %v1871
      %2108 = vmatpush.bf16.msra.mxu0 %v1865
      %2109 = vmatpush.bf16.msra.mxu0 %v1859
      %2110 = vmatpush.bf16.msra.mxu0 %v1853
      %2111 = vmatmul.bf16.gmra.mxu0 %v1471
      %v2112 = vpop.f32.mrf.mxu0
      %v2113 = vadd.f32 %v2094, %v2112
      %v2114 = vpop.f32.mrf.mxu0
      %v2115 = vadd.f32 %v2096, %v2114
      %2116 = vmatmul.bf16.gmra.mxu0 %v1474
      %v2117 = vpop.f32.mrf.mxu0
      %v2118 = vadd.f32 %v2099, %v2117
      %v2119 = vpop.f32.mrf.mxu0
      %v2120 = vadd.f32 %v2101, %v2119
      %2121 = vdwg.mxu0
      %2122 = vmatpush.bf16.msra.mxu0 0
      %2123 = vmatpush.bf16.msra.mxu0 0
      %2124 = vmatpush.bf16.msra.mxu0 0
      %2125 = vmatpush.bf16.msra.mxu0 0
      %2126 = vmatpush.bf16.msra.mxu0 0
      %2127 = vmatpush.bf16.msra.mxu0 0
      %2128 = vmatpush.bf16.msra.mxu0 %v1907
      %2129 = vmatpush.bf16.msra.mxu0 %v1901
      %2130 = vmatmul.bf16.gmra.mxu0 %v2022
      %v2131 = vpop.f32.mrf.mxu0
      %v2132 = vadd.f32 %v2113, %v2131
      %v2133 = vpop.f32.mrf.mxu0
      %v2134 = vadd.f32 %v2115, %v2133
      %2135 = vmatmul.bf16.gmra.mxu0 %v2025
      %v2136 = vpop.f32.mrf.mxu0
      %v2137 = vadd.f32 %v2118, %v2136
      %v2138 = vpop.f32.mrf.mxu0
      %v2139 = vadd.f32 %v2120, %v2138
      %2140 = vdwg.mxu0
      %2141 = vmatpush.bf16.msra.mxu0 %v1848
      %2142 = vmatpush.bf16.msra.mxu0 %v1842
      %2143 = vmatpush.bf16.msra.mxu0 %v1836
      %2144 = vmatpush.bf16.msra.mxu0 %v1830
      %2145 = vmatpush.bf16.msra.mxu0 %v1824
      %2146 = vmatpush.bf16.msra.mxu0 %v1818
      %2147 = vmatpush.bf16.msra.mxu0 %v1812
      %2148 = vmatpush.bf16.msra.mxu0 %v1806
      %2149 = vmatmul.bf16.gmra.mxu0 %v1470
      %v2150 = vpop.f32.mrf.mxu0
      %v2151 = vadd.f32 %v1433, %v2150
      %v2152 = vpop.f32.mrf.mxu0
      %v2153 = vadd.f32 %v1438, %v2152
      %2154 = vmatmul.bf16.gmra.mxu0 %v1473
      %v2155 = vpop.f32.mrf.mxu0
      %v2156 = vadd.f32 %v1443, %v2155
      %v2157 = vpop.f32.mrf.mxu0
      %v2158 = vadd.f32 %v1448, %v2157
      %2159 = vdwg.mxu0
      %2160 = vmatpush.bf16.msra.mxu0 %v1896
      %2161 = vmatpush.bf16.msra.mxu0 %v1890
      %2162 = vmatpush.bf16.msra.mxu0 %v1884
      %2163 = vmatpush.bf16.msra.mxu0 %v1878
      %2164 = vmatpush.bf16.msra.mxu0 %v1872
      %2165 = vmatpush.bf16.msra.mxu0 %v1866
      %2166 = vmatpush.bf16.msra.mxu0 %v1860
      %2167 = vmatpush.bf16.msra.mxu0 %v1854
      %2168 = vmatmul.bf16.gmra.mxu0 %v1471
      %v2169 = vpop.f32.mrf.mxu0
      %v2170 = vadd.f32 %v2151, %v2169
      %v2171 = vpop.f32.mrf.mxu0
      %v2172 = vadd.f32 %v2153, %v2171
      %2173 = vmatmul.bf16.gmra.mxu0 %v1474
      %v2174 = vpop.f32.mrf.mxu0
      %v2175 = vadd.f32 %v2156, %v2174
      %v2176 = vpop.f32.mrf.mxu0
      %v2177 = vadd.f32 %v2158, %v2176
      %2178 = vdwg.mxu0
      %2179 = vmatpush.bf16.msra.mxu0 0
      %2180 = vmatpush.bf16.msra.mxu0 0
      %2181 = vmatpush.bf16.msra.mxu0 0
      %2182 = vmatpush.bf16.msra.mxu0 0
      %2183 = vmatpush.bf16.msra.mxu0 0
      %2184 = vmatpush.bf16.msra.mxu0 0
      %2185 = vmatpush.bf16.msra.mxu0 %v1908
      %2186 = vmatpush.bf16.msra.mxu0 %v1902
      %2187 = vmatmul.bf16.gmra.mxu0 %v2022
      %v2188 = vpop.f32.mrf.mxu0
      %v2189 = vadd.f32 %v2170, %v2188
      %v2190 = vpop.f32.mrf.mxu0
      %v2191 = vadd.f32 %v2172, %v2190
      %2192 = vmatmul.bf16.gmra.mxu0 %v2025
      %v2193 = vpop.f32.mrf.mxu0
      %v2194 = vadd.f32 %v2175, %v2193
      %v2195 = vpop.f32.mrf.mxu0
      %v2196 = vadd.f32 %v2177, %v2195
      %2197 = vdwg.mxu0
      %2198 = vmatpush.bf16.msra.mxu0 %v1849
      %2199 = vmatpush.bf16.msra.mxu0 %v1843
      %2200 = vmatpush.bf16.msra.mxu0 %v1837
      %2201 = vmatpush.bf16.msra.mxu0 %v1831
      %2202 = vmatpush.bf16.msra.mxu0 %v1825
      %2203 = vmatpush.bf16.msra.mxu0 %v1819
      %2204 = vmatpush.bf16.msra.mxu0 %v1813
      %2205 = vmatpush.bf16.msra.mxu0 %v1807
      %2206 = vmatmul.bf16.gmra.mxu0 %v1470
      %v2207 = vpop.f32.mrf.mxu0
      %v2208 = vadd.f32 %v1433, %v2207
      %v2209 = vpop.f32.mrf.mxu0
      %v2210 = vadd.f32 %v1438, %v2209
      %2211 = vmatmul.bf16.gmra.mxu0 %v1473
      %v2212 = vpop.f32.mrf.mxu0
      %v2213 = vadd.f32 %v1443, %v2212
      %v2214 = vpop.f32.mrf.mxu0
      %v2215 = vadd.f32 %v1448, %v2214
      %2216 = vdwg.mxu0
      %2217 = vmatpush.bf16.msra.mxu0 %v1897
      %2218 = vmatpush.bf16.msra.mxu0 %v1891
      %2219 = vmatpush.bf16.msra.mxu0 %v1885
      %2220 = vmatpush.bf16.msra.mxu0 %v1879
      %2221 = vmatpush.bf16.msra.mxu0 %v1873
      %2222 = vmatpush.bf16.msra.mxu0 %v1867
      %2223 = vmatpush.bf16.msra.mxu0 %v1861
      %2224 = vmatpush.bf16.msra.mxu0 %v1855
      %2225 = vmatmul.bf16.gmra.mxu0 %v1471
      %v2226 = vpop.f32.mrf.mxu0
      %v2227 = vadd.f32 %v2208, %v2226
      %v2228 = vpop.f32.mrf.mxu0
      %v2229 = vadd.f32 %v2210, %v2228
      %2230 = vmatmul.bf16.gmra.mxu0 %v1474
      %v2231 = vpop.f32.mrf.mxu0
      %v2232 = vadd.f32 %v2213, %v2231
      %v2233 = vpop.f32.mrf.mxu0
      %v2234 = vadd.f32 %v2215, %v2233
      %2235 = vdwg.mxu0
      %2236 = vmatpush.bf16.msra.mxu0 0
      %2237 = vmatpush.bf16.msra.mxu0 0
      %2238 = vmatpush.bf16.msra.mxu0 0
      %2239 = vmatpush.bf16.msra.mxu0 0
      %2240 = vmatpush.bf16.msra.mxu0 0
      %2241 = vmatpush.bf16.msra.mxu0 0
      %2242 = vmatpush.bf16.msra.mxu0 %v1909
      %2243 = vmatpush.bf16.msra.mxu0 %v1903
      %2244 = vmatmul.bf16.gmra.mxu0 %v2022
      %v2245 = vpop.f32.mrf.mxu0
      %v2246 = vadd.f32 %v2227, %v2245
      %v2247 = vpop.f32.mrf.mxu0
      %v2248 = vadd.f32 %v2229, %v2247
      %2249 = vmatmul.bf16.gmra.mxu0 %v2025
      %v2250 = vpop.f32.mrf.mxu0
      %v2251 = vadd.f32 %v2232, %v2250
      %v2252 = vpop.f32.mrf.mxu0
      %v2253 = vadd.f32 %v2234, %v2252
      %2254 = vdwg.mxu0
      %2255 = vmatpush.bf16.msra.mxu0 %v1850
      %2256 = vmatpush.bf16.msra.mxu0 %v1844
      %2257 = vmatpush.bf16.msra.mxu0 %v1838
      %2258 = vmatpush.bf16.msra.mxu0 %v1832
      %2259 = vmatpush.bf16.msra.mxu0 %v1826
      %2260 = vmatpush.bf16.msra.mxu0 %v1820
      %2261 = vmatpush.bf16.msra.mxu0 %v1814
      %2262 = vmatpush.bf16.msra.mxu0 %v1808
      %2263 = vmatmul.bf16.gmra.mxu0 %v1470
      %v2264 = vpop.f32.mrf.mxu0
      %v2265 = vadd.f32 %v1433, %v2264
      %v2266 = vpop.f32.mrf.mxu0
      %v2267 = vadd.f32 %v1438, %v2266
      %2268 = vmatmul.bf16.gmra.mxu0 %v1473
      %v2269 = vpop.f32.mrf.mxu0
      %v2270 = vadd.f32 %v1443, %v2269
      %v2271 = vpop.f32.mrf.mxu0
      %v2272 = vadd.f32 %v1448, %v2271
      %2273 = vdwg.mxu0
      %2274 = vmatpush.bf16.msra.mxu0 %v1898
      %2275 = vmatpush.bf16.msra.mxu0 %v1892
      %2276 = vmatpush.bf16.msra.mxu0 %v1886
      %2277 = vmatpush.bf16.msra.mxu0 %v1880
      %2278 = vmatpush.bf16.msra.mxu0 %v1874
      %2279 = vmatpush.bf16.msra.mxu0 %v1868
      %2280 = vmatpush.bf16.msra.mxu0 %v1862
      %2281 = vmatpush.bf16.msra.mxu0 %v1856
      %2282 = vmatmul.bf16.gmra.mxu0 %v1471
      %v2283 = vpop.f32.mrf.mxu0
      %v2284 = vadd.f32 %v2265, %v2283
      %v2285 = vpop.f32.mrf.mxu0
      %v2286 = vadd.f32 %v2267, %v2285
      %2287 = vmatmul.bf16.gmra.mxu0 %v1474
      %v2288 = vpop.f32.mrf.mxu0
      %v2289 = vadd.f32 %v2270, %v2288
      %v2290 = vpop.f32.mrf.mxu0
      %v2291 = vadd.f32 %v2272, %v2290
      %2292 = vdwg.mxu0
      %2293 = vmatpush.bf16.msra.mxu0 0
      %2294 = vmatpush.bf16.msra.mxu0 0
      %2295 = vmatpush.bf16.msra.mxu0 0
      %2296 = vmatpush.bf16.msra.mxu0 0
      %2297 = vmatpush.bf16.msra.mxu0 0
      %2298 = vmatpush.bf16.msra.mxu0 0
      %2299 = vmatpush.bf16.msra.mxu0 %v1910
      %2300 = vmatpush.bf16.msra.mxu0 %v1904
      %2301 = vmatmul.bf16.gmra.mxu0 %v2022
      %v2302 = vpop.f32.mrf.mxu0
      %v2303 = vadd.f32 %v2284, %v2302
      %v2304 = vpop.f32.mrf.mxu0
      %v2305 = vadd.f32 %v2286, %v2304
      %2306 = vmatmul.bf16.gmra.mxu0 %v2025
      %v2307 = vpop.f32.mrf.mxu0
      %v2308 = vadd.f32 %v2289, %v2307
      %v2309 = vpop.f32.mrf.mxu0
      %v2310 = vadd.f32 %v2291, %v2309
      %2311 = vdwg.mxu0
      %2312 = vmatpush.bf16.msra.mxu0 %v1851
      %2313 = vmatpush.bf16.msra.mxu0 %v1845
      %2314 = vmatpush.bf16.msra.mxu0 %v1839
      %2315 = vmatpush.bf16.msra.mxu0 %v1833
      %2316 = vmatpush.bf16.msra.mxu0 %v1827
      %2317 = vmatpush.bf16.msra.mxu0 %v1821
      %2318 = vmatpush.bf16.msra.mxu0 %v1815
      %2319 = vmatpush.bf16.msra.mxu0 %v1809
      %2320 = vmatmul.bf16.gmra.mxu0 %v1470
      %v2321 = vpop.f32.mrf.mxu0
      %v2322 = vadd.f32 %v1433, %v2321
      %v2323 = vpop.f32.mrf.mxu0
      %v2324 = vadd.f32 %v1438, %v2323
      %2325 = vmatmul.bf16.gmra.mxu0 %v1473
      %v2326 = vpop.f32.mrf.mxu0
      %v2327 = vadd.f32 %v1443, %v2326
      %v2328 = vpop.f32.mrf.mxu0
      %v2329 = vadd.f32 %v1448, %v2328
      %2330 = vdwg.mxu0
      %2331 = vmatpush.bf16.msra.mxu0 %v1899
      %2332 = vmatpush.bf16.msra.mxu0 %v1893
      %2333 = vmatpush.bf16.msra.mxu0 %v1887
      %2334 = vmatpush.bf16.msra.mxu0 %v1881
      %2335 = vmatpush.bf16.msra.mxu0 %v1875
      %2336 = vmatpush.bf16.msra.mxu0 %v1869
      %2337 = vmatpush.bf16.msra.mxu0 %v1863
      %2338 = vmatpush.bf16.msra.mxu0 %v1857
      %2339 = vmatmul.bf16.gmra.mxu0 %v1471
      %v2340 = vpop.f32.mrf.mxu0
      %v2341 = vadd.f32 %v2322, %v2340
      %v2342 = vpop.f32.mrf.mxu0
      %v2343 = vadd.f32 %v2324, %v2342
      %2344 = vmatmul.bf16.gmra.mxu0 %v1474
      %v2345 = vpop.f32.mrf.mxu0
      %v2346 = vadd.f32 %v2327, %v2345
      %v2347 = vpop.f32.mrf.mxu0
      %v2348 = vadd.f32 %v2329, %v2347
      %2349 = vdwg.mxu0
      %2350 = vmatpush.bf16.msra.mxu0 0
      %2351 = vmatpush.bf16.msra.mxu0 0
      %2352 = vmatpush.bf16.msra.mxu0 0
      %2353 = vmatpush.bf16.msra.mxu0 0
      %2354 = vmatpush.bf16.msra.mxu0 0
      %2355 = vmatpush.bf16.msra.mxu0 0
      %2356 = vmatpush.bf16.msra.mxu0 %v1911
      %2357 = vmatpush.bf16.msra.mxu0 %v1905
      %2358 = vmatmul.bf16.gmra.mxu0 %v2022
      %v2359 = vpop.f32.mrf.mxu0
      %v2360 = vadd.f32 %v2341, %v2359
      %v2361 = vpop.f32.mrf.mxu0
      %v2362 = vadd.f32 %v2343, %v2361
      %2363 = vmatmul.bf16.gmra.mxu0 %v2025
      %v2364 = vpop.f32.mrf.mxu0
      %v2365 = vadd.f32 %v2346, %v2364
      %v2366 = vpop.f32.mrf.mxu0
      %v2367 = vadd.f32 %v2348, %v2366
      %2368 = vdwg.mxu0
      %vm2369 = vcmp.ge.f32.partialorder %v2075, 0.0
      %vm2370 = vcmp.ge.f32.partialorder %v2132, 0.0
      %vm2371 = vcmp.ge.f32.partialorder %v2189, 0.0
      %vm2372 = vcmp.ge.f32.partialorder %v2246, 0.0
      %vm2373 = vcmp.ge.f32.partialorder %v2303, 0.0
      %vm2374 = vcmp.ge.f32.partialorder %v2360, 0.0
      %vm2375 = vcmp.ge.f32.partialorder %v2077, 0.0
      %vm2376 = vcmp.ge.f32.partialorder %v2134, 0.0
      %vm2377 = vcmp.ge.f32.partialorder %v2191, 0.0
      %vm2378 = vcmp.ge.f32.partialorder %v2248, 0.0
      %vm2379 = vcmp.ge.f32.partialorder %v2305, 0.0
      %vm2380 = vcmp.ge.f32.partialorder %v2362, 0.0
      %vm2381 = vcmp.ge.f32.partialorder %v2080, 0.0
      %vm2382 = vcmp.ge.f32.partialorder %v2137, 0.0
      %vm2383 = vcmp.ge.f32.partialorder %v2194, 0.0
      %vm2384 = vcmp.ge.f32.partialorder %v2251, 0.0
      %vm2385 = vcmp.ge.f32.partialorder %v2308, 0.0
      %vm2386 = vcmp.ge.f32.partialorder %v2365, 0.0
      %vm2387 = vcmp.ge.f32.partialorder %v2082, 0.0
      %vm2388 = vcmp.ge.f32.partialorder %v2139, 0.0
      %vm2389 = vcmp.ge.f32.partialorder %v2196, 0.0
      %vm2390 = vcmp.ge.f32.partialorder %v2253, 0.0
      %vm2391 = vcmp.ge.f32.partialorder %v2310, 0.0
      %vm2392 = vcmp.ge.f32.partialorder %v2367, 0.0
      %v2393 = vmul.f32 %v2075, 0.2
      %v2394 = vmul.f32 %v2132, 0.2
      %v2395 = vmul.f32 %v2189, 0.2
      %v2396 = vmul.f32 %v2246, 0.2
      %v2397 = vmul.f32 %v2303, 0.2
      %v2398 = vmul.f32 %v2360, 0.2
      %v2399 = vmul.f32 %v2077, 0.2
      %v2400 = vmul.f32 %v2134, 0.2
      %v2401 = vmul.f32 %v2191, 0.2
      %v2402 = vmul.f32 %v2248, 0.2
      %v2403 = vmul.f32 %v2305, 0.2
      %v2404 = vmul.f32 %v2362, 0.2
      %v2405 = vmul.f32 %v2080, 0.2
      %v2406 = vmul.f32 %v2137, 0.2
      %v2407 = vmul.f32 %v2194, 0.2
      %v2408 = vmul.f32 %v2251, 0.2
      %v2409 = vmul.f32 %v2308, 0.2
      %v2410 = vmul.f32 %v2365, 0.2
      %v2411 = vmul.f32 %v2082, 0.2
      %v2412 = vmul.f32 %v2139, 0.2
      %v2413 = vmul.f32 %v2196, 0.2
      %v2414 = vmul.f32 %v2253, 0.2
      %v2415 = vmul.f32 %v2310, 0.2
      %v2416 = vmul.f32 %v2367, 0.2
      %v2417 = vsel %vm2369, %v2075, %v2393
      %v2418 = vsel %vm2370, %v2132, %v2394
      %v2419 = vsel %vm2371, %v2189, %v2395
      %v2420 = vsel %vm2372, %v2246, %v2396
      %v2421 = vsel %vm2373, %v2303, %v2397
      %v2422 = vsel %vm2374, %v2360, %v2398
      %v2423 = vsel %vm2375, %v2077, %v2399
      %v2424 = vsel %vm2376, %v2134, %v2400
      %v2425 = vsel %vm2377, %v2191, %v2401
      %v2426 = vsel %vm2378, %v2248, %v2402
      %v2427 = vsel %vm2379, %v2305, %v2403
      %v2428 = vsel %vm2380, %v2362, %v2404
      %v2429 = vsel %vm2381, %v2080, %v2405
      %v2430 = vsel %vm2382, %v2137, %v2406
      %v2431 = vsel %vm2383, %v2194, %v2407
      %v2432 = vsel %vm2384, %v2251, %v2408
      %v2433 = vsel %vm2385, %v2308, %v2409
      %v2434 = vsel %vm2386, %v2365, %v2410
      %v2435 = vsel %vm2387, %v2082, %v2411
      %v2436 = vsel %vm2388, %v2139, %v2412
      %v2437 = vsel %vm2389, %v2196, %v2413
      %v2438 = vsel %vm2390, %v2253, %v2414
      %v2439 = vsel %vm2391, %v2310, %v2415
      %v2440 = vsel %vm2392, %v2367, %v2416
      %2441 = vst [vmem:[%s177] sm:$0xff] %v2417
      %2442 = vst [vmem:[%s177 + $0x8] sm:$0xff] %v2418
      %2443 = vst [vmem:[%s177 + $0x10] sm:$0xff] %v2419
      %2444 = vst [vmem:[%s177 + $0x18] sm:$0xff] %v2423
      %2445 = vst [vmem:[%s177 + $0x20] sm:$0xff] %v2424
      %2446 = vst [vmem:[%s177 + $0x28] sm:$0xff] %v2425
      %2447 = vst [vmem:[%s177 + $0x30] sm:$0xff] %v2429
      %2448 = vst [vmem:[%s177 + $0x38] sm:$0xff] %v2430
      %2449 = vst [vmem:[%s177 + $0x40] sm:$0xff] %v2431
      %2450 = vst [vmem:[%s177 + $0x48] sm:$0xff] %v2435
      %2451 = vst [vmem:[%s177 + $0x50] sm:$0xff] %v2436
      %2452 = vst [vmem:[%s177 + $0x58] sm:$0xff] %v2437
      %s2453 = scalar_lea.vmem %s177, 96
      %2454 = vst [vmem:[%s2453] sm:$0xff] %v2420
      %2455 = vst [vmem:[%s2453 + $0x8] sm:$0xff] %v2421
      %2456 = vst [vmem:[%s2453 + $0x10] sm:$0xff] %v2422
      %2457 = vst [vmem:[%s2453 + $0x18] sm:$0xff] %v2426
      %2458 = vst [vmem:[%s2453 + $0x20] sm:$0xff] %v2427
      %2459 = vst [vmem:[%s2453 + $0x28] sm:$0xff] %v2428
      %2460 = vst [vmem:[%s2453 + $0x30] sm:$0xff] %v2432
      %2461 = vst [vmem:[%s2453 + $0x38] sm:$0xff] %v2433
      %2462 = vst [vmem:[%s2453 + $0x40] sm:$0xff] %v2434
      %2463 = vst [vmem:[%s2453 + $0x48] sm:$0xff] %v2438
      %2464 = vst [vmem:[%s2453 + $0x50] sm:$0xff] %v2439
      %2465 = vst [vmem:[%s2453 + $0x58] sm:$0xff] %v2440
      %s2466 = smul.u32 2, %s14
      %p2467 = scmp.lt.s32.totalorder %s2466, 3
      %s2468 = scalar_select %p2467, %s2466, 3
      %s2469 = smul.addr %s2468, 12
      %s2470 = smul.addr %s2469, 8
      %s2471 = scalar_lea.vmem %s3, %s2470
      // Predicated region
      $region33: #{fwd.6} parent=31 // pred_check
        %p2472 = pneg %p100
      $region34: #{fwd.6} parent=31 // pred_check_branch
        %2474 = sbr.rel (%p2472) target = $region36
      $region35: #{fwd.6} parent=31 // pred_region
        %s2475 = smul.u32 2, %s14
      $region36: #{fwd.6} parent=31 // pred_fallthru
        _
    $region32: #{fwd.6} parent=5 // pred_fallthru
      _
    %p2476 = scmp.le.s32.totalorder 2, %s9
    // Predicated region
    $region37: #{fwd.6} parent=5 // pred_check
      %p2477 = pneg %p2476
    $region38: #{fwd.6} parent=5 // pred_check_branch
      %2479 = sbr.rel (%p2477) target = $region40
    $region39: #{fwd.6} parent=5 // pred_region
      %s2480 = ssub.s32 %s9, 2
      // Predicated region
      $region41: #{fwd.6} parent=39 // pred_check
        %p2481 = pneg %p106
      $region42: #{fwd.6} parent=39 // pred_check_branch
        %2483 = sbr.rel (%p2481) target = $region44
      $region43: #{fwd.6} parent=39 // pred_region
        %s2484 = smul.u32 2, %s15
        %p2485 = scmp.lt.s32.totalorder %s2484, 3
        %s2486 = scalar_select %p2485, %s2484, 3
        %s2487 = smul.addr %s2486, 12
        %s2488 = smul.addr %s2487, 8
        %s2489 = scalar_lea.vmem %s3, %s2488
      $region44: #{fwd.6} parent=39 // pred_fallthru
        _
    $region40: #{fwd.6} parent=5 // pred_fallthru
      _
  $region6: #{fwd.6} parent=0 // loop_footer
    %s13 = sadd.s32 1, %s9
  $region7: #{fwd.6} parent=0 // loop_footer_branch
    %8 = sbr.rel target = $region3
  $region8: #{fwd.6} parent=0 // loop_exit
    _

// kernel: fwd.7
$region0: #{fwd.7}
  #allocation0 [shape = 'u32[]', space=smem, size = 0x4, offset = 0x4, fixed_abs, tag = 'smem constant byte address 0x4 - core index']
  #allocation1 [shape = 'u32[72,128]{1,0:T(1,128)}', space=vmem, size = 0x9000, scoped, tag = 'internal scratch']
  #allocation2 [shape = 'bf16[288,1024]{1,0:T(8,128)(2,1)}', space=vmem, size = 0x90000, scoped, tag = 'scratch operand']
  #allocation3 [shape = 'bf16[32,1024]{1,0:T(8,128)(2,1)}', space=vmem, size = 0x10000, scoped, tag = 'scratch operand']
  #allocation4 [shape = 'bf16[288,768]{1,0:T(8,128)(2,1)}', space=vmem, size = 0x6c000, scoped, tag = 'scratch operand']
  %s0 = inlined_call_operand.vmem [shape: bf16[4,32,616], index: 0, kind: input, shape index: {}]
  %s1 = inlined_call_operand.vmem [shape: bf16[32,288], index: 1, kind: input, shape index: {}]
  %s2 = inlined_call_operand.vmem [shape: f32[32,1], index: 2, kind: input, shape index: {}]
  %s3 = inlined_call_operand.vmem [shape: f32[1,1024], index: 3, kind: input, shape index: {}]
  %s4 = inlined_call_operand.vmem [shape: bf16[32,288], index: 4, kind: input, shape index: {}]
  %s5 = inlined_call_operand.vmem [shape: f32[32,1], index: 5, kind: input, shape index: {}]
  %s6 = inlined_call_operand.vmem [shape: f32[4,32,384], index: 6, kind: output, shape index: {}]
  %s7 = sld [smem:[#allocation0]]
  $region57: #{fwd.7} parent=0
    _
  %s9 = ssub.s32 1, %s7
  %s10 = scalar_select 0, %s9, %s7
  loop: start=0, step=1, limit=4
  $region2: #{fwd.7} parent=0 // loop_pre_header
    _
  $region3: #{fwd.7} parent=0 // loop_header
    %s12 = sphi 0, %s16
    %p13 = scmp.ge.s32.totalorder %s12, 4
    %s22 = sphi 0, %s24
    %s25 = sphi 0, %s22
    %s26 = sphi 0, %s25
    %s42 = sphi 0, %s26
    %s46 = sphi 0, %s46
    %s48 = sphi 0, %s46
    %s49 = sphi 0, %s48
    %s63 = sphi 0, %s49
    %s67 = sphi 0, %s67
    %s69 = sphi 0, %s67
    %s70 = sphi 0, %s69
    %s84 = sphi 0, %s70
    %s88 = sphi 0, %s88
    %s90 = sphi 0, %s88
    %s91 = sphi 0, %s90
    %s105 = sphi 0, %s91
    %s109 = sphi 0, %s109
    %s111 = sphi 0, %s109
    %s112 = sphi 0, %s111
    %s126 = sphi 0, %s112
    %s130 = sphi 0, %s130
    %s132 = sphi 0, %s130
    %s133 = sphi 0, %s132
    %s147 = sphi 0, %s133
    %s153 = sphi 0, %s155
    %s156 = sphi 0, %s153
    %s157 = sphi 0, %s156
    %s173 = sphi 0, %s157
  $region4: #{fwd.7} parent=0 // loop_header_branch
    %15 = sbr.rel (%p13) target = $region8
  $region5: #{fwd.7} parent=0 // loop_body
    %s17 = ssub.s32 %s12, 1
    %s18 = ssub.s32 %s12, 2
    %s19 = sadd.s32 %s12, 1
    %s20 = ssub.s32 %s12, %s19
    %p21 = scmp.eq.s32.totalorder %s20, 0
    %s23 = sadd.s32 %s22, 1
    %s24 = scalar_select %p21, %s22, %s23
    %p27 = pneg %p21
    %p28 = scmp.eq.s32.totalorder %s12, 1
    %p29 = por %p27, %p28
    %p30 = scmp.ne.s32.totalorder %s22, %s25
    %p31 = scmp.eq.s32.totalorder %s12, 0
    %p32 = por %p30, %p31
    %p33 = scmp.ne.s32.totalorder %s22, %s25
    %p34 = scmp.eq.s32.totalorder %s17, 1
    %p35 = por %p33, %p34
    %p36 = scmp.ne.s32.totalorder %s25, %s26
    %p37 = scmp.eq.s32.totalorder %s17, 0
    %p38 = por %p36, %p37
    %p39 = scmp.ne.s32.totalorder %s25, %s26
    %p40 = scmp.eq.s32.totalorder %s18, 1
    %p41 = por %p39, %p40
    %p43 = scmp.ne.s32.totalorder %s26, %s42
    %p44 = scmp.eq.s32.totalorder %s18, 0
    %p45 = por %p43, %p44
    %s47 = sadd.s32 %s46, 1
    %p50 = scmp.eq.s32.totalorder %s12, 1
    %p51 = scmp.ne.s32.totalorder %s46, %s48
    %p52 = scmp.eq.s32.totalorder %s12, 0
    %p53 = por %p51, %p52
    %p54 = scmp.ne.s32.totalorder %s46, %s48
    %p55 = scmp.eq.s32.totalorder %s17, 1
    %p56 = por %p54, %p55
    %p57 = scmp.ne.s32.totalorder %s48, %s49
    %p58 = scmp.eq.s32.totalorder %s17, 0
    %p59 = por %p57, %p58
    %p60 = scmp.ne.s32.totalorder %s48, %s49
    %p61 = scmp.eq.s32.totalorder %s18, 1
    %p62 = por %p60, %p61
    %p64 = scmp.ne.s32.totalorder %s49, %s63
    %p65 = scmp.eq.s32.totalorder %s18, 0
    %p66 = por %p64, %p65
    %s68 = sadd.s32 %s67, 1
    %p71 = scmp.eq.s32.totalorder %s12, 1
    %p72 = scmp.ne.s32.totalorder %s67, %s69
    %p73 = scmp.eq.s32.totalorder %s12, 0
    %p74 = por %p72, %p73
    %p75 = scmp.ne.s32.totalorder %s67, %s69
    %p76 = scmp.eq.s32.totalorder %s17, 1
    %p77 = por %p75, %p76
    %p78 = scmp.ne.s32.totalorder %s69, %s70
    %p79 = scmp.eq.s32.totalorder %s17, 0
    %p80 = por %p78, %p79
    %p81 = scmp.ne.s32.totalorder %s69, %s70
    %p82 = scmp.eq.s32.totalorder %s18, 1
    %p83 = por %p81, %p82
    %p85 = scmp.ne.s32.totalorder %s70, %s84
    %p86 = scmp.eq.s32.totalorder %s18, 0
    %p87 = por %p85, %p86
    %s89 = sadd.s32 %s88, 1
    %p92 = scmp.eq.s32.totalorder %s12, 1
    %p93 = scmp.ne.s32.totalorder %s88, %s90
    %p94 = scmp.eq.s32.totalorder %s12, 0
    %p95 = por %p93, %p94
    %p96 = scmp.ne.s32.totalorder %s88, %s90
    %p97 = scmp.eq.s32.totalorder %s17, 1
    %p98 = por %p96, %p97
    %p99 = scmp.ne.s32.totalorder %s90, %s91
    %p100 = scmp.eq.s32.totalorder %s17, 0
    %p101 = por %p99, %p100
    %p102 = scmp.ne.s32.totalorder %s90, %s91
    %p103 = scmp.eq.s32.totalorder %s18, 1
    %p104 = por %p102, %p103
    %p106 = scmp.ne.s32.totalorder %s91, %s105
    %p107 = scmp.eq.s32.totalorder %s18, 0
    %p108 = por %p106, %p107
    %s110 = sadd.s32 %s109, 1
    %p113 = scmp.eq.s32.totalorder %s12, 1
    %p114 = scmp.ne.s32.totalorder %s109, %s111
    %p115 = scmp.eq.s32.totalorder %s12, 0
    %p116 = por %p114, %p115
    %p117 = scmp.ne.s32.totalorder %s109, %s111
    %p118 = scmp.eq.s32.totalorder %s17, 1
    %p119 = por %p117, %p118
    %p120 = scmp.ne.s32.totalorder %s111, %s112
    %p121 = scmp.eq.s32.totalorder %s17, 0
    %p122 = por %p120, %p121
    %p123 = scmp.ne.s32.totalorder %s111, %s112
    %p124 = scmp.eq.s32.totalorder %s18, 1
    %p125 = por %p123, %p124
    %p127 = scmp.ne.s32.totalorder %s112, %s126
    %p128 = scmp.eq.s32.totalorder %s18, 0
    %p129 = por %p127, %p128
    %s131 = sadd.s32 %s130, 1
    %p134 = scmp.eq.s32.totalorder %s12, 1
    %p135 = scmp.ne.s32.totalorder %s130, %s132
    %p136 = scmp.eq.s32.totalorder %s12, 0
    %p137 = por %p135, %p136
    %p138 = scmp.ne.s32.totalorder %s130, %s132
    %p139 = scmp.eq.s32.totalorder %s17, 1
    %p140 = por %p138, %p139
    %p141 = scmp.ne.s32.totalorder %s132, %s133
    %p142 = scmp.eq.s32.totalorder %s17, 0
    %p143 = por %p141, %p142
    %p144 = scmp.ne.s32.totalorder %s132, %s133
    %p145 = scmp.eq.s32.totalorder %s18, 1
    %p146 = por %p144, %p145
    %p148 = scmp.ne.s32.totalorder %s133, %s147
    %p149 = scmp.eq.s32.totalorder %s18, 0
    %p150 = por %p148, %p149
    %s151 = ssub.s32 %s12, %s19
    %p152 = scmp.eq.s32.totalorder %s151, 0
    %s154 = sadd.s32 %s153, 1
    %s155 = scalar_select %p152, %s153, %s154
    %p158 = pneg %p152
    %p159 = scmp.eq.s32.totalorder %s12, 1
    %p160 = por %p158, %p159
    %p161 = scmp.ne.s32.totalorder %s153, %s156
    %p162 = scmp.eq.s32.totalorder %s12, 0
    %p163 = por %p161, %p162
    %p164 = scmp.ne.s32.totalorder %s153, %s156
    %p165 = scmp.eq.s32.totalorder %s17, 1
    %p166 = por %p164, %p165
    %p167 = scmp.ne.s32.totalorder %s156, %s157
    %p168 = scmp.eq.s32.totalorder %s17, 0
    %p169 = por %p167, %p168
    %p170 = scmp.ne.s32.totalorder %s156, %s157
    %p171 = scmp.eq.s32.totalorder %s18, 1
    %p172 = por %p170, %p171
    %p174 = scmp.ne.s32.totalorder %s157, %s173
    %p175 = scmp.eq.s32.totalorder %s18, 0
    %p176 = por %p174, %p175
    %p177 = scmp.le.s32.totalorder 1, %s12
    %p178 = scmp.lt.s32.totalorder %s12, 3
    %p179 = pnand %p177, %p178
    %p180 = pneg %p179
    // Predicated region
    $region9: #{fwd.7} parent=5 // pred_check
      _
    $region10: #{fwd.7} parent=5 // pred_check_branch
      %182 = sbr.rel (%p179) target = $region12
    $region11: #{fwd.7} parent=5 // pred_region
      %s183 = ssub.s32 %s12, 1
      // Predicated region
      $region13: #{fwd.7} parent=11 // pred_check
        %p184 = pneg %p59
      $region14: #{fwd.7} parent=11 // pred_check_branch
        %186 = sbr.rel (%p184) target = $region16
      $region15: #{fwd.7} parent=11 // pred_region
        _
      $region16: #{fwd.7} parent=11 // pred_fallthru
        _
      // Predicated region
      $region17: #{fwd.7} parent=11 // pred_check
        %p187 = pneg %p80
      $region18: #{fwd.7} parent=11 // pred_check_branch
        %189 = sbr.rel (%p187) target = $region20
      $region19: #{fwd.7} parent=11 // pred_region
        _
      $region20: #{fwd.7} parent=11 // pred_fallthru
        _
      // Predicated region
      $region21: #{fwd.7} parent=11 // pred_check
        %p190 = pneg %p101
      $region22: #{fwd.7} parent=11 // pred_check_branch
        %192 = sbr.rel (%p190) target = $region24
      $region23: #{fwd.7} parent=11 // pred_region
        _
      $region24: #{fwd.7} parent=11 // pred_fallthru
        _
      // Predicated region
      $region25: #{fwd.7} parent=11 // pred_check
        %p193 = pneg %p122
      $region26: #{fwd.7} parent=11 // pred_check_branch
        %195 = sbr.rel (%p193) target = $region28
      $region27: #{fwd.7} parent=11 // pred_region
        _
      $region28: #{fwd.7} parent=11 // pred_fallthru
        _
      // Predicated region
      $region29: #{fwd.7} parent=11 // pred_check
        %p196 = pneg %p143
      $region30: #{fwd.7} parent=11 // pred_check_branch
        %198 = sbr.rel (%p196) target = $region32
      $region31: #{fwd.7} parent=11 // pred_region
        _
      $region32: #{fwd.7} parent=11 // pred_fallthru
        _
    $region12: #{fwd.7} parent=5 // pred_fallthru
      _
    %p199 = scmp.lt.s32.totalorder %s12, 2
    // Predicated region
    $region33: #{fwd.7} parent=5 // pred_check
      %p200 = pneg %p199
    $region34: #{fwd.7} parent=5 // pred_check_branch
      %202 = sbr.rel (%p200) target = $region36
    $region35: #{fwd.7} parent=5 // pred_region
      // Predicated region
      $region37: #{fwd.7} parent=35 // pred_check
        %p203 = pneg %p32
      $region38: #{fwd.7} parent=35 // pred_check_branch
        %205 = sbr.rel (%p203) target = $region40
      $region39: #{fwd.7} parent=35 // pred_region
        %s206 = smul.u32 2, %s12
        %p207 = scmp.lt.s32.totalorder %s206, 3
        %s208 = scalar_select %p207, %s206, 3
        %s209 = smul.addr %s208, 20
        %s210 = smul.addr %s209, 4
        %s211 = scalar_lea.vmem %s0, %s210
        %s212 = smul.u32 2, %s12
      $region40: #{fwd.7} parent=35 // pred_fallthru
        _
    $region36: #{fwd.7} parent=5 // pred_fallthru
      _
    %p213 = scmp.le.s32.totalorder 1, %s12
    %p214 = scmp.lt.s32.totalorder %s12, 3
    %p215 = pnand %p213, %p214
    %p216 = pneg %p215
    // Predicated region
    $region41: #{fwd.7} parent=5 // pred_check
      _
    $region42: #{fwd.7} parent=5 // pred_check_branch
      %218 = sbr.rel (%p215) target = $region44
    $region43: #{fwd.7} parent=5 // pred_region
      %s219 = ssub.s32 %s12, 1
      %s220 = smul.u32 2, %s17
      %p221 = scmp.lt.s32.totalorder %s220, 3
      %s222 = scalar_select %p221, %s220, 3
      %s223 = smul.addr %s222, 20
      %s224 = smul.addr %s223, 4
      %s225 = scalar_lea.vmem %s0, %s224
      %p226 = pneg %p38
      %p227 = pneg %p35
      %p228 = pneg %p59
      %p229 = pneg %p56
      %p230 = pneg %p80
      %p231 = pneg %p77
      %p232 = pneg %p101
      %p233 = pneg %p98
      %p234 = pneg %p122
      %p235 = pneg %p119
      %p236 = pneg %p143
      %p237 = pneg %p140
      %p238 = pneg %p169
      %p239 = pneg %p166
      %s240 = smul.u32 2, %s17
      %p241 = scmp.lt.s32.totalorder %s240, 3
      %s242 = scalar_select %p241, %s240, 3
      %s243 = smul.addr %s242, 12
      %s244 = smul.addr %s243, 8
      %s245 = scalar_lea.vmem %s6, %s244
      %s246 = smul.u32 2, %s17
      %p247 = scmp.lt.s32.totalorder %s246, 3
      %s248 = scalar_select %p247, %s246, 3
      %s249 = smul.addr %s248, 20
      %s250 = smul.addr %s249, 4
      %s251 = scalar_lea.vmem %s0, %s250
      %s252 = smul.u32 2, %s17
      %s253 = smul.u32 2, %s17
      %p254 = scmp.lt.s32.totalorder %s253, 3
      %s255 = scalar_select %p254, %s253, 3
      %s256 = smul.addr %s255, 12
      %s257 = smul.addr %s256, 8
      %s258 = scalar_lea.vmem %s6, %s257
      %s259 = smul.u32 2, %s17
      %v261 = vld [vmem:[%s251] sm:$0xff]
      %v262 = vld [vmem:[%s251 + $0x8] sm:$0xff]
      %v263 = vld [vmem:[%s251 + $0x14] sm:$0xff]
      %v264 = vld [vmem:[%s251 + $0x1c] sm:$0xff]
      %v265 = vld [vmem:[%s251 + $0x28] sm:$0xff]
      %v266 = vld [vmem:[%s251 + $0x30] sm:$0xff]
      %v267 = vld [vmem:[%s251 + $0x3c] sm:$0xff]
      %v268 = vld [vmem:[%s251 + $0x44] sm:$0xff]
      %269 = vst [vmem:[#allocation2] sm:$0xff] %v261
      %270 = vst [vmem:[#allocation2 + $0x8] sm:$0xff] %v262
      %271 = vst [vmem:[#allocation2 + $0x20] sm:$0xff] %v263
      %272 = vst [vmem:[#allocation2 + $0x28] sm:$0xff] %v264
      %273 = vst [vmem:[#allocation2 + $0x40] sm:$0xff] %v265
      %274 = vst [vmem:[#allocation2 + $0x48] sm:$0xff] %v266
      %275 = vst [vmem:[#allocation2 + $0x60] sm:$0xff] %v267
      %276 = vst [vmem:[#allocation2 + $0x68] sm:$0xff] %v268
      %v277 = vld [vmem:[%s251] sm:$0xff]
      %v278 = vld [vmem:[%s251 + $0x8] sm:$0xff]
      %v279 = vld [vmem:[%s251 + $0x10] sm:$0xf]
      %v280 = vld [vmem:[%s251 + $0x14] sm:$0xff]
      %v281 = vld [vmem:[%s251 + $0x1c] sm:$0xff]
      %v282 = vld [vmem:[%s251 + $0x24] sm:$0xf]
      %v283 = vld [vmem:[%s251 + $0x28] sm:$0xff]
      %v284 = vld [vmem:[%s251 + $0x30] sm:$0xff]
      %v285 = vld [vmem:[%s251 + $0x38] sm:$0xf]
      %v286 = vld [vmem:[%s251 + $0x3c] sm:$0xff]
      %v287 = vld [vmem:[%s251 + $0x44] sm:$0xff]
      %v288 = vld [vmem:[%s251 + $0x4c] sm:$0xf]
      %301 = vrot.lane.b32.xlu0 %v277, 126
      %v302 = vpop.permute.xlu0 %301
      %303 = vrot.lane.b32.xlu0 %v278, 126
      %v304 = vpop.permute.xlu0 %303
      %305 = vrot.lane.b32.xlu0 %v279, 126
      %v306 = vpop.permute.xlu0 %305
      %307 = vrot.lane.b32.xlu0 %v280, 126
      %v308 = vpop.permute.xlu0 %307
      %309 = vrot.lane.b32.xlu0 %v281, 126
      %v310 = vpop.permute.xlu0 %309
      %311 = vrot.lane.b32.xlu0 %v282, 126
      %v312 = vpop.permute.xlu0 %311
      %313 = vrot.lane.b32.xlu0 %v283, 126
      %v314 = vpop.permute.xlu0 %313
      %315 = vrot.lane.b32.xlu0 %v284, 126
      %v316 = vpop.permute.xlu0 %315
      %317 = vrot.lane.b32.xlu0 %v285, 126
      %v318 = vpop.permute.xlu0 %317
      %319 = vrot.lane.b32.xlu0 %v286, 126
      %v320 = vpop.permute.xlu0 %319
      %321 = vrot.lane.b32.xlu0 %v287, 126
      %v322 = vpop.permute.xlu0 %321
      %323 = vrot.lane.b32.xlu0 %v288, 126
      %v324 = vpop.permute.xlu0 %323
      %v325 = vrot.slane %v302, 4
      %v326 = vrot.slane %v304, 4
      %v327 = vrot.slane %v306, 4
      %v328 = vrot.slane %v308, 4
      %v329 = vrot.slane %v310, 4
      %v330 = vrot.slane %v312, 4
      %v331 = vrot.slane %v314, 4
      %v332 = vrot.slane %v316, 4
      %v333 = vrot.slane %v318, 4
      %v334 = vrot.slane %v320, 4
      %v335 = vrot.slane %v322, 4
      %v336 = vrot.slane %v324, 4
      %vm337 = vcmask 1043456
      %v338 = vsel %vm337, %v325, %v326
      %vm339 = vcmask 1031168
      %v340 = vsel %vm339, %v302, %v338
      %v341 = vsel %vm337, %v326, %v327
      %v342 = vsel %vm339, %v304, %v341
      %v343 = vsel %vm337, %v328, %v329
      %v344 = vsel %vm339, %v308, %v343
      %v345 = vsel %vm337, %v329, %v330
      %v346 = vsel %vm339, %v310, %v345
      %v347 = vsel %vm337, %v331, %v332
      %v348 = vsel %vm339, %v314, %v347
      %v349 = vsel %vm337, %v332, %v333
      %v350 = vsel %vm339, %v316, %v349
      %v351 = vsel %vm337, %v334, %v335
      %v352 = vsel %vm339, %v320, %v351
      %v353 = vsel %vm337, %v335, %v336
      %v354 = vsel %vm339, %v322, %v353
      %363 = vst [vmem:[#allocation2 + $0x80] sm:$0xff] %v340
      %364 = vst [vmem:[#allocation2 + $0x88] sm:$0xff] %v342
      %365 = vst [vmem:[#allocation2 + $0xa0] sm:$0xff] %v344
      %366 = vst [vmem:[#allocation2 + $0xa8] sm:$0xff] %v346
      %367 = vst [vmem:[#allocation2 + $0xc0] sm:$0xff] %v348
      %368 = vst [vmem:[#allocation2 + $0xc8] sm:$0xff] %v350
      %369 = vst [vmem:[#allocation2 + $0xe0] sm:$0xff] %v352
      %370 = vst [vmem:[#allocation2 + $0xe8] sm:$0xff] %v354
      %v371 = vld [vmem:[%s251] sm:$0xff]
      %v372 = vld [vmem:[%s251 + $0x8] sm:$0xff]
      %v373 = vld [vmem:[%s251 + $0x10] sm:$0xf]
      %v374 = vld [vmem:[%s251 + $0x14] sm:$0xff]
      %v375 = vld [vmem:[%s251 + $0x1c] sm:$0xff]
      %v376 = vld [vmem:[%s251 + $0x24] sm:$0xf]
      %v377 = vld [vmem:[%s251 + $0x28] sm:$0xff]
      %v378 = vld [vmem:[%s251 + $0x30] sm:$0xff]
      %v379 = vld [vmem:[%s251 + $0x38] sm:$0xf]
      %v380 = vld [vmem:[%s251 + $0x3c] sm:$0xff]
      %v381 = vld [vmem:[%s251 + $0x44] sm:$0xff]
      %v382 = vld [vmem:[%s251 + $0x4c] sm:$0xf]
      %395 = vrot.lane.b32.xlu0 %v371, 124
      %v396 = vpop.permute.xlu0 %395
      %397 = vrot.lane.b32.xlu0 %v372, 124
      %v398 = vpop.permute.xlu0 %397
      %399 = vrot.lane.b32.xlu0 %v373, 124
      %v400 = vpop.permute.xlu0 %399
      %401 = vrot.lane.b32.xlu0 %v374, 124
      %v402 = vpop.permute.xlu0 %401
      %403 = vrot.lane.b32.xlu0 %v375, 124
      %v404 = vpop.permute.xlu0 %403
      %405 = vrot.lane.b32.xlu0 %v376, 124
      %v406 = vpop.permute.xlu0 %405
      %407 = vrot.lane.b32.xlu0 %v377, 124
      %v408 = vpop.permute.xlu0 %407
      %409 = vrot.lane.b32.xlu0 %v378, 124
      %v410 = vpop.permute.xlu0 %409
      %411 = vrot.lane.b32.xlu0 %v379, 124
      %v412 = vpop.permute.xlu0 %411
      %413 = vrot.lane.b32.xlu0 %v380, 124
      %v414 = vpop.permute.xlu0 %413
      %415 = vrot.lane.b32.xlu0 %v381, 124
      %v416 = vpop.permute.xlu0 %415
      %417 = vrot.lane.b32.xlu0 %v382, 124
      %v418 = vpop.permute.xlu0 %417
      %v419 = vrot.slane %v396, 4
      %v420 = vrot.slane %v398, 4
      %v421 = vrot.slane %v400, 4
      %v422 = vrot.slane %v402, 4
      %v423 = vrot.slane %v404, 4
      %v424 = vrot.slane %v406, 4
      %v425 = vrot.slane %v408, 4
      %v426 = vrot.slane %v410, 4
      %v427 = vrot.slane %v412, 4
      %v428 = vrot.slane %v414, 4
      %v429 = vrot.slane %v416, 4
      %v430 = vrot.slane %v418, 4
      %v431 = vsel %vm337, %v419, %v420
      %vm432 = vcmask 1014784
      %v433 = vsel %vm432, %v396, %v431
      %v434 = vsel %vm337, %v420, %v421
      %v435 = vsel %vm432, %v398, %v434
      %v436 = vsel %vm337, %v422, %v423
      %v437 = vsel %vm432, %v402, %v436
      %v438 = vsel %vm337, %v423, %v424
      %v439 = vsel %vm432, %v404, %v438
      %v440 = vsel %vm337, %v425, %v426
      %v441 = vsel %vm432, %v408, %v440
      %v442 = vsel %vm337, %v426, %v427
      %v443 = vsel %vm432, %v410, %v442
      %v444 = vsel %vm337, %v428, %v429
      %v445 = vsel %vm432, %v414, %v444
      %v446 = vsel %vm337, %v429, %v430
      %v447 = vsel %vm432, %v416, %v446
      %456 = vst [vmem:[#allocation2 + $0x100] sm:$0xff] %v433
      %457 = vst [vmem:[#allocation2 + $0x108] sm:$0xff] %v435
      %458 = vst [vmem:[#allocation2 + $0x120] sm:$0xff] %v437
      %459 = vst [vmem:[#allocation2 + $0x128] sm:$0xff] %v439
      %460 = vst [vmem:[#allocation2 + $0x140] sm:$0xff] %v441
      %461 = vst [vmem:[#allocation2 + $0x148] sm:$0xff] %v443
      %462 = vst [vmem:[#allocation2 + $0x160] sm:$0xff] %v445
      %463 = vst [vmem:[#allocation2 + $0x168] sm:$0xff] %v447
      %v464 = vld [vmem:[%s251] sm:$0xff]
      %v465 = vld [vmem:[%s251 + $0x8] sm:$0xff]
      %v466 = vld [vmem:[%s251 + $0x10] sm:$0xf]
      %v467 = vld [vmem:[%s251 + $0x14] sm:$0xff]
      %v468 = vld [vmem:[%s251 + $0x1c] sm:$0xff]
      %v469 = vld [vmem:[%s251 + $0x24] sm:$0xf]
      %v470 = vld [vmem:[%s251 + $0x28] sm:$0xff]
      %v471 = vld [vmem:[%s251 + $0x30] sm:$0xff]
      %v472 = vld [vmem:[%s251 + $0x38] sm:$0xf]
      %v473 = vld [vmem:[%s251 + $0x3c] sm:$0xff]
      %v474 = vld [vmem:[%s251 + $0x44] sm:$0xff]
      %v475 = vld [vmem:[%s251 + $0x4c] sm:$0xf]
      %488 = vrot.lane.b32.xlu0 %v464, 84
      %v489 = vpop.permute.xlu0 %488
      %490 = vrot.lane.b32.xlu0 %v465, 84
      %v491 = vpop.permute.xlu0 %490
      %492 = vrot.lane.b32.xlu0 %v466, 84
      %v493 = vpop.permute.xlu0 %492
      %494 = vrot.lane.b32.xlu0 %v467, 84
      %v495 = vpop.permute.xlu0 %494
      %496 = vrot.lane.b32.xlu0 %v468, 84
      %v497 = vpop.permute.xlu0 %496
      %498 = vrot.lane.b32.xlu0 %v469, 84
      %v499 = vpop.permute.xlu0 %498
      %500 = vrot.lane.b32.xlu0 %v470, 84
      %v501 = vpop.permute.xlu0 %500
      %502 = vrot.lane.b32.xlu0 %v471, 84
      %v503 = vpop.permute.xlu0 %502
      %504 = vrot.lane.b32.xlu0 %v472, 84
      %v505 = vpop.permute.xlu0 %504
      %506 = vrot.lane.b32.xlu0 %v473, 84
      %v507 = vpop.permute.xlu0 %506
      %508 = vrot.lane.b32.xlu0 %v474, 84
      %v509 = vpop.permute.xlu0 %508
      %510 = vrot.lane.b32.xlu0 %v475, 84
      %v511 = vpop.permute.xlu0 %510
      %v512 = vrot.slane %v489, 4
      %v513 = vrot.slane %v491, 4
      %v514 = vrot.slane %v493, 4
      %v515 = vrot.slane %v495, 4
      %v516 = vrot.slane %v497, 4
      %v517 = vrot.slane %v499, 4
      %v518 = vrot.slane %v501, 4
      %v519 = vrot.slane %v503, 4
      %v520 = vrot.slane %v505, 4
      %v521 = vrot.slane %v507, 4
      %v522 = vrot.slane %v509, 4
      %v523 = vrot.slane %v511, 4
      %v524 = vsel %vm337, %v512, %v513
      %vm525 = vcmask 687104
      %v526 = vsel %vm525, %v489, %v524
      %v527 = vsel %vm337, %v513, %v514
      %v528 = vsel %vm525, %v491, %v527
      %v529 = vsel %vm337, %v515, %v516
      %v530 = vsel %vm525, %v495, %v529
      %v531 = vsel %vm337, %v516, %v517
      %v532 = vsel %vm525, %v497, %v531
      %v533 = vsel %vm337, %v518, %v519
      %v534 = vsel %vm525, %v501, %v533
      %v535 = vsel %vm337, %v519, %v520
      %v536 = vsel %vm525, %v503, %v535
      %v537 = vsel %vm337, %v521, %v522
      %v538 = vsel %vm525, %v507, %v537
      %v539 = vsel %vm337, %v522, %v523
      %v540 = vsel %vm525, %v509, %v539
      %549 = vst [vmem:[#allocation2 + $0x180] sm:$0xff] %v526
      %550 = vst [vmem:[#allocation2 + $0x188] sm:$0xff] %v528
      %551 = vst [vmem:[#allocation2 + $0x1a0] sm:$0xff] %v530
      %552 = vst [vmem:[#allocation2 + $0x1a8] sm:$0xff] %v532
      %553 = vst [vmem:[#allocation2 + $0x1c0] sm:$0xff] %v534
      %554 = vst [vmem:[#allocation2 + $0x1c8] sm:$0xff] %v536
      %555 = vst [vmem:[#allocation2 + $0x1e0] sm:$0xff] %v538
      %556 = vst [vmem:[#allocation2 + $0x1e8] sm:$0xff] %v540
      %v557 = vld [vmem:[%s251] sm:$0xff]
      %v558 = vld [vmem:[%s251 + $0x8] sm:$0xff]
      %v559 = vld [vmem:[%s251 + $0x10] sm:$0xf]
      %v560 = vld [vmem:[%s251 + $0x14] sm:$0xff]
      %v561 = vld [vmem:[%s251 + $0x1c] sm:$0xff]
      %v562 = vld [vmem:[%s251 + $0x24] sm:$0xf]
      %v563 = vld [vmem:[%s251 + $0x28] sm:$0xff]
      %v564 = vld [vmem:[%s251 + $0x30] sm:$0xff]
      %v565 = vld [vmem:[%s251 + $0x38] sm:$0xf]
      %v566 = vld [vmem:[%s251 + $0x3c] sm:$0xff]
      %v567 = vld [vmem:[%s251 + $0x44] sm:$0xff]
      %v568 = vld [vmem:[%s251 + $0x4c] sm:$0xf]
      %581 = vrot.lane.b32.xlu0 %v557, 82
      %v582 = vpop.permute.xlu0 %581
      %583 = vrot.lane.b32.xlu0 %v558, 82
      %v584 = vpop.permute.xlu0 %583
      %585 = vrot.lane.b32.xlu0 %v559, 82
      %v586 = vpop.permute.xlu0 %585
      %587 = vrot.lane.b32.xlu0 %v560, 82
      %v588 = vpop.permute.xlu0 %587
      %589 = vrot.lane.b32.xlu0 %v561, 82
      %v590 = vpop.permute.xlu0 %589
      %591 = vrot.lane.b32.xlu0 %v562, 82
      %v592 = vpop.permute.xlu0 %591
      %593 = vrot.lane.b32.xlu0 %v563, 82
      %v594 = vpop.permute.xlu0 %593
      %595 = vrot.lane.b32.xlu0 %v564, 82
      %v596 = vpop.permute.xlu0 %595
      %597 = vrot.lane.b32.xlu0 %v565, 82
      %v598 = vpop.permute.xlu0 %597
      %599 = vrot.lane.b32.xlu0 %v566, 82
      %v600 = vpop.permute.xlu0 %599
      %601 = vrot.lane.b32.xlu0 %v567, 82
      %v602 = vpop.permute.xlu0 %601
      %603 = vrot.lane.b32.xlu0 %v568, 82
      %v604 = vpop.permute.xlu0 %603
      %v605 = vrot.slane %v582, 4
      %v606 = vrot.slane %v584, 4
      %v607 = vrot.slane %v586, 4
      %v608 = vrot.slane %v588, 4
      %v609 = vrot.slane %v590, 4
      %v610 = vrot.slane %v592, 4
      %v611 = vrot.slane %v594, 4
      %v612 = vrot.slane %v596, 4
      %v613 = vrot.slane %v598, 4
      %v614 = vrot.slane %v600, 4
      %v615 = vrot.slane %v602, 4
      %v616 = vrot.slane %v604, 4
      %v617 = vsel %vm337, %v605, %v606
      %vm618 = vcmask 670720
      %v619 = vsel %vm618, %v582, %v617
      %v620 = vsel %vm337, %v606, %v607
      %v621 = vsel %vm618, %v584, %v620
      %v622 = vsel %vm337, %v608, %v609
      %v623 = vsel %vm618, %v588, %v622
      %v624 = vsel %vm337, %v609, %v610
      %v625 = vsel %vm618, %v590, %v624
      %v626 = vsel %vm337, %v611, %v612
      %v627 = vsel %vm618, %v594, %v626
      %v628 = vsel %vm337, %v612, %v613
      %v629 = vsel %vm618, %v596, %v628
      %v630 = vsel %vm337, %v614, %v615
      %v631 = vsel %vm618, %v600, %v630
      %v632 = vsel %vm337, %v615, %v616
      %v633 = vsel %vm618, %v602, %v632
      %642 = vst [vmem:[#allocation2 + $0x200] sm:$0xff] %v619
      %643 = vst [vmem:[#allocation2 + $0x208] sm:$0xff] %v621
      %644 = vst [vmem:[#allocation2 + $0x220] sm:$0xff] %v623
      %645 = vst [vmem:[#allocation2 + $0x228] sm:$0xff] %v625
      %646 = vst [vmem:[#allocation2 + $0x240] sm:$0xff] %v627
      %647 = vst [vmem:[#allocation2 + $0x248] sm:$0xff] %v629
      %648 = vst [vmem:[#allocation2 + $0x260] sm:$0xff] %v631
      %649 = vst [vmem:[#allocation2 + $0x268] sm:$0xff] %v633
      %v650 = vld [vmem:[%s251] sm:$0xff]
      %v651 = vld [vmem:[%s251 + $0x8] sm:$0xff]
      %v652 = vld [vmem:[%s251 + $0x10] sm:$0xf]
      %v653 = vld [vmem:[%s251 + $0x14] sm:$0xff]
      %v654 = vld [vmem:[%s251 + $0x1c] sm:$0xff]
      %v655 = vld [vmem:[%s251 + $0x24] sm:$0xf]
      %v656 = vld [vmem:[%s251 + $0x28] sm:$0xff]
      %v657 = vld [vmem:[%s251 + $0x30] sm:$0xff]
      %v658 = vld [vmem:[%s251 + $0x38] sm:$0xf]
      %v659 = vld [vmem:[%s251 + $0x3c] sm:$0xff]
      %v660 = vld [vmem:[%s251 + $0x44] sm:$0xff]
      %v661 = vld [vmem:[%s251 + $0x4c] sm:$0xf]
      %674 = vrot.lane.b32.xlu0 %v650, 80
      %v675 = vpop.permute.xlu0 %674
      %676 = vrot.lane.b32.xlu0 %v651, 80
      %v677 = vpop.permute.xlu0 %676
      %678 = vrot.lane.b32.xlu0 %v652, 80
      %v679 = vpop.permute.xlu0 %678
      %680 = vrot.lane.b32.xlu0 %v653, 80
      %v681 = vpop.permute.xlu0 %680
      %682 = vrot.lane.b32.xlu0 %v654, 80
      %v683 = vpop.permute.xlu0 %682
      %684 = vrot.lane.b32.xlu0 %v655, 80
      %v685 = vpop.permute.xlu0 %684
      %686 = vrot.lane.b32.xlu0 %v656, 80
      %v687 = vpop.permute.xlu0 %686
      %688 = vrot.lane.b32.xlu0 %v657, 80
      %v689 = vpop.permute.xlu0 %688
      %690 = vrot.lane.b32.xlu0 %v658, 80
      %v691 = vpop.permute.xlu0 %690
      %692 = vrot.lane.b32.xlu0 %v659, 80
      %v693 = vpop.permute.xlu0 %692
      %694 = vrot.lane.b32.xlu0 %v660, 80
      %v695 = vpop.permute.xlu0 %694
      %696 = vrot.lane.b32.xlu0 %v661, 80
      %v697 = vpop.permute.xlu0 %696
      %v698 = vrot.slane %v675, 4
      %v699 = vrot.slane %v677, 4
      %v700 = vrot.slane %v679, 4
      %v701 = vrot.slane %v681, 4
      %v702 = vrot.slane %v683, 4
      %v703 = vrot.slane %v685, 4
      %v704 = vrot.slane %v687, 4
      %v705 = vrot.slane %v689, 4
      %v706 = vrot.slane %v691, 4
      %v707 = vrot.slane %v693, 4
      %v708 = vrot.slane %v695, 4
      %v709 = vrot.slane %v697, 4
      %v710 = vsel %vm337, %v698, %v699
      %vm711 = vcmask 654336
      %v712 = vsel %vm711, %v675, %v710
      %v713 = vsel %vm337, %v699, %v700
      %v714 = vsel %vm711, %v677, %v713
      %v715 = vsel %vm337, %v701, %v702
      %v716 = vsel %vm711, %v681, %v715
      %v717 = vsel %vm337, %v702, %v703
      %v718 = vsel %vm711, %v683, %v717
      %v719 = vsel %vm337, %v704, %v705
      %v720 = vsel %vm711, %v687, %v719
      %v721 = vsel %vm337, %v705, %v706
      %v722 = vsel %vm711, %v689, %v721
      %v723 = vsel %vm337, %v707, %v708
      %v724 = vsel %vm711, %v693, %v723
      %v725 = vsel %vm337, %v708, %v709
      %v726 = vsel %vm711, %v695, %v725
      %735 = vst [vmem:[#allocation2 + $0x280] sm:$0xff] %v712
      %736 = vst [vmem:[#allocation2 + $0x288] sm:$0xff] %v714
      %737 = vst [vmem:[#allocation2 + $0x2a0] sm:$0xff] %v716
      %738 = vst [vmem:[#allocation2 + $0x2a8] sm:$0xff] %v718
      %739 = vst [vmem:[#allocation2 + $0x2c0] sm:$0xff] %v720
      %740 = vst [vmem:[#allocation2 + $0x2c8] sm:$0xff] %v722
      %741 = vst [vmem:[#allocation2 + $0x2e0] sm:$0xff] %v724
      %742 = vst [vmem:[#allocation2 + $0x2e8] sm:$0xff] %v726
      %v743 = vld [vmem:[%s251] sm:$0xff]
      %v744 = vld [vmem:[%s251 + $0x8] sm:$0xff]
      %v745 = vld [vmem:[%s251 + $0x10] sm:$0xf]
      %v746 = vld [vmem:[%s251 + $0x14] sm:$0xff]
      %v747 = vld [vmem:[%s251 + $0x1c] sm:$0xff]
      %v748 = vld [vmem:[%s251 + $0x24] sm:$0xf]
      %v749 = vld [vmem:[%s251 + $0x28] sm:$0xff]
      %v750 = vld [vmem:[%s251 + $0x30] sm:$0xff]
      %v751 = vld [vmem:[%s251 + $0x38] sm:$0xf]
      %v752 = vld [vmem:[%s251 + $0x3c] sm:$0xff]
      %v753 = vld [vmem:[%s251 + $0x44] sm:$0xff]
      %v754 = vld [vmem:[%s251 + $0x4c] sm:$0xf]
      %767 = vrot.lane.b32.xlu0 %v743, 40
      %v768 = vpop.permute.xlu0 %767
      %769 = vrot.lane.b32.xlu0 %v744, 40
      %v770 = vpop.permute.xlu0 %769
      %771 = vrot.lane.b32.xlu0 %v745, 40
      %v772 = vpop.permute.xlu0 %771
      %773 = vrot.lane.b32.xlu0 %v746, 40
      %v774 = vpop.permute.xlu0 %773
      %775 = vrot.lane.b32.xlu0 %v747, 40
      %v776 = vpop.permute.xlu0 %775
      %777 = vrot.lane.b32.xlu0 %v748, 40
      %v778 = vpop.permute.xlu0 %777
      %779 = vrot.lane.b32.xlu0 %v749, 40
      %v780 = vpop.permute.xlu0 %779
      %781 = vrot.lane.b32.xlu0 %v750, 40
      %v782 = vpop.permute.xlu0 %781
      %783 = vrot.lane.b32.xlu0 %v751, 40
      %v784 = vpop.permute.xlu0 %783
      %785 = vrot.lane.b32.xlu0 %v752, 40
      %v786 = vpop.permute.xlu0 %785
      %787 = vrot.lane.b32.xlu0 %v753, 40
      %v788 = vpop.permute.xlu0 %787
      %789 = vrot.lane.b32.xlu0 %v754, 40
      %v790 = vpop.permute.xlu0 %789
      %v791 = vrot.slane %v768, 4
      %v792 = vrot.slane %v770, 4
      %v793 = vrot.slane %v772, 4
      %v794 = vrot.slane %v774, 4
      %v795 = vrot.slane %v776, 4
      %v796 = vrot.slane %v778, 4
      %v797 = vrot.slane %v780, 4
      %v798 = vrot.slane %v782, 4
      %v799 = vrot.slane %v784, 4
      %v800 = vrot.slane %v786, 4
      %v801 = vrot.slane %v788, 4
      %v802 = vrot.slane %v790, 4
      %v803 = vsel %vm337, %v791, %v792
      %vm804 = vcmask 326656
      %v805 = vsel %vm804, %v768, %v803
      %v806 = vsel %vm337, %v792, %v793
      %v807 = vsel %vm804, %v770, %v806
      %v808 = vsel %vm337, %v794, %v795
      %v809 = vsel %vm804, %v774, %v808
      %v810 = vsel %vm337, %v795, %v796
      %v811 = vsel %vm804, %v776, %v810
      %v812 = vsel %vm337, %v797, %v798
      %v813 = vsel %vm804, %v780, %v812
      %v814 = vsel %vm337, %v798, %v799
      %v815 = vsel %vm804, %v782, %v814
      %v816 = vsel %vm337, %v800, %v801
      %v817 = vsel %vm804, %v786, %v816
      %v818 = vsel %vm337, %v801, %v802
      %v819 = vsel %vm804, %v788, %v818
      %828 = vst [vmem:[#allocation2 + $0x300] sm:$0xff] %v805
      %829 = vst [vmem:[#allocation2 + $0x308] sm:$0xff] %v807
      %830 = vst [vmem:[#allocation2 + $0x320] sm:$0xff] %v809
      %831 = vst [vmem:[#allocation2 + $0x328] sm:$0xff] %v811
      %832 = vst [vmem:[#allocation2 + $0x340] sm:$0xff] %v813
      %833 = vst [vmem:[#allocation2 + $0x348] sm:$0xff] %v815
      %834 = vst [vmem:[#allocation2 + $0x360] sm:$0xff] %v817
      %835 = vst [vmem:[#allocation2 + $0x368] sm:$0xff] %v819
      %v836 = vld [vmem:[%s251] sm:$0xff]
      %v837 = vld [vmem:[%s251 + $0x8] sm:$0xff]
      %v838 = vld [vmem:[%s251 + $0x10] sm:$0xf]
      %v839 = vld [vmem:[%s251 + $0x14] sm:$0xff]
      %v840 = vld [vmem:[%s251 + $0x1c] sm:$0xff]
      %v841 = vld [vmem:[%s251 + $0x24] sm:$0xf]
      %v842 = vld [vmem:[%s251 + $0x28] sm:$0xff]
      %v843 = vld [vmem:[%s251 + $0x30] sm:$0xff]
      %v844 = vld [vmem:[%s251 + $0x38] sm:$0xf]
      %v845 = vld [vmem:[%s251 + $0x3c] sm:$0xff]
      %v846 = vld [vmem:[%s251 + $0x44] sm:$0xff]
      %v847 = vld [vmem:[%s251 + $0x4c] sm:$0xf]
      %860 = vrot.lane.b32.xlu0 %v836, 38
      %v861 = vpop.permute.xlu0 %860
      %862 = vrot.lane.b32.xlu0 %v837, 38
      %v863 = vpop.permute.xlu0 %862
      %864 = vrot.lane.b32.xlu0 %v838, 38
      %v865 = vpop.permute.xlu0 %864
      %866 = vrot.lane.b32.xlu0 %v839, 38
      %v867 = vpop.permute.xlu0 %866
      %868 = vrot.lane.b32.xlu0 %v840, 38
      %v869 = vpop.permute.xlu0 %868
      %870 = vrot.lane.b32.xlu0 %v841, 38
      %v871 = vpop.permute.xlu0 %870
      %872 = vrot.lane.b32.xlu0 %v842, 38
      %v873 = vpop.permute.xlu0 %872
      %874 = vrot.lane.b32.xlu0 %v843, 38
      %v875 = vpop.permute.xlu0 %874
      %876 = vrot.lane.b32.xlu0 %v844, 38
      %v877 = vpop.permute.xlu0 %876
      %878 = vrot.lane.b32.xlu0 %v845, 38
      %v879 = vpop.permute.xlu0 %878
      %880 = vrot.lane.b32.xlu0 %v846, 38
      %v881 = vpop.permute.xlu0 %880
      %882 = vrot.lane.b32.xlu0 %v847, 38
      %v883 = vpop.permute.xlu0 %882
      %v884 = vrot.slane %v861, 4
      %v885 = vrot.slane %v863, 4
      %v886 = vrot.slane %v865, 4
      %v887 = vrot.slane %v867, 4
      %v888 = vrot.slane %v869, 4
      %v889 = vrot.slane %v871, 4
      %v890 = vrot.slane %v873, 4
      %v891 = vrot.slane %v875, 4
      %v892 = vrot.slane %v877, 4
      %v893 = vrot.slane %v879, 4
      %v894 = vrot.slane %v881, 4
      %v895 = vrot.slane %v883, 4
      %v896 = vsel %vm337, %v884, %v885
      %vm897 = vcmask 310272
      %v898 = vsel %vm897, %v861, %v896
      %v899 = vsel %vm337, %v885, %v886
      %v900 = vsel %vm897, %v863, %v899
      %v901 = vsel %vm337, %v887, %v888
      %v902 = vsel %vm897, %v867, %v901
      %v903 = vsel %vm337, %v888, %v889
      %v904 = vsel %vm897, %v869, %v903
      %v905 = vsel %vm337, %v890, %v891
      %v906 = vsel %vm897, %v873, %v905
      %v907 = vsel %vm337, %v891, %v892
      %v908 = vsel %vm897, %v875, %v907
      %v909 = vsel %vm337, %v893, %v894
      %v910 = vsel %vm897, %v879, %v909
      %v911 = vsel %vm337, %v894, %v895
      %v912 = vsel %vm897, %v881, %v911
      %921 = vst [vmem:[#allocation2 + $0x380] sm:$0xff] %v898
      %922 = vst [vmem:[#allocation2 + $0x388] sm:$0xff] %v900
      %923 = vst [vmem:[#allocation2 + $0x3a0] sm:$0xff] %v902
      %924 = vst [vmem:[#allocation2 + $0x3a8] sm:$0xff] %v904
      %925 = vst [vmem:[#allocation2 + $0x3c0] sm:$0xff] %v906
      %926 = vst [vmem:[#allocation2 + $0x3c8] sm:$0xff] %v908
      %927 = vst [vmem:[#allocation2 + $0x3e0] sm:$0xff] %v910
      %928 = vst [vmem:[#allocation2 + $0x3e8] sm:$0xff] %v912
      %v929 = vld [vmem:[%s251] sm:$0xff]
      %v930 = vld [vmem:[%s251 + $0x8] sm:$0xff]
      %v931 = vld [vmem:[%s251 + $0x10] sm:$0xf]
      %v932 = vld [vmem:[%s251 + $0x14] sm:$0xff]
      %v933 = vld [vmem:[%s251 + $0x1c] sm:$0xff]
      %v934 = vld [vmem:[%s251 + $0x24] sm:$0xf]
      %v935 = vld [vmem:[%s251 + $0x28] sm:$0xff]
      %v936 = vld [vmem:[%s251 + $0x30] sm:$0xff]
      %v937 = vld [vmem:[%s251 + $0x38] sm:$0xf]
      %v938 = vld [vmem:[%s251 + $0x3c] sm:$0xff]
      %v939 = vld [vmem:[%s251 + $0x44] sm:$0xff]
      %v940 = vld [vmem:[%s251 + $0x4c] sm:$0xf]
      %953 = vrot.lane.b32.xlu0 %v929, 36
      %v954 = vpop.permute.xlu0 %953
      %955 = vrot.lane.b32.xlu0 %v930, 36
      %v956 = vpop.permute.xlu0 %955
      %957 = vrot.lane.b32.xlu0 %v931, 36
      %v958 = vpop.permute.xlu0 %957
      %959 = vrot.lane.b32.xlu0 %v932, 36
      %v960 = vpop.permute.xlu0 %959
      %961 = vrot.lane.b32.xlu0 %v933, 36
      %v962 = vpop.permute.xlu0 %961
      %963 = vrot.lane.b32.xlu0 %v934, 36
      %v964 = vpop.permute.xlu0 %963
      %965 = vrot.lane.b32.xlu0 %v935, 36
      %v966 = vpop.permute.xlu0 %965
      %967 = vrot.lane.b32.xlu0 %v936, 36
      %v968 = vpop.permute.xlu0 %967
      %969 = vrot.lane.b32.xlu0 %v937, 36
      %v970 = vpop.permute.xlu0 %969
      %971 = vrot.lane.b32.xlu0 %v938, 36
      %v972 = vpop.permute.xlu0 %971
      %973 = vrot.lane.b32.xlu0 %v939, 36
      %v974 = vpop.permute.xlu0 %973
      %975 = vrot.lane.b32.xlu0 %v940, 36
      %v976 = vpop.permute.xlu0 %975
      %v977 = vrot.slane %v954, 4
      %v978 = vrot.slane %v956, 4
      %v979 = vrot.slane %v958, 4
      %v980 = vrot.slane %v960, 4
      %v981 = vrot.slane %v962, 4
      %v982 = vrot.slane %v964, 4
      %v983 = vrot.slane %v966, 4
      %v984 = vrot.slane %v968, 4
      %v985 = vrot.slane %v970, 4
      %v986 = vrot.slane %v972, 4
      %v987 = vrot.slane %v974, 4
      %v988 = vrot.slane %v976, 4
      %v989 = vsel %vm337, %v977, %v978
      %vm990 = vcmask 293888
      %v991 = vsel %vm990, %v954, %v989
      %v992 = vsel %vm337, %v978, %v979
      %v993 = vsel %vm990, %v956, %v992
      %v994 = vsel %vm337, %v980, %v981
      %v995 = vsel %vm990, %v960, %v994
      %v996 = vsel %vm337, %v981, %v982
      %v997 = vsel %vm990, %v962, %v996
      %v998 = vsel %vm337, %v983, %v984
      %v999 = vsel %vm990, %v966, %v998
      %v1000 = vsel %vm337, %v984, %v985
      %v1001 = vsel %vm990, %v968, %v1000
      %v1002 = vsel %vm337, %v986, %v987
      %v1003 = vsel %vm990, %v972, %v1002
      %v1004 = vsel %vm337, %v987, %v988
      %v1005 = vsel %vm990, %v974, %v1004
      %1014 = vst [vmem:[#allocation2 + $0x400] sm:$0xff] %v991
      %1015 = vst [vmem:[#allocation2 + $0x408] sm:$0xff] %v993
      %1016 = vst [vmem:[#allocation2 + $0x420] sm:$0xff] %v995
      %1017 = vst [vmem:[#allocation2 + $0x428] sm:$0xff] %v997
      %1018 = vst [vmem:[#allocation2 + $0x440] sm:$0xff] %v999
      %1019 = vst [vmem:[#allocation2 + $0x448] sm:$0xff] %v1001
      %1020 = vst [vmem:[#allocation2 + $0x460] sm:$0xff] %v1003
      %1021 = vst [vmem:[#allocation2 + $0x468] sm:$0xff] %v1005
      %s1022 = scalar_lea.vmem %s251, 80
      %v1023 = vld [vmem:[%s1022] sm:$0xff]
      %v1024 = vld [vmem:[%s1022 + $0x8] sm:$0xff]
      %v1025 = vld [vmem:[%s1022 + $0x14] sm:$0xff]
      %v1026 = vld [vmem:[%s1022 + $0x1c] sm:$0xff]
      %v1027 = vld [vmem:[%s1022 + $0x28] sm:$0xff]
      %v1028 = vld [vmem:[%s1022 + $0x30] sm:$0xff]
      %v1029 = vld [vmem:[%s1022 + $0x3c] sm:$0xff]
      %v1030 = vld [vmem:[%s1022 + $0x44] sm:$0xff]
      %1031 = vst [vmem:[#allocation2 + $0x10] sm:$0xff] %v1023
      %1032 = vst [vmem:[#allocation2 + $0x18] sm:$0xff] %v1024
      %1033 = vst [vmem:[#allocation2 + $0x30] sm:$0xff] %v1025
      %1034 = vst [vmem:[#allocation2 + $0x38] sm:$0xff] %v1026
      %1035 = vst [vmem:[#allocation2 + $0x50] sm:$0xff] %v1027
      %1036 = vst [vmem:[#allocation2 + $0x58] sm:$0xff] %v1028
      %1037 = vst [vmem:[#allocation2 + $0x70] sm:$0xff] %v1029
      %1038 = vst [vmem:[#allocation2 + $0x78] sm:$0xff] %v1030
      %v1039 = vld [vmem:[%s1022] sm:$0xff]
      %v1040 = vld [vmem:[%s1022 + $0x8] sm:$0xff]
      %v1041 = vld [vmem:[%s1022 + $0x10] sm:$0xf]
      %v1042 = vld [vmem:[%s1022 + $0x14] sm:$0xff]
      %v1043 = vld [vmem:[%s1022 + $0x1c] sm:$0xff]
      %v1044 = vld [vmem:[%s1022 + $0x24] sm:$0xf]
      %v1045 = vld [vmem:[%s1022 + $0x28] sm:$0xff]
      %v1046 = vld [vmem:[%s1022 + $0x30] sm:$0xff]
      %v1047 = vld [vmem:[%s1022 + $0x38] sm:$0xf]
      %v1048 = vld [vmem:[%s1022 + $0x3c] sm:$0xff]
      %v1049 = vld [vmem:[%s1022 + $0x44] sm:$0xff]
      %v1050 = vld [vmem:[%s1022 + $0x4c] sm:$0xf]
      %1063 = vrot.lane.b32.xlu0 %v1039, 126
      %v1064 = vpop.permute.xlu0 %1063
      %1065 = vrot.lane.b32.xlu0 %v1040, 126
      %v1066 = vpop.permute.xlu0 %1065
      %1067 = vrot.lane.b32.xlu0 %v1041, 126
      %v1068 = vpop.permute.xlu0 %1067
      %1069 = vrot.lane.b32.xlu0 %v1042, 126
      %v1070 = vpop.permute.xlu0 %1069
      %1071 = vrot.lane.b32.xlu0 %v1043, 126
      %v1072 = vpop.permute.xlu0 %1071
      %1073 = vrot.lane.b32.xlu0 %v1044, 126
      %v1074 = vpop.permute.xlu0 %1073
      %1075 = vrot.lane.b32.xlu0 %v1045, 126
      %v1076 = vpop.permute.xlu0 %1075
      %1077 = vrot.lane.b32.xlu0 %v1046, 126
      %v1078 = vpop.permute.xlu0 %1077
      %1079 = vrot.lane.b32.xlu0 %v1047, 126
      %v1080 = vpop.permute.xlu0 %1079
      %1081 = vrot.lane.b32.xlu0 %v1048, 126
      %v1082 = vpop.permute.xlu0 %1081
      %1083 = vrot.lane.b32.xlu0 %v1049, 126
      %v1084 = vpop.permute.xlu0 %1083
      %1085 = vrot.lane.b32.xlu0 %v1050, 126
      %v1086 = vpop.permute.xlu0 %1085
      %v1087 = vrot.slane %v1064, 4
      %v1088 = vrot.slane %v1066, 4
      %v1089 = vrot.slane %v1068, 4
      %v1090 = vrot.slane %v1070, 4
      %v1091 = vrot.slane %v1072, 4
      %v1092 = vrot.slane %v1074, 4
      %v1093 = vrot.slane %v1076, 4
      %v1094 = vrot.slane %v1078, 4
      %v1095 = vrot.slane %v1080, 4
      %v1096 = vrot.slane %v1082, 4
      %v1097 = vrot.slane %v1084, 4
      %v1098 = vrot.slane %v1086, 4
      %v1099 = vsel %vm337, %v1087, %v1088
      %v1100 = vsel %vm339, %v1064, %v1099
      %v1101 = vsel %vm337, %v1088, %v1089
      %v1102 = vsel %vm339, %v1066, %v1101
      %v1103 = vsel %vm337, %v1090, %v1091
      %v1104 = vsel %vm339, %v1070, %v1103
      %v1105 = vsel %vm337, %v1091, %v1092
      %v1106 = vsel %vm339, %v1072, %v1105
      %v1107 = vsel %vm337, %v1093, %v1094
      %v1108 = vsel %vm339, %v1076, %v1107
      %v1109 = vsel %vm337, %v1094, %v1095
      %v1110 = vsel %vm339, %v1078, %v1109
      %v1111 = vsel %vm337, %v1096, %v1097
      %v1112 = vsel %vm339, %v1082, %v1111
      %v1113 = vsel %vm337, %v1097, %v1098
      %v1114 = vsel %vm339, %v1084, %v1113
      %1123 = vst [vmem:[#allocation2 + $0x90] sm:$0xff] %v1100
      %1124 = vst [vmem:[#allocation2 + $0x98] sm:$0xff] %v1102
      %1125 = vst [vmem:[#allocation2 + $0xb0] sm:$0xff] %v1104
      %1126 = vst [vmem:[#allocation2 + $0xb8] sm:$0xff] %v1106
      %1127 = vst [vmem:[#allocation2 + $0xd0] sm:$0xff] %v1108
      %1128 = vst [vmem:[#allocation2 + $0xd8] sm:$0xff] %v1110
      %1129 = vst [vmem:[#allocation2 + $0xf0] sm:$0xff] %v1112
      %1130 = vst [vmem:[#allocation2 + $0xf8] sm:$0xff] %v1114
      %v1131 = vld [vmem:[%s1022] sm:$0xff]
      %v1132 = vld [vmem:[%s1022 + $0x8] sm:$0xff]
      %v1133 = vld [vmem:[%s1022 + $0x10] sm:$0xf]
      %v1134 = vld [vmem:[%s1022 + $0x14] sm:$0xff]
      %v1135 = vld [vmem:[%s1022 + $0x1c] sm:$0xff]
      %v1136 = vld [vmem:[%s1022 + $0x24] sm:$0xf]
      %v1137 = vld [vmem:[%s1022 + $0x28] sm:$0xff]
      %v1138 = vld [vmem:[%s1022 + $0x30] sm:$0xff]
      %v1139 = vld [vmem:[%s1022 + $0x38] sm:$0xf]
      %v1140 = vld [vmem:[%s1022 + $0x3c] sm:$0xff]
      %v1141 = vld [vmem:[%s1022 + $0x44] sm:$0xff]
      %v1142 = vld [vmem:[%s1022 + $0x4c] sm:$0xf]
      %1155 = vrot.lane.b32.xlu0 %v1131, 124
      %v1156 = vpop.permute.xlu0 %1155
      %1157 = vrot.lane.b32.xlu0 %v1132, 124
      %v1158 = vpop.permute.xlu0 %1157
      %1159 = vrot.lane.b32.xlu0 %v1133, 124
      %v1160 = vpop.permute.xlu0 %1159
      %1161 = vrot.lane.b32.xlu0 %v1134, 124
      %v1162 = vpop.permute.xlu0 %1161
      %1163 = vrot.lane.b32.xlu0 %v1135, 124
      %v1164 = vpop.permute.xlu0 %1163
      %1165 = vrot.lane.b32.xlu0 %v1136, 124
      %v1166 = vpop.permute.xlu0 %1165
      %1167 = vrot.lane.b32.xlu0 %v1137, 124
      %v1168 = vpop.permute.xlu0 %1167
      %1169 = vrot.lane.b32.xlu0 %v1138, 124
      %v1170 = vpop.permute.xlu0 %1169
      %1171 = vrot.lane.b32.xlu0 %v1139, 124
      %v1172 = vpop.permute.xlu0 %1171
      %1173 = vrot.lane.b32.xlu0 %v1140, 124
      %v1174 = vpop.permute.xlu0 %1173
      %1175 = vrot.lane.b32.xlu0 %v1141, 124
      %v1176 = vpop.permute.xlu0 %1175
      %1177 = vrot.lane.b32.xlu0 %v1142, 124
      %v1178 = vpop.permute.xlu0 %1177
      %v1179 = vrot.slane %v1156, 4
      %v1180 = vrot.slane %v1158, 4
      %v1181 = vrot.slane %v1160, 4
      %v1182 = vrot.slane %v1162, 4
      %v1183 = vrot.slane %v1164, 4
      %v1184 = vrot.slane %v1166, 4
      %v1185 = vrot.slane %v1168, 4
      %v1186 = vrot.slane %v1170, 4
      %v1187 = vrot.slane %v1172, 4
      %v1188 = vrot.slane %v1174, 4
      %v1189 = vrot.slane %v1176, 4
      %v1190 = vrot.slane %v1178, 4
      %v1191 = vsel %vm337, %v1179, %v1180
      %v1192 = vsel %vm432, %v1156, %v1191
      %v1193 = vsel %vm337, %v1180, %v1181
      %v1194 = vsel %vm432, %v1158, %v1193
      %v1195 = vsel %vm337, %v1182, %v1183
      %v1196 = vsel %vm432, %v1162, %v1195
      %v1197 = vsel %vm337, %v1183, %v1184
      %v1198 = vsel %vm432, %v1164, %v1197
      %v1199 = vsel %vm337, %v1185, %v1186
      %v1200 = vsel %vm432, %v1168, %v1199
      %v1201 = vsel %vm337, %v1186, %v1187
      %v1202 = vsel %vm432, %v1170, %v1201
      %v1203 = vsel %vm337, %v1188, %v1189
      %v1204 = vsel %vm432, %v1174, %v1203
      %v1205 = vsel %vm337, %v1189, %v1190
      %v1206 = vsel %vm432, %v1176, %v1205
      %1215 = vst [vmem:[#allocation2 + $0x110] sm:$0xff] %v1192
      %1216 = vst [vmem:[#allocation2 + $0x118] sm:$0xff] %v1194
      %1217 = vst [vmem:[#allocation2 + $0x130] sm:$0xff] %v1196
      %1218 = vst [vmem:[#allocation2 + $0x138] sm:$0xff] %v1198
      %1219 = vst [vmem:[#allocation2 + $0x150] sm:$0xff] %v1200
      %1220 = vst [vmem:[#allocation2 + $0x158] sm:$0xff] %v1202
      %1221 = vst [vmem:[#allocation2 + $0x170] sm:$0xff] %v1204
      %1222 = vst [vmem:[#allocation2 + $0x178] sm:$0xff] %v1206
      %v1223 = vld [vmem:[%s1022] sm:$0xff]
      %v1224 = vld [vmem:[%s1022 + $0x8] sm:$0xff]
      %v1225 = vld [vmem:[%s1022 + $0x10] sm:$0xf]
      %v1226 = vld [vmem:[%s1022 + $0x14] sm:$0xff]
      %v1227 = vld [vmem:[%s1022 + $0x1c] sm:$0xff]
      %v1228 = vld [vmem:[%s1022 + $0x24] sm:$0xf]
      %v1229 = vld [vmem:[%s1022 + $0x28] sm:$0xff]
      %v1230 = vld [vmem:[%s1022 + $0x30] sm:$0xff]
      %v1231 = vld [vmem:[%s1022 + $0x38] sm:$0xf]
      %v1232 = vld [vmem:[%s1022 + $0x3c] sm:$0xff]
      %v1233 = vld [vmem:[%s1022 + $0x44] sm:$0xff]
      %v1234 = vld [vmem:[%s1022 + $0x4c] sm:$0xf]
      %1247 = vrot.lane.b32.xlu0 %v1223, 84
      %v1248 = vpop.permute.xlu0 %1247
      %1249 = vrot.lane.b32.xlu0 %v1224, 84
      %v1250 = vpop.permute.xlu0 %1249
      %1251 = vrot.lane.b32.xlu0 %v1225, 84
      %v1252 = vpop.permute.xlu0 %1251
      %1253 = vrot.lane.b32.xlu0 %v1226, 84
      %v1254 = vpop.permute.xlu0 %1253
      %1255 = vrot.lane.b32.xlu0 %v1227, 84
      %v1256 = vpop.permute.xlu0 %1255
      %1257 = vrot.lane.b32.xlu0 %v1228, 84
      %v1258 = vpop.permute.xlu0 %1257
      %1259 = vrot.lane.b32.xlu0 %v1229, 84
      %v1260 = vpop.permute.xlu0 %1259
      %1261 = vrot.lane.b32.xlu0 %v1230, 84
      %v1262 = vpop.permute.xlu0 %1261
      %1263 = vrot.lane.b32.xlu0 %v1231, 84
      %v1264 = vpop.permute.xlu0 %1263
      %1265 = vrot.lane.b32.xlu0 %v1232, 84
      %v1266 = vpop.permute.xlu0 %1265
      %1267 = vrot.lane.b32.xlu0 %v1233, 84
      %v1268 = vpop.permute.xlu0 %1267
      %1269 = vrot.lane.b32.xlu0 %v1234, 84
      %v1270 = vpop.permute.xlu0 %1269
      %v1271 = vrot.slane %v1248, 4
      %v1272 = vrot.slane %v1250, 4
      %v1273 = vrot.slane %v1252, 4
      %v1274 = vrot.slane %v1254, 4
      %v1275 = vrot.slane %v1256, 4
      %v1276 = vrot.slane %v1258, 4
      %v1277 = vrot.slane %v1260, 4
      %v1278 = vrot.slane %v1262, 4
      %v1279 = vrot.slane %v1264, 4
      %v1280 = vrot.slane %v1266, 4
      %v1281 = vrot.slane %v1268, 4
      %v1282 = vrot.slane %v1270, 4
      %v1283 = vsel %vm337, %v1271, %v1272
      %v1284 = vsel %vm525, %v1248, %v1283
      %v1285 = vsel %vm337, %v1272, %v1273
      %v1286 = vsel %vm525, %v1250, %v1285
      %v1287 = vsel %vm337, %v1274, %v1275
      %v1288 = vsel %vm525, %v1254, %v1287
      %v1289 = vsel %vm337, %v1275, %v1276
      %v1290 = vsel %vm525, %v1256, %v1289
      %v1291 = vsel %vm337, %v1277, %v1278
      %v1292 = vsel %vm525, %v1260, %v1291
      %v1293 = vsel %vm337, %v1278, %v1279
      %v1294 = vsel %vm525, %v1262, %v1293
      %v1295 = vsel %vm337, %v1280, %v1281
      %v1296 = vsel %vm525, %v1266, %v1295
      %v1297 = vsel %vm337, %v1281, %v1282
      %v1298 = vsel %vm525, %v1268, %v1297
      %1307 = vst [vmem:[#allocation2 + $0x190] sm:$0xff] %v1284
      %1308 = vst [vmem:[#allocation2 + $0x198] sm:$0xff] %v1286
      %1309 = vst [vmem:[#allocation2 + $0x1b0] sm:$0xff] %v1288
      %1310 = vst [vmem:[#allocation2 + $0x1b8] sm:$0xff] %v1290
      %1311 = vst [vmem:[#allocation2 + $0x1d0] sm:$0xff] %v1292
      %1312 = vst [vmem:[#allocation2 + $0x1d8] sm:$0xff] %v1294
      %1313 = vst [vmem:[#allocation2 + $0x1f0] sm:$0xff] %v1296
      %1314 = vst [vmem:[#allocation2 + $0x1f8] sm:$0xff] %v1298
      %v1315 = vld [vmem:[%s1022] sm:$0xff]
      %v1316 = vld [vmem:[%s1022 + $0x8] sm:$0xff]
      %v1317 = vld [vmem:[%s1022 + $0x10] sm:$0xf]
      %v1318 = vld [vmem:[%s1022 + $0x14] sm:$0xff]
      %v1319 = vld [vmem:[%s1022 + $0x1c] sm:$0xff]
      %v1320 = vld [vmem:[%s1022 + $0x24] sm:$0xf]
      %v1321 = vld [vmem:[%s1022 + $0x28] sm:$0xff]
      %v1322 = vld [vmem:[%s1022 + $0x30] sm:$0xff]
      %v1323 = vld [vmem:[%s1022 + $0x38] sm:$0xf]
      %v1324 = vld [vmem:[%s1022 + $0x3c] sm:$0xff]
      %v1325 = vld [vmem:[%s1022 + $0x44] sm:$0xff]
      %v1326 = vld [vmem:[%s1022 + $0x4c] sm:$0xf]
      %1339 = vrot.lane.b32.xlu0 %v1315, 82
      %v1340 = vpop.permute.xlu0 %1339
      %1341 = vrot.lane.b32.xlu0 %v1316, 82
      %v1342 = vpop.permute.xlu0 %1341
      %1343 = vrot.lane.b32.xlu0 %v1317, 82
      %v1344 = vpop.permute.xlu0 %1343
      %1345 = vrot.lane.b32.xlu0 %v1318, 82
      %v1346 = vpop.permute.xlu0 %1345
      %1347 = vrot.lane.b32.xlu0 %v1319, 82
      %v1348 = vpop.permute.xlu0 %1347
      %1349 = vrot.lane.b32.xlu0 %v1320, 82
      %v1350 = vpop.permute.xlu0 %1349
      %1351 = vrot.lane.b32.xlu0 %v1321, 82
      %v1352 = vpop.permute.xlu0 %1351
      %1353 = vrot.lane.b32.xlu0 %v1322, 82
      %v1354 = vpop.permute.xlu0 %1353
      %1355 = vrot.lane.b32.xlu0 %v1323, 82
      %v1356 = vpop.permute.xlu0 %1355
      %1357 = vrot.lane.b32.xlu0 %v1324, 82
      %v1358 = vpop.permute.xlu0 %1357
      %1359 = vrot.lane.b32.xlu0 %v1325, 82
      %v1360 = vpop.permute.xlu0 %1359
      %1361 = vrot.lane.b32.xlu0 %v1326, 82
      %v1362 = vpop.permute.xlu0 %1361
      %v1363 = vrot.slane %v1340, 4
      %v1364 = vrot.slane %v1342, 4
      %v1365 = vrot.slane %v1344, 4
      %v1366 = vrot.slane %v1346, 4
      %v1367 = vrot.slane %v1348, 4
      %v1368 = vrot.slane %v1350, 4
      %v1369 = vrot.slane %v1352, 4
      %v1370 = vrot.slane %v1354, 4
      %v1371 = vrot.slane %v1356, 4
      %v1372 = vrot.slane %v1358, 4
      %v1373 = vrot.slane %v1360, 4
      %v1374 = vrot.slane %v1362, 4
      %v1375 = vsel %vm337, %v1363, %v1364
      %v1376 = vsel %vm618, %v1340, %v1375
      %v1377 = vsel %vm337, %v1364, %v1365
      %v1378 = vsel %vm618, %v1342, %v1377
      %v1379 = vsel %vm337, %v1366, %v1367
      %v1380 = vsel %vm618, %v1346, %v1379
      %v1381 = vsel %vm337, %v1367, %v1368
      %v1382 = vsel %vm618, %v1348, %v1381
      %v1383 = vsel %vm337, %v1369, %v1370
      %v1384 = vsel %vm618, %v1352, %v1383
      %v1385 = vsel %vm337, %v1370, %v1371
      %v1386 = vsel %vm618, %v1354, %v1385
      %v1387 = vsel %vm337, %v1372, %v1373
      %v1388 = vsel %vm618, %v1358, %v1387
      %v1389 = vsel %vm337, %v1373, %v1374
      %v1390 = vsel %vm618, %v1360, %v1389
      %1399 = vst [vmem:[#allocation2 + $0x210] sm:$0xff] %v1376
      %1400 = vst [vmem:[#allocation2 + $0x218] sm:$0xff] %v1378
      %1401 = vst [vmem:[#allocation2 + $0x230] sm:$0xff] %v1380
      %1402 = vst [vmem:[#allocation2 + $0x238] sm:$0xff] %v1382
      %1403 = vst [vmem:[#allocation2 + $0x250] sm:$0xff] %v1384
      %1404 = vst [vmem:[#allocation2 + $0x258] sm:$0xff] %v1386
      %1405 = vst [vmem:[#allocation2 + $0x270] sm:$0xff] %v1388
      %1406 = vst [vmem:[#allocation2 + $0x278] sm:$0xff] %v1390
      %v1407 = vld [vmem:[%s1022] sm:$0xff]
      %v1408 = vld [vmem:[%s1022 + $0x8] sm:$0xff]
      %v1409 = vld [vmem:[%s1022 + $0x10] sm:$0xf]
      %v1410 = vld [vmem:[%s1022 + $0x14] sm:$0xff]
      %v1411 = vld [vmem:[%s1022 + $0x1c] sm:$0xff]
      %v1412 = vld [vmem:[%s1022 + $0x24] sm:$0xf]
      %v1413 = vld [vmem:[%s1022 + $0x28] sm:$0xff]
      %v1414 = vld [vmem:[%s1022 + $0x30] sm:$0xff]
      %v1415 = vld [vmem:[%s1022 + $0x38] sm:$0xf]
      %v1416 = vld [vmem:[%s1022 + $0x3c] sm:$0xff]
      %v1417 = vld [vmem:[%s1022 + $0x44] sm:$0xff]
      %v1418 = vld [vmem:[%s1022 + $0x4c] sm:$0xf]
      %1431 = vrot.lane.b32.xlu0 %v1407, 80
      %v1432 = vpop.permute.xlu0 %1431
      %1433 = vrot.lane.b32.xlu0 %v1408, 80
      %v1434 = vpop.permute.xlu0 %1433
      %1435 = vrot.lane.b32.xlu0 %v1409, 80
      %v1436 = vpop.permute.xlu0 %1435
      %1437 = vrot.lane.b32.xlu0 %v1410, 80
      %v1438 = vpop.permute.xlu0 %1437
      %1439 = vrot.lane.b32.xlu0 %v1411, 80
      %v1440 = vpop.permute.xlu0 %1439
      %1441 = vrot.lane.b32.xlu0 %v1412, 80
      %v1442 = vpop.permute.xlu0 %1441
      %1443 = vrot.lane.b32.xlu0 %v1413, 80
      %v1444 = vpop.permute.xlu0 %1443
      %1445 = vrot.lane.b32.xlu0 %v1414, 80
      %v1446 = vpop.permute.xlu0 %1445
      %1447 = vrot.lane.b32.xlu0 %v1415, 80
      %v1448 = vpop.permute.xlu0 %1447
      %1449 = vrot.lane.b32.xlu0 %v1416, 80
      %v1450 = vpop.permute.xlu0 %1449
      %1451 = vrot.lane.b32.xlu0 %v1417, 80
      %v1452 = vpop.permute.xlu0 %1451
      %1453 = vrot.lane.b32.xlu0 %v1418, 80
      %v1454 = vpop.permute.xlu0 %1453
      %v1455 = vrot.slane %v1432, 4
      %v1456 = vrot.slane %v1434, 4
      %v1457 = vrot.slane %v1436, 4
      %v1458 = vrot.slane %v1438, 4
      %v1459 = vrot.slane %v1440, 4
      %v1460 = vrot.slane %v1442, 4
      %v1461 = vrot.slane %v1444, 4
      %v1462 = vrot.slane %v1446, 4
      %v1463 = vrot.slane %v1448, 4
      %v1464 = vrot.slane %v1450, 4
      %v1465 = vrot.slane %v1452, 4
      %v1466 = vrot.slane %v1454, 4
      %v1467 = vsel %vm337, %v1455, %v1456
      %v1468 = vsel %vm711, %v1432, %v1467
      %v1469 = vsel %vm337, %v1456, %v1457
      %v1470 = vsel %vm711, %v1434, %v1469
      %v1471 = vsel %vm337, %v1458, %v1459
      %v1472 = vsel %vm711, %v1438, %v1471
      %v1473 = vsel %vm337, %v1459, %v1460
      %v1474 = vsel %vm711, %v1440, %v1473
      %v1475 = vsel %vm337, %v1461, %v1462
      %v1476 = vsel %vm711, %v1444, %v1475
      %v1477 = vsel %vm337, %v1462, %v1463
      %v1478 = vsel %vm711, %v1446, %v1477
      %v1479 = vsel %vm337, %v1464, %v1465
      %v1480 = vsel %vm711, %v1450, %v1479
      %v1481 = vsel %vm337, %v1465, %v1466
      %v1482 = vsel %vm711, %v1452, %v1481
      %1491 = vst [vmem:[#allocation2 + $0x290] sm:$0xff] %v1468
      %1492 = vst [vmem:[#allocation2 + $0x298] sm:$0xff] %v1470
      %1493 = vst [vmem:[#allocation2 + $0x2b0] sm:$0xff] %v1472
      %1494 = vst [vmem:[#allocation2 + $0x2b8] sm:$0xff] %v1474
      %1495 = vst [vmem:[#allocation2 + $0x2d0] sm:$0xff] %v1476
      %1496 = vst [vmem:[#allocation2 + $0x2d8] sm:$0xff] %v1478
      %1497 = vst [vmem:[#allocation2 + $0x2f0] sm:$0xff] %v1480
      %1498 = vst [vmem:[#allocation2 + $0x2f8] sm:$0xff] %v1482
      %v1499 = vld [vmem:[%s1022] sm:$0xff]
      %v1500 = vld [vmem:[%s1022 + $0x8] sm:$0xff]
      %v1501 = vld [vmem:[%s1022 + $0x10] sm:$0xf]
      %v1502 = vld [vmem:[%s1022 + $0x14] sm:$0xff]
      %v1503 = vld [vmem:[%s1022 + $0x1c] sm:$0xff]
      %v1504 = vld [vmem:[%s1022 + $0x24] sm:$0xf]
      %v1505 = vld [vmem:[%s1022 + $0x28] sm:$0xff]
      %v1506 = vld [vmem:[%s1022 + $0x30] sm:$0xff]
      %v1507 = vld [vmem:[%s1022 + $0x38] sm:$0xf]
      %v1508 = vld [vmem:[%s1022 + $0x3c] sm:$0xff]
      %v1509 = vld [vmem:[%s1022 + $0x44] sm:$0xff]
      %v1510 = vld [vmem:[%s1022 + $0x4c] sm:$0xf]
      %1523 = vrot.lane.b32.xlu0 %v1499, 40
      %v1524 = vpop.permute.xlu0 %1523
      %1525 = vrot.lane.b32.xlu0 %v1500, 40
      %v1526 = vpop.permute.xlu0 %1525
      %1527 = vrot.lane.b32.xlu0 %v1501, 40
      %v1528 = vpop.permute.xlu0 %1527
      %1529 = vrot.lane.b32.xlu0 %v1502, 40
      %v1530 = vpop.permute.xlu0 %1529
      %1531 = vrot.lane.b32.xlu0 %v1503, 40
      %v1532 = vpop.permute.xlu0 %1531
      %1533 = vrot.lane.b32.xlu0 %v1504, 40
      %v1534 = vpop.permute.xlu0 %1533
      %1535 = vrot.lane.b32.xlu0 %v1505, 40
      %v1536 = vpop.permute.xlu0 %1535
      %1537 = vrot.lane.b32.xlu0 %v1506, 40
      %v1538 = vpop.permute.xlu0 %1537
      %1539 = vrot.lane.b32.xlu0 %v1507, 40
      %v1540 = vpop.permute.xlu0 %1539
      %1541 = vrot.lane.b32.xlu0 %v1508, 40
      %v1542 = vpop.permute.xlu0 %1541
      %1543 = vrot.lane.b32.xlu0 %v1509, 40
      %v1544 = vpop.permute.xlu0 %1543
      %1545 = vrot.lane.b32.xlu0 %v1510, 40
      %v1546 = vpop.permute.xlu0 %1545
      %v1547 = vrot.slane %v1524, 4
      %v1548 = vrot.slane %v1526, 4
      %v1549 = vrot.slane %v1528, 4
      %v1550 = vrot.slane %v1530, 4
      %v1551 = vrot.slane %v1532, 4
      %v1552 = vrot.slane %v1534, 4
      %v1553 = vrot.slane %v1536, 4
      %v1554 = vrot.slane %v1538, 4
      %v1555 = vrot.slane %v1540, 4
      %v1556 = vrot.slane %v1542, 4
      %v1557 = vrot.slane %v1544, 4
      %v1558 = vrot.slane %v1546, 4
      %v1559 = vsel %vm337, %v1547, %v1548
      %v1560 = vsel %vm804, %v1524, %v1559
      %v1561 = vsel %vm337, %v1548, %v1549
      %v1562 = vsel %vm804, %v1526, %v1561
      %v1563 = vsel %vm337, %v1550, %v1551
      %v1564 = vsel %vm804, %v1530, %v1563
      %v1565 = vsel %vm337, %v1551, %v1552
      %v1566 = vsel %vm804, %v1532, %v1565
      %v1567 = vsel %vm337, %v1553, %v1554
      %v1568 = vsel %vm804, %v1536, %v1567
      %v1569 = vsel %vm337, %v1554, %v1555
      %v1570 = vsel %vm804, %v1538, %v1569
      %v1571 = vsel %vm337, %v1556, %v1557
      %v1572 = vsel %vm804, %v1542, %v1571
      %v1573 = vsel %vm337, %v1557, %v1558
      %v1574 = vsel %vm804, %v1544, %v1573
      %1583 = vst [vmem:[#allocation2 + $0x310] sm:$0xff] %v1560
      %1584 = vst [vmem:[#allocation2 + $0x318] sm:$0xff] %v1562
      %1585 = vst [vmem:[#allocation2 + $0x330] sm:$0xff] %v1564
      %1586 = vst [vmem:[#allocation2 + $0x338] sm:$0xff] %v1566
      %1587 = vst [vmem:[#allocation2 + $0x350] sm:$0xff] %v1568
      %1588 = vst [vmem:[#allocation2 + $0x358] sm:$0xff] %v1570
      %1589 = vst [vmem:[#allocation2 + $0x370] sm:$0xff] %v1572
      %1590 = vst [vmem:[#allocation2 + $0x378] sm:$0xff] %v1574
      %v1591 = vld [vmem:[%s1022] sm:$0xff]
      %v1592 = vld [vmem:[%s1022 + $0x8] sm:$0xff]
      %v1593 = vld [vmem:[%s1022 + $0x10] sm:$0xf]
      %v1594 = vld [vmem:[%s1022 + $0x14] sm:$0xff]
      %v1595 = vld [vmem:[%s1022 + $0x1c] sm:$0xff]
      %v1596 = vld [vmem:[%s1022 + $0x24] sm:$0xf]
      %v1597 = vld [vmem:[%s1022 + $0x28] sm:$0xff]
      %v1598 = vld [vmem:[%s1022 + $0x30] sm:$0xff]
      %v1599 = vld [vmem:[%s1022 + $0x38] sm:$0xf]
      %v1600 = vld [vmem:[%s1022 + $0x3c] sm:$0xff]
      %v1601 = vld [vmem:[%s1022 + $0x44] sm:$0xff]
      %v1602 = vld [vmem:[%s1022 + $0x4c] sm:$0xf]
      %1615 = vrot.lane.b32.xlu0 %v1591, 38
      %v1616 = vpop.permute.xlu0 %1615
      %1617 = vrot.lane.b32.xlu0 %v1592, 38
      %v1618 = vpop.permute.xlu0 %1617
      %1619 = vrot.lane.b32.xlu0 %v1593, 38
      %v1620 = vpop.permute.xlu0 %1619
      %1621 = vrot.lane.b32.xlu0 %v1594, 38
      %v1622 = vpop.permute.xlu0 %1621
      %1623 = vrot.lane.b32.xlu0 %v1595, 38
      %v1624 = vpop.permute.xlu0 %1623
      %1625 = vrot.lane.b32.xlu0 %v1596, 38
      %v1626 = vpop.permute.xlu0 %1625
      %1627 = vrot.lane.b32.xlu0 %v1597, 38
      %v1628 = vpop.permute.xlu0 %1627
      %1629 = vrot.lane.b32.xlu0 %v1598, 38
      %v1630 = vpop.permute.xlu0 %1629
      %1631 = vrot.lane.b32.xlu0 %v1599, 38
      %v1632 = vpop.permute.xlu0 %1631
      %1633 = vrot.lane.b32.xlu0 %v1600, 38
      %v1634 = vpop.permute.xlu0 %1633
      %1635 = vrot.lane.b32.xlu0 %v1601, 38
      %v1636 = vpop.permute.xlu0 %1635
      %1637 = vrot.lane.b32.xlu0 %v1602, 38
      %v1638 = vpop.permute.xlu0 %1637
      %v1639 = vrot.slane %v1616, 4
      %v1640 = vrot.slane %v1618, 4
      %v1641 = vrot.slane %v1620, 4
      %v1642 = vrot.slane %v1622, 4
      %v1643 = vrot.slane %v1624, 4
      %v1644 = vrot.slane %v1626, 4
      %v1645 = vrot.slane %v1628, 4
      %v1646 = vrot.slane %v1630, 4
      %v1647 = vrot.slane %v1632, 4
      %v1648 = vrot.slane %v1634, 4
      %v1649 = vrot.slane %v1636, 4
      %v1650 = vrot.slane %v1638, 4
      %v1651 = vsel %vm337, %v1639, %v1640
      %v1652 = vsel %vm897, %v1616, %v1651
      %v1653 = vsel %vm337, %v1640, %v1641
      %v1654 = vsel %vm897, %v1618, %v1653
      %v1655 = vsel %vm337, %v1642, %v1643
      %v1656 = vsel %vm897, %v1622, %v1655
      %v1657 = vsel %vm337, %v1643, %v1644
      %v1658 = vsel %vm897, %v1624, %v1657
      %v1659 = vsel %vm337, %v1645, %v1646
      %v1660 = vsel %vm897, %v1628, %v1659
      %v1661 = vsel %vm337, %v1646, %v1647
      %v1662 = vsel %vm897, %v1630, %v1661
      %v1663 = vsel %vm337, %v1648, %v1649
      %v1664 = vsel %vm897, %v1634, %v1663
      %v1665 = vsel %vm337, %v1649, %v1650
      %v1666 = vsel %vm897, %v1636, %v1665
      %1675 = vst [vmem:[#allocation2 + $0x390] sm:$0xff] %v1652
      %1676 = vst [vmem:[#allocation2 + $0x398] sm:$0xff] %v1654
      %1677 = vst [vmem:[#allocation2 + $0x3b0] sm:$0xff] %v1656
      %1678 = vst [vmem:[#allocation2 + $0x3b8] sm:$0xff] %v1658
      %1679 = vst [vmem:[#allocation2 + $0x3d0] sm:$0xff] %v1660
      %1680 = vst [vmem:[#allocation2 + $0x3d8] sm:$0xff] %v1662
      %1681 = vst [vmem:[#allocation2 + $0x3f0] sm:$0xff] %v1664
      %1682 = vst [vmem:[#allocation2 + $0x3f8] sm:$0xff] %v1666
      %v1683 = vld [vmem:[%s1022] sm:$0xff]
      %v1684 = vld [vmem:[%s1022 + $0x8] sm:$0xff]
      %v1685 = vld [vmem:[%s1022 + $0x10] sm:$0xf]
      %v1686 = vld [vmem:[%s1022 + $0x14] sm:$0xff]
      %v1687 = vld [vmem:[%s1022 + $0x1c] sm:$0xff]
      %v1688 = vld [vmem:[%s1022 + $0x24] sm:$0xf]
      %v1689 = vld [vmem:[%s1022 + $0x28] sm:$0xff]
      %v1690 = vld [vmem:[%s1022 + $0x30] sm:$0xff]
      %v1691 = vld [vmem:[%s1022 + $0x38] sm:$0xf]
      %v1692 = vld [vmem:[%s1022 + $0x3c] sm:$0xff]
      %v1693 = vld [vmem:[%s1022 + $0x44] sm:$0xff]
      %v1694 = vld [vmem:[%s1022 + $0x4c] sm:$0xf]
      %1707 = vrot.lane.b32.xlu0 %v1683, 36
      %v1708 = vpop.permute.xlu0 %1707
      %1709 = vrot.lane.b32.xlu0 %v1684, 36
      %v1710 = vpop.permute.xlu0 %1709
      %1711 = vrot.lane.b32.xlu0 %v1685, 36
      %v1712 = vpop.permute.xlu0 %1711
      %1713 = vrot.lane.b32.xlu0 %v1686, 36
      %v1714 = vpop.permute.xlu0 %1713
      %1715 = vrot.lane.b32.xlu0 %v1687, 36
      %v1716 = vpop.permute.xlu0 %1715
      %1717 = vrot.lane.b32.xlu0 %v1688, 36
      %v1718 = vpop.permute.xlu0 %1717
      %1719 = vrot.lane.b32.xlu0 %v1689, 36
      %v1720 = vpop.permute.xlu0 %1719
      %1721 = vrot.lane.b32.xlu0 %v1690, 36
      %v1722 = vpop.permute.xlu0 %1721
      %1723 = vrot.lane.b32.xlu0 %v1691, 36
      %v1724 = vpop.permute.xlu0 %1723
      %1725 = vrot.lane.b32.xlu0 %v1692, 36
      %v1726 = vpop.permute.xlu0 %1725
      %1727 = vrot.lane.b32.xlu0 %v1693, 36
      %v1728 = vpop.permute.xlu0 %1727
      %1729 = vrot.lane.b32.xlu0 %v1694, 36
      %v1730 = vpop.permute.xlu0 %1729
      %v1731 = vrot.slane %v1708, 4
      %v1732 = vrot.slane %v1710, 4
      %v1733 = vrot.slane %v1712, 4
      %v1734 = vrot.slane %v1714, 4
      %v1735 = vrot.slane %v1716, 4
      %v1736 = vrot.slane %v1718, 4
      %v1737 = vrot.slane %v1720, 4
      %v1738 = vrot.slane %v1722, 4
      %v1739 = vrot.slane %v1724, 4
      %v1740 = vrot.slane %v1726, 4
      %v1741 = vrot.slane %v1728, 4
      %v1742 = vrot.slane %v1730, 4
      %v1743 = vsel %vm337, %v1731, %v1732
      %v1744 = vsel %vm990, %v1708, %v1743
      %v1745 = vsel %vm337, %v1732, %v1733
      %v1746 = vsel %vm990, %v1710, %v1745
      %v1747 = vsel %vm337, %v1734, %v1735
      %v1748 = vsel %vm990, %v1714, %v1747
      %v1749 = vsel %vm337, %v1735, %v1736
      %v1750 = vsel %vm990, %v1716, %v1749
      %v1751 = vsel %vm337, %v1737, %v1738
      %v1752 = vsel %vm990, %v1720, %v1751
      %v1753 = vsel %vm337, %v1738, %v1739
      %v1754 = vsel %vm990, %v1722, %v1753
      %v1755 = vsel %vm337, %v1740, %v1741
      %v1756 = vsel %vm990, %v1726, %v1755
      %v1757 = vsel %vm337, %v1741, %v1742
      %v1758 = vsel %vm990, %v1728, %v1757
      %1767 = vst [vmem:[#allocation2 + $0x410] sm:$0xff] %v1744
      %1768 = vst [vmem:[#allocation2 + $0x418] sm:$0xff] %v1746
      %1769 = vst [vmem:[#allocation2 + $0x430] sm:$0xff] %v1748
      %1770 = vst [vmem:[#allocation2 + $0x438] sm:$0xff] %v1750
      %1771 = vst [vmem:[#allocation2 + $0x450] sm:$0xff] %v1752
      %1772 = vst [vmem:[#allocation2 + $0x458] sm:$0xff] %v1754
      %1773 = vst [vmem:[#allocation2 + $0x470] sm:$0xff] %v1756
      %1774 = vst [vmem:[#allocation2 + $0x478] sm:$0xff] %v1758
      %v1775 = vld [vmem:[%s1] sm:$0xff]
      %v1776 = vld [vmem:[%s1 + $0x8] sm:$0xf]
      %v1777 = vld [vmem:[%s1 + $0xc] sm:$0xff]
      %v1778 = vld [vmem:[%s1 + $0x14] sm:$0xf]
      %v1779 = vld [vmem:[%s1 + $0x18] sm:$0xff]
      %v1780 = vld [vmem:[%s1 + $0x20] sm:$0xf]
      %v1781 = vld [vmem:[%s1 + $0x24] sm:$0xff]
      %v1782 = vld [vmem:[%s1 + $0x2c] sm:$0xf]
      %v1783 = vld [vmem:[#allocation2] sm:$0xff]
      %v1784 = vld [vmem:[#allocation2 + $0x8] sm:$0xff]
      %v1785 = vld [vmem:[#allocation2 + $0x10] sm:$0xff]
      %v1786 = vld [vmem:[#allocation2 + $0x18] sm:$0xff]
      %v1787 = vld [vmem:[#allocation2 + $0x20] sm:$0xff]
      %v1788 = vld [vmem:[#allocation2 + $0x28] sm:$0xff]
      %v1789 = vld [vmem:[#allocation2 + $0x30] sm:$0xff]
      %v1790 = vld [vmem:[#allocation2 + $0x38] sm:$0xff]
      %v1791 = vld [vmem:[#allocation2 + $0x40] sm:$0xff]
      %v1792 = vld [vmem:[#allocation2 + $0x48] sm:$0xff]
      %v1793 = vld [vmem:[#allocation2 + $0x50] sm:$0xff]
      %v1794 = vld [vmem:[#allocation2 + $0x58] sm:$0xff]
      %v1795 = vld [vmem:[#allocation2 + $0x60] sm:$0xff]
      %v1796 = vld [vmem:[#allocation2 + $0x68] sm:$0xff]
      %v1797 = vld [vmem:[#allocation2 + $0x70] sm:$0xff]
      %v1798 = vld [vmem:[#allocation2 + $0x78] sm:$0xff]
      %v1799 = vld [vmem:[#allocation2 + $0x80] sm:$0xff]
      %v1800 = vld [vmem:[#allocation2 + $0x88] sm:$0xff]
      %v1801 = vld [vmem:[#allocation2 + $0x90] sm:$0xff]
      %v1802 = vld [vmem:[#allocation2 + $0x98] sm:$0xff]
      %v1803 = vld [vmem:[#allocation2 + $0xa0] sm:$0xff]
      %v1804 = vld [vmem:[#allocation2 + $0xa8] sm:$0xff]
      %v1805 = vld [vmem:[#allocation2 + $0xb0] sm:$0xff]
      %v1806 = vld [vmem:[#allocation2 + $0xb8] sm:$0xff]
      %v1807 = vld [vmem:[#allocation2 + $0xc0] sm:$0xff]
      %v1808 = vld [vmem:[#allocation2 + $0xc8] sm:$0xff]
      %v1809 = vld [vmem:[#allocation2 + $0xd0] sm:$0xff]
      %v1810 = vld [vmem:[#allocation2 + $0xd8] sm:$0xff]
      %v1811 = vld [vmem:[#allocation2 + $0xe0] sm:$0xff]
      %v1812 = vld [vmem:[#allocation2 + $0xe8] sm:$0xff]
      %v1813 = vld [vmem:[#allocation2 + $0xf0] sm:$0xff]
      %v1814 = vld [vmem:[#allocation2 + $0xf8] sm:$0xff]
      %v1815 = vld [vmem:[#allocation2 + $0x100] sm:$0xff]
      %v1816 = vld [vmem:[#allocation2 + $0x108] sm:$0xff]
      %v1817 = vld [vmem:[#allocation2 + $0x110] sm:$0xff]
      %v1818 = vld [vmem:[#allocation2 + $0x118] sm:$0xff]
      %v1819 = vld [vmem:[#allocation2 + $0x120] sm:$0xff]
      %v1820 = vld [vmem:[#allocation2 + $0x128] sm:$0xff]
      %v1821 = vld [vmem:[#allocation2 + $0x130] sm:$0xff]
      %v1822 = vld [vmem:[#allocation2 + $0x138] sm:$0xff]
      %v1823 = vld [vmem:[#allocation2 + $0x140] sm:$0xff]
      %v1824 = vld [vmem:[#allocation2 + $0x148] sm:$0xff]
      %v1825 = vld [vmem:[#allocation2 + $0x150] sm:$0xff]
      %v1826 = vld [vmem:[#allocation2 + $0x158] sm:$0xff]
      %v1827 = vld [vmem:[#allocation2 + $0x160] sm:$0xff]
      %v1828 = vld [vmem:[#allocation2 + $0x168] sm:$0xff]
      %v1829 = vld [vmem:[#allocation2 + $0x170] sm:$0xff]
      %v1830 = vld [vmem:[#allocation2 + $0x178] sm:$0xff]
      %v1831 = vld [vmem:[#allocation2 + $0x180] sm:$0xff]
      %v1832 = vld [vmem:[#allocation2 + $0x188] sm:$0xff]
      %v1833 = vld [vmem:[#allocation2 + $0x190] sm:$0xff]
      %v1834 = vld [vmem:[#allocation2 + $0x198] sm:$0xff]
      %v1835 = vld [vmem:[#allocation2 + $0x1a0] sm:$0xff]
      %v1836 = vld [vmem:[#allocation2 + $0x1a8] sm:$0xff]
      %v1837 = vld [vmem:[#allocation2 + $0x1b0] sm:$0xff]
      %v1838 = vld [vmem:[#allocation2 + $0x1b8] sm:$0xff]
      %v1839 = vld [vmem:[#allocation2 + $0x1c0] sm:$0xff]
      %v1840 = vld [vmem:[#allocation2 + $0x1c8] sm:$0xff]
      %v1841 = vld [vmem:[#allocation2 + $0x1d0] sm:$0xff]
      %v1842 = vld [vmem:[#allocation2 + $0x1d8] sm:$0xff]
      %v1843 = vld [vmem:[#allocation2 + $0x1e0] sm:$0xff]
      %v1844 = vld [vmem:[#allocation2 + $0x1e8] sm:$0xff]
      %v1845 = vld [vmem:[#allocation2 + $0x1f0] sm:$0xff]
      %v1846 = vld [vmem:[#allocation2 + $0x1f8] sm:$0xff]
      %v1847 = vld [vmem:[#allocation2 + $0x200] sm:$0xff]
      %v1848 = vld [vmem:[#allocation2 + $0x208] sm:$0xff]
      %v1849 = vld [vmem:[#allocation2 + $0x210] sm:$0xff]
      %v1850 = vld [vmem:[#allocation2 + $0x218] sm:$0xff]
      %v1851 = vld [vmem:[#allocation2 + $0x220] sm:$0xff]
      %v1852 = vld [vmem:[#allocation2 + $0x228] sm:$0xff]
      %v1853 = vld [vmem:[#allocation2 + $0x230] sm:$0xff]
      %v1854 = vld [vmem:[#allocation2 + $0x238] sm:$0xff]
      %v1855 = vld [vmem:[#allocation2 + $0x240] sm:$0xff]
      %v1856 = vld [vmem:[#allocation2 + $0x248] sm:$0xff]
      %v1857 = vld [vmem:[#allocation2 + $0x250] sm:$0xff]
      %v1858 = vld [vmem:[#allocation2 + $0x258] sm:$0xff]
      %v1859 = vld [vmem:[#allocation2 + $0x260] sm:$0xff]
      %v1860 = vld [vmem:[#allocation2 + $0x268] sm:$0xff]
      %v1861 = vld [vmem:[#allocation2 + $0x270] sm:$0xff]
      %v1862 = vld [vmem:[#allocation2 + $0x278] sm:$0xff]
      %v1863 = vld [vmem:[#allocation2 + $0x280] sm:$0xff]
      %v1864 = vld [vmem:[#allocation2 + $0x288] sm:$0xff]
      %v1865 = vld [vmem:[#allocation2 + $0x290] sm:$0xff]
      %v1866 = vld [vmem:[#allocation2 + $0x298] sm:$0xff]
      %v1867 = vld [vmem:[#allocation2 + $0x2a0] sm:$0xff]
      %v1868 = vld [vmem:[#allocation2 + $0x2a8] sm:$0xff]
      %v1869 = vld [vmem:[#allocation2 + $0x2b0] sm:$0xff]
      %v1870 = vld [vmem:[#allocation2 + $0x2b8] sm:$0xff]
      %v1871 = vld [vmem:[#allocation2 + $0x2c0] sm:$0xff]
      %v1872 = vld [vmem:[#allocation2 + $0x2c8] sm:$0xff]
      %v1873 = vld [vmem:[#allocation2 + $0x2d0] sm:$0xff]
      %v1874 = vld [vmem:[#allocation2 + $0x2d8] sm:$0xff]
      %v1875 = vld [vmem:[#allocation2 + $0x2e0] sm:$0xff]
      %v1876 = vld [vmem:[#allocation2 + $0x2e8] sm:$0xff]
      %v1877 = vld [vmem:[#allocation2 + $0x2f0] sm:$0xff]
      %v1878 = vld [vmem:[#allocation2 + $0x2f8] sm:$0xff]
      %v1879 = vld [vmem:[#allocation2 + $0x300] sm:$0xff]
      %v1880 = vld [vmem:[#allocation2 + $0x308] sm:$0xff]
      %v1881 = vld [vmem:[#allocation2 + $0x310] sm:$0xff]
      %v1882 = vld [vmem:[#allocation2 + $0x318] sm:$0xff]
      %v1883 = vld [vmem:[#allocation2 + $0x320] sm:$0xff]
      %v1884 = vld [vmem:[#allocation2 + $0x328] sm:$0xff]
      %v1885 = vld [vmem:[#allocation2 + $0x330] sm:$0xff]
      %v1886 = vld [vmem:[#allocation2 + $0x338] sm:$0xff]
      %v1887 = vld [vmem:[#allocation2 + $0x340] sm:$0xff]
      %v1888 = vld [vmem:[#allocation2 + $0x348] sm:$0xff]
      %v1889 = vld [vmem:[#allocation2 + $0x350] sm:$0xff]
      %v1890 = vld [vmem:[#allocation2 + $0x358] sm:$0xff]
      %v1891 = vld [vmem:[#allocation2 + $0x360] sm:$0xff]
      %v1892 = vld [vmem:[#allocation2 + $0x368] sm:$0xff]
      %v1893 = vld [vmem:[#allocation2 + $0x370] sm:$0xff]
      %v1894 = vld [vmem:[#allocation2 + $0x378] sm:$0xff]
      %v1895 = vld [vmem:[#allocation2 + $0x380] sm:$0xff]
      %v1896 = vld [vmem:[#allocation2 + $0x388] sm:$0xff]
      %v1897 = vld [vmem:[#allocation2 + $0x390] sm:$0xff]
      %v1898 = vld [vmem:[#allocation2 + $0x398] sm:$0xff]
      %v1899 = vld [vmem:[#allocation2 + $0x3a0] sm:$0xff]
      %v1900 = vld [vmem:[#allocation2 + $0x3a8] sm:$0xff]
      %v1901 = vld [vmem:[#allocation2 + $0x3b0] sm:$0xff]
      %v1902 = vld [vmem:[#allocation2 + $0x3b8] sm:$0xff]
      %v1903 = vld [vmem:[#allocation2 + $0x3c0] sm:$0xff]
      %v1904 = vld [vmem:[#allocation2 + $0x3c8] sm:$0xff]
      %v1905 = vld [vmem:[#allocation2 + $0x3d0] sm:$0xff]
      %v1906 = vld [vmem:[#allocation2 + $0x3d8] sm:$0xff]
      %v1907 = vld [vmem:[#allocation2 + $0x3e0] sm:$0xff]
      %v1908 = vld [vmem:[#allocation2 + $0x3e8] sm:$0xff]
      %v1909 = vld [vmem:[#allocation2 + $0x3f0] sm:$0xff]
      %v1910 = vld [vmem:[#allocation2 + $0x3f8] sm:$0xff]
      %v1911 = vld [vmem:[#allocation2 + $0x400] sm:$0xff]
      %v1912 = vld [vmem:[#allocation2 + $0x408] sm:$0xff]
      %v1913 = vld [vmem:[#allocation2 + $0x410] sm:$0xff]
      %v1914 = vld [vmem:[#allocation2 + $0x418] sm:$0xff]
      %v1915 = vld [vmem:[#allocation2 + $0x420] sm:$0xff]
      %v1916 = vld [vmem:[#allocation2 + $0x428] sm:$0xff]
      %v1917 = vld [vmem:[#allocation2 + $0x430] sm:$0xff]
      %v1918 = vld [vmem:[#allocation2 + $0x438] sm:$0xff]
      %v1919 = vld [vmem:[#allocation2 + $0x440] sm:$0xff]
      %v1920 = vld [vmem:[#allocation2 + $0x448] sm:$0xff]
      %v1921 = vld [vmem:[#allocation2 + $0x450] sm:$0xff]
      %v1922 = vld [vmem:[#allocation2 + $0x458] sm:$0xff]
      %v1923 = vld [vmem:[#allocation2 + $0x460] sm:$0xff]
      %v1924 = vld [vmem:[#allocation2 + $0x468] sm:$0xff]
      %v1925 = vld [vmem:[#allocation2 + $0x470] sm:$0xff]
      %v1926 = vld [vmem:[#allocation2 + $0x478] sm:$0xff]
      %v1927 = vld [vmem:[%s2] sm:$0xff]
      %v1928 = vld [vmem:[%s2 + $0x8] sm:$0xff]
      %v1929 = vld [vmem:[%s2 + $0x10] sm:$0xff]
      %v1930 = vld [vmem:[%s2 + $0x18] sm:$0xff]
      %1932 = vset.pattern.permute.xlu0 0
      %1933 = vperm.xlu0 %1932, %v1927
      %v1934 = vpop.permute.xlu0 %1933
      %1937 = vset.pattern.permute.xlu0 0
      %1938 = vperm.xlu0 %1937, %v1928
      %v1939 = vpop.permute.xlu0 %1938
      %1942 = vset.pattern.permute.xlu0 0
      %1943 = vperm.xlu0 %1942, %v1929
      %v1944 = vpop.permute.xlu0 %1943
      %1947 = vset.pattern.permute.xlu0 0
      %1948 = vperm.xlu0 %1947, %v1930
      %v1949 = vpop.permute.xlu0 %1948
      %v1959 = vunpack.c.l.b16 %v1775
      %v1960 = vunpack.c.h.b16 %v1775
      %v1961 = vunpack.c.l.b16 %v1776
      %v1962 = vunpack.c.l.b16 %v1777
      %v1963 = vunpack.c.h.b16 %v1777
      %v1964 = vunpack.c.l.b16 %v1778
      %v1965 = vunpack.c.l.b16 %v1779
      %v1966 = vunpack.c.h.b16 %v1779
      %v1967 = vunpack.c.l.b16 %v1780
      %v1968 = vunpack.c.l.b16 %v1781
      %v1969 = vunpack.c.h.b16 %v1781
      %v1970 = vunpack.c.l.b16 %v1782
      %v1971 = vpack.c.b16 %v1962, %v1959
      %v1972 = vpack.c.b16 %v1963, %v1960
      %v1973 = vpack.c.b16 %v1964, %v1961
      %v1974 = vpack.c.b16 %v1968, %v1965
      %v1975 = vpack.c.b16 %v1969, %v1966
      %v1976 = vpack.c.b16 %v1970, %v1967
      %v2125 = vunpack.c.l.b16 %v1783
      %v2126 = vunpack.c.h.b16 %v1783
      %v2127 = vunpack.c.l.b16 %v1784
      %v2128 = vunpack.c.h.b16 %v1784
      %v2129 = vunpack.c.l.b16 %v1785
      %v2130 = vunpack.c.h.b16 %v1785
      %v2131 = vunpack.c.l.b16 %v1786
      %v2132 = vunpack.c.h.b16 %v1786
      %v2133 = vunpack.c.l.b16 %v1787
      %v2134 = vunpack.c.h.b16 %v1787
      %v2135 = vunpack.c.l.b16 %v1788
      %v2136 = vunpack.c.h.b16 %v1788
      %v2137 = vunpack.c.l.b16 %v1789
      %v2138 = vunpack.c.h.b16 %v1789
      %v2139 = vunpack.c.l.b16 %v1790
      %v2140 = vunpack.c.h.b16 %v1790
      %v2141 = vunpack.c.l.b16 %v1791
      %v2142 = vunpack.c.h.b16 %v1791
      %v2143 = vunpack.c.l.b16 %v1792
      %v2144 = vunpack.c.h.b16 %v1792
      %v2145 = vunpack.c.l.b16 %v1793
      %v2146 = vunpack.c.h.b16 %v1793
      %v2147 = vunpack.c.l.b16 %v1794
      %v2148 = vunpack.c.h.b16 %v1794
      %v2149 = vunpack.c.l.b16 %v1795
      %v2150 = vunpack.c.h.b16 %v1795
      %v2151 = vunpack.c.l.b16 %v1796
      %v2152 = vunpack.c.h.b16 %v1796
      %v2153 = vunpack.c.l.b16 %v1797
      %v2154 = vunpack.c.h.b16 %v1797
      %v2155 = vunpack.c.l.b16 %v1798
      %v2156 = vunpack.c.h.b16 %v1798
      %v2157 = vunpack.c.l.b16 %v1799
      %v2158 = vunpack.c.h.b16 %v1799
      %v2159 = vunpack.c.l.b16 %v1800
      %v2160 = vunpack.c.h.b16 %v1800
      %v2161 = vunpack.c.l.b16 %v1801
      %v2162 = vunpack.c.h.b16 %v1801
      %v2163 = vunpack.c.l.b16 %v1802
      %v2164 = vunpack.c.h.b16 %v1802
      %v2165 = vunpack.c.l.b16 %v1803
      %v2166 = vunpack.c.h.b16 %v1803
      %v2167 = vunpack.c.l.b16 %v1804
      %v2168 = vunpack.c.h.b16 %v1804
      %v2169 = vunpack.c.l.b16 %v1805
      %v2170 = vunpack.c.h.b16 %v1805
      %v2171 = vunpack.c.l.b16 %v1806
      %v2172 = vunpack.c.h.b16 %v1806
      %v2173 = vunpack.c.l.b16 %v1807
      %v2174 = vunpack.c.h.b16 %v1807
      %v2175 = vunpack.c.l.b16 %v1808
      %v2176 = vunpack.c.h.b16 %v1808
      %v2177 = vunpack.c.l.b16 %v1809
      %v2178 = vunpack.c.h.b16 %v1809
      %v2179 = vunpack.c.l.b16 %v1810
      %v2180 = vunpack.c.h.b16 %v1810
      %v2181 = vunpack.c.l.b16 %v1811
      %v2182 = vunpack.c.h.b16 %v1811
      %v2183 = vunpack.c.l.b16 %v1812
      %v2184 = vunpack.c.h.b16 %v1812
      %v2185 = vunpack.c.l.b16 %v1813
      %v2186 = vunpack.c.h.b16 %v1813
      %v2187 = vunpack.c.l.b16 %v1814
      %v2188 = vunpack.c.h.b16 %v1814
      %v2189 = vunpack.c.l.b16 %v1815
      %v2190 = vunpack.c.h.b16 %v1815
      %v2191 = vunpack.c.l.b16 %v1816
      %v2192 = vunpack.c.h.b16 %v1816
      %v2193 = vunpack.c.l.b16 %v1817
      %v2194 = vunpack.c.h.b16 %v1817
      %v2195 = vunpack.c.l.b16 %v1818
      %v2196 = vunpack.c.h.b16 %v1818
      %v2197 = vunpack.c.l.b16 %v1819
      %v2198 = vunpack.c.h.b16 %v1819
      %v2199 = vunpack.c.l.b16 %v1820
      %v2200 = vunpack.c.h.b16 %v1820
      %v2201 = vunpack.c.l.b16 %v1821
      %v2202 = vunpack.c.h.b16 %v1821
      %v2203 = vunpack.c.l.b16 %v1822
      %v2204 = vunpack.c.h.b16 %v1822
      %v2205 = vunpack.c.l.b16 %v1823
      %v2206 = vunpack.c.h.b16 %v1823
      %v2207 = vunpack.c.l.b16 %v1824
      %v2208 = vunpack.c.h.b16 %v1824
      %v2209 = vunpack.c.l.b16 %v1825
      %v2210 = vunpack.c.h.b16 %v1825
      %v2211 = vunpack.c.l.b16 %v1826
      %v2212 = vunpack.c.h.b16 %v1826
      %v2213 = vunpack.c.l.b16 %v1827
      %v2214 = vunpack.c.h.b16 %v1827
      %v2215 = vunpack.c.l.b16 %v1828
      %v2216 = vunpack.c.h.b16 %v1828
      %v2217 = vunpack.c.l.b16 %v1829
      %v2218 = vunpack.c.h.b16 %v1829
      %v2219 = vunpack.c.l.b16 %v1830
      %v2220 = vunpack.c.h.b16 %v1830
      %v2221 = vunpack.c.l.b16 %v1831
      %v2222 = vunpack.c.h.b16 %v1831
      %v2223 = vunpack.c.l.b16 %v1832
      %v2224 = vunpack.c.h.b16 %v1832
      %v2225 = vunpack.c.l.b16 %v1833
      %v2226 = vunpack.c.h.b16 %v1833
      %v2227 = vunpack.c.l.b16 %v1834
      %v2228 = vunpack.c.h.b16 %v1834
      %v2229 = vunpack.c.l.b16 %v1835
      %v2230 = vunpack.c.h.b16 %v1835
      %v2231 = vunpack.c.l.b16 %v1836
      %v2232 = vunpack.c.h.b16 %v1836
      %v2233 = vunpack.c.l.b16 %v1837
      %v2234 = vunpack.c.h.b16 %v1837
      %v2235 = vunpack.c.l.b16 %v1838
      %v2236 = vunpack.c.h.b16 %v1838
      %v2237 = vunpack.c.l.b16 %v1839
      %v2238 = vunpack.c.h.b16 %v1839
      %v2239 = vunpack.c.l.b16 %v1840
      %v2240 = vunpack.c.h.b16 %v1840
      %v2241 = vunpack.c.l.b16 %v1841
      %v2242 = vunpack.c.h.b16 %v1841
      %v2243 = vunpack.c.l.b16 %v1842
      %v2244 = vunpack.c.h.b16 %v1842
      %v2245 = vunpack.c.l.b16 %v1843
      %v2246 = vunpack.c.h.b16 %v1843
      %v2247 = vunpack.c.l.b16 %v1844
      %v2248 = vunpack.c.h.b16 %v1844
      %v2249 = vunpack.c.l.b16 %v1845
      %v2250 = vunpack.c.h.b16 %v1845
      %v2251 = vunpack.c.l.b16 %v1846
      %v2252 = vunpack.c.h.b16 %v1846
      %v2253 = vunpack.c.l.b16 %v1847
      %v2254 = vunpack.c.h.b16 %v1847
      %v2255 = vunpack.c.l.b16 %v1848
      %v2256 = vunpack.c.h.b16 %v1848
      %v2257 = vunpack.c.l.b16 %v1849
      %v2258 = vunpack.c.h.b16 %v1849
      %v2259 = vunpack.c.l.b16 %v1850
      %v2260 = vunpack.c.h.b16 %v1850
      %v2261 = vunpack.c.l.b16 %v1851
      %v2262 = vunpack.c.h.b16 %v1851
      %v2263 = vunpack.c.l.b16 %v1852
      %v2264 = vunpack.c.h.b16 %v1852
      %v2265 = vunpack.c.l.b16 %v1853
      %v2266 = vunpack.c.h.b16 %v1853
      %v2267 = vunpack.c.l.b16 %v1854
      %v2268 = vunpack.c.h.b16 %v1854
      %v2269 = vunpack.c.l.b16 %v1855
      %v2270 = vunpack.c.h.b16 %v1855
      %v2271 = vunpack.c.l.b16 %v1856
      %v2272 = vunpack.c.h.b16 %v1856
      %v2273 = vunpack.c.l.b16 %v1857
      %v2274 = vunpack.c.h.b16 %v1857
      %v2275 = vunpack.c.l.b16 %v1858
      %v2276 = vunpack.c.h.b16 %v1858
      %v2277 = vunpack.c.l.b16 %v1859
      %v2278 = vunpack.c.h.b16 %v1859
      %v2279 = vunpack.c.l.b16 %v1860
      %v2280 = vunpack.c.h.b16 %v1860
      %v2281 = vunpack.c.l.b16 %v1861
      %v2282 = vunpack.c.h.b16 %v1861
      %v2283 = vunpack.c.l.b16 %v1862
      %v2284 = vunpack.c.h.b16 %v1862
      %v2285 = vunpack.c.l.b16 %v1863
      %v2286 = vunpack.c.h.b16 %v1863
      %v2287 = vunpack.c.l.b16 %v1864
      %v2288 = vunpack.c.h.b16 %v1864
      %v2289 = vunpack.c.l.b16 %v1865
      %v2290 = vunpack.c.h.b16 %v1865
      %v2291 = vunpack.c.l.b16 %v1866
      %v2292 = vunpack.c.h.b16 %v1866
      %v2293 = vunpack.c.l.b16 %v1867
      %v2294 = vunpack.c.h.b16 %v1867
      %v2295 = vunpack.c.l.b16 %v1868
      %v2296 = vunpack.c.h.b16 %v1868
      %v2297 = vunpack.c.l.b16 %v1869
      %v2298 = vunpack.c.h.b16 %v1869
      %v2299 = vunpack.c.l.b16 %v1870
      %v2300 = vunpack.c.h.b16 %v1870
      %v2301 = vunpack.c.l.b16 %v1871
      %v2302 = vunpack.c.h.b16 %v1871
      %v2303 = vunpack.c.l.b16 %v1872
      %v2304 = vunpack.c.h.b16 %v1872
      %v2305 = vunpack.c.l.b16 %v1873
      %v2306 = vunpack.c.h.b16 %v1873
      %v2307 = vunpack.c.l.b16 %v1874
      %v2308 = vunpack.c.h.b16 %v1874
      %v2309 = vunpack.c.l.b16 %v1875
      %v2310 = vunpack.c.h.b16 %v1875
      %v2311 = vunpack.c.l.b16 %v1876
      %v2312 = vunpack.c.h.b16 %v1876
      %v2313 = vunpack.c.l.b16 %v1877
      %v2314 = vunpack.c.h.b16 %v1877
      %v2315 = vunpack.c.l.b16 %v1878
      %v2316 = vunpack.c.h.b16 %v1878
      %v2317 = vunpack.c.l.b16 %v1879
      %v2318 = vunpack.c.h.b16 %v1879
      %v2319 = vunpack.c.l.b16 %v1880
      %v2320 = vunpack.c.h.b16 %v1880
      %v2321 = vunpack.c.l.b16 %v1881
      %v2322 = vunpack.c.h.b16 %v1881
      %v2323 = vunpack.c.l.b16 %v1882
      %v2324 = vunpack.c.h.b16 %v1882
      %v2325 = vunpack.c.l.b16 %v1883
      %v2326 = vunpack.c.h.b16 %v1883
      %v2327 = vunpack.c.l.b16 %v1884
      %v2328 = vunpack.c.h.b16 %v1884
      %v2329 = vunpack.c.l.b16 %v1885
      %v2330 = vunpack.c.h.b16 %v1885
      %v2331 = vunpack.c.l.b16 %v1886
      %v2332 = vunpack.c.h.b16 %v1886
      %v2333 = vunpack.c.l.b16 %v1887
      %v2334 = vunpack.c.h.b16 %v1887
      %v2335 = vunpack.c.l.b16 %v1888
      %v2336 = vunpack.c.h.b16 %v1888
      %v2337 = vunpack.c.l.b16 %v1889
      %v2338 = vunpack.c.h.b16 %v1889
      %v2339 = vunpack.c.l.b16 %v1890
      %v2340 = vunpack.c.h.b16 %v1890
      %v2341 = vunpack.c.l.b16 %v1891
      %v2342 = vunpack.c.h.b16 %v1891
      %v2343 = vunpack.c.l.b16 %v1892
      %v2344 = vunpack.c.h.b16 %v1892
      %v2345 = vunpack.c.l.b16 %v1893
      %v2346 = vunpack.c.h.b16 %v1893
      %v2347 = vunpack.c.l.b16 %v1894
      %v2348 = vunpack.c.h.b16 %v1894
      %v2349 = vunpack.c.l.b16 %v1895
      %v2350 = vunpack.c.h.b16 %v1895
      %v2351 = vunpack.c.l.b16 %v1896
      %v2352 = vunpack.c.h.b16 %v1896
      %v2353 = vunpack.c.l.b16 %v1897
      %v2354 = vunpack.c.h.b16 %v1897
      %v2355 = vunpack.c.l.b16 %v1898
      %v2356 = vunpack.c.h.b16 %v1898
      %v2357 = vunpack.c.l.b16 %v1899
      %v2358 = vunpack.c.h.b16 %v1899
      %v2359 = vunpack.c.l.b16 %v1900
      %v2360 = vunpack.c.h.b16 %v1900
      %v2361 = vunpack.c.l.b16 %v1901
      %v2362 = vunpack.c.h.b16 %v1901
      %v2363 = vunpack.c.l.b16 %v1902
      %v2364 = vunpack.c.h.b16 %v1902
      %v2365 = vunpack.c.l.b16 %v1903
      %v2366 = vunpack.c.h.b16 %v1903
      %v2367 = vunpack.c.l.b16 %v1904
      %v2368 = vunpack.c.h.b16 %v1904
      %v2369 = vunpack.c.l.b16 %v1905
      %v2370 = vunpack.c.h.b16 %v1905
      %v2371 = vunpack.c.l.b16 %v1906
      %v2372 = vunpack.c.h.b16 %v1906
      %v2373 = vunpack.c.l.b16 %v1907
      %v2374 = vunpack.c.h.b16 %v1907
      %v2375 = vunpack.c.l.b16 %v1908
      %v2376 = vunpack.c.h.b16 %v1908
      %v2377 = vunpack.c.l.b16 %v1909
      %v2378 = vunpack.c.h.b16 %v1909
      %v2379 = vunpack.c.l.b16 %v1910
      %v2380 = vunpack.c.h.b16 %v1910
      %v2381 = vunpack.c.l.b16 %v1911
      %v2382 = vunpack.c.h.b16 %v1911
      %v2383 = vunpack.c.l.b16 %v1912
      %v2384 = vunpack.c.h.b16 %v1912
      %v2385 = vunpack.c.l.b16 %v1913
      %v2386 = vunpack.c.h.b16 %v1913
      %v2387 = vunpack.c.l.b16 %v1914
      %v2388 = vunpack.c.h.b16 %v1914
      %v2389 = vunpack.c.l.b16 %v1915
      %v2390 = vunpack.c.h.b16 %v1915
      %v2391 = vunpack.c.l.b16 %v1916
      %v2392 = vunpack.c.h.b16 %v1916
      %v2393 = vunpack.c.l.b16 %v1917
      %v2394 = vunpack.c.h.b16 %v1917
      %v2395 = vunpack.c.l.b16 %v1918
      %v2396 = vunpack.c.h.b16 %v1918
      %v2397 = vunpack.c.l.b16 %v1919
      %v2398 = vunpack.c.h.b16 %v1919
      %v2399 = vunpack.c.l.b16 %v1920
      %v2400 = vunpack.c.h.b16 %v1920
      %v2401 = vunpack.c.l.b16 %v1921
      %v2402 = vunpack.c.h.b16 %v1921
      %v2403 = vunpack.c.l.b16 %v1922
      %v2404 = vunpack.c.h.b16 %v1922
      %v2405 = vunpack.c.l.b16 %v1923
      %v2406 = vunpack.c.h.b16 %v1923
      %v2407 = vunpack.c.l.b16 %v1924
      %v2408 = vunpack.c.h.b16 %v1924
      %v2409 = vunpack.c.l.b16 %v1925
      %v2410 = vunpack.c.h.b16 %v1925
      %v2411 = vunpack.c.l.b16 %v1926
      %v2412 = vunpack.c.h.b16 %v1926
      %v2413 = vpack.c.b16 %v2133, %v2125
      %v2414 = vpack.c.b16 %v2134, %v2126
      %v2415 = vpack.c.b16 %v2135, %v2127
      %v2416 = vpack.c.b16 %v2136, %v2128
      %v2417 = vpack.c.b16 %v2137, %v2129
      %v2418 = vpack.c.b16 %v2138, %v2130
      %v2419 = vpack.c.b16 %v2139, %v2131
      %v2420 = vpack.c.b16 %v2140, %v2132
      %v2421 = vpack.c.b16 %v2149, %v2141
      %v2422 = vpack.c.b16 %v2150, %v2142
      %v2423 = vpack.c.b16 %v2151, %v2143
      %v2424 = vpack.c.b16 %v2152, %v2144
      %v2425 = vpack.c.b16 %v2153, %v2145
      %v2426 = vpack.c.b16 %v2154, %v2146
      %v2427 = vpack.c.b16 %v2155, %v2147
      %v2428 = vpack.c.b16 %v2156, %v2148
      %v2429 = vpack.c.b16 %v2165, %v2157
      %v2430 = vpack.c.b16 %v2166, %v2158
      %v2431 = vpack.c.b16 %v2167, %v2159
      %v2432 = vpack.c.b16 %v2168, %v2160
      %v2433 = vpack.c.b16 %v2169, %v2161
      %v2434 = vpack.c.b16 %v2170, %v2162
      %v2435 = vpack.c.b16 %v2171, %v2163
      %v2436 = vpack.c.b16 %v2172, %v2164
      %v2437 = vpack.c.b16 %v2181, %v2173
      %v2438 = vpack.c.b16 %v2182, %v2174
      %v2439 = vpack.c.b16 %v2183, %v2175
      %v2440 = vpack.c.b16 %v2184, %v2176
      %v2441 = vpack.c.b16 %v2185, %v2177
      %v2442 = vpack.c.b16 %v2186, %v2178
      %v2443 = vpack.c.b16 %v2187, %v2179
      %v2444 = vpack.c.b16 %v2188, %v2180
      %v2445 = vpack.c.b16 %v2197, %v2189
      %v2446 = vpack.c.b16 %v2198, %v2190
      %v2447 = vpack.c.b16 %v2199, %v2191
      %v2448 = vpack.c.b16 %v2200, %v2192
      %v2449 = vpack.c.b16 %v2201, %v2193
      %v2450 = vpack.c.b16 %v2202, %v2194
      %v2451 = vpack.c.b16 %v2203, %v2195
      %v2452 = vpack.c.b16 %v2204, %v2196
      %v2453 = vpack.c.b16 %v2213, %v2205
      %v2454 = vpack.c.b16 %v2214, %v2206
      %v2455 = vpack.c.b16 %v2215, %v2207
      %v2456 = vpack.c.b16 %v2216, %v2208
      %v2457 = vpack.c.b16 %v2217, %v2209
      %v2458 = vpack.c.b16 %v2218, %v2210
      %v2459 = vpack.c.b16 %v2219, %v2211
      %v2460 = vpack.c.b16 %v2220, %v2212
      %v2461 = vpack.c.b16 %v2229, %v2221
      %v2462 = vpack.c.b16 %v2230, %v2222
      %v2463 = vpack.c.b16 %v2231, %v2223
      %v2464 = vpack.c.b16 %v2232, %v2224
      %v2465 = vpack.c.b16 %v2233, %v2225
      %v2466 = vpack.c.b16 %v2234, %v2226
      %v2467 = vpack.c.b16 %v2235, %v2227
      %v2468 = vpack.c.b16 %v2236, %v2228
      %v2469 = vpack.c.b16 %v2245, %v2237
      %v2470 = vpack.c.b16 %v2246, %v2238
      %v2471 = vpack.c.b16 %v2247, %v2239
      %v2472 = vpack.c.b16 %v2248, %v2240
      %v2473 = vpack.c.b16 %v2249, %v2241
      %v2474 = vpack.c.b16 %v2250, %v2242
      %v2475 = vpack.c.b16 %v2251, %v2243
      %v2476 = vpack.c.b16 %v2252, %v2244
      %v2477 = vpack.c.b16 %v2261, %v2253
      %v2478 = vpack.c.b16 %v2262, %v2254
      %v2479 = vpack.c.b16 %v2263, %v2255
      %v2480 = vpack.c.b16 %v2264, %v2256
      %v2481 = vpack.c.b16 %v2265, %v2257
      %v2482 = vpack.c.b16 %v2266, %v2258
      %v2483 = vpack.c.b16 %v2267, %v2259
      %v2484 = vpack.c.b16 %v2268, %v2260
      %v2485 = vpack.c.b16 %v2277, %v2269
      %v2486 = vpack.c.b16 %v2278, %v2270
      %v2487 = vpack.c.b16 %v2279, %v2271
      %v2488 = vpack.c.b16 %v2280, %v2272
      %v2489 = vpack.c.b16 %v2281, %v2273
      %v2490 = vpack.c.b16 %v2282, %v2274
      %v2491 = vpack.c.b16 %v2283, %v2275
      %v2492 = vpack.c.b16 %v2284, %v2276
      %v2493 = vpack.c.b16 %v2293, %v2285
      %v2494 = vpack.c.b16 %v2294, %v2286
      %v2495 = vpack.c.b16 %v2295, %v2287
      %v2496 = vpack.c.b16 %v2296, %v2288
      %v2497 = vpack.c.b16 %v2297, %v2289
      %v2498 = vpack.c.b16 %v2298, %v2290
      %v2499 = vpack.c.b16 %v2299, %v2291
      %v2500 = vpack.c.b16 %v2300, %v2292
      %v2501 = vpack.c.b16 %v2309, %v2301
      %v2502 = vpack.c.b16 %v2310, %v2302
      %v2503 = vpack.c.b16 %v2311, %v2303
      %v2504 = vpack.c.b16 %v2312, %v2304
      %v2505 = vpack.c.b16 %v2313, %v2305
      %v2506 = vpack.c.b16 %v2314, %v2306
      %v2507 = vpack.c.b16 %v2315, %v2307
      %v2508 = vpack.c.b16 %v2316, %v2308
      %v2509 = vpack.c.b16 %v2325, %v2317
      %v2510 = vpack.c.b16 %v2326, %v2318
      %v2511 = vpack.c.b16 %v2327, %v2319
      %v2512 = vpack.c.b16 %v2328, %v2320
      %v2513 = vpack.c.b16 %v2329, %v2321
      %v2514 = vpack.c.b16 %v2330, %v2322
      %v2515 = vpack.c.b16 %v2331, %v2323
      %v2516 = vpack.c.b16 %v2332, %v2324
      %v2517 = vpack.c.b16 %v2341, %v2333
      %v2518 = vpack.c.b16 %v2342, %v2334
      %v2519 = vpack.c.b16 %v2343, %v2335
      %v2520 = vpack.c.b16 %v2344, %v2336
      %v2521 = vpack.c.b16 %v2345, %v2337
      %v2522 = vpack.c.b16 %v2346, %v2338
      %v2523 = vpack.c.b16 %v2347, %v2339
      %v2524 = vpack.c.b16 %v2348, %v2340
      %v2525 = vpack.c.b16 %v2357, %v2349
      %v2526 = vpack.c.b16 %v2358, %v2350
      %v2527 = vpack.c.b16 %v2359, %v2351
      %v2528 = vpack.c.b16 %v2360, %v2352
      %v2529 = vpack.c.b16 %v2361, %v2353
      %v2530 = vpack.c.b16 %v2362, %v2354
      %v2531 = vpack.c.b16 %v2363, %v2355
      %v2532 = vpack.c.b16 %v2364, %v2356
      %v2533 = vpack.c.b16 %v2373, %v2365
      %v2534 = vpack.c.b16 %v2374, %v2366
      %v2535 = vpack.c.b16 %v2375, %v2367
      %v2536 = vpack.c.b16 %v2376, %v2368
      %v2537 = vpack.c.b16 %v2377, %v2369
      %v2538 = vpack.c.b16 %v2378, %v2370
      %v2539 = vpack.c.b16 %v2379, %v2371
      %v2540 = vpack.c.b16 %v2380, %v2372
      %v2541 = vpack.c.b16 %v2389, %v2381
      %v2542 = vpack.c.b16 %v2390, %v2382
      %v2543 = vpack.c.b16 %v2391, %v2383
      %v2544 = vpack.c.b16 %v2392, %v2384
      %v2545 = vpack.c.b16 %v2393, %v2385
      %v2546 = vpack.c.b16 %v2394, %v2386
      %v2547 = vpack.c.b16 %v2395, %v2387
      %v2548 = vpack.c.b16 %v2396, %v2388
      %v2549 = vpack.c.b16 %v2405, %v2397
      %v2550 = vpack.c.b16 %v2406, %v2398
      %v2551 = vpack.c.b16 %v2407, %v2399
      %v2552 = vpack.c.b16 %v2408, %v2400
      %v2553 = vpack.c.b16 %v2409, %v2401
      %v2554 = vpack.c.b16 %v2410, %v2402
      %v2555 = vpack.c.b16 %v2411, %v2403
      %v2556 = vpack.c.b16 %v2412, %v2404
      %vm2701 = vcmask 261120
      %v2703 = vsel %vm2701, %v1973, 0
      %v2706 = vsel %vm2701, %v1976, 0
      %2708 = vmatpush.bf16.msra.mxu0 %v2469
      %2709 = vmatpush.bf16.msra.mxu0 %v2461
      %2710 = vmatpush.bf16.msra.mxu0 %v2453
      %2711 = vmatpush.bf16.msra.mxu0 %v2445
      %2712 = vmatpush.bf16.msra.mxu0 %v2437
      %2713 = vmatpush.bf16.msra.mxu0 %v2429
      %2714 = vmatpush.bf16.msra.mxu0 %v2421
      %2715 = vmatpush.bf16.msra.mxu0 %v2413
      %2716 = vmatmul.bf16.gmra.mxu0 %v1971
      %v2717 = vpop.f32.mrf.mxu0
      %v2718 = vadd.f32 %v1934, %v2717
      %v2719 = vpop.f32.mrf.mxu0
      %v2720 = vadd.f32 %v1939, %v2719
      %2721 = vmatmul.bf16.gmra.mxu0 %v1974
      %v2722 = vpop.f32.mrf.mxu0
      %v2723 = vadd.f32 %v1944, %v2722
      %v2724 = vpop.f32.mrf.mxu0
      %v2725 = vadd.f32 %v1949, %v2724
      %2726 = vdwg.mxu0
      %2727 = vmatpush.bf16.msra.mxu0 %v2533
      %2728 = vmatpush.bf16.msra.mxu0 %v2525
      %2729 = vmatpush.bf16.msra.mxu0 %v2517
      %2730 = vmatpush.bf16.msra.mxu0 %v2509
      %2731 = vmatpush.bf16.msra.mxu0 %v2501
      %2732 = vmatpush.bf16.msra.mxu0 %v2493
      %2733 = vmatpush.bf16.msra.mxu0 %v2485
      %2734 = vmatpush.bf16.msra.mxu0 %v2477
      %2735 = vmatmul.bf16.gmra.mxu0 %v1972
      %v2736 = vpop.f32.mrf.mxu0
      %v2737 = vadd.f32 %v2718, %v2736
      %v2738 = vpop.f32.mrf.mxu0
      %v2739 = vadd.f32 %v2720, %v2738
      %2740 = vmatmul.bf16.gmra.mxu0 %v1975
      %v2741 = vpop.f32.mrf.mxu0
      %v2742 = vadd.f32 %v2723, %v2741
      %v2743 = vpop.f32.mrf.mxu0
      %v2744 = vadd.f32 %v2725, %v2743
      %2745 = vdwg.mxu0
      %2746 = vmatpush.bf16.msra.mxu0 0
      %2747 = vmatpush.bf16.msra.mxu0 0
      %2748 = vmatpush.bf16.msra.mxu0 0
      %2749 = vmatpush.bf16.msra.mxu0 0
      %2750 = vmatpush.bf16.msra.mxu0 0
      %2751 = vmatpush.bf16.msra.mxu0 0
      %2752 = vmatpush.bf16.msra.mxu0 %v2549
      %2753 = vmatpush.bf16.msra.mxu0 %v2541
      %2754 = vmatmul.bf16.gmra.mxu0 %v2703
      %v2755 = vpop.f32.mrf.mxu0
      %v2756 = vadd.f32 %v2737, %v2755
      %v2757 = vpop.f32.mrf.mxu0
      %v2758 = vadd.f32 %v2739, %v2757
      %2759 = vmatmul.bf16.gmra.mxu0 %v2706
      %v2760 = vpop.f32.mrf.mxu0
      %v2761 = vadd.f32 %v2742, %v2760
      %v2762 = vpop.f32.mrf.mxu0
      %v2763 = vadd.f32 %v2744, %v2762
      %2764 = vdwg.mxu0
      %2765 = vmatpush.bf16.msra.mxu0 %v2470
      %2766 = vmatpush.bf16.msra.mxu0 %v2462
      %2767 = vmatpush.bf16.msra.mxu0 %v2454
      %2768 = vmatpush.bf16.msra.mxu0 %v2446
      %2769 = vmatpush.bf16.msra.mxu0 %v2438
      %2770 = vmatpush.bf16.msra.mxu0 %v2430
      %2771 = vmatpush.bf16.msra.mxu0 %v2422
      %2772 = vmatpush.bf16.msra.mxu0 %v2414
      %2773 = vmatmul.bf16.gmra.mxu0 %v1971
      %v2774 = vpop.f32.mrf.mxu0
      %v2775 = vadd.f32 %v1934, %v2774
      %v2776 = vpop.f32.mrf.mxu0
      %v2777 = vadd.f32 %v1939, %v2776
      %2778 = vmatmul.bf16.gmra.mxu0 %v1974
      %v2779 = vpop.f32.mrf.mxu0
      %v2780 = vadd.f32 %v1944, %v2779
      %v2781 = vpop.f32.mrf.mxu0
      %v2782 = vadd.f32 %v1949, %v2781
      %2783 = vdwg.mxu0
      %2784 = vmatpush.bf16.msra.mxu0 %v2534
      %2785 = vmatpush.bf16.msra.mxu0 %v2526
      %2786 = vmatpush.bf16.msra.mxu0 %v2518
      %2787 = vmatpush.bf16.msra.mxu0 %v2510
      %2788 = vmatpush.bf16.msra.mxu0 %v2502
      %2789 = vmatpush.bf16.msra.mxu0 %v2494
      %2790 = vmatpush.bf16.msra.mxu0 %v2486
      %2791 = vmatpush.bf16.msra.mxu0 %v2478
      %2792 = vmatmul.bf16.gmra.mxu0 %v1972
      %v2793 = vpop.f32.mrf.mxu0
      %v2794 = vadd.f32 %v2775, %v2793
      %v2795 = vpop.f32.mrf.mxu0
      %v2796 = vadd.f32 %v2777, %v2795
      %2797 = vmatmul.bf16.gmra.mxu0 %v1975
      %v2798 = vpop.f32.mrf.mxu0
      %v2799 = vadd.f32 %v2780, %v2798
      %v2800 = vpop.f32.mrf.mxu0
      %v2801 = vadd.f32 %v2782, %v2800
      %2802 = vdwg.mxu0
      %2803 = vmatpush.bf16.msra.mxu0 0
      %2804 = vmatpush.bf16.msra.mxu0 0
      %2805 = vmatpush.bf16.msra.mxu0 0
      %2806 = vmatpush.bf16.msra.mxu0 0
      %2807 = vmatpush.bf16.msra.mxu0 0
      %2808 = vmatpush.bf16.msra.mxu0 0
      %2809 = vmatpush.bf16.msra.mxu0 %v2550
      %2810 = vmatpush.bf16.msra.mxu0 %v2542
      %2811 = vmatmul.bf16.gmra.mxu0 %v2703
      %v2812 = vpop.f32.mrf.mxu0
      %v2813 = vadd.f32 %v2794, %v2812
      %v2814 = vpop.f32.mrf.mxu0
      %v2815 = vadd.f32 %v2796, %v2814
      %2816 = vmatmul.bf16.gmra.mxu0 %v2706
      %v2817 = vpop.f32.mrf.mxu0
      %v2818 = vadd.f32 %v2799, %v2817
      %v2819 = vpop.f32.mrf.mxu0
      %v2820 = vadd.f32 %v2801, %v2819
      %2821 = vdwg.mxu0
      %2822 = vmatpush.bf16.msra.mxu0 %v2471
      %2823 = vmatpush.bf16.msra.mxu0 %v2463
      %2824 = vmatpush.bf16.msra.mxu0 %v2455
      %2825 = vmatpush.bf16.msra.mxu0 %v2447
      %2826 = vmatpush.bf16.msra.mxu0 %v2439
      %2827 = vmatpush.bf16.msra.mxu0 %v2431
      %2828 = vmatpush.bf16.msra.mxu0 %v2423
      %2829 = vmatpush.bf16.msra.mxu0 %v2415
      %2830 = vmatmul.bf16.gmra.mxu0 %v1971
      %v2831 = vpop.f32.mrf.mxu0
      %v2832 = vadd.f32 %v1934, %v2831
      %v2833 = vpop.f32.mrf.mxu0
      %v2834 = vadd.f32 %v1939, %v2833
      %2835 = vmatmul.bf16.gmra.mxu0 %v1974
      %v2836 = vpop.f32.mrf.mxu0
      %v2837 = vadd.f32 %v1944, %v2836
      %v2838 = vpop.f32.mrf.mxu0
      %v2839 = vadd.f32 %v1949, %v2838
      %2840 = vdwg.mxu0
      %2841 = vmatpush.bf16.msra.mxu0 %v2535
      %2842 = vmatpush.bf16.msra.mxu0 %v2527
      %2843 = vmatpush.bf16.msra.mxu0 %v2519
      %2844 = vmatpush.bf16.msra.mxu0 %v2511
      %2845 = vmatpush.bf16.msra.mxu0 %v2503
      %2846 = vmatpush.bf16.msra.mxu0 %v2495
      %2847 = vmatpush.bf16.msra.mxu0 %v2487
      %2848 = vmatpush.bf16.msra.mxu0 %v2479
      %2849 = vmatmul.bf16.gmra.mxu0 %v1972
      %v2850 = vpop.f32.mrf.mxu0
      %v2851 = vadd.f32 %v2832, %v2850
      %v2852 = vpop.f32.mrf.mxu0
      %v2853 = vadd.f32 %v2834, %v2852
      %2854 = vmatmul.bf16.gmra.mxu0 %v1975
      %v2855 = vpop.f32.mrf.mxu0
      %v2856 = vadd.f32 %v2837, %v2855
      %v2857 = vpop.f32.mrf.mxu0
      %v2858 = vadd.f32 %v2839, %v2857
      %2859 = vdwg.mxu0
      %2860 = vmatpush.bf16.msra.mxu0 0
      %2861 = vmatpush.bf16.msra.mxu0 0
      %2862 = vmatpush.bf16.msra.mxu0 0
      %2863 = vmatpush.bf16.msra.mxu0 0
      %2864 = vmatpush.bf16.msra.mxu0 0
      %2865 = vmatpush.bf16.msra.mxu0 0
      %2866 = vmatpush.bf16.msra.mxu0 %v2551
      %2867 = vmatpush.bf16.msra.mxu0 %v2543
      %2868 = vmatmul.bf16.gmra.mxu0 %v2703
      %v2869 = vpop.f32.mrf.mxu0
      %v2870 = vadd.f32 %v2851, %v2869
      %v2871 = vpop.f32.mrf.mxu0
      %v2872 = vadd.f32 %v2853, %v2871
      %2873 = vmatmul.bf16.gmra.mxu0 %v2706
      %v2874 = vpop.f32.mrf.mxu0
      %v2875 = vadd.f32 %v2856, %v2874
      %v2876 = vpop.f32.mrf.mxu0
      %v2877 = vadd.f32 %v2858, %v2876
      %2878 = vdwg.mxu0
      %2879 = vmatpush.bf16.msra.mxu0 %v2472
      %2880 = vmatpush.bf16.msra.mxu0 %v2464
      %2881 = vmatpush.bf16.msra.mxu0 %v2456
      %2882 = vmatpush.bf16.msra.mxu0 %v2448
      %2883 = vmatpush.bf16.msra.mxu0 %v2440
      %2884 = vmatpush.bf16.msra.mxu0 %v2432
      %2885 = vmatpush.bf16.msra.mxu0 %v2424
      %2886 = vmatpush.bf16.msra.mxu0 %v2416
      %2887 = vmatmul.bf16.gmra.mxu0 %v1971
      %v2888 = vpop.f32.mrf.mxu0
      %v2889 = vadd.f32 %v1934, %v2888
      %v2890 = vpop.f32.mrf.mxu0
      %v2891 = vadd.f32 %v1939, %v2890
      %2892 = vmatmul.bf16.gmra.mxu0 %v1974
      %v2893 = vpop.f32.mrf.mxu0
      %v2894 = vadd.f32 %v1944, %v2893
      %v2895 = vpop.f32.mrf.mxu0
      %v2896 = vadd.f32 %v1949, %v2895
      %2897 = vdwg.mxu0
      %2898 = vmatpush.bf16.msra.mxu0 %v2536
      %2899 = vmatpush.bf16.msra.mxu0 %v2528
      %2900 = vmatpush.bf16.msra.mxu0 %v2520
      %2901 = vmatpush.bf16.msra.mxu0 %v2512
      %2902 = vmatpush.bf16.msra.mxu0 %v2504
      %2903 = vmatpush.bf16.msra.mxu0 %v2496
      %2904 = vmatpush.bf16.msra.mxu0 %v2488
      %2905 = vmatpush.bf16.msra.mxu0 %v2480
      %2906 = vmatmul.bf16.gmra.mxu0 %v1972
      %v2907 = vpop.f32.mrf.mxu0
      %v2908 = vadd.f32 %v2889, %v2907
      %v2909 = vpop.f32.mrf.mxu0
      %v2910 = vadd.f32 %v2891, %v2909
      %2911 = vmatmul.bf16.gmra.mxu0 %v1975
      %v2912 = vpop.f32.mrf.mxu0
      %v2913 = vadd.f32 %v2894, %v2912
      %v2914 = vpop.f32.mrf.mxu0
      %v2915 = vadd.f32 %v2896, %v2914
      %2916 = vdwg.mxu0
      %2917 = vmatpush.bf16.msra.mxu0 0
      %2918 = vmatpush.bf16.msra.mxu0 0
      %2919 = vmatpush.bf16.msra.mxu0 0
      %2920 = vmatpush.bf16.msra.mxu0 0
      %2921 = vmatpush.bf16.msra.mxu0 0
      %2922 = vmatpush.bf16.msra.mxu0 0
      %2923 = vmatpush.bf16.msra.mxu0 %v2552
      %2924 = vmatpush.bf16.msra.mxu0 %v2544
      %2925 = vmatmul.bf16.gmra.mxu0 %v2703
      %v2926 = vpop.f32.mrf.mxu0
      %v2927 = vadd.f32 %v2908, %v2926
      %v2928 = vpop.f32.mrf.mxu0
      %v2929 = vadd.f32 %v2910, %v2928
      %2930 = vmatmul.bf16.gmra.mxu0 %v2706
      %v2931 = vpop.f32.mrf.mxu0
      %v2932 = vadd.f32 %v2913, %v2931
      %v2933 = vpop.f32.mrf.mxu0
      %v2934 = vadd.f32 %v2915, %v2933
      %2935 = vdwg.mxu0
      %2936 = vmatpush.bf16.msra.mxu0 %v2473
      %2937 = vmatpush.bf16.msra.mxu0 %v2465
      %2938 = vmatpush.bf16.msra.mxu0 %v2457
      %2939 = vmatpush.bf16.msra.mxu0 %v2449
      %2940 = vmatpush.bf16.msra.mxu0 %v2441
      %2941 = vmatpush.bf16.msra.mxu0 %v2433
      %2942 = vmatpush.bf16.msra.mxu0 %v2425
      %2943 = vmatpush.bf16.msra.mxu0 %v2417
      %2944 = vmatmul.bf16.gmra.mxu0 %v1971
      %v2945 = vpop.f32.mrf.mxu0
      %v2946 = vadd.f32 %v1934, %v2945
      %v2947 = vpop.f32.mrf.mxu0
      %v2948 = vadd.f32 %v1939, %v2947
      %2949 = vmatmul.bf16.gmra.mxu0 %v1974
      %v2950 = vpop.f32.mrf.mxu0
      %v2951 = vadd.f32 %v1944, %v2950
      %v2952 = vpop.f32.mrf.mxu0
      %v2953 = vadd.f32 %v1949, %v2952
      %2954 = vdwg.mxu0
      %2955 = vmatpush.bf16.msra.mxu0 %v2537
      %2956 = vmatpush.bf16.msra.mxu0 %v2529
      %2957 = vmatpush.bf16.msra.mxu0 %v2521
      %2958 = vmatpush.bf16.msra.mxu0 %v2513
      %2959 = vmatpush.bf16.msra.mxu0 %v2505
      %2960 = vmatpush.bf16.msra.mxu0 %v2497
      %2961 = vmatpush.bf16.msra.mxu0 %v2489
      %2962 = vmatpush.bf16.msra.mxu0 %v2481
      %2963 = vmatmul.bf16.gmra.mxu0 %v1972
      %v2964 = vpop.f32.mrf.mxu0
      %v2965 = vadd.f32 %v2946, %v2964
      %v2966 = vpop.f32.mrf.mxu0
      %v2967 = vadd.f32 %v2948, %v2966
      %2968 = vmatmul.bf16.gmra.mxu0 %v1975
      %v2969 = vpop.f32.mrf.mxu0
      %v2970 = vadd.f32 %v2951, %v2969
      %v2971 = vpop.f32.mrf.mxu0
      %v2972 = vadd.f32 %v2953, %v2971
      %2973 = vdwg.mxu0
      %2974 = vmatpush.bf16.msra.mxu0 0
      %2975 = vmatpush.bf16.msra.mxu0 0
      %2976 = vmatpush.bf16.msra.mxu0 0
      %2977 = vmatpush.bf16.msra.mxu0 0
      %2978 = vmatpush.bf16.msra.mxu0 0
      %2979 = vmatpush.bf16.msra.mxu0 0
      %2980 = vmatpush.bf16.msra.mxu0 %v2553
      %2981 = vmatpush.bf16.msra.mxu0 %v2545
      %2982 = vmatmul.bf16.gmra.mxu0 %v2703
      %v2983 = vpop.f32.mrf.mxu0
      %v2984 = vadd.f32 %v2965, %v2983
      %v2985 = vpop.f32.mrf.mxu0
      %v2986 = vadd.f32 %v2967, %v2985
      %2987 = vmatmul.bf16.gmra.mxu0 %v2706
      %v2988 = vpop.f32.mrf.mxu0
      %v2989 = vadd.f32 %v2970, %v2988
      %v2990 = vpop.f32.mrf.mxu0
      %v2991 = vadd.f32 %v2972, %v2990
      %2992 = vdwg.mxu0
      %2993 = vmatpush.bf16.msra.mxu0 %v2474
      %2994 = vmatpush.bf16.msra.mxu0 %v2466
      %2995 = vmatpush.bf16.msra.mxu0 %v2458
      %2996 = vmatpush.bf16.msra.mxu0 %v2450
      %2997 = vmatpush.bf16.msra.mxu0 %v2442
      %2998 = vmatpush.bf16.msra.mxu0 %v2434
      %2999 = vmatpush.bf16.msra.mxu0 %v2426
      %3000 = vmatpush.bf16.msra.mxu0 %v2418
      %3001 = vmatmul.bf16.gmra.mxu0 %v1971
      %v3002 = vpop.f32.mrf.mxu0
      %v3003 = vadd.f32 %v1934, %v3002
      %v3004 = vpop.f32.mrf.mxu0
      %v3005 = vadd.f32 %v1939, %v3004
      %3006 = vmatmul.bf16.gmra.mxu0 %v1974
      %v3007 = vpop.f32.mrf.mxu0
      %v3008 = vadd.f32 %v1944, %v3007
      %v3009 = vpop.f32.mrf.mxu0
      %v3010 = vadd.f32 %v1949, %v3009
      %3011 = vdwg.mxu0
      %3012 = vmatpush.bf16.msra.mxu0 %v2538
      %3013 = vmatpush.bf16.msra.mxu0 %v2530
      %3014 = vmatpush.bf16.msra.mxu0 %v2522
      %3015 = vmatpush.bf16.msra.mxu0 %v2514
      %3016 = vmatpush.bf16.msra.mxu0 %v2506
      %3017 = vmatpush.bf16.msra.mxu0 %v2498
      %3018 = vmatpush.bf16.msra.mxu0 %v2490
      %3019 = vmatpush.bf16.msra.mxu0 %v2482
      %3020 = vmatmul.bf16.gmra.mxu0 %v1972
      %v3021 = vpop.f32.mrf.mxu0
      %v3022 = vadd.f32 %v3003, %v3021
      %v3023 = vpop.f32.mrf.mxu0
      %v3024 = vadd.f32 %v3005, %v3023
      %3025 = vmatmul.bf16.gmra.mxu0 %v1975
      %v3026 = vpop.f32.mrf.mxu0
      %v3027 = vadd.f32 %v3008, %v3026
      %v3028 = vpop.f32.mrf.mxu0
      %v3029 = vadd.f32 %v3010, %v3028
      %3030 = vdwg.mxu0
      %3031 = vmatpush.bf16.msra.mxu0 0
      %3032 = vmatpush.bf16.msra.mxu0 0
      %3033 = vmatpush.bf16.msra.mxu0 0
      %3034 = vmatpush.bf16.msra.mxu0 0
      %3035 = vmatpush.bf16.msra.mxu0 0
      %3036 = vmatpush.bf16.msra.mxu0 0
      %3037 = vmatpush.bf16.msra.mxu0 %v2554
      %3038 = vmatpush.bf16.msra.mxu0 %v2546
      %3039 = vmatmul.bf16.gmra.mxu0 %v2703
      %v3040 = vpop.f32.mrf.mxu0
      %v3041 = vadd.f32 %v3022, %v3040
      %v3042 = vpop.f32.mrf.mxu0
      %v3043 = vadd.f32 %v3024, %v3042
      %3044 = vmatmul.bf16.gmra.mxu0 %v2706
      %v3045 = vpop.f32.mrf.mxu0
      %v3046 = vadd.f32 %v3027, %v3045
      %v3047 = vpop.f32.mrf.mxu0
      %v3048 = vadd.f32 %v3029, %v3047
      %3049 = vdwg.mxu0
      %3050 = vmatpush.bf16.msra.mxu0 %v2475
      %3051 = vmatpush.bf16.msra.mxu0 %v2467
      %3052 = vmatpush.bf16.msra.mxu0 %v2459
      %3053 = vmatpush.bf16.msra.mxu0 %v2451
      %3054 = vmatpush.bf16.msra.mxu0 %v2443
      %3055 = vmatpush.bf16.msra.mxu0 %v2435
      %3056 = vmatpush.bf16.msra.mxu0 %v2427
      %3057 = vmatpush.bf16.msra.mxu0 %v2419
      %3058 = vmatmul.bf16.gmra.mxu0 %v1971
      %v3059 = vpop.f32.mrf.mxu0
      %v3060 = vadd.f32 %v1934, %v3059
      %v3061 = vpop.f32.mrf.mxu0
      %v3062 = vadd.f32 %v1939, %v3061
      %3063 = vmatmul.bf16.gmra.mxu0 %v1974
      %v3064 = vpop.f32.mrf.mxu0
      %v3065 = vadd.f32 %v1944, %v3064
      %v3066 = vpop.f32.mrf.mxu0
      %v3067 = vadd.f32 %v1949, %v3066
      %3068 = vdwg.mxu0
      %3069 = vmatpush.bf16.msra.mxu0 %v2539
      %3070 = vmatpush.bf16.msra.mxu0 %v2531
      %3071 = vmatpush.bf16.msra.mxu0 %v2523
      %3072 = vmatpush.bf16.msra.mxu0 %v2515
      %3073 = vmatpush.bf16.msra.mxu0 %v2507
      %3074 = vmatpush.bf16.msra.mxu0 %v2499
      %3075 = vmatpush.bf16.msra.mxu0 %v2491
      %3076 = vmatpush.bf16.msra.mxu0 %v2483
      %3077 = vmatmul.bf16.gmra.mxu0 %v1972
      %v3078 = vpop.f32.mrf.mxu0
      %v3079 = vadd.f32 %v3060, %v3078
      %v3080 = vpop.f32.mrf.mxu0
      %v3081 = vadd.f32 %v3062, %v3080
      %3082 = vmatmul.bf16.gmra.mxu0 %v1975
      %v3083 = vpop.f32.mrf.mxu0
      %v3084 = vadd.f32 %v3065, %v3083
      %v3085 = vpop.f32.mrf.mxu0
      %v3086 = vadd.f32 %v3067, %v3085
      %3087 = vdwg.mxu0
      %3088 = vmatpush.bf16.msra.mxu0 0
      %3089 = vmatpush.bf16.msra.mxu0 0
      %3090 = vmatpush.bf16.msra.mxu0 0
      %3091 = vmatpush.bf16.msra.mxu0 0
      %3092 = vmatpush.bf16.msra.mxu0 0
      %3093 = vmatpush.bf16.msra.mxu0 0
      %3094 = vmatpush.bf16.msra.mxu0 %v2555
      %3095 = vmatpush.bf16.msra.mxu0 %v2547
      %3096 = vmatmul.bf16.gmra.mxu0 %v2703
      %v3097 = vpop.f32.mrf.mxu0
      %v3098 = vadd.f32 %v3079, %v3097
      %v3099 = vpop.f32.mrf.mxu0
      %v3100 = vadd.f32 %v3081, %v3099
      %3101 = vmatmul.bf16.gmra.mxu0 %v2706
      %v3102 = vpop.f32.mrf.mxu0
      %v3103 = vadd.f32 %v3084, %v3102
      %v3104 = vpop.f32.mrf.mxu0
      %v3105 = vadd.f32 %v3086, %v3104
      %3106 = vdwg.mxu0
      %3107 = vmatpush.bf16.msra.mxu0 %v2476
      %3108 = vmatpush.bf16.msra.mxu0 %v2468
      %3109 = vmatpush.bf16.msra.mxu0 %v2460
      %3110 = vmatpush.bf16.msra.mxu0 %v2452
      %3111 = vmatpush.bf16.msra.mxu0 %v2444
      %3112 = vmatpush.bf16.msra.mxu0 %v2436
      %3113 = vmatpush.bf16.msra.mxu0 %v2428
      %3114 = vmatpush.bf16.msra.mxu0 %v2420
      %3115 = vmatmul.bf16.gmra.mxu0 %v1971
      %v3116 = vpop.f32.mrf.mxu0
      %v3117 = vadd.f32 %v1934, %v3116
      %v3118 = vpop.f32.mrf.mxu0
      %v3119 = vadd.f32 %v1939, %v3118
      %3120 = vmatmul.bf16.gmra.mxu0 %v1974
      %v3121 = vpop.f32.mrf.mxu0
      %v3122 = vadd.f32 %v1944, %v3121
      %v3123 = vpop.f32.mrf.mxu0
      %v3124 = vadd.f32 %v1949, %v3123
      %3125 = vdwg.mxu0
      %3126 = vmatpush.bf16.msra.mxu0 %v2540
      %3127 = vmatpush.bf16.msra.mxu0 %v2532
      %3128 = vmatpush.bf16.msra.mxu0 %v2524
      %3129 = vmatpush.bf16.msra.mxu0 %v2516
      %3130 = vmatpush.bf16.msra.mxu0 %v2508
      %3131 = vmatpush.bf16.msra.mxu0 %v2500
      %3132 = vmatpush.bf16.msra.mxu0 %v2492
      %3133 = vmatpush.bf16.msra.mxu0 %v2484
      %3134 = vmatmul.bf16.gmra.mxu0 %v1972
      %v3135 = vpop.f32.mrf.mxu0
      %v3136 = vadd.f32 %v3117, %v3135
      %v3137 = vpop.f32.mrf.mxu0
      %v3138 = vadd.f32 %v3119, %v3137
      %3139 = vmatmul.bf16.gmra.mxu0 %v1975
      %v3140 = vpop.f32.mrf.mxu0
      %v3141 = vadd.f32 %v3122, %v3140
      %v3142 = vpop.f32.mrf.mxu0
      %v3143 = vadd.f32 %v3124, %v3142
      %3144 = vdwg.mxu0
      %3145 = vmatpush.bf16.msra.mxu0 0
      %3146 = vmatpush.bf16.msra.mxu0 0
      %3147 = vmatpush.bf16.msra.mxu0 0
      %3148 = vmatpush.bf16.msra.mxu0 0
      %3149 = vmatpush.bf16.msra.mxu0 0
      %3150 = vmatpush.bf16.msra.mxu0 0
      %3151 = vmatpush.bf16.msra.mxu0 %v2556
      %3152 = vmatpush.bf16.msra.mxu0 %v2548
      %3153 = vmatmul.bf16.gmra.mxu0 %v2703
      %v3154 = vpop.f32.mrf.mxu0
      %v3155 = vadd.f32 %v3136, %v3154
      %v3156 = vpop.f32.mrf.mxu0
      %v3157 = vadd.f32 %v3138, %v3156
      %3158 = vmatmul.bf16.gmra.mxu0 %v2706
      %v3159 = vpop.f32.mrf.mxu0
      %v3160 = vadd.f32 %v3141, %v3159
      %v3161 = vpop.f32.mrf.mxu0
      %v3162 = vadd.f32 %v3143, %v3161
      %3163 = vdwg.mxu0
      %vm3164 = vcmp.ge.f32.partialorder %v2756, 0.0
      %vm3165 = vcmp.ge.f32.partialorder %v2813, 0.0
      %vm3166 = vcmp.ge.f32.partialorder %v2870, 0.0
      %vm3167 = vcmp.ge.f32.partialorder %v2927, 0.0
      %vm3168 = vcmp.ge.f32.partialorder %v2984, 0.0
      %vm3169 = vcmp.ge.f32.partialorder %v3041, 0.0
      %vm3170 = vcmp.ge.f32.partialorder %v3098, 0.0
      %vm3171 = vcmp.ge.f32.partialorder %v3155, 0.0
      %vm3172 = vcmp.ge.f32.partialorder %v2758, 0.0
      %vm3173 = vcmp.ge.f32.partialorder %v2815, 0.0
      %vm3174 = vcmp.ge.f32.partialorder %v2872, 0.0
      %vm3175 = vcmp.ge.f32.partialorder %v2929, 0.0
      %vm3176 = vcmp.ge.f32.partialorder %v2986, 0.0
      %vm3177 = vcmp.ge.f32.partialorder %v3043, 0.0
      %vm3178 = vcmp.ge.f32.partialorder %v3100, 0.0
      %vm3179 = vcmp.ge.f32.partialorder %v3157, 0.0
      %vm3180 = vcmp.ge.f32.partialorder %v2761, 0.0
      %vm3181 = vcmp.ge.f32.partialorder %v2818, 0.0
      %vm3182 = vcmp.ge.f32.partialorder %v2875, 0.0
      %vm3183 = vcmp.ge.f32.partialorder %v2932, 0.0
      %vm3184 = vcmp.ge.f32.partialorder %v2989, 0.0
      %vm3185 = vcmp.ge.f32.partialorder %v3046, 0.0
      %vm3186 = vcmp.ge.f32.partialorder %v3103, 0.0
      %vm3187 = vcmp.ge.f32.partialorder %v3160, 0.0
      %vm3188 = vcmp.ge.f32.partialorder %v2763, 0.0
      %vm3189 = vcmp.ge.f32.partialorder %v2820, 0.0
      %vm3190 = vcmp.ge.f32.partialorder %v2877, 0.0
      %vm3191 = vcmp.ge.f32.partialorder %v2934, 0.0
      %vm3192 = vcmp.ge.f32.partialorder %v2991, 0.0
      %vm3193 = vcmp.ge.f32.partialorder %v3048, 0.0
      %vm3194 = vcmp.ge.f32.partialorder %v3105, 0.0
      %vm3195 = vcmp.ge.f32.partialorder %v3162, 0.0
      %v3196 = vmul.f32 %v2756, 0.2
      %v3197 = vmul.f32 %v2813, 0.2
      %v3198 = vmul.f32 %v2870, 0.2
      %v3199 = vmul.f32 %v2927, 0.2
      %v3200 = vmul.f32 %v2984, 0.2
      %v3201 = vmul.f32 %v3041, 0.2
      %v3202 = vmul.f32 %v3098, 0.2
      %v3203 = vmul.f32 %v3155, 0.2
      %v3204 = vmul.f32 %v2758, 0.2
      %v3205 = vmul.f32 %v2815, 0.2
      %v3206 = vmul.f32 %v2872, 0.2
      %v3207 = vmul.f32 %v2929, 0.2
      %v3208 = vmul.f32 %v2986, 0.2
      %v3209 = vmul.f32 %v3043, 0.2
      %v3210 = vmul.f32 %v3100, 0.2
      %v3211 = vmul.f32 %v3157, 0.2
      %v3212 = vmul.f32 %v2761, 0.2
      %v3213 = vmul.f32 %v2818, 0.2
      %v3214 = vmul.f32 %v2875, 0.2
      %v3215 = vmul.f32 %v2932, 0.2
      %v3216 = vmul.f32 %v2989, 0.2
      %v3217 = vmul.f32 %v3046, 0.2
      %v3218 = vmul.f32 %v3103, 0.2
      %v3219 = vmul.f32 %v3160, 0.2
      %v3220 = vmul.f32 %v2763, 0.2
      %v3221 = vmul.f32 %v2820, 0.2
      %v3222 = vmul.f32 %v2877, 0.2
      %v3223 = vmul.f32 %v2934, 0.2
      %v3224 = vmul.f32 %v2991, 0.2
      %v3225 = vmul.f32 %v3048, 0.2
      %v3226 = vmul.f32 %v3105, 0.2
      %v3227 = vmul.f32 %v3162, 0.2
      %v3228 = vsel %vm3164, %v2756, %v3196
      %v3229 = vsel %vm3165, %v2813, %v3197
      %v3230 = vsel %vm3166, %v2870, %v3198
      %v3231 = vsel %vm3167, %v2927, %v3199
      %v3232 = vsel %vm3168, %v2984, %v3200
      %v3233 = vsel %vm3169, %v3041, %v3201
      %v3234 = vsel %vm3170, %v3098, %v3202
      %v3235 = vsel %vm3171, %v3155, %v3203
      %v3236 = vsel %vm3172, %v2758, %v3204
      %v3237 = vsel %vm3173, %v2815, %v3205
      %v3238 = vsel %vm3174, %v2872, %v3206
      %v3239 = vsel %vm3175, %v2929, %v3207
      %v3240 = vsel %vm3176, %v2986, %v3208
      %v3241 = vsel %vm3177, %v3043, %v3209
      %v3242 = vsel %vm3178, %v3100, %v3210
      %v3243 = vsel %vm3179, %v3157, %v3211
      %v3244 = vsel %vm3180, %v2761, %v3212
      %v3245 = vsel %vm3181, %v2818, %v3213
      %v3246 = vsel %vm3182, %v2875, %v3214
      %v3247 = vsel %vm3183, %v2932, %v3215
      %v3248 = vsel %vm3184, %v2989, %v3216
      %v3249 = vsel %vm3185, %v3046, %v3217
      %v3250 = vsel %vm3186, %v3103, %v3218
      %v3251 = vsel %vm3187, %v3160, %v3219
      %v3252 = vsel %vm3188, %v2763, %v3220
      %v3253 = vsel %vm3189, %v2820, %v3221
      %v3254 = vsel %vm3190, %v2877, %v3222
      %v3255 = vsel %vm3191, %v2934, %v3223
      %v3256 = vsel %vm3192, %v2991, %v3224
      %v3257 = vsel %vm3193, %v3048, %v3225
      %v3258 = vsel %vm3194, %v3105, %v3226
      %v3259 = vsel %vm3195, %v3162, %v3227
      %v3260 = vld [vmem:[%s3] sm:$0xff]
      %v3262 = vperm.slane %v3260, 0
      %v3263 = vperm.slane %v3260, 1
      %v3264 = vperm.slane %v3260, 2
      %v3265 = vperm.slane %v3260, 3
      %v3266 = vperm.slane %v3260, 4
      %v3267 = vperm.slane %v3260, 5
      %v3268 = vperm.slane %v3260, 6
      %v3269 = vperm.slane %v3260, 7
      %v3278 = vmul.f32 %v3228, %v3262
      %v3279 = vmul.f32 %v3229, %v3263
      %v3280 = vmul.f32 %v3230, %v3264
      %v3281 = vmul.f32 %v3231, %v3265
      %v3282 = vmul.f32 %v3232, %v3266
      %v3283 = vmul.f32 %v3233, %v3267
      %v3284 = vmul.f32 %v3234, %v3268
      %v3285 = vmul.f32 %v3235, %v3269
      %v3286 = vmul.f32 %v3236, %v3262
      %v3287 = vmul.f32 %v3237, %v3263
      %v3288 = vmul.f32 %v3238, %v3264
      %v3289 = vmul.f32 %v3239, %v3265
      %v3290 = vmul.f32 %v3240, %v3266
      %v3291 = vmul.f32 %v3241, %v3267
      %v3292 = vmul.f32 %v3242, %v3268
      %v3293 = vmul.f32 %v3243, %v3269
      %v3294 = vmul.f32 %v3244, %v3262
      %v3295 = vmul.f32 %v3245, %v3263
      %v3296 = vmul.f32 %v3246, %v3264
      %v3297 = vmul.f32 %v3247, %v3265
      %v3298 = vmul.f32 %v3248, %v3266
      %v3299 = vmul.f32 %v3249, %v3267
      %v3300 = vmul.f32 %v3250, %v3268
      %v3301 = vmul.f32 %v3251, %v3269
      %v3302 = vmul.f32 %v3252, %v3262
      %v3303 = vmul.f32 %v3253, %v3263
      %v3304 = vmul.f32 %v3254, %v3264
      %v3305 = vmul.f32 %v3255, %v3265
      %v3306 = vmul.f32 %v3256, %v3266
      %v3307 = vmul.f32 %v3257, %v3267
      %v3308 = vmul.f32 %v3258, %v3268
      %v3309 = vmul.f32 %v3259, %v3269
      %v3310 = vpack.c.bf16 %v3279, %v3278
      %v3311 = vpack.c.bf16 %v3281, %v3280
      %v3312 = vpack.c.bf16 %v3283, %v3282
      %v3313 = vpack.c.bf16 %v3285, %v3284
      %v3314 = vpack.c.bf16 %v3287, %v3286
      %v3315 = vpack.c.bf16 %v3289, %v3288
      %v3316 = vpack.c.bf16 %v3291, %v3290
      %v3317 = vpack.c.bf16 %v3293, %v3292
      %v3318 = vpack.c.bf16 %v3295, %v3294
      %v3319 = vpack.c.bf16 %v3297, %v3296
      %v3320 = vpack.c.bf16 %v3299, %v3298
      %v3321 = vpack.c.bf16 %v3301, %v3300
      %v3322 = vpack.c.bf16 %v3303, %v3302
      %v3323 = vpack.c.bf16 %v3305, %v3304
      %v3324 = vpack.c.bf16 %v3307, %v3306
      %v3325 = vpack.c.bf16 %v3309, %v3308
      %3326 = vst [vmem:[#allocation3] sm:$0xff] %v3310
      %3327 = vst [vmem:[#allocation3 + $0x8] sm:$0xff] %v3311
      %3328 = vst [vmem:[#allocation3 + $0x10] sm:$0xff] %v3312
      %3329 = vst [vmem:[#allocation3 + $0x18] sm:$0xff] %v3313
      %3330 = vst [vmem:[#allocation3 + $0x20] sm:$0xff] %v3314
      %3331 = vst [vmem:[#allocation3 + $0x28] sm:$0xff] %v3315
      %3332 = vst [vmem:[#allocation3 + $0x30] sm:$0xff] %v3316
      %3333 = vst [vmem:[#allocation3 + $0x38] sm:$0xff] %v3317
      %3334 = vst [vmem:[#allocation3 + $0x40] sm:$0xff] %v3318
      %3335 = vst [vmem:[#allocation3 + $0x48] sm:$0xff] %v3319
      %3336 = vst [vmem:[#allocation3 + $0x50] sm:$0xff] %v3320
      %3337 = vst [vmem:[#allocation3 + $0x58] sm:$0xff] %v3321
      %3338 = vst [vmem:[#allocation3 + $0x60] sm:$0xff] %v3322
      %3339 = vst [vmem:[#allocation3 + $0x68] sm:$0xff] %v3323
      %3340 = vst [vmem:[#allocation3 + $0x70] sm:$0xff] %v3324
      %3341 = vst [vmem:[#allocation3 + $0x78] sm:$0xff] %v3325
      %v3342 = vld [vmem:[#allocation3] sm:$0xff]
      %v3343 = vld [vmem:[#allocation3 + $0x8] sm:$0xf]
      %v3344 = vld [vmem:[#allocation3 + $0x20] sm:$0xff]
      %v3345 = vld [vmem:[#allocation3 + $0x28] sm:$0xf]
      %v3346 = vld [vmem:[#allocation3 + $0x40] sm:$0xff]
      %v3347 = vld [vmem:[#allocation3 + $0x48] sm:$0xf]
      %v3348 = vld [vmem:[#allocation3 + $0x60] sm:$0xff]
      %v3349 = vld [vmem:[#allocation3 + $0x68] sm:$0xf]
      %3350 = vst [vmem:[#allocation4] sm:$0xff] %v3342
      %3351 = vst [vmem:[#allocation4 + $0x8] sm:$0xf] %v3343
      %3352 = vst [vmem:[#allocation4 + $0x18] sm:$0xff] %v3344
      %3353 = vst [vmem:[#allocation4 + $0x20] sm:$0xf] %v3345
      %3354 = vst [vmem:[#allocation4 + $0x30] sm:$0xff] %v3346
      %3355 = vst [vmem:[#allocation4 + $0x38] sm:$0xf] %v3347
      %3356 = vst [vmem:[#allocation4 + $0x48] sm:$0xff] %v3348
      %3357 = vst [vmem:[#allocation4 + $0x50] sm:$0xf] %v3349
      %v3358 = vld [vmem:[#allocation3] sm:$0xff]
      %v3359 = vld [vmem:[#allocation3 + $0x8] sm:$0xff]
      %v3360 = vld [vmem:[#allocation3 + $0x20] sm:$0xff]
      %v3361 = vld [vmem:[#allocation3 + $0x28] sm:$0xff]
      %v3362 = vld [vmem:[#allocation3 + $0x40] sm:$0xff]
      %v3363 = vld [vmem:[#allocation3 + $0x48] sm:$0xff]
      %v3364 = vld [vmem:[#allocation3 + $0x60] sm:$0xff]
      %v3365 = vld [vmem:[#allocation3 + $0x68] sm:$0xff]
      %3374 = vrot.lane.b32.xlu0 %v3358, 127
      %v3375 = vpop.permute.xlu0 %3374
      %3376 = vrot.lane.b32.xlu0 %v3359, 127
      %v3377 = vpop.permute.xlu0 %3376
      %3378 = vrot.lane.b32.xlu0 %v3360, 127
      %v3379 = vpop.permute.xlu0 %3378
      %3380 = vrot.lane.b32.xlu0 %v3361, 127
      %v3381 = vpop.permute.xlu0 %3380
      %3382 = vrot.lane.b32.xlu0 %v3362, 127
      %v3383 = vpop.permute.xlu0 %3382
      %3384 = vrot.lane.b32.xlu0 %v3363, 127
      %v3385 = vpop.permute.xlu0 %3384
      %3386 = vrot.lane.b32.xlu0 %v3364, 127
      %v3387 = vpop.permute.xlu0 %3386
      %3388 = vrot.lane.b32.xlu0 %v3365, 127
      %v3389 = vpop.permute.xlu0 %3388
      %v3390 = vrot.slane %v3375, 4
      %v3391 = vrot.slane %v3377, 4
      %v3392 = vrot.slane %v3379, 4
      %v3393 = vrot.slane %v3381, 4
      %v3394 = vrot.slane %v3383, 4
      %v3395 = vrot.slane %v3385, 4
      %v3396 = vrot.slane %v3387, 4
      %v3397 = vrot.slane %v3389, 4
      %v3398 = vsel %vm337, %v3390, %v3391
      %vm3399 = vcmask 1039360
      %v3400 = vsel %vm3399, %v3375, %v3398
      %v3401 = vsel %vm3399, %v3377, %v3391
      %v3402 = vsel %vm337, %v3392, %v3393
      %v3403 = vsel %vm3399, %v3379, %v3402
      %v3404 = vsel %vm3399, %v3381, %v3393
      %v3405 = vsel %vm337, %v3394, %v3395
      %v3406 = vsel %vm3399, %v3383, %v3405
      %v3407 = vsel %vm3399, %v3385, %v3395
      %v3408 = vsel %vm337, %v3396, %v3397
      %v3409 = vsel %vm3399, %v3387, %v3408
      %v3410 = vsel %vm3399, %v3389, %v3397
      %3419 = vst [vmem:[#allocation4 + $0x60] sm:$0xff] %v3400
      %3420 = vst [vmem:[#allocation4 + $0x68] sm:$0xf] %v3401
      %3421 = vst [vmem:[#allocation4 + $0x78] sm:$0xff] %v3403
      %3422 = vst [vmem:[#allocation4 + $0x80] sm:$0xf] %v3404
      %3423 = vst [vmem:[#allocation4 + $0x90] sm:$0xff] %v3406
      %3424 = vst [vmem:[#allocation4 + $0x98] sm:$0xf] %v3407
      %3425 = vst [vmem:[#allocation4 + $0xa8] sm:$0xff] %v3409
      %3426 = vst [vmem:[#allocation4 + $0xb0] sm:$0xf] %v3410
      %v3427 = vld [vmem:[#allocation3] sm:$0xff]
      %v3428 = vld [vmem:[#allocation3 + $0x8] sm:$0xff]
      %v3429 = vld [vmem:[#allocation3 + $0x20] sm:$0xff]
      %v3430 = vld [vmem:[#allocation3 + $0x28] sm:$0xff]
      %v3431 = vld [vmem:[#allocation3 + $0x40] sm:$0xff]
      %v3432 = vld [vmem:[#allocation3 + $0x48] sm:$0xff]
      %v3433 = vld [vmem:[#allocation3 + $0x60] sm:$0xff]
      %v3434 = vld [vmem:[#allocation3 + $0x68] sm:$0xff]
      %3443 = vrot.lane.b32.xlu0 %v3427, 126
      %v3444 = vpop.permute.xlu0 %3443
      %3445 = vrot.lane.b32.xlu0 %v3428, 126
      %v3446 = vpop.permute.xlu0 %3445
      %3447 = vrot.lane.b32.xlu0 %v3429, 126
      %v3448 = vpop.permute.xlu0 %3447
      %3449 = vrot.lane.b32.xlu0 %v3430, 126
      %v3450 = vpop.permute.xlu0 %3449
      %3451 = vrot.lane.b32.xlu0 %v3431, 126
      %v3452 = vpop.permute.xlu0 %3451
      %3453 = vrot.lane.b32.xlu0 %v3432, 126
      %v3454 = vpop.permute.xlu0 %3453
      %3455 = vrot.lane.b32.xlu0 %v3433, 126
      %v3456 = vpop.permute.xlu0 %3455
      %3457 = vrot.lane.b32.xlu0 %v3434, 126
      %v3458 = vpop.permute.xlu0 %3457
      %v3459 = vrot.slane %v3444, 4
      %v3460 = vrot.slane %v3446, 4
      %v3461 = vrot.slane %v3448, 4
      %v3462 = vrot.slane %v3450, 4
      %v3463 = vrot.slane %v3452, 4
      %v3464 = vrot.slane %v3454, 4
      %v3465 = vrot.slane %v3456, 4
      %v3466 = vrot.slane %v3458, 4
      %v3467 = vsel %vm337, %v3459, %v3460
      %v3468 = vsel %vm339, %v3444, %v3467
      %v3469 = vsel %vm339, %v3446, %v3460
      %v3470 = vsel %vm337, %v3461, %v3462
      %v3471 = vsel %vm339, %v3448, %v3470
      %v3472 = vsel %vm339, %v3450, %v3462
      %v3473 = vsel %vm337, %v3463, %v3464
      %v3474 = vsel %vm339, %v3452, %v3473
      %v3475 = vsel %vm339, %v3454, %v3464
      %v3476 = vsel %vm337, %v3465, %v3466
      %v3477 = vsel %vm339, %v3456, %v3476
      %v3478 = vsel %vm339, %v3458, %v3466
      %3487 = vst [vmem:[#allocation4 + $0xc0] sm:$0xff] %v3468
      %3488 = vst [vmem:[#allocation4 + $0xc8] sm:$0xf] %v3469
      %3489 = vst [vmem:[#allocation4 + $0xd8] sm:$0xff] %v3471
      %3490 = vst [vmem:[#allocation4 + $0xe0] sm:$0xf] %v3472
      %3491 = vst [vmem:[#allocation4 + $0xf0] sm:$0xff] %v3474
      %3492 = vst [vmem:[#allocation4 + $0xf8] sm:$0xf] %v3475
      %3493 = vst [vmem:[#allocation4 + $0x108] sm:$0xff] %v3477
      %3494 = vst [vmem:[#allocation4 + $0x110] sm:$0xf] %v3478
      %v3495 = vld [vmem:[#allocation3] sm:$0xff]
      %v3496 = vld [vmem:[#allocation3 + $0x8] sm:$0xff]
      %v3497 = vld [vmem:[#allocation3 + $0x20] sm:$0xff]
      %v3498 = vld [vmem:[#allocation3 + $0x28] sm:$0xff]
      %v3499 = vld [vmem:[#allocation3 + $0x40] sm:$0xff]
      %v3500 = vld [vmem:[#allocation3 + $0x48] sm:$0xff]
      %v3501 = vld [vmem:[#allocation3 + $0x60] sm:$0xff]
      %v3502 = vld [vmem:[#allocation3 + $0x68] sm:$0xff]
      %3511 = vrot.lane.b32.xlu0 %v3495, 106
      %v3512 = vpop.permute.xlu0 %3511
      %3513 = vrot.lane.b32.xlu0 %v3496, 106
      %v3514 = vpop.permute.xlu0 %3513
      %3515 = vrot.lane.b32.xlu0 %v3497, 106
      %v3516 = vpop.permute.xlu0 %3515
      %3517 = vrot.lane.b32.xlu0 %v3498, 106
      %v3518 = vpop.permute.xlu0 %3517
      %3519 = vrot.lane.b32.xlu0 %v3499, 106
      %v3520 = vpop.permute.xlu0 %3519
      %3521 = vrot.lane.b32.xlu0 %v3500, 106
      %v3522 = vpop.permute.xlu0 %3521
      %3523 = vrot.lane.b32.xlu0 %v3501, 106
      %v3524 = vpop.permute.xlu0 %3523
      %3525 = vrot.lane.b32.xlu0 %v3502, 106
      %v3526 = vpop.permute.xlu0 %3525
      %v3527 = vrot.slane %v3512, 4
      %v3528 = vrot.slane %v3514, 4
      %v3529 = vrot.slane %v3516, 4
      %v3530 = vrot.slane %v3518, 4
      %v3531 = vrot.slane %v3520, 4
      %v3532 = vrot.slane %v3522, 4
      %v3533 = vrot.slane %v3524, 4
      %v3534 = vrot.slane %v3526, 4
      %v3535 = vsel %vm337, %v3527, %v3528
      %vm3536 = vcmask 867328
      %v3537 = vsel %vm3536, %v3512, %v3535
      %v3538 = vsel %vm3536, %v3514, %v3528
      %v3539 = vsel %vm337, %v3529, %v3530
      %v3540 = vsel %vm3536, %v3516, %v3539
      %v3541 = vsel %vm3536, %v3518, %v3530
      %v3542 = vsel %vm337, %v3531, %v3532
      %v3543 = vsel %vm3536, %v3520, %v3542
      %v3544 = vsel %vm3536, %v3522, %v3532
      %v3545 = vsel %vm337, %v3533, %v3534
      %v3546 = vsel %vm3536, %v3524, %v3545
      %v3547 = vsel %vm3536, %v3526, %v3534
      %3556 = vst [vmem:[#allocation4 + $0x120] sm:$0xff] %v3537
      %3557 = vst [vmem:[#allocation4 + $0x128] sm:$0xf] %v3538
      %3558 = vst [vmem:[#allocation4 + $0x138] sm:$0xff] %v3540
      %3559 = vst [vmem:[#allocation4 + $0x140] sm:$0xf] %v3541
      %3560 = vst [vmem:[#allocation4 + $0x150] sm:$0xff] %v3543
      %3561 = vst [vmem:[#allocation4 + $0x158] sm:$0xf] %v3544
      %3562 = vst [vmem:[#allocation4 + $0x168] sm:$0xff] %v3546
      %3563 = vst [vmem:[#allocation4 + $0x170] sm:$0xf] %v3547
      %v3564 = vld [vmem:[#allocation3] sm:$0xff]
      %v3565 = vld [vmem:[#allocation3 + $0x8] sm:$0xff]
      %v3566 = vld [vmem:[#allocation3 + $0x20] sm:$0xff]
      %v3567 = vld [vmem:[#allocation3 + $0x28] sm:$0xff]
      %v3568 = vld [vmem:[#allocation3 + $0x40] sm:$0xff]
      %v3569 = vld [vmem:[#allocation3 + $0x48] sm:$0xff]
      %v3570 = vld [vmem:[#allocation3 + $0x60] sm:$0xff]
      %v3571 = vld [vmem:[#allocation3 + $0x68] sm:$0xff]
      %3580 = vrot.lane.b32.xlu0 %v3564, 105
      %v3581 = vpop.permute.xlu0 %3580
      %3582 = vrot.lane.b32.xlu0 %v3565, 105
      %v3583 = vpop.permute.xlu0 %3582
      %3584 = vrot.lane.b32.xlu0 %v3566, 105
      %v3585 = vpop.permute.xlu0 %3584
      %3586 = vrot.lane.b32.xlu0 %v3567, 105
      %v3587 = vpop.permute.xlu0 %3586
      %3588 = vrot.lane.b32.xlu0 %v3568, 105
      %v3589 = vpop.permute.xlu0 %3588
      %3590 = vrot.lane.b32.xlu0 %v3569, 105
      %v3591 = vpop.permute.xlu0 %3590
      %3592 = vrot.lane.b32.xlu0 %v3570, 105
      %v3593 = vpop.permute.xlu0 %3592
      %3594 = vrot.lane.b32.xlu0 %v3571, 105
      %v3595 = vpop.permute.xlu0 %3594
      %v3596 = vrot.slane %v3581, 4
      %v3597 = vrot.slane %v3583, 4
      %v3598 = vrot.slane %v3585, 4
      %v3599 = vrot.slane %v3587, 4
      %v3600 = vrot.slane %v3589, 4
      %v3601 = vrot.slane %v3591, 4
      %v3602 = vrot.slane %v3593, 4
      %v3603 = vrot.slane %v3595, 4
      %v3604 = vsel %vm337, %v3596, %v3597
      %vm3605 = vcmask 859136
      %v3606 = vsel %vm3605, %v3581, %v3604
      %v3607 = vsel %vm3605, %v3583, %v3597
      %v3608 = vsel %vm337, %v3598, %v3599
      %v3609 = vsel %vm3605, %v3585, %v3608
      %v3610 = vsel %vm3605, %v3587, %v3599
      %v3611 = vsel %vm337, %v3600, %v3601
      %v3612 = vsel %vm3605, %v3589, %v3611
      %v3613 = vsel %vm3605, %v3591, %v3601
      %v3614 = vsel %vm337, %v3602, %v3603
      %v3615 = vsel %vm3605, %v3593, %v3614
      %v3616 = vsel %vm3605, %v3595, %v3603
      %3625 = vst [vmem:[#allocation4 + $0x180] sm:$0xff] %v3606
      %3626 = vst [vmem:[#allocation4 + $0x188] sm:$0xf] %v3607
      %3627 = vst [vmem:[#allocation4 + $0x198] sm:$0xff] %v3609
      %3628 = vst [vmem:[#allocation4 + $0x1a0] sm:$0xf] %v3610
      %3629 = vst [vmem:[#allocation4 + $0x1b0] sm:$0xff] %v3612
      %3630 = vst [vmem:[#allocation4 + $0x1b8] sm:$0xf] %v3613
      %3631 = vst [vmem:[#allocation4 + $0x1c8] sm:$0xff] %v3615
      %3632 = vst [vmem:[#allocation4 + $0x1d0] sm:$0xf] %v3616
      %v3633 = vld [vmem:[#allocation3] sm:$0xff]
      %v3634 = vld [vmem:[#allocation3 + $0x8] sm:$0xff]
      %v3635 = vld [vmem:[#allocation3 + $0x20] sm:$0xff]
      %v3636 = vld [vmem:[#allocation3 + $0x28] sm:$0xff]
      %v3637 = vld [vmem:[#allocation3 + $0x40] sm:$0xff]
      %v3638 = vld [vmem:[#allocation3 + $0x48] sm:$0xff]
      %v3639 = vld [vmem:[#allocation3 + $0x60] sm:$0xff]
      %v3640 = vld [vmem:[#allocation3 + $0x68] sm:$0xff]
      %3649 = vrot.lane.b32.xlu0 %v3633, 104
      %v3650 = vpop.permute.xlu0 %3649
      %3651 = vrot.lane.b32.xlu0 %v3634, 104
      %v3652 = vpop.permute.xlu0 %3651
      %3653 = vrot.lane.b32.xlu0 %v3635, 104
      %v3654 = vpop.permute.xlu0 %3653
      %3655 = vrot.lane.b32.xlu0 %v3636, 104
      %v3656 = vpop.permute.xlu0 %3655
      %3657 = vrot.lane.b32.xlu0 %v3637, 104
      %v3658 = vpop.permute.xlu0 %3657
      %3659 = vrot.lane.b32.xlu0 %v3638, 104
      %v3660 = vpop.permute.xlu0 %3659
      %3661 = vrot.lane.b32.xlu0 %v3639, 104
      %v3662 = vpop.permute.xlu0 %3661
      %3663 = vrot.lane.b32.xlu0 %v3640, 104
      %v3664 = vpop.permute.xlu0 %3663
      %v3665 = vrot.slane %v3650, 4
      %v3666 = vrot.slane %v3652, 4
      %v3667 = vrot.slane %v3654, 4
      %v3668 = vrot.slane %v3656, 4
      %v3669 = vrot.slane %v3658, 4
      %v3670 = vrot.slane %v3660, 4
      %v3671 = vrot.slane %v3662, 4
      %v3672 = vrot.slane %v3664, 4
      %v3673 = vsel %vm337, %v3665, %v3666
      %vm3674 = vcmask 850944
      %v3675 = vsel %vm3674, %v3650, %v3673
      %v3676 = vsel %vm3674, %v3652, %v3666
      %v3677 = vsel %vm337, %v3667, %v3668
      %v3678 = vsel %vm3674, %v3654, %v3677
      %v3679 = vsel %vm3674, %v3656, %v3668
      %v3680 = vsel %vm337, %v3669, %v3670
      %v3681 = vsel %vm3674, %v3658, %v3680
      %v3682 = vsel %vm3674, %v3660, %v3670
      %v3683 = vsel %vm337, %v3671, %v3672
      %v3684 = vsel %vm3674, %v3662, %v3683
      %v3685 = vsel %vm3674, %v3664, %v3672
      %3694 = vst [vmem:[#allocation4 + $0x1e0] sm:$0xff] %v3675
      %3695 = vst [vmem:[#allocation4 + $0x1e8] sm:$0xf] %v3676
      %3696 = vst [vmem:[#allocation4 + $0x1f8] sm:$0xff] %v3678
      %3697 = vst [vmem:[#allocation4 + $0x200] sm:$0xf] %v3679
      %3698 = vst [vmem:[#allocation4 + $0x210] sm:$0xff] %v3681
      %3699 = vst [vmem:[#allocation4 + $0x218] sm:$0xf] %v3682
      %3700 = vst [vmem:[#allocation4 + $0x228] sm:$0xff] %v3684
      %3701 = vst [vmem:[#allocation4 + $0x230] sm:$0xf] %v3685
      %v3702 = vld [vmem:[#allocation3] sm:$0xff]
      %v3703 = vld [vmem:[#allocation3 + $0x8] sm:$0xff]
      %v3704 = vld [vmem:[#allocation3 + $0x20] sm:$0xff]
      %v3705 = vld [vmem:[#allocation3 + $0x28] sm:$0xff]
      %v3706 = vld [vmem:[#allocation3 + $0x40] sm:$0xff]
      %v3707 = vld [vmem:[#allocation3 + $0x48] sm:$0xff]
      %v3708 = vld [vmem:[#allocation3 + $0x60] sm:$0xff]
      %v3709 = vld [vmem:[#allocation3 + $0x68] sm:$0xff]
      %3718 = vrot.lane.b32.xlu0 %v3702, 84
      %v3719 = vpop.permute.xlu0 %3718
      %3720 = vrot.lane.b32.xlu0 %v3703, 84
      %v3721 = vpop.permute.xlu0 %3720
      %3722 = vrot.lane.b32.xlu0 %v3704, 84
      %v3723 = vpop.permute.xlu0 %3722
      %3724 = vrot.lane.b32.xlu0 %v3705, 84
      %v3725 = vpop.permute.xlu0 %3724
      %3726 = vrot.lane.b32.xlu0 %v3706, 84
      %v3727 = vpop.permute.xlu0 %3726
      %3728 = vrot.lane.b32.xlu0 %v3707, 84
      %v3729 = vpop.permute.xlu0 %3728
      %3730 = vrot.lane.b32.xlu0 %v3708, 84
      %v3731 = vpop.permute.xlu0 %3730
      %3732 = vrot.lane.b32.xlu0 %v3709, 84
      %v3733 = vpop.permute.xlu0 %3732
      %v3734 = vrot.slane %v3719, 4
      %v3735 = vrot.slane %v3721, 4
      %v3736 = vrot.slane %v3723, 4
      %v3737 = vrot.slane %v3725, 4
      %v3738 = vrot.slane %v3727, 4
      %v3739 = vrot.slane %v3729, 4
      %v3740 = vrot.slane %v3731, 4
      %v3741 = vrot.slane %v3733, 4
      %v3742 = vsel %vm337, %v3734, %v3735
      %v3743 = vsel %vm525, %v3719, %v3742
      %v3744 = vsel %vm525, %v3721, %v3735
      %v3745 = vsel %vm337, %v3736, %v3737
      %v3746 = vsel %vm525, %v3723, %v3745
      %v3747 = vsel %vm525, %v3725, %v3737
      %v3748 = vsel %vm337, %v3738, %v3739
      %v3749 = vsel %vm525, %v3727, %v3748
      %v3750 = vsel %vm525, %v3729, %v3739
      %v3751 = vsel %vm337, %v3740, %v3741
      %v3752 = vsel %vm525, %v3731, %v3751
      %v3753 = vsel %vm525, %v3733, %v3741
      %3762 = vst [vmem:[#allocation4 + $0x240] sm:$0xff] %v3743
      %3763 = vst [vmem:[#allocation4 + $0x248] sm:$0xf] %v3744
      %3764 = vst [vmem:[#allocation4 + $0x258] sm:$0xff] %v3746
      %3765 = vst [vmem:[#allocation4 + $0x260] sm:$0xf] %v3747
      %3766 = vst [vmem:[#allocation4 + $0x270] sm:$0xff] %v3749
      %3767 = vst [vmem:[#allocation4 + $0x278] sm:$0xf] %v3750
      %3768 = vst [vmem:[#allocation4 + $0x288] sm:$0xff] %v3752
      %3769 = vst [vmem:[#allocation4 + $0x290] sm:$0xf] %v3753
      %v3770 = vld [vmem:[#allocation3] sm:$0xff]
      %v3771 = vld [vmem:[#allocation3 + $0x8] sm:$0xff]
      %v3772 = vld [vmem:[#allocation3 + $0x20] sm:$0xff]
      %v3773 = vld [vmem:[#allocation3 + $0x28] sm:$0xff]
      %v3774 = vld [vmem:[#allocation3 + $0x40] sm:$0xff]
      %v3775 = vld [vmem:[#allocation3 + $0x48] sm:$0xff]
      %v3776 = vld [vmem:[#allocation3 + $0x60] sm:$0xff]
      %v3777 = vld [vmem:[#allocation3 + $0x68] sm:$0xff]
      %3786 = vrot.lane.b32.xlu0 %v3770, 83
      %v3787 = vpop.permute.xlu0 %3786
      %3788 = vrot.lane.b32.xlu0 %v3771, 83
      %v3789 = vpop.permute.xlu0 %3788
      %3790 = vrot.lane.b32.xlu0 %v3772, 83
      %v3791 = vpop.permute.xlu0 %3790
      %3792 = vrot.lane.b32.xlu0 %v3773, 83
      %v3793 = vpop.permute.xlu0 %3792
      %3794 = vrot.lane.b32.xlu0 %v3774, 83
      %v3795 = vpop.permute.xlu0 %3794
      %3796 = vrot.lane.b32.xlu0 %v3775, 83
      %v3797 = vpop.permute.xlu0 %3796
      %3798 = vrot.lane.b32.xlu0 %v3776, 83
      %v3799 = vpop.permute.xlu0 %3798
      %3800 = vrot.lane.b32.xlu0 %v3777, 83
      %v3801 = vpop.permute.xlu0 %3800
      %v3802 = vrot.slane %v3787, 4
      %v3803 = vrot.slane %v3789, 4
      %v3804 = vrot.slane %v3791, 4
      %v3805 = vrot.slane %v3793, 4
      %v3806 = vrot.slane %v3795, 4
      %v3807 = vrot.slane %v3797, 4
      %v3808 = vrot.slane %v3799, 4
      %v3809 = vrot.slane %v3801, 4
      %v3810 = vsel %vm337, %v3802, %v3803
      %vm3811 = vcmask 678912
      %v3812 = vsel %vm3811, %v3787, %v3810
      %v3813 = vsel %vm3811, %v3789, %v3803
      %v3814 = vsel %vm337, %v3804, %v3805
      %v3815 = vsel %vm3811, %v3791, %v3814
      %v3816 = vsel %vm3811, %v3793, %v3805
      %v3817 = vsel %vm337, %v3806, %v3807
      %v3818 = vsel %vm3811, %v3795, %v3817
      %v3819 = vsel %vm3811, %v3797, %v3807
      %v3820 = vsel %vm337, %v3808, %v3809
      %v3821 = vsel %vm3811, %v3799, %v3820
      %v3822 = vsel %vm3811, %v3801, %v3809
      %3831 = vst [vmem:[#allocation4 + $0x2a0] sm:$0xff] %v3812
      %3832 = vst [vmem:[#allocation4 + $0x2a8] sm:$0xf] %v3813
      %3833 = vst [vmem:[#allocation4 + $0x2b8] sm:$0xff] %v3815
      %3834 = vst [vmem:[#allocation4 + $0x2c0] sm:$0xf] %v3816
      %3835 = vst [vmem:[#allocation4 + $0x2d0] sm:$0xff] %v3818
      %3836 = vst [vmem:[#allocation4 + $0x2d8] sm:$0xf] %v3819
      %3837 = vst [vmem:[#allocation4 + $0x2e8] sm:$0xff] %v3821
      %3838 = vst [vmem:[#allocation4 + $0x2f0] sm:$0xf] %v3822
      %v3839 = vld [vmem:[#allocation3] sm:$0xff]
      %v3840 = vld [vmem:[#allocation3 + $0x8] sm:$0xff]
      %v3841 = vld [vmem:[#allocation3 + $0x20] sm:$0xff]
      %v3842 = vld [vmem:[#allocation3 + $0x28] sm:$0xff]
      %v3843 = vld [vmem:[#allocation3 + $0x40] sm:$0xff]
      %v3844 = vld [vmem:[#allocation3 + $0x48] sm:$0xff]
      %v3845 = vld [vmem:[#allocation3 + $0x60] sm:$0xff]
      %v3846 = vld [vmem:[#allocation3 + $0x68] sm:$0xff]
      %3855 = vrot.lane.b32.xlu0 %v3839, 82
      %v3856 = vpop.permute.xlu0 %3855
      %3857 = vrot.lane.b32.xlu0 %v3840, 82
      %v3858 = vpop.permute.xlu0 %3857
      %3859 = vrot.lane.b32.xlu0 %v3841, 82
      %v3860 = vpop.permute.xlu0 %3859
      %3861 = vrot.lane.b32.xlu0 %v3842, 82
      %v3862 = vpop.permute.xlu0 %3861
      %3863 = vrot.lane.b32.xlu0 %v3843, 82
      %v3864 = vpop.permute.xlu0 %3863
      %3865 = vrot.lane.b32.xlu0 %v3844, 82
      %v3866 = vpop.permute.xlu0 %3865
      %3867 = vrot.lane.b32.xlu0 %v3845, 82
      %v3868 = vpop.permute.xlu0 %3867
      %3869 = vrot.lane.b32.xlu0 %v3846, 82
      %v3870 = vpop.permute.xlu0 %3869
      %v3871 = vrot.slane %v3856, 4
      %v3872 = vrot.slane %v3858, 4
      %v3873 = vrot.slane %v3860, 4
      %v3874 = vrot.slane %v3862, 4
      %v3875 = vrot.slane %v3864, 4
      %v3876 = vrot.slane %v3866, 4
      %v3877 = vrot.slane %v3868, 4
      %v3878 = vrot.slane %v3870, 4
      %v3879 = vsel %vm337, %v3871, %v3872
      %v3880 = vsel %vm618, %v3856, %v3879
      %v3881 = vsel %vm618, %v3858, %v3872
      %v3882 = vsel %vm337, %v3873, %v3874
      %v3883 = vsel %vm618, %v3860, %v3882
      %v3884 = vsel %vm618, %v3862, %v3874
      %v3885 = vsel %vm337, %v3875, %v3876
      %v3886 = vsel %vm618, %v3864, %v3885
      %v3887 = vsel %vm618, %v3866, %v3876
      %v3888 = vsel %vm337, %v3877, %v3878
      %v3889 = vsel %vm618, %v3868, %v3888
      %v3890 = vsel %vm618, %v3870, %v3878
      %3899 = vst [vmem:[#allocation4 + $0x300] sm:$0xff] %v3880
      %3900 = vst [vmem:[#allocation4 + $0x308] sm:$0xf] %v3881
      %3901 = vst [vmem:[#allocation4 + $0x318] sm:$0xff] %v3883
      %3902 = vst [vmem:[#allocation4 + $0x320] sm:$0xf] %v3884
      %3903 = vst [vmem:[#allocation4 + $0x330] sm:$0xff] %v3886
      %3904 = vst [vmem:[#allocation4 + $0x338] sm:$0xf] %v3887
      %3905 = vst [vmem:[#allocation4 + $0x348] sm:$0xff] %v3889
      %3906 = vst [vmem:[#allocation4 + $0x350] sm:$0xf] %v3890
      %v3907 = vld [vmem:[#allocation3 + $0x10] sm:$0xff]
      %v3908 = vld [vmem:[#allocation3 + $0x18] sm:$0xf]
      %v3909 = vld [vmem:[#allocation3 + $0x30] sm:$0xff]
      %v3910 = vld [vmem:[#allocation3 + $0x38] sm:$0xf]
      %v3911 = vld [vmem:[#allocation3 + $0x50] sm:$0xff]
      %v3912 = vld [vmem:[#allocation3 + $0x58] sm:$0xf]
      %v3913 = vld [vmem:[#allocation3 + $0x70] sm:$0xff]
      %v3914 = vld [vmem:[#allocation3 + $0x78] sm:$0xf]
      %3915 = vst [vmem:[#allocation4 + $0xc] sm:$0xff] %v3907
      %3916 = vst [vmem:[#allocation4 + $0x14] sm:$0xf] %v3908
      %3917 = vst [vmem:[#allocation4 + $0x24] sm:$0xff] %v3909
      %3918 = vst [vmem:[#allocation4 + $0x2c] sm:$0xf] %v3910
      %3919 = vst [vmem:[#allocation4 + $0x3c] sm:$0xff] %v3911
      %3920 = vst [vmem:[#allocation4 + $0x44] sm:$0xf] %v3912
      %3921 = vst [vmem:[#allocation4 + $0x54] sm:$0xff] %v3913
      %3922 = vst [vmem:[#allocation4 + $0x5c] sm:$0xf] %v3914
      %v3923 = vld [vmem:[#allocation3 + $0x10] sm:$0xff]
      %v3924 = vld [vmem:[#allocation3 + $0x18] sm:$0xff]
      %v3925 = vld [vmem:[#allocation3 + $0x30] sm:$0xff]
      %v3926 = vld [vmem:[#allocation3 + $0x38] sm:$0xff]
      %v3927 = vld [vmem:[#allocation3 + $0x50] sm:$0xff]
      %v3928 = vld [vmem:[#allocation3 + $0x58] sm:$0xff]
      %v3929 = vld [vmem:[#allocation3 + $0x70] sm:$0xff]
      %v3930 = vld [vmem:[#allocation3 + $0x78] sm:$0xff]
      %3939 = vrot.lane.b32.xlu0 %v3923, 127
      %v3940 = vpop.permute.xlu0 %3939
      %3941 = vrot.lane.b32.xlu0 %v3924, 127
      %v3942 = vpop.permute.xlu0 %3941
      %3943 = vrot.lane.b32.xlu0 %v3925, 127
      %v3944 = vpop.permute.xlu0 %3943
      %3945 = vrot.lane.b32.xlu0 %v3926, 127
      %v3946 = vpop.permute.xlu0 %3945
      %3947 = vrot.lane.b32.xlu0 %v3927, 127
      %v3948 = vpop.permute.xlu0 %3947
      %3949 = vrot.lane.b32.xlu0 %v3928, 127
      %v3950 = vpop.permute.xlu0 %3949
      %3951 = vrot.lane.b32.xlu0 %v3929, 127
      %v3952 = vpop.permute.xlu0 %3951
      %3953 = vrot.lane.b32.xlu0 %v3930, 127
      %v3954 = vpop.permute.xlu0 %3953
      %v3955 = vrot.slane %v3940, 4
      %v3956 = vrot.slane %v3942, 4
      %v3957 = vrot.slane %v3944, 4
      %v3958 = vrot.slane %v3946, 4
      %v3959 = vrot.slane %v3948, 4
      %v3960 = vrot.slane %v3950, 4
      %v3961 = vrot.slane %v3952, 4
      %v3962 = vrot.slane %v3954, 4
      %v3963 = vsel %vm337, %v3955, %v3956
      %v3964 = vsel %vm3399, %v3940, %v3963
      %v3965 = vsel %vm3399, %v3942, %v3956
      %v3966 = vsel %vm337, %v3957, %v3958
      %v3967 = vsel %vm3399, %v3944, %v3966
      %v3968 = vsel %vm3399, %v3946, %v3958
      %v3969 = vsel %vm337, %v3959, %v3960
      %v3970 = vsel %vm3399, %v3948, %v3969
      %v3971 = vsel %vm3399, %v3950, %v3960
      %v3972 = vsel %vm337, %v3961, %v3962
      %v3973 = vsel %vm3399, %v3952, %v3972
      %v3974 = vsel %vm3399, %v3954, %v3962
      %3983 = vst [vmem:[#allocation4 + $0x6c] sm:$0xff] %v3964
      %3984 = vst [vmem:[#allocation4 + $0x74] sm:$0xf] %v3965
      %3985 = vst [vmem:[#allocation4 + $0x84] sm:$0xff] %v3967
      %3986 = vst [vmem:[#allocation4 + $0x8c] sm:$0xf] %v3968
      %3987 = vst [vmem:[#allocation4 + $0x9c] sm:$0xff] %v3970
      %3988 = vst [vmem:[#allocation4 + $0xa4] sm:$0xf] %v3971
      %3989 = vst [vmem:[#allocation4 + $0xb4] sm:$0xff] %v3973
      %3990 = vst [vmem:[#allocation4 + $0xbc] sm:$0xf] %v3974
      %v3991 = vld [vmem:[#allocation3 + $0x10] sm:$0xff]
      %v3992 = vld [vmem:[#allocation3 + $0x18] sm:$0xff]
      %v3993 = vld [vmem:[#allocation3 + $0x30] sm:$0xff]
      %v3994 = vld [vmem:[#allocation3 + $0x38] sm:$0xff]
      %v3995 = vld [vmem:[#allocation3 + $0x50] sm:$0xff]
      %v3996 = vld [vmem:[#allocation3 + $0x58] sm:$0xff]
      %v3997 = vld [vmem:[#allocation3 + $0x70] sm:$0xff]
      %v3998 = vld [vmem:[#allocation3 + $0x78] sm:$0xff]
      %4007 = vrot.lane.b32.xlu0 %v3991, 126
      %v4008 = vpop.permute.xlu0 %4007
      %4009 = vrot.lane.b32.xlu0 %v3992, 126
      %v4010 = vpop.permute.xlu0 %4009
      %4011 = vrot.lane.b32.xlu0 %v3993, 126
      %v4012 = vpop.permute.xlu0 %4011
      %4013 = vrot.lane.b32.xlu0 %v3994, 126
      %v4014 = vpop.permute.xlu0 %4013
      %4015 = vrot.lane.b32.xlu0 %v3995, 126
      %v4016 = vpop.permute.xlu0 %4015
      %4017 = vrot.lane.b32.xlu0 %v3996, 126
      %v4018 = vpop.permute.xlu0 %4017
      %4019 = vrot.lane.b32.xlu0 %v3997, 126
      %v4020 = vpop.permute.xlu0 %4019
      %4021 = vrot.lane.b32.xlu0 %v3998, 126
      %v4022 = vpop.permute.xlu0 %4021
      %v4023 = vrot.slane %v4008, 4
      %v4024 = vrot.slane %v4010, 4
      %v4025 = vrot.slane %v4012, 4
      %v4026 = vrot.slane %v4014, 4
      %v4027 = vrot.slane %v4016, 4
      %v4028 = vrot.slane %v4018, 4
      %v4029 = vrot.slane %v4020, 4
      %v4030 = vrot.slane %v4022, 4
      %v4031 = vsel %vm337, %v4023, %v4024
      %v4032 = vsel %vm339, %v4008, %v4031
      %v4033 = vsel %vm339, %v4010, %v4024
      %v4034 = vsel %vm337, %v4025, %v4026
      %v4035 = vsel %vm339, %v4012, %v4034
      %v4036 = vsel %vm339, %v4014, %v4026
      %v4037 = vsel %vm337, %v4027, %v4028
      %v4038 = vsel %vm339, %v4016, %v4037
      %v4039 = vsel %vm339, %v4018, %v4028
      %v4040 = vsel %vm337, %v4029, %v4030
      %v4041 = vsel %vm339, %v4020, %v4040
      %v4042 = vsel %vm339, %v4022, %v4030
      %4051 = vst [vmem:[#allocation4 + $0xcc] sm:$0xff] %v4032
      %4052 = vst [vmem:[#allocation4 + $0xd4] sm:$0xf] %v4033
      %4053 = vst [vmem:[#allocation4 + $0xe4] sm:$0xff] %v4035
      %4054 = vst [vmem:[#allocation4 + $0xec] sm:$0xf] %v4036
      %4055 = vst [vmem:[#allocation4 + $0xfc] sm:$0xff] %v4038
      %4056 = vst [vmem:[#allocation4 + $0x104] sm:$0xf] %v4039
      %4057 = vst [vmem:[#allocation4 + $0x114] sm:$0xff] %v4041
      %4058 = vst [vmem:[#allocation4 + $0x11c] sm:$0xf] %v4042
      %v4059 = vld [vmem:[#allocation3 + $0x10] sm:$0xff]
      %v4060 = vld [vmem:[#allocation3 + $0x18] sm:$0xff]
      %v4061 = vld [vmem:[#allocation3 + $0x30] sm:$0xff]
      %v4062 = vld [vmem:[#allocation3 + $0x38] sm:$0xff]
      %v4063 = vld [vmem:[#allocation3 + $0x50] sm:$0xff]
      %v4064 = vld [vmem:[#allocation3 + $0x58] sm:$0xff]
      %v4065 = vld [vmem:[#allocation3 + $0x70] sm:$0xff]
      %v4066 = vld [vmem:[#allocation3 + $0x78] sm:$0xff]
      %4075 = vrot.lane.b32.xlu0 %v4059, 106
      %v4076 = vpop.permute.xlu0 %4075
      %4077 = vrot.lane.b32.xlu0 %v4060, 106
      %v4078 = vpop.permute.xlu0 %4077
      %4079 = vrot.lane.b32.xlu0 %v4061, 106
      %v4080 = vpop.permute.xlu0 %4079
      %4081 = vrot.lane.b32.xlu0 %v4062, 106
      %v4082 = vpop.permute.xlu0 %4081
      %4083 = vrot.lane.b32.xlu0 %v4063, 106
      %v4084 = vpop.permute.xlu0 %4083
      %4085 = vrot.lane.b32.xlu0 %v4064, 106
      %v4086 = vpop.permute.xlu0 %4085
      %4087 = vrot.lane.b32.xlu0 %v4065, 106
      %v4088 = vpop.permute.xlu0 %4087
      %4089 = vrot.lane.b32.xlu0 %v4066, 106
      %v4090 = vpop.permute.xlu0 %4089
      %v4091 = vrot.slane %v4076, 4
      %v4092 = vrot.slane %v4078, 4
      %v4093 = vrot.slane %v4080, 4
      %v4094 = vrot.slane %v4082, 4
      %v4095 = vrot.slane %v4084, 4
      %v4096 = vrot.slane %v4086, 4
      %v4097 = vrot.slane %v4088, 4
      %v4098 = vrot.slane %v4090, 4
      %v4099 = vsel %vm337, %v4091, %v4092
      %v4100 = vsel %vm3536, %v4076, %v4099
      %v4101 = vsel %vm3536, %v4078, %v4092
      %v4102 = vsel %vm337, %v4093, %v4094
      %v4103 = vsel %vm3536, %v4080, %v4102
      %v4104 = vsel %vm3536, %v4082, %v4094
      %v4105 = vsel %vm337, %v4095, %v4096
      %v4106 = vsel %vm3536, %v4084, %v4105
      %v4107 = vsel %vm3536, %v4086, %v4096
      %v4108 = vsel %vm337, %v4097, %v4098
      %v4109 = vsel %vm3536, %v4088, %v4108
      %v4110 = vsel %vm3536, %v4090, %v4098
      %4119 = vst [vmem:[#allocation4 + $0x12c] sm:$0xff] %v4100
      %4120 = vst [vmem:[#allocation4 + $0x134] sm:$0xf] %v4101
      %4121 = vst [vmem:[#allocation4 + $0x144] sm:$0xff] %v4103
      %4122 = vst [vmem:[#allocation4 + $0x14c] sm:$0xf] %v4104
      %4123 = vst [vmem:[#allocation4 + $0x15c] sm:$0xff] %v4106
      %4124 = vst [vmem:[#allocation4 + $0x164] sm:$0xf] %v4107
      %4125 = vst [vmem:[#allocation4 + $0x174] sm:$0xff] %v4109
      %4126 = vst [vmem:[#allocation4 + $0x17c] sm:$0xf] %v4110
      %v4127 = vld [vmem:[#allocation3 + $0x10] sm:$0xff]
      %v4128 = vld [vmem:[#allocation3 + $0x18] sm:$0xff]
      %v4129 = vld [vmem:[#allocation3 + $0x30] sm:$0xff]
      %v4130 = vld [vmem:[#allocation3 + $0x38] sm:$0xff]
      %v4131 = vld [vmem:[#allocation3 + $0x50] sm:$0xff]
      %v4132 = vld [vmem:[#allocation3 + $0x58] sm:$0xff]
      %v4133 = vld [vmem:[#allocation3 + $0x70] sm:$0xff]
      %v4134 = vld [vmem:[#allocation3 + $0x78] sm:$0xff]
      %4143 = vrot.lane.b32.xlu0 %v4127, 105
      %v4144 = vpop.permute.xlu0 %4143
      %4145 = vrot.lane.b32.xlu0 %v4128, 105
      %v4146 = vpop.permute.xlu0 %4145
      %4147 = vrot.lane.b32.xlu0 %v4129, 105
      %v4148 = vpop.permute.xlu0 %4147
      %4149 = vrot.lane.b32.xlu0 %v4130, 105
      %v4150 = vpop.permute.xlu0 %4149
      %4151 = vrot.lane.b32.xlu0 %v4131, 105
      %v4152 = vpop.permute.xlu0 %4151
      %4153 = vrot.lane.b32.xlu0 %v4132, 105
      %v4154 = vpop.permute.xlu0 %4153
      %4155 = vrot.lane.b32.xlu0 %v4133, 105
      %v4156 = vpop.permute.xlu0 %4155
      %4157 = vrot.lane.b32.xlu0 %v4134, 105
      %v4158 = vpop.permute.xlu0 %4157
      %v4159 = vrot.slane %v4144, 4
      %v4160 = vrot.slane %v4146, 4
      %v4161 = vrot.slane %v4148, 4
      %v4162 = vrot.slane %v4150, 4
      %v4163 = vrot.slane %v4152, 4
      %v4164 = vrot.slane %v4154, 4
      %v4165 = vrot.slane %v4156, 4
      %v4166 = vrot.slane %v4158, 4
      %v4167 = vsel %vm337, %v4159, %v4160
      %v4168 = vsel %vm3605, %v4144, %v4167
      %v4169 = vsel %vm3605, %v4146, %v4160
      %v4170 = vsel %vm337, %v4161, %v4162
      %v4171 = vsel %vm3605, %v4148, %v4170
      %v4172 = vsel %vm3605, %v4150, %v4162
      %v4173 = vsel %vm337, %v4163, %v4164
      %v4174 = vsel %vm3605, %v4152, %v4173
      %v4175 = vsel %vm3605, %v4154, %v4164
      %v4176 = vsel %vm337, %v4165, %v4166
      %v4177 = vsel %vm3605, %v4156, %v4176
      %v4178 = vsel %vm3605, %v4158, %v4166
      %4187 = vst [vmem:[#allocation4 + $0x18c] sm:$0xff] %v4168
      %4188 = vst [vmem:[#allocation4 + $0x194] sm:$0xf] %v4169
      %4189 = vst [vmem:[#allocation4 + $0x1a4] sm:$0xff] %v4171
      %4190 = vst [vmem:[#allocation4 + $0x1ac] sm:$0xf] %v4172
      %4191 = vst [vmem:[#allocation4 + $0x1bc] sm:$0xff] %v4174
      %4192 = vst [vmem:[#allocation4 + $0x1c4] sm:$0xf] %v4175
      %4193 = vst [vmem:[#allocation4 + $0x1d4] sm:$0xff] %v4177
      %4194 = vst [vmem:[#allocation4 + $0x1dc] sm:$0xf] %v4178
      %v4195 = vld [vmem:[#allocation3 + $0x10] sm:$0xff]
      %v4196 = vld [vmem:[#allocation3 + $0x18] sm:$0xff]
      %v4197 = vld [vmem:[#allocation3 + $0x30] sm:$0xff]
      %v4198 = vld [vmem:[#allocation3 + $0x38] sm:$0xff]
      %v4199 = vld [vmem:[#allocation3 + $0x50] sm:$0xff]
      %v4200 = vld [vmem:[#allocation3 + $0x58] sm:$0xff]
      %v4201 = vld [vmem:[#allocation3 + $0x70] sm:$0xff]
      %v4202 = vld [vmem:[#allocation3 + $0x78] sm:$0xff]
      %4211 = vrot.lane.b32.xlu0 %v4195, 104
      %v4212 = vpop.permute.xlu0 %4211
      %4213 = vrot.lane.b32.xlu0 %v4196, 104
      %v4214 = vpop.permute.xlu0 %4213
      %4215 = vrot.lane.b32.xlu0 %v4197, 104
      %v4216 = vpop.permute.xlu0 %4215
      %4217 = vrot.lane.b32.xlu0 %v4198, 104
      %v4218 = vpop.permute.xlu0 %4217
      %4219 = vrot.lane.b32.xlu0 %v4199, 104
      %v4220 = vpop.permute.xlu0 %4219
      %4221 = vrot.lane.b32.xlu0 %v4200, 104
      %v4222 = vpop.permute.xlu0 %4221
      %4223 = vrot.lane.b32.xlu0 %v4201, 104
      %v4224 = vpop.permute.xlu0 %4223
      %4225 = vrot.lane.b32.xlu0 %v4202, 104
      %v4226 = vpop.permute.xlu0 %4225
      %v4227 = vrot.slane %v4212, 4
      %v4228 = vrot.slane %v4214, 4
      %v4229 = vrot.slane %v4216, 4
      %v4230 = vrot.slane %v4218, 4
      %v4231 = vrot.slane %v4220, 4
      %v4232 = vrot.slane %v4222, 4
      %v4233 = vrot.slane %v4224, 4
      %v4234 = vrot.slane %v4226, 4
      %v4235 = vsel %vm337, %v4227, %v4228
      %v4236 = vsel %vm3674, %v4212, %v4235
      %v4237 = vsel %vm3674, %v4214, %v4228
      %v4238 = vsel %vm337, %v4229, %v4230
      %v4239 = vsel %vm3674, %v4216, %v4238
      %v4240 = vsel %vm3674, %v4218, %v4230
      %v4241 = vsel %vm337, %v4231, %v4232
      %v4242 = vsel %vm3674, %v4220, %v4241
      %v4243 = vsel %vm3674, %v4222, %v4232
      %v4244 = vsel %vm337, %v4233, %v4234
      %v4245 = vsel %vm3674, %v4224, %v4244
      %v4246 = vsel %vm3674, %v4226, %v4234
      %4255 = vst [vmem:[#allocation4 + $0x1ec] sm:$0xff] %v4236
      %4256 = vst [vmem:[#allocation4 + $0x1f4] sm:$0xf] %v4237
      %4257 = vst [vmem:[#allocation4 + $0x204] sm:$0xff] %v4239
      %4258 = vst [vmem:[#allocation4 + $0x20c] sm:$0xf] %v4240
      %4259 = vst [vmem:[#allocation4 + $0x21c] sm:$0xff] %v4242
      %4260 = vst [vmem:[#allocation4 + $0x224] sm:$0xf] %v4243
      %4261 = vst [vmem:[#allocation4 + $0x234] sm:$0xff] %v4245
      %4262 = vst [vmem:[#allocation4 + $0x23c] sm:$0xf] %v4246
      %v4263 = vld [vmem:[#allocation3 + $0x10] sm:$0xff]
      %v4264 = vld [vmem:[#allocation3 + $0x18] sm:$0xff]
      %v4265 = vld [vmem:[#allocation3 + $0x30] sm:$0xff]
      %v4266 = vld [vmem:[#allocation3 + $0x38] sm:$0xff]
      %v4267 = vld [vmem:[#allocation3 + $0x50] sm:$0xff]
      %v4268 = vld [vmem:[#allocation3 + $0x58] sm:$0xff]
      %v4269 = vld [vmem:[#allocation3 + $0x70] sm:$0xff]
      %v4270 = vld [vmem:[#allocation3 + $0x78] sm:$0xff]
      %4279 = vrot.lane.b32.xlu0 %v4263, 84
      %v4280 = vpop.permute.xlu0 %4279
      %4281 = vrot.lane.b32.xlu0 %v4264, 84
      %v4282 = vpop.permute.xlu0 %4281
      %4283 = vrot.lane.b32.xlu0 %v4265, 84
      %v4284 = vpop.permute.xlu0 %4283
      %4285 = vrot.lane.b32.xlu0 %v4266, 84
      %v4286 = vpop.permute.xlu0 %4285
      %4287 = vrot.lane.b32.xlu0 %v4267, 84
      %v4288 = vpop.permute.xlu0 %4287
      %4289 = vrot.lane.b32.xlu0 %v4268, 84
      %v4290 = vpop.permute.xlu0 %4289
      %4291 = vrot.lane.b32.xlu0 %v4269, 84
      %v4292 = vpop.permute.xlu0 %4291
      %4293 = vrot.lane.b32.xlu0 %v4270, 84
      %v4294 = vpop.permute.xlu0 %4293
      %v4295 = vrot.slane %v4280, 4
      %v4296 = vrot.slane %v4282, 4
      %v4297 = vrot.slane %v4284, 4
      %v4298 = vrot.slane %v4286, 4
      %v4299 = vrot.slane %v4288, 4
      %v4300 = vrot.slane %v4290, 4
      %v4301 = vrot.slane %v4292, 4
      %v4302 = vrot.slane %v4294, 4
      %v4303 = vsel %vm337, %v4295, %v4296
      %v4304 = vsel %vm525, %v4280, %v4303
      %v4305 = vsel %vm525, %v4282, %v4296
      %v4306 = vsel %vm337, %v4297, %v4298
      %v4307 = vsel %vm525, %v4284, %v4306
      %v4308 = vsel %vm525, %v4286, %v4298
      %v4309 = vsel %vm337, %v4299, %v4300
      %v4310 = vsel %vm525, %v4288, %v4309
      %v4311 = vsel %vm525, %v4290, %v4300
      %v4312 = vsel %vm337, %v4301, %v4302
      %v4313 = vsel %vm525, %v4292, %v4312
      %v4314 = vsel %vm525, %v4294, %v4302
      %4323 = vst [vmem:[#allocation4 + $0x24c] sm:$0xff] %v4304
      %4324 = vst [vmem:[#allocation4 + $0x254] sm:$0xf] %v4305
      %4325 = vst [vmem:[#allocation4 + $0x264] sm:$0xff] %v4307
      %4326 = vst [vmem:[#allocation4 + $0x26c] sm:$0xf] %v4308
      %4327 = vst [vmem:[#allocation4 + $0x27c] sm:$0xff] %v4310
      %4328 = vst [vmem:[#allocation4 + $0x284] sm:$0xf] %v4311
      %4329 = vst [vmem:[#allocation4 + $0x294] sm:$0xff] %v4313
      %4330 = vst [vmem:[#allocation4 + $0x29c] sm:$0xf] %v4314
      %v4331 = vld [vmem:[#allocation3 + $0x10] sm:$0xff]
      %v4332 = vld [vmem:[#allocation3 + $0x18] sm:$0xff]
      %v4333 = vld [vmem:[#allocation3 + $0x30] sm:$0xff]
      %v4334 = vld [vmem:[#allocation3 + $0x38] sm:$0xff]
      %v4335 = vld [vmem:[#allocation3 + $0x50] sm:$0xff]
      %v4336 = vld [vmem:[#allocation3 + $0x58] sm:$0xff]
      %v4337 = vld [vmem:[#allocation3 + $0x70] sm:$0xff]
      %v4338 = vld [vmem:[#allocation3 + $0x78] sm:$0xff]
      %4347 = vrot.lane.b32.xlu0 %v4331, 83
      %v4348 = vpop.permute.xlu0 %4347
      %4349 = vrot.lane.b32.xlu0 %v4332, 83
      %v4350 = vpop.permute.xlu0 %4349
      %4351 = vrot.lane.b32.xlu0 %v4333, 83
      %v4352 = vpop.permute.xlu0 %4351
      %4353 = vrot.lane.b32.xlu0 %v4334, 83
      %v4354 = vpop.permute.xlu0 %4353
      %4355 = vrot.lane.b32.xlu0 %v4335, 83
      %v4356 = vpop.permute.xlu0 %4355
      %4357 = vrot.lane.b32.xlu0 %v4336, 83
      %v4358 = vpop.permute.xlu0 %4357
      %4359 = vrot.lane.b32.xlu0 %v4337, 83
      %v4360 = vpop.permute.xlu0 %4359
      %4361 = vrot.lane.b32.xlu0 %v4338, 83
      %v4362 = vpop.permute.xlu0 %4361
      %v4363 = vrot.slane %v4348, 4
      %v4364 = vrot.slane %v4350, 4
      %v4365 = vrot.slane %v4352, 4
      %v4366 = vrot.slane %v4354, 4
      %v4367 = vrot.slane %v4356, 4
      %v4368 = vrot.slane %v4358, 4
      %v4369 = vrot.slane %v4360, 4
      %v4370 = vrot.slane %v4362, 4
      %v4371 = vsel %vm337, %v4363, %v4364
      %v4372 = vsel %vm3811, %v4348, %v4371
      %v4373 = vsel %vm3811, %v4350, %v4364
      %v4374 = vsel %vm337, %v4365, %v4366
      %v4375 = vsel %vm3811, %v4352, %v4374
      %v4376 = vsel %vm3811, %v4354, %v4366
      %v4377 = vsel %vm337, %v4367, %v4368
      %v4378 = vsel %vm3811, %v4356, %v4377
      %v4379 = vsel %vm3811, %v4358, %v4368
      %v4380 = vsel %vm337, %v4369, %v4370
      %v4381 = vsel %vm3811, %v4360, %v4380
      %v4382 = vsel %vm3811, %v4362, %v4370
      %4391 = vst [vmem:[#allocation4 + $0x2ac] sm:$0xff] %v4372
      %4392 = vst [vmem:[#allocation4 + $0x2b4] sm:$0xf] %v4373
      %4393 = vst [vmem:[#allocation4 + $0x2c4] sm:$0xff] %v4375
      %4394 = vst [vmem:[#allocation4 + $0x2cc] sm:$0xf] %v4376
      %4395 = vst [vmem:[#allocation4 + $0x2dc] sm:$0xff] %v4378
      %4396 = vst [vmem:[#allocation4 + $0x2e4] sm:$0xf] %v4379
      %4397 = vst [vmem:[#allocation4 + $0x2f4] sm:$0xff] %v4381
      %4398 = vst [vmem:[#allocation4 + $0x2fc] sm:$0xf] %v4382
      %v4399 = vld [vmem:[#allocation3 + $0x10] sm:$0xff]
      %v4400 = vld [vmem:[#allocation3 + $0x18] sm:$0xff]
      %v4401 = vld [vmem:[#allocation3 + $0x30] sm:$0xff]
      %v4402 = vld [vmem:[#allocation3 + $0x38] sm:$0xff]
      %v4403 = vld [vmem:[#allocation3 + $0x50] sm:$0xff]
      %v4404 = vld [vmem:[#allocation3 + $0x58] sm:$0xff]
      %v4405 = vld [vmem:[#allocation3 + $0x70] sm:$0xff]
      %v4406 = vld [vmem:[#allocation3 + $0x78] sm:$0xff]
      %4415 = vrot.lane.b32.xlu0 %v4399, 82
      %v4416 = vpop.permute.xlu0 %4415
      %4417 = vrot.lane.b32.xlu0 %v4400, 82
      %v4418 = vpop.permute.xlu0 %4417
      %4419 = vrot.lane.b32.xlu0 %v4401, 82
      %v4420 = vpop.permute.xlu0 %4419
      %4421 = vrot.lane.b32.xlu0 %v4402, 82
      %v4422 = vpop.permute.xlu0 %4421
      %4423 = vrot.lane.b32.xlu0 %v4403, 82
      %v4424 = vpop.permute.xlu0 %4423
      %4425 = vrot.lane.b32.xlu0 %v4404, 82
      %v4426 = vpop.permute.xlu0 %4425
      %4427 = vrot.lane.b32.xlu0 %v4405, 82
      %v4428 = vpop.permute.xlu0 %4427
      %4429 = vrot.lane.b32.xlu0 %v4406, 82
      %v4430 = vpop.permute.xlu0 %4429
      %v4431 = vrot.slane %v4416, 4
      %v4432 = vrot.slane %v4418, 4
      %v4433 = vrot.slane %v4420, 4
      %v4434 = vrot.slane %v4422, 4
      %v4435 = vrot.slane %v4424, 4
      %v4436 = vrot.slane %v4426, 4
      %v4437 = vrot.slane %v4428, 4
      %v4438 = vrot.slane %v4430, 4
      %v4439 = vsel %vm337, %v4431, %v4432
      %v4440 = vsel %vm618, %v4416, %v4439
      %v4441 = vsel %vm618, %v4418, %v4432
      %v4442 = vsel %vm337, %v4433, %v4434
      %v4443 = vsel %vm618, %v4420, %v4442
      %v4444 = vsel %vm618, %v4422, %v4434
      %v4445 = vsel %vm337, %v4435, %v4436
      %v4446 = vsel %vm618, %v4424, %v4445
      %v4447 = vsel %vm618, %v4426, %v4436
      %v4448 = vsel %vm337, %v4437, %v4438
      %v4449 = vsel %vm618, %v4428, %v4448
      %v4450 = vsel %vm618, %v4430, %v4438
      %4459 = vst [vmem:[#allocation4 + $0x30c] sm:$0xff] %v4440
      %4460 = vst [vmem:[#allocation4 + $0x314] sm:$0xf] %v4441
      %4461 = vst [vmem:[#allocation4 + $0x324] sm:$0xff] %v4443
      %4462 = vst [vmem:[#allocation4 + $0x32c] sm:$0xf] %v4444
      %4463 = vst [vmem:[#allocation4 + $0x33c] sm:$0xff] %v4446
      %4464 = vst [vmem:[#allocation4 + $0x344] sm:$0xf] %v4447
      %4465 = vst [vmem:[#allocation4 + $0x354] sm:$0xff] %v4449
      %4466 = vst [vmem:[#allocation4 + $0x35c] sm:$0xf] %v4450
      %v4467 = vld [vmem:[%s4] sm:$0xff]
      %v4468 = vld [vmem:[%s4 + $0x8] sm:$0xf]
      %v4469 = vld [vmem:[%s4 + $0xc] sm:$0xff]
      %v4470 = vld [vmem:[%s4 + $0x14] sm:$0xf]
      %v4471 = vld [vmem:[%s4 + $0x18] sm:$0xff]
      %v4472 = vld [vmem:[%s4 + $0x20] sm:$0xf]
      %v4473 = vld [vmem:[%s4 + $0x24] sm:$0xff]
      %v4474 = vld [vmem:[%s4 + $0x2c] sm:$0xf]
      %v4475 = vld [vmem:[#allocation4] sm:$0xff]
      %v4476 = vld [vmem:[#allocation4 + $0x8] sm:$0xff]
      %v4477 = vld [vmem:[#allocation4 + $0x10] sm:$0xff]
      %v4478 = vld [vmem:[#allocation4 + $0x18] sm:$0xff]
      %v4479 = vld [vmem:[#allocation4 + $0x20] sm:$0xff]
      %v4480 = vld [vmem:[#allocation4 + $0x28] sm:$0xff]
      %v4481 = vld [vmem:[#allocation4 + $0x30] sm:$0xff]
      %v4482 = vld [vmem:[#allocation4 + $0x38] sm:$0xff]
      %v4483 = vld [vmem:[#allocation4 + $0x40] sm:$0xff]
      %v4484 = vld [vmem:[#allocation4 + $0x48] sm:$0xff]
      %v4485 = vld [vmem:[#allocation4 + $0x50] sm:$0xff]
      %v4486 = vld [vmem:[#allocation4 + $0x58] sm:$0xff]
      %v4487 = vld [vmem:[#allocation4 + $0x60] sm:$0xff]
      %v4488 = vld [vmem:[#allocation4 + $0x68] sm:$0xff]
      %v4489 = vld [vmem:[#allocation4 + $0x70] sm:$0xff]
      %v4490 = vld [vmem:[#allocation4 + $0x78] sm:$0xff]
      %v4491 = vld [vmem:[#allocation4 + $0x80] sm:$0xff]
      %v4492 = vld [vmem:[#allocation4 + $0x88] sm:$0xff]
      %v4493 = vld [vmem:[#allocation4 + $0x90] sm:$0xff]
      %v4494 = vld [vmem:[#allocation4 + $0x98] sm:$0xff]
      %v4495 = vld [vmem:[#allocation4 + $0xa0] sm:$0xff]
      %v4496 = vld [vmem:[#allocation4 + $0xa8] sm:$0xff]
      %v4497 = vld [vmem:[#allocation4 + $0xb0] sm:$0xff]
      %v4498 = vld [vmem:[#allocation4 + $0xb8] sm:$0xff]
      %v4499 = vld [vmem:[#allocation4 + $0xc0] sm:$0xff]
      %v4500 = vld [vmem:[#allocation4 + $0xc8] sm:$0xff]
      %v4501 = vld [vmem:[#allocation4 + $0xd0] sm:$0xff]
      %v4502 = vld [vmem:[#allocation4 + $0xd8] sm:$0xff]
      %v4503 = vld [vmem:[#allocation4 + $0xe0] sm:$0xff]
      %v4504 = vld [vmem:[#allocation4 + $0xe8] sm:$0xff]
      %v4505 = vld [vmem:[#allocation4 + $0xf0] sm:$0xff]
      %v4506 = vld [vmem:[#allocation4 + $0xf8] sm:$0xff]
      %v4507 = vld [vmem:[#allocation4 + $0x100] sm:$0xff]
      %v4508 = vld [vmem:[#allocation4 + $0x108] sm:$0xff]
      %v4509 = vld [vmem:[#allocation4 + $0x110] sm:$0xff]
      %v4510 = vld [vmem:[#allocation4 + $0x118] sm:$0xff]
      %v4511 = vld [vmem:[#allocation4 + $0x120] sm:$0xff]
      %v4512 = vld [vmem:[#allocation4 + $0x128] sm:$0xff]
      %v4513 = vld [vmem:[#allocation4 + $0x130] sm:$0xff]
      %v4514 = vld [vmem:[#allocation4 + $0x138] sm:$0xff]
      %v4515 = vld [vmem:[#allocation4 + $0x140] sm:$0xff]
      %v4516 = vld [vmem:[#allocation4 + $0x148] sm:$0xff]
      %v4517 = vld [vmem:[#allocation4 + $0x150] sm:$0xff]
      %v4518 = vld [vmem:[#allocation4 + $0x158] sm:$0xff]
      %v4519 = vld [vmem:[#allocation4 + $0x160] sm:$0xff]
      %v4520 = vld [vmem:[#allocation4 + $0x168] sm:$0xff]
      %v4521 = vld [vmem:[#allocation4 + $0x170] sm:$0xff]
      %v4522 = vld [vmem:[#allocation4 + $0x178] sm:$0xff]
      %v4523 = vld [vmem:[#allocation4 + $0x180] sm:$0xff]
      %v4524 = vld [vmem:[#allocation4 + $0x188] sm:$0xff]
      %v4525 = vld [vmem:[#allocation4 + $0x190] sm:$0xff]
      %v4526 = vld [vmem:[#allocation4 + $0x198] sm:$0xff]
      %v4527 = vld [vmem:[#allocation4 + $0x1a0] sm:$0xff]
      %v4528 = vld [vmem:[#allocation4 + $0x1a8] sm:$0xff]
      %v4529 = vld [vmem:[#allocation4 + $0x1b0] sm:$0xff]
      %v4530 = vld [vmem:[#allocation4 + $0x1b8] sm:$0xff]
      %v4531 = vld [vmem:[#allocation4 + $0x1c0] sm:$0xff]
      %v4532 = vld [vmem:[#allocation4 + $0x1c8] sm:$0xff]
      %v4533 = vld [vmem:[#allocation4 + $0x1d0] sm:$0xff]
      %v4534 = vld [vmem:[#allocation4 + $0x1d8] sm:$0xff]
      %v4535 = vld [vmem:[#allocation4 + $0x1e0] sm:$0xff]
      %v4536 = vld [vmem:[#allocation4 + $0x1e8] sm:$0xff]
      %v4537 = vld [vmem:[#allocation4 + $0x1f0] sm:$0xff]
      %v4538 = vld [vmem:[#allocation4 + $0x1f8] sm:$0xff]
      %v4539 = vld [vmem:[#allocation4 + $0x200] sm:$0xff]
      %v4540 = vld [vmem:[#allocation4 + $0x208] sm:$0xff]
      %v4541 = vld [vmem:[#allocation4 + $0x210] sm:$0xff]
      %v4542 = vld [vmem:[#allocation4 + $0x218] sm:$0xff]
      %v4543 = vld [vmem:[#allocation4 + $0x220] sm:$0xff]
      %v4544 = vld [vmem:[#allocation4 + $0x228] sm:$0xff]
      %v4545 = vld [vmem:[#allocation4 + $0x230] sm:$0xff]
      %v4546 = vld [vmem:[#allocation4 + $0x238] sm:$0xff]
      %v4547 = vld [vmem:[#allocation4 + $0x240] sm:$0xff]
      %v4548 = vld [vmem:[#allocation4 + $0x248] sm:$0xff]
      %v4549 = vld [vmem:[#allocation4 + $0x250] sm:$0xff]
      %v4550 = vld [vmem:[#allocation4 + $0x258] sm:$0xff]
      %v4551 = vld [vmem:[#allocation4 + $0x260] sm:$0xff]
      %v4552 = vld [vmem:[#allocation4 + $0x268] sm:$0xff]
      %v4553 = vld [vmem:[#allocation4 + $0x270] sm:$0xff]
      %v4554 = vld [vmem:[#allocation4 + $0x278] sm:$0xff]
      %v4555 = vld [vmem:[#allocation4 + $0x280] sm:$0xff]
      %v4556 = vld [vmem:[#allocation4 + $0x288] sm:$0xff]
      %v4557 = vld [vmem:[#allocation4 + $0x290] sm:$0xff]
      %v4558 = vld [vmem:[#allocation4 + $0x298] sm:$0xff]
      %v4559 = vld [vmem:[#allocation4 + $0x2a0] sm:$0xff]
      %v4560 = vld [vmem:[#allocation4 + $0x2a8] sm:$0xff]
      %v4561 = vld [vmem:[#allocation4 + $0x2b0] sm:$0xff]
      %v4562 = vld [vmem:[#allocation4 + $0x2b8] sm:$0xff]
      %v4563 = vld [vmem:[#allocation4 + $0x2c0] sm:$0xff]
      %v4564 = vld [vmem:[#allocation4 + $0x2c8] sm:$0xff]
      %v4565 = vld [vmem:[#allocation4 + $0x2d0] sm:$0xff]
      %v4566 = vld [vmem:[#allocation4 + $0x2d8] sm:$0xff]
      %v4567 = vld [vmem:[#allocation4 + $0x2e0] sm:$0xff]
      %v4568 = vld [vmem:[#allocation4 + $0x2e8] sm:$0xff]
      %v4569 = vld [vmem:[#allocation4 + $0x2f0] sm:$0xff]
      %v4570 = vld [vmem:[#allocation4 + $0x2f8] sm:$0xff]
      %v4571 = vld [vmem:[#allocation4 + $0x300] sm:$0xff]
      %v4572 = vld [vmem:[#allocation4 + $0x308] sm:$0xff]
      %v4573 = vld [vmem:[#allocation4 + $0x310] sm:$0xff]
      %v4574 = vld [vmem:[#allocation4 + $0x318] sm:$0xff]
      %v4575 = vld [vmem:[#allocation4 + $0x320] sm:$0xff]
      %v4576 = vld [vmem:[#allocation4 + $0x328] sm:$0xff]
      %v4577 = vld [vmem:[#allocation4 + $0x330] sm:$0xff]
      %v4578 = vld [vmem:[#allocation4 + $0x338] sm:$0xff]
      %v4579 = vld [vmem:[#allocation4 + $0x340] sm:$0xff]
      %v4580 = vld [vmem:[#allocation4 + $0x348] sm:$0xff]
      %v4581 = vld [vmem:[#allocation4 + $0x350] sm:$0xff]
      %v4582 = vld [vmem:[#allocation4 + $0x358] sm:$0xff]
      %v4583 = vld [vmem:[%s5] sm:$0xff]
      %v4584 = vld [vmem:[%s5 + $0x8] sm:$0xff]
      %v4585 = vld [vmem:[%s5 + $0x10] sm:$0xff]
      %v4586 = vld [vmem:[%s5 + $0x18] sm:$0xff]
      %4588 = vset.pattern.permute.xlu0 0
      %4589 = vperm.xlu0 %4588, %v4583
      %v4590 = vpop.permute.xlu0 %4589
      %4593 = vset.pattern.permute.xlu0 0
      %4594 = vperm.xlu0 %4593, %v4584
      %v4595 = vpop.permute.xlu0 %4594
      %4598 = vset.pattern.permute.xlu0 0
      %4599 = vperm.xlu0 %4598, %v4585
      %v4600 = vpop.permute.xlu0 %4599
      %4603 = vset.pattern.permute.xlu0 0
      %4604 = vperm.xlu0 %4603, %v4586
      %v4605 = vpop.permute.xlu0 %4604
      %v4615 = vunpack.c.l.b16 %v4467
      %v4616 = vunpack.c.h.b16 %v4467
      %v4617 = vunpack.c.l.b16 %v4468
      %v4618 = vunpack.c.l.b16 %v4469
      %v4619 = vunpack.c.h.b16 %v4469
      %v4620 = vunpack.c.l.b16 %v4470
      %v4621 = vunpack.c.l.b16 %v4471
      %v4622 = vunpack.c.h.b16 %v4471
      %v4623 = vunpack.c.l.b16 %v4472
      %v4624 = vunpack.c.l.b16 %v4473
      %v4625 = vunpack.c.h.b16 %v4473
      %v4626 = vunpack.c.l.b16 %v4474
      %v4627 = vpack.c.b16 %v4618, %v4615
      %v4628 = vpack.c.b16 %v4619, %v4616
      %v4629 = vpack.c.b16 %v4620, %v4617
      %v4630 = vpack.c.b16 %v4624, %v4621
      %v4631 = vpack.c.b16 %v4625, %v4622
      %v4632 = vpack.c.b16 %v4626, %v4623
      %v4745 = vunpack.c.l.b16 %v4475
      %v4746 = vunpack.c.h.b16 %v4475
      %v4747 = vunpack.c.l.b16 %v4476
      %v4748 = vunpack.c.h.b16 %v4476
      %v4749 = vunpack.c.l.b16 %v4477
      %v4750 = vunpack.c.h.b16 %v4477
      %v4751 = vunpack.c.l.b16 %v4478
      %v4752 = vunpack.c.h.b16 %v4478
      %v4753 = vunpack.c.l.b16 %v4479
      %v4754 = vunpack.c.h.b16 %v4479
      %v4755 = vunpack.c.l.b16 %v4480
      %v4756 = vunpack.c.h.b16 %v4480
      %v4757 = vunpack.c.l.b16 %v4481
      %v4758 = vunpack.c.h.b16 %v4481
      %v4759 = vunpack.c.l.b16 %v4482
      %v4760 = vunpack.c.h.b16 %v4482
      %v4761 = vunpack.c.l.b16 %v4483
      %v4762 = vunpack.c.h.b16 %v4483
      %v4763 = vunpack.c.l.b16 %v4484
      %v4764 = vunpack.c.h.b16 %v4484
      %v4765 = vunpack.c.l.b16 %v4485
      %v4766 = vunpack.c.h.b16 %v4485
      %v4767 = vunpack.c.l.b16 %v4486
      %v4768 = vunpack.c.h.b16 %v4486
      %v4769 = vunpack.c.l.b16 %v4487
      %v4770 = vunpack.c.h.b16 %v4487
      %v4771 = vunpack.c.l.b16 %v4488
      %v4772 = vunpack.c.h.b16 %v4488
      %v4773 = vunpack.c.l.b16 %v4489
      %v4774 = vunpack.c.h.b16 %v4489
      %v4775 = vunpack.c.l.b16 %v4490
      %v4776 = vunpack.c.h.b16 %v4490
      %v4777 = vunpack.c.l.b16 %v4491
      %v4778 = vunpack.c.h.b16 %v4491
      %v4779 = vunpack.c.l.b16 %v4492
      %v4780 = vunpack.c.h.b16 %v4492
      %v4781 = vunpack.c.l.b16 %v4493
      %v4782 = vunpack.c.h.b16 %v4493
      %v4783 = vunpack.c.l.b16 %v4494
      %v4784 = vunpack.c.h.b16 %v4494
      %v4785 = vunpack.c.l.b16 %v4495
      %v4786 = vunpack.c.h.b16 %v4495
      %v4787 = vunpack.c.l.b16 %v4496
      %v4788 = vunpack.c.h.b16 %v4496
      %v4789 = vunpack.c.l.b16 %v4497
      %v4790 = vunpack.c.h.b16 %v4497
      %v4791 = vunpack.c.l.b16 %v4498
      %v4792 = vunpack.c.h.b16 %v4498
      %v4793 = vunpack.c.l.b16 %v4499
      %v4794 = vunpack.c.h.b16 %v4499
      %v4795 = vunpack.c.l.b16 %v4500
      %v4796 = vunpack.c.h.b16 %v4500
      %v4797 = vunpack.c.l.b16 %v4501
      %v4798 = vunpack.c.h.b16 %v4501
      %v4799 = vunpack.c.l.b16 %v4502
      %v4800 = vunpack.c.h.b16 %v4502
      %v4801 = vunpack.c.l.b16 %v4503
      %v4802 = vunpack.c.h.b16 %v4503
      %v4803 = vunpack.c.l.b16 %v4504
      %v4804 = vunpack.c.h.b16 %v4504
      %v4805 = vunpack.c.l.b16 %v4505
      %v4806 = vunpack.c.h.b16 %v4505
      %v4807 = vunpack.c.l.b16 %v4506
      %v4808 = vunpack.c.h.b16 %v4506
      %v4809 = vunpack.c.l.b16 %v4507
      %v4810 = vunpack.c.h.b16 %v4507
      %v4811 = vunpack.c.l.b16 %v4508
      %v4812 = vunpack.c.h.b16 %v4508
      %v4813 = vunpack.c.l.b16 %v4509
      %v4814 = vunpack.c.h.b16 %v4509
      %v4815 = vunpack.c.l.b16 %v4510
      %v4816 = vunpack.c.h.b16 %v4510
      %v4817 = vunpack.c.l.b16 %v4511
      %v4818 = vunpack.c.h.b16 %v4511
      %v4819 = vunpack.c.l.b16 %v4512
      %v4820 = vunpack.c.h.b16 %v4512
      %v4821 = vunpack.c.l.b16 %v4513
      %v4822 = vunpack.c.h.b16 %v4513
      %v4823 = vunpack.c.l.b16 %v4514
      %v4824 = vunpack.c.h.b16 %v4514
      %v4825 = vunpack.c.l.b16 %v4515
      %v4826 = vunpack.c.h.b16 %v4515
      %v4827 = vunpack.c.l.b16 %v4516
      %v4828 = vunpack.c.h.b16 %v4516
      %v4829 = vunpack.c.l.b16 %v4517
      %v4830 = vunpack.c.h.b16 %v4517
      %v4831 = vunpack.c.l.b16 %v4518
      %v4832 = vunpack.c.h.b16 %v4518
      %v4833 = vunpack.c.l.b16 %v4519
      %v4834 = vunpack.c.h.b16 %v4519
      %v4835 = vunpack.c.l.b16 %v4520
      %v4836 = vunpack.c.h.b16 %v4520
      %v4837 = vunpack.c.l.b16 %v4521
      %v4838 = vunpack.c.h.b16 %v4521
      %v4839 = vunpack.c.l.b16 %v4522
      %v4840 = vunpack.c.h.b16 %v4522
      %v4841 = vunpack.c.l.b16 %v4523
      %v4842 = vunpack.c.h.b16 %v4523
      %v4843 = vunpack.c.l.b16 %v4524
      %v4844 = vunpack.c.h.b16 %v4524
      %v4845 = vunpack.c.l.b16 %v4525
      %v4846 = vunpack.c.h.b16 %v4525
      %v4847 = vunpack.c.l.b16 %v4526
      %v4848 = vunpack.c.h.b16 %v4526
      %v4849 = vunpack.c.l.b16 %v4527
      %v4850 = vunpack.c.h.b16 %v4527
      %v4851 = vunpack.c.l.b16 %v4528
      %v4852 = vunpack.c.h.b16 %v4528
      %v4853 = vunpack.c.l.b16 %v4529
      %v4854 = vunpack.c.h.b16 %v4529
      %v4855 = vunpack.c.l.b16 %v4530
      %v4856 = vunpack.c.h.b16 %v4530
      %v4857 = vunpack.c.l.b16 %v4531
      %v4858 = vunpack.c.h.b16 %v4531
      %v4859 = vunpack.c.l.b16 %v4532
      %v4860 = vunpack.c.h.b16 %v4532
      %v4861 = vunpack.c.l.b16 %v4533
      %v4862 = vunpack.c.h.b16 %v4533
      %v4863 = vunpack.c.l.b16 %v4534
      %v4864 = vunpack.c.h.b16 %v4534
      %v4865 = vunpack.c.l.b16 %v4535
      %v4866 = vunpack.c.h.b16 %v4535
      %v4867 = vunpack.c.l.b16 %v4536
      %v4868 = vunpack.c.h.b16 %v4536
      %v4869 = vunpack.c.l.b16 %v4537
      %v4870 = vunpack.c.h.b16 %v4537
      %v4871 = vunpack.c.l.b16 %v4538
      %v4872 = vunpack.c.h.b16 %v4538
      %v4873 = vunpack.c.l.b16 %v4539
      %v4874 = vunpack.c.h.b16 %v4539
      %v4875 = vunpack.c.l.b16 %v4540
      %v4876 = vunpack.c.h.b16 %v4540
      %v4877 = vunpack.c.l.b16 %v4541
      %v4878 = vunpack.c.h.b16 %v4541
      %v4879 = vunpack.c.l.b16 %v4542
      %v4880 = vunpack.c.h.b16 %v4542
      %v4881 = vunpack.c.l.b16 %v4543
      %v4882 = vunpack.c.h.b16 %v4543
      %v4883 = vunpack.c.l.b16 %v4544
      %v4884 = vunpack.c.h.b16 %v4544
      %v4885 = vunpack.c.l.b16 %v4545
      %v4886 = vunpack.c.h.b16 %v4545
      %v4887 = vunpack.c.l.b16 %v4546
      %v4888 = vunpack.c.h.b16 %v4546
      %v4889 = vunpack.c.l.b16 %v4547
      %v4890 = vunpack.c.h.b16 %v4547
      %v4891 = vunpack.c.l.b16 %v4548
      %v4892 = vunpack.c.h.b16 %v4548
      %v4893 = vunpack.c.l.b16 %v4549
      %v4894 = vunpack.c.h.b16 %v4549
      %v4895 = vunpack.c.l.b16 %v4550
      %v4896 = vunpack.c.h.b16 %v4550
      %v4897 = vunpack.c.l.b16 %v4551
      %v4898 = vunpack.c.h.b16 %v4551
      %v4899 = vunpack.c.l.b16 %v4552
      %v4900 = vunpack.c.h.b16 %v4552
      %v4901 = vunpack.c.l.b16 %v4553
      %v4902 = vunpack.c.h.b16 %v4553
      %v4903 = vunpack.c.l.b16 %v4554
      %v4904 = vunpack.c.h.b16 %v4554
      %v4905 = vunpack.c.l.b16 %v4555
      %v4906 = vunpack.c.h.b16 %v4555
      %v4907 = vunpack.c.l.b16 %v4556
      %v4908 = vunpack.c.h.b16 %v4556
      %v4909 = vunpack.c.l.b16 %v4557
      %v4910 = vunpack.c.h.b16 %v4557
      %v4911 = vunpack.c.l.b16 %v4558
      %v4912 = vunpack.c.h.b16 %v4558
      %v4913 = vunpack.c.l.b16 %v4559
      %v4914 = vunpack.c.h.b16 %v4559
      %v4915 = vunpack.c.l.b16 %v4560
      %v4916 = vunpack.c.h.b16 %v4560
      %v4917 = vunpack.c.l.b16 %v4561
      %v4918 = vunpack.c.h.b16 %v4561
      %v4919 = vunpack.c.l.b16 %v4562
      %v4920 = vunpack.c.h.b16 %v4562
      %v4921 = vunpack.c.l.b16 %v4563
      %v4922 = vunpack.c.h.b16 %v4563
      %v4923 = vunpack.c.l.b16 %v4564
      %v4924 = vunpack.c.h.b16 %v4564
      %v4925 = vunpack.c.l.b16 %v4565
      %v4926 = vunpack.c.h.b16 %v4565
      %v4927 = vunpack.c.l.b16 %v4566
      %v4928 = vunpack.c.h.b16 %v4566
      %v4929 = vunpack.c.l.b16 %v4567
      %v4930 = vunpack.c.h.b16 %v4567
      %v4931 = vunpack.c.l.b16 %v4568
      %v4932 = vunpack.c.h.b16 %v4568
      %v4933 = vunpack.c.l.b16 %v4569
      %v4934 = vunpack.c.h.b16 %v4569
      %v4935 = vunpack.c.l.b16 %v4570
      %v4936 = vunpack.c.h.b16 %v4570
      %v4937 = vunpack.c.l.b16 %v4571
      %v4938 = vunpack.c.h.b16 %v4571
      %v4939 = vunpack.c.l.b16 %v4572
      %v4940 = vunpack.c.h.b16 %v4572
      %v4941 = vunpack.c.l.b16 %v4573
      %v4942 = vunpack.c.h.b16 %v4573
      %v4943 = vunpack.c.l.b16 %v4574
      %v4944 = vunpack.c.h.b16 %v4574
      %v4945 = vunpack.c.l.b16 %v4575
      %v4946 = vunpack.c.h.b16 %v4575
      %v4947 = vunpack.c.l.b16 %v4576
      %v4948 = vunpack.c.h.b16 %v4576
      %v4949 = vunpack.c.l.b16 %v4577
      %v4950 = vunpack.c.h.b16 %v4577
      %v4951 = vunpack.c.l.b16 %v4578
      %v4952 = vunpack.c.h.b16 %v4578
      %v4953 = vunpack.c.l.b16 %v4579
      %v4954 = vunpack.c.h.b16 %v4579
      %v4955 = vunpack.c.l.b16 %v4580
      %v4956 = vunpack.c.h.b16 %v4580
      %v4957 = vunpack.c.l.b16 %v4581
      %v4958 = vunpack.c.h.b16 %v4581
      %v4959 = vunpack.c.l.b16 %v4582
      %v4960 = vunpack.c.h.b16 %v4582
      %v4961 = vpack.c.b16 %v4751, %v4745
      %v4962 = vpack.c.b16 %v4752, %v4746
      %v4963 = vpack.c.b16 %v4753, %v4747
      %v4964 = vpack.c.b16 %v4754, %v4748
      %v4965 = vpack.c.b16 %v4755, %v4749
      %v4966 = vpack.c.b16 %v4756, %v4750
      %v4967 = vpack.c.b16 %v4763, %v4757
      %v4968 = vpack.c.b16 %v4764, %v4758
      %v4969 = vpack.c.b16 %v4765, %v4759
      %v4970 = vpack.c.b16 %v4766, %v4760
      %v4971 = vpack.c.b16 %v4767, %v4761
      %v4972 = vpack.c.b16 %v4768, %v4762
      %v4973 = vpack.c.b16 %v4775, %v4769
      %v4974 = vpack.c.b16 %v4776, %v4770
      %v4975 = vpack.c.b16 %v4777, %v4771
      %v4976 = vpack.c.b16 %v4778, %v4772
      %v4977 = vpack.c.b16 %v4779, %v4773
      %v4978 = vpack.c.b16 %v4780, %v4774
      %v4979 = vpack.c.b16 %v4787, %v4781
      %v4980 = vpack.c.b16 %v4788, %v4782
      %v4981 = vpack.c.b16 %v4789, %v4783
      %v4982 = vpack.c.b16 %v4790, %v4784
      %v4983 = vpack.c.b16 %v4791, %v4785
      %v4984 = vpack.c.b16 %v4792, %v4786
      %v4985 = vpack.c.b16 %v4799, %v4793
      %v4986 = vpack.c.b16 %v4800, %v4794
      %v4987 = vpack.c.b16 %v4801, %v4795
      %v4988 = vpack.c.b16 %v4802, %v4796
      %v4989 = vpack.c.b16 %v4803, %v4797
      %v4990 = vpack.c.b16 %v4804, %v4798
      %v4991 = vpack.c.b16 %v4811, %v4805
      %v4992 = vpack.c.b16 %v4812, %v4806
      %v4993 = vpack.c.b16 %v4813, %v4807
      %v4994 = vpack.c.b16 %v4814, %v4808
      %v4995 = vpack.c.b16 %v4815, %v4809
      %v4996 = vpack.c.b16 %v4816, %v4810
      %v4997 = vpack.c.b16 %v4823, %v4817
      %v4998 = vpack.c.b16 %v4824, %v4818
      %v4999 = vpack.c.b16 %v4825, %v4819
      %v5000 = vpack.c.b16 %v4826, %v4820
      %v5001 = vpack.c.b16 %v4827, %v4821
      %v5002 = vpack.c.b16 %v4828, %v4822
      %v5003 = vpack.c.b16 %v4835, %v4829
      %v5004 = vpack.c.b16 %v4836, %v4830
      %v5005 = vpack.c.b16 %v4837, %v4831
      %v5006 = vpack.c.b16 %v4838, %v4832
      %v5007 = vpack.c.b16 %v4839, %v4833
      %v5008 = vpack.c.b16 %v4840, %v4834
      %v5009 = vpack.c.b16 %v4847, %v4841
      %v5010 = vpack.c.b16 %v4848, %v4842
      %v5011 = vpack.c.b16 %v4849, %v4843
      %v5012 = vpack.c.b16 %v4850, %v4844
      %v5013 = vpack.c.b16 %v4851, %v4845
      %v5014 = vpack.c.b16 %v4852, %v4846
      %v5015 = vpack.c.b16 %v4859, %v4853
      %v5016 = vpack.c.b16 %v4860, %v4854
      %v5017 = vpack.c.b16 %v4861, %v4855
      %v5018 = vpack.c.b16 %v4862, %v4856
      %v5019 = vpack.c.b16 %v4863, %v4857
      %v5020 = vpack.c.b16 %v4864, %v4858
      %v5021 = vpack.c.b16 %v4871, %v4865
      %v5022 = vpack.c.b16 %v4872, %v4866
      %v5023 = vpack.c.b16 %v4873, %v4867
      %v5024 = vpack.c.b16 %v4874, %v4868
      %v5025 = vpack.c.b16 %v4875, %v4869
      %v5026 = vpack.c.b16 %v4876, %v4870
      %v5027 = vpack.c.b16 %v4883, %v4877
      %v5028 = vpack.c.b16 %v4884, %v4878
      %v5029 = vpack.c.b16 %v4885, %v4879
      %v5030 = vpack.c.b16 %v4886, %v4880
      %v5031 = vpack.c.b16 %v4887, %v4881
      %v5032 = vpack.c.b16 %v4888, %v4882
      %v5033 = vpack.c.b16 %v4895, %v4889
      %v5034 = vpack.c.b16 %v4896, %v4890
      %v5035 = vpack.c.b16 %v4897, %v4891
      %v5036 = vpack.c.b16 %v4898, %v4892
      %v5037 = vpack.c.b16 %v4899, %v4893
      %v5038 = vpack.c.b16 %v4900, %v4894
      %v5039 = vpack.c.b16 %v4907, %v4901
      %v5040 = vpack.c.b16 %v4908, %v4902
      %v5041 = vpack.c.b16 %v4909, %v4903
      %v5042 = vpack.c.b16 %v4910, %v4904
      %v5043 = vpack.c.b16 %v4911, %v4905
      %v5044 = vpack.c.b16 %v4912, %v4906
      %v5045 = vpack.c.b16 %v4919, %v4913
      %v5046 = vpack.c.b16 %v4920, %v4914
      %v5047 = vpack.c.b16 %v4921, %v4915
      %v5048 = vpack.c.b16 %v4922, %v4916
      %v5049 = vpack.c.b16 %v4923, %v4917
      %v5050 = vpack.c.b16 %v4924, %v4918
      %v5051 = vpack.c.b16 %v4931, %v4925
      %v5052 = vpack.c.b16 %v4932, %v4926
      %v5053 = vpack.c.b16 %v4933, %v4927
      %v5054 = vpack.c.b16 %v4934, %v4928
      %v5055 = vpack.c.b16 %v4935, %v4929
      %v5056 = vpack.c.b16 %v4936, %v4930
      %v5057 = vpack.c.b16 %v4943, %v4937
      %v5058 = vpack.c.b16 %v4944, %v4938
      %v5059 = vpack.c.b16 %v4945, %v4939
      %v5060 = vpack.c.b16 %v4946, %v4940
      %v5061 = vpack.c.b16 %v4947, %v4941
      %v5062 = vpack.c.b16 %v4948, %v4942
      %v5063 = vpack.c.b16 %v4955, %v4949
      %v5064 = vpack.c.b16 %v4956, %v4950
      %v5065 = vpack.c.b16 %v4957, %v4951
      %v5066 = vpack.c.b16 %v4958, %v4952
      %v5067 = vpack.c.b16 %v4959, %v4953
      %v5068 = vpack.c.b16 %v4960, %v4954
      %v5178 = vsel %vm2701, %v4629, 0
      %v5181 = vsel %vm2701, %v4632, 0
      %5183 = vmatpush.bf16.msra.mxu0 %v5003
      %5184 = vmatpush.bf16.msra.mxu0 %v4997
      %5185 = vmatpush.bf16.msra.mxu0 %v4991
      %5186 = vmatpush.bf16.msra.mxu0 %v4985
      %5187 = vmatpush.bf16.msra.mxu0 %v4979
      %5188 = vmatpush.bf16.msra.mxu0 %v4973
      %5189 = vmatpush.bf16.msra.mxu0 %v4967
      %5190 = vmatpush.bf16.msra.mxu0 %v4961
      %5191 = vmatmul.bf16.gmra.mxu0 %v4627
      %v5192 = vpop.f32.mrf.mxu0
      %v5193 = vadd.f32 %v4590, %v5192
      %v5194 = vpop.f32.mrf.mxu0
      %v5195 = vadd.f32 %v4595, %v5194
      %5196 = vmatmul.bf16.gmra.mxu0 %v4630
      %v5197 = vpop.f32.mrf.mxu0
      %v5198 = vadd.f32 %v4600, %v5197
      %v5199 = vpop.f32.mrf.mxu0
      %v5200 = vadd.f32 %v4605, %v5199
      %5201 = vdwg.mxu0
      %5202 = vmatpush.bf16.msra.mxu0 %v5051
      %5203 = vmatpush.bf16.msra.mxu0 %v5045
      %5204 = vmatpush.bf16.msra.mxu0 %v5039
      %5205 = vmatpush.bf16.msra.mxu0 %v5033
      %5206 = vmatpush.bf16.msra.mxu0 %v5027
      %5207 = vmatpush.bf16.msra.mxu0 %v5021
      %5208 = vmatpush.bf16.msra.mxu0 %v5015
      %5209 = vmatpush.bf16.msra.mxu0 %v5009
      %5210 = vmatmul.bf16.gmra.mxu0 %v4628
      %v5211 = vpop.f32.mrf.mxu0
      %v5212 = vadd.f32 %v5193, %v5211
      %v5213 = vpop.f32.mrf.mxu0
      %v5214 = vadd.f32 %v5195, %v5213
      %5215 = vmatmul.bf16.gmra.mxu0 %v4631
      %v5216 = vpop.f32.mrf.mxu0
      %v5217 = vadd.f32 %v5198, %v5216
      %v5218 = vpop.f32.mrf.mxu0
      %v5219 = vadd.f32 %v5200, %v5218
      %5220 = vdwg.mxu0
      %5221 = vmatpush.bf16.msra.mxu0 0
      %5222 = vmatpush.bf16.msra.mxu0 0
      %5223 = vmatpush.bf16.msra.mxu0 0
      %5224 = vmatpush.bf16.msra.mxu0 0
      %5225 = vmatpush.bf16.msra.mxu0 0
      %5226 = vmatpush.bf16.msra.mxu0 0
      %5227 = vmatpush.bf16.msra.mxu0 %v5063
      %5228 = vmatpush.bf16.msra.mxu0 %v5057
      %5229 = vmatmul.bf16.gmra.mxu0 %v5178
      %v5230 = vpop.f32.mrf.mxu0
      %v5231 = vadd.f32 %v5212, %v5230
      %v5232 = vpop.f32.mrf.mxu0
      %v5233 = vadd.f32 %v5214, %v5232
      %5234 = vmatmul.bf16.gmra.mxu0 %v5181
      %v5235 = vpop.f32.mrf.mxu0
      %v5236 = vadd.f32 %v5217, %v5235
      %v5237 = vpop.f32.mrf.mxu0
      %v5238 = vadd.f32 %v5219, %v5237
      %5239 = vdwg.mxu0
      %5240 = vmatpush.bf16.msra.mxu0 %v5004
      %5241 = vmatpush.bf16.msra.mxu0 %v4998
      %5242 = vmatpush.bf16.msra.mxu0 %v4992
      %5243 = vmatpush.bf16.msra.mxu0 %v4986
      %5244 = vmatpush.bf16.msra.mxu0 %v4980
      %5245 = vmatpush.bf16.msra.mxu0 %v4974
      %5246 = vmatpush.bf16.msra.mxu0 %v4968
      %5247 = vmatpush.bf16.msra.mxu0 %v4962
      %5248 = vmatmul.bf16.gmra.mxu0 %v4627
      %v5249 = vpop.f32.mrf.mxu0
      %v5250 = vadd.f32 %v4590, %v5249
      %v5251 = vpop.f32.mrf.mxu0
      %v5252 = vadd.f32 %v4595, %v5251
      %5253 = vmatmul.bf16.gmra.mxu0 %v4630
      %v5254 = vpop.f32.mrf.mxu0
      %v5255 = vadd.f32 %v4600, %v5254
      %v5256 = vpop.f32.mrf.mxu0
      %v5257 = vadd.f32 %v4605, %v5256
      %5258 = vdwg.mxu0
      %5259 = vmatpush.bf16.msra.mxu0 %v5052
      %5260 = vmatpush.bf16.msra.mxu0 %v5046
      %5261 = vmatpush.bf16.msra.mxu0 %v5040
      %5262 = vmatpush.bf16.msra.mxu0 %v5034
      %5263 = vmatpush.bf16.msra.mxu0 %v5028
      %5264 = vmatpush.bf16.msra.mxu0 %v5022
      %5265 = vmatpush.bf16.msra.mxu0 %v5016
      %5266 = vmatpush.bf16.msra.mxu0 %v5010
      %5267 = vmatmul.bf16.gmra.mxu0 %v4628
      %v5268 = vpop.f32.mrf.mxu0
      %v5269 = vadd.f32 %v5250, %v5268
      %v5270 = vpop.f32.mrf.mxu0
      %v5271 = vadd.f32 %v5252, %v5270
      %5272 = vmatmul.bf16.gmra.mxu0 %v4631
      %v5273 = vpop.f32.mrf.mxu0
      %v5274 = vadd.f32 %v5255, %v5273
      %v5275 = vpop.f32.mrf.mxu0
      %v5276 = vadd.f32 %v5257, %v5275
      %5277 = vdwg.mxu0
      %5278 = vmatpush.bf16.msra.mxu0 0
      %5279 = vmatpush.bf16.msra.mxu0 0
      %5280 = vmatpush.bf16.msra.mxu0 0
      %5281 = vmatpush.bf16.msra.mxu0 0
      %5282 = vmatpush.bf16.msra.mxu0 0
      %5283 = vmatpush.bf16.msra.mxu0 0
      %5284 = vmatpush.bf16.msra.mxu0 %v5064
      %5285 = vmatpush.bf16.msra.mxu0 %v5058
      %5286 = vmatmul.bf16.gmra.mxu0 %v5178
      %v5287 = vpop.f32.mrf.mxu0
      %v5288 = vadd.f32 %v5269, %v5287
      %v5289 = vpop.f32.mrf.mxu0
      %v5290 = vadd.f32 %v5271, %v5289
      %5291 = vmatmul.bf16.gmra.mxu0 %v5181
      %v5292 = vpop.f32.mrf.mxu0
      %v5293 = vadd.f32 %v5274, %v5292
      %v5294 = vpop.f32.mrf.mxu0
      %v5295 = vadd.f32 %v5276, %v5294
      %5296 = vdwg.mxu0
      %5297 = vmatpush.bf16.msra.mxu0 %v5005
      %5298 = vmatpush.bf16.msra.mxu0 %v4999
      %5299 = vmatpush.bf16.msra.mxu0 %v4993
      %5300 = vmatpush.bf16.msra.mxu0 %v4987
      %5301 = vmatpush.bf16.msra.mxu0 %v4981
      %5302 = vmatpush.bf16.msra.mxu0 %v4975
      %5303 = vmatpush.bf16.msra.mxu0 %v4969
      %5304 = vmatpush.bf16.msra.mxu0 %v4963
      %5305 = vmatmul.bf16.gmra.mxu0 %v4627
      %v5306 = vpop.f32.mrf.mxu0
      %v5307 = vadd.f32 %v4590, %v5306
      %v5308 = vpop.f32.mrf.mxu0
      %v5309 = vadd.f32 %v4595, %v5308
      %5310 = vmatmul.bf16.gmra.mxu0 %v4630
      %v5311 = vpop.f32.mrf.mxu0
      %v5312 = vadd.f32 %v4600, %v5311
      %v5313 = vpop.f32.mrf.mxu0
      %v5314 = vadd.f32 %v4605, %v5313
      %5315 = vdwg.mxu0
      %5316 = vmatpush.bf16.msra.mxu0 %v5053
      %5317 = vmatpush.bf16.msra.mxu0 %v5047
      %5318 = vmatpush.bf16.msra.mxu0 %v5041
      %5319 = vmatpush.bf16.msra.mxu0 %v5035
      %5320 = vmatpush.bf16.msra.mxu0 %v5029
      %5321 = vmatpush.bf16.msra.mxu0 %v5023
      %5322 = vmatpush.bf16.msra.mxu0 %v5017
      %5323 = vmatpush.bf16.msra.mxu0 %v5011
      %5324 = vmatmul.bf16.gmra.mxu0 %v4628
      %v5325 = vpop.f32.mrf.mxu0
      %v5326 = vadd.f32 %v5307, %v5325
      %v5327 = vpop.f32.mrf.mxu0
      %v5328 = vadd.f32 %v5309, %v5327
      %5329 = vmatmul.bf16.gmra.mxu0 %v4631
      %v5330 = vpop.f32.mrf.mxu0
      %v5331 = vadd.f32 %v5312, %v5330
      %v5332 = vpop.f32.mrf.mxu0
      %v5333 = vadd.f32 %v5314, %v5332
      %5334 = vdwg.mxu0
      %5335 = vmatpush.bf16.msra.mxu0 0
      %5336 = vmatpush.bf16.msra.mxu0 0
      %5337 = vmatpush.bf16.msra.mxu0 0
      %5338 = vmatpush.bf16.msra.mxu0 0
      %5339 = vmatpush.bf16.msra.mxu0 0
      %5340 = vmatpush.bf16.msra.mxu0 0
      %5341 = vmatpush.bf16.msra.mxu0 %v5065
      %5342 = vmatpush.bf16.msra.mxu0 %v5059
      %5343 = vmatmul.bf16.gmra.mxu0 %v5178
      %v5344 = vpop.f32.mrf.mxu0
      %v5345 = vadd.f32 %v5326, %v5344
      %v5346 = vpop.f32.mrf.mxu0
      %v5347 = vadd.f32 %v5328, %v5346
      %5348 = vmatmul.bf16.gmra.mxu0 %v5181
      %v5349 = vpop.f32.mrf.mxu0
      %v5350 = vadd.f32 %v5331, %v5349
      %v5351 = vpop.f32.mrf.mxu0
      %v5352 = vadd.f32 %v5333, %v5351
      %5353 = vdwg.mxu0
      %5354 = vmatpush.bf16.msra.mxu0 %v5006
      %5355 = vmatpush.bf16.msra.mxu0 %v5000
      %5356 = vmatpush.bf16.msra.mxu0 %v4994
      %5357 = vmatpush.bf16.msra.mxu0 %v4988
      %5358 = vmatpush.bf16.msra.mxu0 %v4982
      %5359 = vmatpush.bf16.msra.mxu0 %v4976
      %5360 = vmatpush.bf16.msra.mxu0 %v4970
      %5361 = vmatpush.bf16.msra.mxu0 %v4964
      %5362 = vmatmul.bf16.gmra.mxu0 %v4627
      %v5363 = vpop.f32.mrf.mxu0
      %v5364 = vadd.f32 %v4590, %v5363
      %v5365 = vpop.f32.mrf.mxu0
      %v5366 = vadd.f32 %v4595, %v5365
      %5367 = vmatmul.bf16.gmra.mxu0 %v4630
      %v5368 = vpop.f32.mrf.mxu0
      %v5369 = vadd.f32 %v4600, %v5368
      %v5370 = vpop.f32.mrf.mxu0
      %v5371 = vadd.f32 %v4605, %v5370
      %5372 = vdwg.mxu0
      %5373 = vmatpush.bf16.msra.mxu0 %v5054
      %5374 = vmatpush.bf16.msra.mxu0 %v5048
      %5375 = vmatpush.bf16.msra.mxu0 %v5042
      %5376 = vmatpush.bf16.msra.mxu0 %v5036
      %5377 = vmatpush.bf16.msra.mxu0 %v5030
      %5378 = vmatpush.bf16.msra.mxu0 %v5024
      %5379 = vmatpush.bf16.msra.mxu0 %v5018
      %5380 = vmatpush.bf16.msra.mxu0 %v5012
      %5381 = vmatmul.bf16.gmra.mxu0 %v4628
      %v5382 = vpop.f32.mrf.mxu0
      %v5383 = vadd.f32 %v5364, %v5382
      %v5384 = vpop.f32.mrf.mxu0
      %v5385 = vadd.f32 %v5366, %v5384
      %5386 = vmatmul.bf16.gmra.mxu0 %v4631
      %v5387 = vpop.f32.mrf.mxu0
      %v5388 = vadd.f32 %v5369, %v5387
      %v5389 = vpop.f32.mrf.mxu0
      %v5390 = vadd.f32 %v5371, %v5389
      %5391 = vdwg.mxu0
      %5392 = vmatpush.bf16.msra.mxu0 0
      %5393 = vmatpush.bf16.msra.mxu0 0
      %5394 = vmatpush.bf16.msra.mxu0 0
      %5395 = vmatpush.bf16.msra.mxu0 0
      %5396 = vmatpush.bf16.msra.mxu0 0
      %5397 = vmatpush.bf16.msra.mxu0 0
      %5398 = vmatpush.bf16.msra.mxu0 %v5066
      %5399 = vmatpush.bf16.msra.mxu0 %v5060
      %5400 = vmatmul.bf16.gmra.mxu0 %v5178
      %v5401 = vpop.f32.mrf.mxu0
      %v5402 = vadd.f32 %v5383, %v5401
      %v5403 = vpop.f32.mrf.mxu0
      %v5404 = vadd.f32 %v5385, %v5403
      %5405 = vmatmul.bf16.gmra.mxu0 %v5181
      %v5406 = vpop.f32.mrf.mxu0
      %v5407 = vadd.f32 %v5388, %v5406
      %v5408 = vpop.f32.mrf.mxu0
      %v5409 = vadd.f32 %v5390, %v5408
      %5410 = vdwg.mxu0
      %5411 = vmatpush.bf16.msra.mxu0 %v5007
      %5412 = vmatpush.bf16.msra.mxu0 %v5001
      %5413 = vmatpush.bf16.msra.mxu0 %v4995
      %5414 = vmatpush.bf16.msra.mxu0 %v4989
      %5415 = vmatpush.bf16.msra.mxu0 %v4983
      %5416 = vmatpush.bf16.msra.mxu0 %v4977
      %5417 = vmatpush.bf16.msra.mxu0 %v4971
      %5418 = vmatpush.bf16.msra.mxu0 %v4965
      %5419 = vmatmul.bf16.gmra.mxu0 %v4627
      %v5420 = vpop.f32.mrf.mxu0
      %v5421 = vadd.f32 %v4590, %v5420
      %v5422 = vpop.f32.mrf.mxu0
      %v5423 = vadd.f32 %v4595, %v5422
      %5424 = vmatmul.bf16.gmra.mxu0 %v4630
      %v5425 = vpop.f32.mrf.mxu0
      %v5426 = vadd.f32 %v4600, %v5425
      %v5427 = vpop.f32.mrf.mxu0
      %v5428 = vadd.f32 %v4605, %v5427
      %5429 = vdwg.mxu0
      %5430 = vmatpush.bf16.msra.mxu0 %v5055
      %5431 = vmatpush.bf16.msra.mxu0 %v5049
      %5432 = vmatpush.bf16.msra.mxu0 %v5043
      %5433 = vmatpush.bf16.msra.mxu0 %v5037
      %5434 = vmatpush.bf16.msra.mxu0 %v5031
      %5435 = vmatpush.bf16.msra.mxu0 %v5025
      %5436 = vmatpush.bf16.msra.mxu0 %v5019
      %5437 = vmatpush.bf16.msra.mxu0 %v5013
      %5438 = vmatmul.bf16.gmra.mxu0 %v4628
      %v5439 = vpop.f32.mrf.mxu0
      %v5440 = vadd.f32 %v5421, %v5439
      %v5441 = vpop.f32.mrf.mxu0
      %v5442 = vadd.f32 %v5423, %v5441
      %5443 = vmatmul.bf16.gmra.mxu0 %v4631
      %v5444 = vpop.f32.mrf.mxu0
      %v5445 = vadd.f32 %v5426, %v5444
      %v5446 = vpop.f32.mrf.mxu0
      %v5447 = vadd.f32 %v5428, %v5446
      %5448 = vdwg.mxu0
      %5449 = vmatpush.bf16.msra.mxu0 0
      %5450 = vmatpush.bf16.msra.mxu0 0
      %5451 = vmatpush.bf16.msra.mxu0 0
      %5452 = vmatpush.bf16.msra.mxu0 0
      %5453 = vmatpush.bf16.msra.mxu0 0
      %5454 = vmatpush.bf16.msra.mxu0 0
      %5455 = vmatpush.bf16.msra.mxu0 %v5067
      %5456 = vmatpush.bf16.msra.mxu0 %v5061
      %5457 = vmatmul.bf16.gmra.mxu0 %v5178
      %v5458 = vpop.f32.mrf.mxu0
      %v5459 = vadd.f32 %v5440, %v5458
      %v5460 = vpop.f32.mrf.mxu0
      %v5461 = vadd.f32 %v5442, %v5460
      %5462 = vmatmul.bf16.gmra.mxu0 %v5181
      %v5463 = vpop.f32.mrf.mxu0
      %v5464 = vadd.f32 %v5445, %v5463
      %v5465 = vpop.f32.mrf.mxu0
      %v5466 = vadd.f32 %v5447, %v5465
      %5467 = vdwg.mxu0
      %5468 = vmatpush.bf16.msra.mxu0 %v5008
      %5469 = vmatpush.bf16.msra.mxu0 %v5002
      %5470 = vmatpush.bf16.msra.mxu0 %v4996
      %5471 = vmatpush.bf16.msra.mxu0 %v4990
      %5472 = vmatpush.bf16.msra.mxu0 %v4984
      %5473 = vmatpush.bf16.msra.mxu0 %v4978
      %5474 = vmatpush.bf16.msra.mxu0 %v4972
      %5475 = vmatpush.bf16.msra.mxu0 %v4966
      %5476 = vmatmul.bf16.gmra.mxu0 %v4627
      %v5477 = vpop.f32.mrf.mxu0
      %v5478 = vadd.f32 %v4590, %v5477
      %v5479 = vpop.f32.mrf.mxu0
      %v5480 = vadd.f32 %v4595, %v5479
      %5481 = vmatmul.bf16.gmra.mxu0 %v4630
      %v5482 = vpop.f32.mrf.mxu0
      %v5483 = vadd.f32 %v4600, %v5482
      %v5484 = vpop.f32.mrf.mxu0
      %v5485 = vadd.f32 %v4605, %v5484
      %5486 = vdwg.mxu0
      %5487 = vmatpush.bf16.msra.mxu0 %v5056
      %5488 = vmatpush.bf16.msra.mxu0 %v5050
      %5489 = vmatpush.bf16.msra.mxu0 %v5044
      %5490 = vmatpush.bf16.msra.mxu0 %v5038
      %5491 = vmatpush.bf16.msra.mxu0 %v5032
      %5492 = vmatpush.bf16.msra.mxu0 %v5026
      %5493 = vmatpush.bf16.msra.mxu0 %v5020
      %5494 = vmatpush.bf16.msra.mxu0 %v5014
      %5495 = vmatmul.bf16.gmra.mxu0 %v4628
      %v5496 = vpop.f32.mrf.mxu0
      %v5497 = vadd.f32 %v5478, %v5496
      %v5498 = vpop.f32.mrf.mxu0
      %v5499 = vadd.f32 %v5480, %v5498
      %5500 = vmatmul.bf16.gmra.mxu0 %v4631
      %v5501 = vpop.f32.mrf.mxu0
      %v5502 = vadd.f32 %v5483, %v5501
      %v5503 = vpop.f32.mrf.mxu0
      %v5504 = vadd.f32 %v5485, %v5503
      %5505 = vdwg.mxu0
      %5506 = vmatpush.bf16.msra.mxu0 0
      %5507 = vmatpush.bf16.msra.mxu0 0
      %5508 = vmatpush.bf16.msra.mxu0 0
      %5509 = vmatpush.bf16.msra.mxu0 0
      %5510 = vmatpush.bf16.msra.mxu0 0
      %5511 = vmatpush.bf16.msra.mxu0 0
      %5512 = vmatpush.bf16.msra.mxu0 %v5068
      %5513 = vmatpush.bf16.msra.mxu0 %v5062
      %5514 = vmatmul.bf16.gmra.mxu0 %v5178
      %v5515 = vpop.f32.mrf.mxu0
      %v5516 = vadd.f32 %v5497, %v5515
      %v5517 = vpop.f32.mrf.mxu0
      %v5518 = vadd.f32 %v5499, %v5517
      %5519 = vmatmul.bf16.gmra.mxu0 %v5181
      %v5520 = vpop.f32.mrf.mxu0
      %v5521 = vadd.f32 %v5502, %v5520
      %v5522 = vpop.f32.mrf.mxu0
      %v5523 = vadd.f32 %v5504, %v5522
      %5524 = vdwg.mxu0
      %vm5525 = vcmp.ge.f32.partialorder %v5231, 0.0
      %vm5526 = vcmp.ge.f32.partialorder %v5288, 0.0
      %vm5527 = vcmp.ge.f32.partialorder %v5345, 0.0
      %vm5528 = vcmp.ge.f32.partialorder %v5402, 0.0
      %vm5529 = vcmp.ge.f32.partialorder %v5459, 0.0
      %vm5530 = vcmp.ge.f32.partialorder %v5516, 0.0
      %vm5531 = vcmp.ge.f32.partialorder %v5233, 0.0
      %vm5532 = vcmp.ge.f32.partialorder %v5290, 0.0
      %vm5533 = vcmp.ge.f32.partialorder %v5347, 0.0
      %vm5534 = vcmp.ge.f32.partialorder %v5404, 0.0
      %vm5535 = vcmp.ge.f32.partialorder %v5461, 0.0
      %vm5536 = vcmp.ge.f32.partialorder %v5518, 0.0
      %vm5537 = vcmp.ge.f32.partialorder %v5236, 0.0
      %vm5538 = vcmp.ge.f32.partialorder %v5293, 0.0
      %vm5539 = vcmp.ge.f32.partialorder %v5350, 0.0
      %vm5540 = vcmp.ge.f32.partialorder %v5407, 0.0
      %vm5541 = vcmp.ge.f32.partialorder %v5464, 0.0
      %vm5542 = vcmp.ge.f32.partialorder %v5521, 0.0
      %vm5543 = vcmp.ge.f32.partialorder %v5238, 0.0
      %vm5544 = vcmp.ge.f32.partialorder %v5295, 0.0
      %vm5545 = vcmp.ge.f32.partialorder %v5352, 0.0
      %vm5546 = vcmp.ge.f32.partialorder %v5409, 0.0
      %vm5547 = vcmp.ge.f32.partialorder %v5466, 0.0
      %vm5548 = vcmp.ge.f32.partialorder %v5523, 0.0
      %v5549 = vmul.f32 %v5231, 0.2
      %v5550 = vmul.f32 %v5288, 0.2
      %v5551 = vmul.f32 %v5345, 0.2
      %v5552 = vmul.f32 %v5402, 0.2
      %v5553 = vmul.f32 %v5459, 0.2
      %v5554 = vmul.f32 %v5516, 0.2
      %v5555 = vmul.f32 %v5233, 0.2
      %v5556 = vmul.f32 %v5290, 0.2
      %v5557 = vmul.f32 %v5347, 0.2
      %v5558 = vmul.f32 %v5404, 0.2
      %v5559 = vmul.f32 %v5461, 0.2
      %v5560 = vmul.f32 %v5518, 0.2
      %v5561 = vmul.f32 %v5236, 0.2
      %v5562 = vmul.f32 %v5293, 0.2
      %v5563 = vmul.f32 %v5350, 0.2
      %v5564 = vmul.f32 %v5407, 0.2
      %v5565 = vmul.f32 %v5464, 0.2
      %v5566 = vmul.f32 %v5521, 0.2
      %v5567 = vmul.f32 %v5238, 0.2
      %v5568 = vmul.f32 %v5295, 0.2
      %v5569 = vmul.f32 %v5352, 0.2
      %v5570 = vmul.f32 %v5409, 0.2
      %v5571 = vmul.f32 %v5466, 0.2
      %v5572 = vmul.f32 %v5523, 0.2
      %v5573 = vsel %vm5525, %v5231, %v5549
      %v5574 = vsel %vm5526, %v5288, %v5550
      %v5575 = vsel %vm5527, %v5345, %v5551
      %v5576 = vsel %vm5528, %v5402, %v5552
      %v5577 = vsel %vm5529, %v5459, %v5553
      %v5578 = vsel %vm5530, %v5516, %v5554
      %v5579 = vsel %vm5531, %v5233, %v5555
      %v5580 = vsel %vm5532, %v5290, %v5556
      %v5581 = vsel %vm5533, %v5347, %v5557
      %v5582 = vsel %vm5534, %v5404, %v5558
      %v5583 = vsel %vm5535, %v5461, %v5559
      %v5584 = vsel %vm5536, %v5518, %v5560
      %v5585 = vsel %vm5537, %v5236, %v5561
      %v5586 = vsel %vm5538, %v5293, %v5562
      %v5587 = vsel %vm5539, %v5350, %v5563
      %v5588 = vsel %vm5540, %v5407, %v5564
      %v5589 = vsel %vm5541, %v5464, %v5565
      %v5590 = vsel %vm5542, %v5521, %v5566
      %v5591 = vsel %vm5543, %v5238, %v5567
      %v5592 = vsel %vm5544, %v5295, %v5568
      %v5593 = vsel %vm5545, %v5352, %v5569
      %v5594 = vsel %vm5546, %v5409, %v5570
      %v5595 = vsel %vm5547, %v5466, %v5571
      %v5596 = vsel %vm5548, %v5523, %v5572
      %5597 = vst [vmem:[%s258] sm:$0xff] %v5573
      %5598 = vst [vmem:[%s258 + $0x8] sm:$0xff] %v5574
      %5599 = vst [vmem:[%s258 + $0x10] sm:$0xff] %v5575
      %5600 = vst [vmem:[%s258 + $0x18] sm:$0xff] %v5579
      %5601 = vst [vmem:[%s258 + $0x20] sm:$0xff] %v5580
      %5602 = vst [vmem:[%s258 + $0x28] sm:$0xff] %v5581
      %5603 = vst [vmem:[%s258 + $0x30] sm:$0xff] %v5585
      %5604 = vst [vmem:[%s258 + $0x38] sm:$0xff] %v5586
      %5605 = vst [vmem:[%s258 + $0x40] sm:$0xff] %v5587
      %5606 = vst [vmem:[%s258 + $0x48] sm:$0xff] %v5591
      %5607 = vst [vmem:[%s258 + $0x50] sm:$0xff] %v5592
      %5608 = vst [vmem:[%s258 + $0x58] sm:$0xff] %v5593
      %s5609 = scalar_lea.vmem %s258, 96
      %5610 = vst [vmem:[%s5609] sm:$0xff] %v5576
      %5611 = vst [vmem:[%s5609 + $0x8] sm:$0xff] %v5577
      %5612 = vst [vmem:[%s5609 + $0x10] sm:$0xff] %v5578
      %5613 = vst [vmem:[%s5609 + $0x18] sm:$0xff] %v5582
      %5614 = vst [vmem:[%s5609 + $0x20] sm:$0xff] %v5583
      %5615 = vst [vmem:[%s5609 + $0x28] sm:$0xff] %v5584
      %5616 = vst [vmem:[%s5609 + $0x30] sm:$0xff] %v5588
      %5617 = vst [vmem:[%s5609 + $0x38] sm:$0xff] %v5589
      %5618 = vst [vmem:[%s5609 + $0x40] sm:$0xff] %v5590
      %5619 = vst [vmem:[%s5609 + $0x48] sm:$0xff] %v5594
      %5620 = vst [vmem:[%s5609 + $0x50] sm:$0xff] %v5595
      %5621 = vst [vmem:[%s5609 + $0x58] sm:$0xff] %v5596
      %s5622 = smul.u32 2, %s17
      %p5623 = scmp.lt.s32.totalorder %s5622, 3
      %s5624 = scalar_select %p5623, %s5622, 3
      %s5625 = smul.addr %s5624, 12
      %s5626 = smul.addr %s5625, 8
      %s5627 = scalar_lea.vmem %s6, %s5626
      // Predicated region
      $region45: #{fwd.7} parent=43 // pred_check
        %p5628 = pneg %p166
      $region46: #{fwd.7} parent=43 // pred_check_branch
        %5630 = sbr.rel (%p5628) target = $region48
      $region47: #{fwd.7} parent=43 // pred_region
        %s5631 = smul.u32 2, %s17
      $region48: #{fwd.7} parent=43 // pred_fallthru
        _
    $region44: #{fwd.7} parent=5 // pred_fallthru
      _
    %p5632 = scmp.le.s32.totalorder 2, %s12
    // Predicated region
    $region49: #{fwd.7} parent=5 // pred_check
      %p5633 = pneg %p5632
    $region50: #{fwd.7} parent=5 // pred_check_branch
      %5635 = sbr.rel (%p5633) target = $region52
    $region51: #{fwd.7} parent=5 // pred_region
      %s5636 = ssub.s32 %s12, 2
      // Predicated region
      $region53: #{fwd.7} parent=51 // pred_check
        %p5637 = pneg %p172
      $region54: #{fwd.7} parent=51 // pred_check_branch
        %5639 = sbr.rel (%p5637) target = $region56
      $region55: #{fwd.7} parent=51 // pred_region
        %s5640 = smul.u32 2, %s18
        %p5641 = scmp.lt.s32.totalorder %s5640, 3
        %s5642 = scalar_select %p5641, %s5640, 3
        %s5643 = smul.addr %s5642, 12
        %s5644 = smul.addr %s5643, 8
        %s5645 = scalar_lea.vmem %s6, %s5644
      $region56: #{fwd.7} parent=51 // pred_fallthru
        _
    $region52: #{fwd.7} parent=5 // pred_fallthru
      _
  $region6: #{fwd.7} parent=0 // loop_footer
    %s16 = sadd.s32 1, %s12
  $region7: #{fwd.7} parent=0 // loop_footer_branch
    %11 = sbr.rel target = $region3
  $region8: #{fwd.7} parent=0 // loop_exit
    _

</llo_original>
